<compile_context>
chip_gen: v5e
topology: v5e:2x2
jax: 0.10.0
libtpu: 0.0.40
codegen_flags: <defaults>
</compile_context>

<pallas_src>
import functools

import jax
import jax.numpy as jnp
from jax.experimental import pallas as pl
from jax.experimental.pallas import tpu as pltpu

LEAKY_SLOPE = 0.2
BN_EPS = 1e-5
_K = 3        # kernel size (stride=1, padding=1 -> "same" spatial size)
_PADL = 8     # left pad of the in-VMEM padded maps -> sublane-aligned interior stores


def _window(ref, a, b, H, W):
    """Window of a zero-halo padded NHWC map for kernel tap (a, b). Static slices only."""
    return ref[:, a:a + H, _PADL - 1 + b:_PADL - 1 + b + W, :]


def _zero_halo(pad_ref, H, W):
    """Zero ONLY the halo cells the 3x3 taps read (rows 0 and H+1; cols PADL-1 and PADL+W).

    Replaces the old full-buffer zero fill (review item 1).  Must run every call:
    VMEM scratch persists across invocations and is never cleared.
    """
    N = pad_ref.shape[0]
    WP = pad_ref.shape[2]
    C = pad_ref.shape[3]
    zrow = jnp.zeros((N, 1, WP, C), jnp.float32)
    zcol = jnp.zeros((N, H, 1, C), jnp.float32)
    pad_ref[:, 0:1, :, :] = zrow                                     # top halo row
    pad_ref[:, H + 1:H + 2, :, :] = zrow                             # bottom halo row
    pad_ref[:, 1:1 + H, _PADL - 1:_PADL, :] = zcol                   # left halo column
    pad_ref[:, 1:1 + H, _PADL + W:_PADL + W + 1, :] = zcol           # right halo column


def _bn_leaky(y, gamma, beta):
    """BatchNorm2d train-mode forward (batch stats over the row axis, biased var,
    eps=1e-5) + LeakyReLU(0.2).  y: [R, C]."""
    mean = jnp.mean(y, axis=0, keepdims=True)
    var = jnp.mean(jnp.square(y - mean), axis=0, keepdims=True)
    z = (y - mean) * jax.lax.rsqrt(var + BN_EPS) * gamma + beta
    return jnp.where(z > 0, z, LEAKY_SLOPE * z)


def _gen_one_kernel(N, H, W,
                    x1_ref, w1_ref, g1_ref, b1_ref,
                    w2_ref, g2_ref, b2_ref, w3_ref,
                    out_ref, pad1_ref, col2_ref, pad2_ref):
    R = N * H * W
    C1 = w1_ref.shape[-1]          # 128
    C2 = w2_ref.shape[-1]          # 64
    K2 = _K * _K * C1              # 1152

    # ---- stage 1: ConvT(2->128) as ONE MXU matmul on the wrapper-built im2col ----
    # x1_ref: [R, 128] (9 taps x 2 channels, zero-padded K), w1_ref: [128, C1].
    y1 = jnp.dot(x1_ref[...], w1_ref[...], preferred_element_type=jnp.float32)
    y1 = _bn_leaky(y1, g1_ref[...], b1_ref[...])

    _zero_halo(pad1_ref, H, W)
    pad1_ref[:, 1:1 + H, _PADL:_PADL + W, :] = y1.reshape(N, H, W, C1)   # aligned store

    # ---- stage 2: ConvT(128->64) via in-VMEM im2col + ONE K=1152 MXU matmul ----
    # 9 lane-aligned column-block stores; no per-tap accumulator round-trips.
    for a in range(_K):
        for b in range(_K):
            t = a * _K + b
            col2_ref[:, :, :, t * C1:(t + 1) * C1] = _window(pad1_ref, a, b, H, W)
    y2 = jnp.dot(col2_ref[...].reshape(R, K2), w2_ref[...],
                 preferred_element_type=jnp.float32)
    y2 = _bn_leaky(y2, g2_ref[...], b2_ref[...])

    _zero_halo(pad2_ref, H, W)
    pad2_ref[:, 1:1 + H, _PADL:_PADL + W, :] = y2.reshape(N, H, W, C2)   # aligned store

    # ---- stage 3: ConvT(64->1) + Tanh -----------------------------------------
    # C_out = 1: per-tap VPU multiply + XLU lane-reduce; the accumulator is the tiny
    # [N, H, W] result (register-resident), not a [R, 64] channel accumulator.
    w3 = w3_ref[...]                                     # [9, C2]
    acc3 = jnp.zeros((N, H, W), jnp.float32)
    for a in range(_K):
        for b in range(_K):
            t = a * _K + b
            win = _window(pad2_ref, a, b, H, W)          # [N, H, W, C2]
            acc3 = acc3 + jnp.sum(win * w3[t], axis=-1)
    out_ref[...] = jnp.tanh(acc3)


def _flip_t(w):
    """PyTorch ConvT weight [C_in, C_out, kh, kw] -> taps [kh, kw, C_in, C_out], 180° flipped."""
    return jnp.transpose(jnp.flip(w, axis=(2, 3)), (2, 3, 0, 1))


def init_params(key):
    k1, k2, k3 = jax.random.split(key, 3)
    # PyTorch ConvTranspose2d weight shape: [C_in, C_out, kh, kw], bias=False
    w1 = jax.random.normal(k1, (2, 128, 3, 3), jnp.float32) * 0.05
    w2 = jax.random.normal(k2, (128, 64, 3, 3), jnp.float32) * 0.05
    w3 = jax.random.normal(k3, (64, 1, 3, 3), jnp.float32) * 0.05
    return {"w1": w1, "w2": w2, "w3": w3,
            "gamma1": jnp.ones((128,), jnp.float32), "beta1": jnp.zeros((128,), jnp.float32),
            "gamma2": jnp.ones((64,), jnp.float32), "beta2": jnp.zeros((64,), jnp.float32)}


@jax.jit
def gen_one_forward(x, upsampled_img, params):
    """x, upsampled_img: [N, 1, H, W] float32 (NCHW, like the PyTorch module)."""
    N, _, H, W = x.shape
    R = N * H * W
    C1 = params["w1"].shape[1]      # 128
    C2 = params["w2"].shape[1]      # 64
    K1 = _K * _K * 2                # 18 = 9 taps x 2 input channels
    K1P = 128                       # zero-pad K so the stage-1 MXU matmul is fully tiled
    K2 = _K * _K * C1               # 1152

    # Channel concat (upsampled first, matching torch.cat((upsampled_img, x), dim=1))
    # and the tiny stage-1 im2col are done once in XLA; everything else is in-kernel.
    xin = jnp.concatenate([upsampled_img, x], axis=1)            # [N, 2, H, W]
    xin = jnp.transpose(xin, (0, 2, 3, 1))                       # [N, H, W, 2]
    xpad = jnp.pad(xin, ((0, 0), (1, 1), (1, 1), (0, 0)))        # [N, H+2, W+2, 2]
    cols = [xpad[:, a:a + H, b:b + W, :] for a in range(_K) for b in range(_K)]
    x1col = jnp.concatenate(cols, axis=-1).reshape(R, K1)        # [R, 18], (tap, ci) minor
    x1col = jnp.pad(x1col, ((0, 0), (0, K1P - K1)))              # [R, 128]

    w1t = _flip_t(params["w1"])                                  # [3, 3, 2, C1]
    w2t = _flip_t(params["w2"])                                  # [3, 3, C1, C2]
    w3t = _flip_t(params["w3"])[..., 0]                          # [3, 3, C2]  (C_out=1 squeezed)
    w1col = jnp.pad(w1t.reshape(K1, C1), ((0, K1P - K1), (0, 0)))   # [128, C1]
    w2col = w2t.reshape(K2, C2)                                     # [1152, C2]
    w3flat = w3t.reshape(_K * _K, C2)                               # [9, C2]

    g1 = params["gamma1"].reshape(1, C1).astype(jnp.float32)
    b1 = params["beta1"].reshape(1, C1).astype(jnp.float32)
    g2 = params["gamma2"].reshape(1, C2).astype(jnp.float32)
    b2 = params["beta2"].reshape(1, C2).astype(jnp.float32)

    vmem = pl.BlockSpec(memory_space=pltpu.MemorySpace.VMEM)
    scratch_shapes = [
        pltpu.VMEM((N, H + 2, W + 2 * _PADL, C1), jnp.float32),   # pad1: stage-1 output + halo
        pltpu.VMEM((N, H, W, K2), jnp.float32),                   # col2: stage-2 im2col
        pltpu.VMEM((N, H + 2, W + 2 * _PADL, C2), jnp.float32),   # pad2: stage-2 output + halo
    ]

    # Explicit scoped-VMEM limit (defaults: 16 MiB v5e / 32 MiB v6e-v7x), sized from the
    # actual footprint with headroom (review item 8).  C2 counted at 128 for lane padding.
    est_bytes = 4 * (
        N * (H + 2) * (W + 2 * _PADL) * (C1 + 128)    # pad1 + pad2
        + N * H * W * K2                              # stage-2 im2col scratch
        + R * (K1P + C1 + C2)                         # x1col input + y1/y2 live values
        + K2 * C2 + K1P * C1                          # weights
    )
    vmem_limit = int(min(96 * 2 ** 20, max(32 * 2 ** 20, 3 * est_bytes)))

    out = pl.pallas_call(
        functools.partial(_gen_one_kernel, N, H, W),
        out_shape=jax.ShapeDtypeStruct((N, H, W), jnp.float32),
        in_specs=[vmem] * 8,
        out_specs=vmem,
        scratch_shapes=scratch_shapes,
        compiler_params=pltpu.CompilerParams(vmem_limit_bytes=vmem_limit),
    )(x1col, w1col, g1, b1, w2col, g2, b2, w3flat)

    return out.reshape(N, 1, H, W)


if __name__ == "__main__":
    key = jax.random.PRNGKey(0)
    kp, kx, ku = jax.random.split(key, 3)
    params = init_params(kp)

    N, H, W = 2, 16, 16
    x = jax.random.uniform(kx, (N, 1, H, W), jnp.float32, minval=-1.0, maxval=1.0)
    upsampled_img = jax.random.uniform(ku, (N, 1, H, W), jnp.float32, minval=-1.0, maxval=1.0)

    out = gen_one_forward(x, upsampled_img, params)
    out = jax.block_until_ready(out)

    assert out.shape == (N, 1, H, W)
    assert bool(jnp.all(jnp.isfinite(out)))
    assert bool(jnp.all(jnp.abs(out) <= 1.0))   # Tanh range
    print("KERNEL_OK")
</pallas_src>

<mosaic_0001>
module attributes {stable_mosaic.version = 11 : i64} {
  func.func @_gen_one_kernel(%arg0: memref<512x128xf32, #tpu.memory_space<vmem>>, %arg1: memref<128x128xf32, #tpu.memory_space<vmem>>, %arg2: memref<1x128xf32, #tpu.memory_space<vmem>>, %arg3: memref<1x128xf32, #tpu.memory_space<vmem>>, %arg4: memref<1152x64xf32, #tpu.memory_space<vmem>>, %arg5: memref<1x64xf32, #tpu.memory_space<vmem>>, %arg6: memref<1x64xf32, #tpu.memory_space<vmem>>, %arg7: memref<9x64xf32, #tpu.memory_space<vmem>>, %arg8: memref<2x16x16xf32, #tpu.memory_space<vmem>>, %arg9: memref<2x18x32x128xf32, #tpu.memory_space<vmem>>, %arg10: memref<2x16x16x1152xf32, #tpu.memory_space<vmem>>, %arg11: memref<2x18x32x64xf32, #tpu.memory_space<vmem>>) attributes {dimension_semantics = [], scalar_prefetch = 0 : i64, scratch_operands = 3 : i64, tpu.core_type = #tpu.core_type<tc>} {
    %c0 = arith.constant 0 : index
    %c0_0 = arith.constant 0 : index
    %0 = vector.load %arg0[%c0, %c0_0] : memref<512x128xf32, #tpu.memory_space<vmem>>, vector<512x128xf32>
    %c0_1 = arith.constant 0 : index
    %c0_2 = arith.constant 0 : index
    %1 = vector.load %arg1[%c0_1, %c0_2] : memref<128x128xf32, #tpu.memory_space<vmem>>, vector<128x128xf32>
    %cst = arith.constant dense<0.000000e+00> : vector<512x128xf32>
    %2 = tpu.matmul %0, %1, %cst {dimension_numbers = #tpu.dot_dimension_numbers<[1], [0], [0], [1], [0, 0, 1, 1], [], []>} : vector<512x128xf32>, vector<128x128xf32>, vector<512x128xf32> -> vector<512x128xf32>
    %c0_3 = arith.constant 0 : index
    %c0_4 = arith.constant 0 : index
    %3 = vector.load %arg2[%c0_3, %c0_4] : memref<1x128xf32, #tpu.memory_space<vmem>>, vector<1x128xf32>
    %c0_5 = arith.constant 0 : index
    %c0_6 = arith.constant 0 : index
    %4 = vector.load %arg3[%c0_5, %c0_6] : memref<1x128xf32, #tpu.memory_space<vmem>>, vector<1x128xf32>
    %cst_7 = arith.constant dense<0.000000e+00> : vector<128xf32>
    %5 = vector.multi_reduction <add>, %2, %cst_7 [0] : vector<512x128xf32> to vector<128xf32>
    %6 = vector.shape_cast %5 : vector<128xf32> to vector<1x128xf32>
    %cst_8 = arith.constant 5.120000e+02 : f32
    %7 = vector.broadcast %cst_8 : f32 to vector<1x128xf32>
    %8 = arith.divf %6, %7 : vector<1x128xf32>
    %9 = vector.broadcast %8 : vector<1x128xf32> to vector<512x128xf32>
    %10 = arith.subf %2, %9 : vector<512x128xf32>
    %11 = arith.mulf %10, %10 : vector<512x128xf32>
    %cst_9 = arith.constant dense<0.000000e+00> : vector<128xf32>
    %12 = vector.multi_reduction <add>, %11, %cst_9 [0] : vector<512x128xf32> to vector<128xf32>
    %13 = vector.shape_cast %12 : vector<128xf32> to vector<1x128xf32>
    %cst_10 = arith.constant 5.120000e+02 : f32
    %14 = vector.broadcast %cst_10 : f32 to vector<1x128xf32>
    %15 = arith.divf %13, %14 : vector<1x128xf32>
    %16 = vector.broadcast %8 : vector<1x128xf32> to vector<512x128xf32>
    %17 = arith.subf %2, %16 : vector<512x128xf32>
    %cst_11 = arith.constant 9.99999974E-6 : f32
    %18 = vector.broadcast %cst_11 : f32 to vector<1x128xf32>
    %19 = arith.addf %15, %18 : vector<1x128xf32>
    %20 = math.rsqrt %19 : vector<1x128xf32>
    %21 = vector.broadcast %20 : vector<1x128xf32> to vector<512x128xf32>
    %22 = arith.mulf %17, %21 : vector<512x128xf32>
    %23 = vector.broadcast %3 : vector<1x128xf32> to vector<512x128xf32>
    %24 = arith.mulf %22, %23 : vector<512x128xf32>
    %25 = vector.broadcast %4 : vector<1x128xf32> to vector<512x128xf32>
    %26 = arith.addf %24, %25 : vector<512x128xf32>
    %cst_12 = arith.constant 0.000000e+00 : f32
    %27 = vector.broadcast %cst_12 : f32 to vector<512x128xf32>
    %28 = arith.cmpf ogt, %26, %27 : vector<512x128xf32>
    %cst_13 = arith.constant 2.000000e-01 : f32
    %29 = vector.broadcast %cst_13 : f32 to vector<512x128xf32>
    %30 = arith.mulf %29, %26 : vector<512x128xf32>
    %31 = arith.select %28, %26, %30 : vector<512x128xi1>, vector<512x128xf32>
    %cst_14 = arith.constant 0.000000e+00 : f32
    %32 = vector.broadcast %cst_14 : f32 to vector<2x1x32x128xf32>
    %cst_15 = arith.constant 0.000000e+00 : f32
    %33 = vector.broadcast %cst_15 : f32 to vector<2x16x1x128xf32>
    %c0_16 = arith.constant 0 : index
    %c0_17 = arith.constant 0 : index
    %c0_18 = arith.constant 0 : index
    %c0_19 = arith.constant 0 : index
    %34 = vector.load %arg9[%c0_16, %c0_17, %c0_18, %c0_19] : memref<2x18x32x128xf32, #tpu.memory_space<vmem>>, vector<2x1x32x128xf32>
    tpu.vector_store %arg9[%c0_16, %c0_17, %c0_18, %c0_19], %32 {strides = array<i32>} : memref<2x18x32x128xf32, #tpu.memory_space<vmem>>, vector<2x1x32x128xf32>,
    %c0_20 = arith.constant 0 : index
    %c17 = arith.constant 17 : index
    %c0_21 = arith.constant 0 : index
    %c0_22 = arith.constant 0 : index
    %35 = vector.load %arg9[%c0_20, %c17, %c0_21, %c0_22] : memref<2x18x32x128xf32, #tpu.memory_space<vmem>>, vector<2x1x32x128xf32>
    tpu.vector_store %arg9[%c0_20, %c17, %c0_21, %c0_22], %32 {strides = array<i32>} : memref<2x18x32x128xf32, #tpu.memory_space<vmem>>, vector<2x1x32x128xf32>,
    %c0_23 = arith.constant 0 : index
    %c1 = arith.constant 1 : index
    %c7 = arith.constant 7 : index
    %c0_24 = arith.constant 0 : index
    %36 = vector.load %arg9[%c0_23, %c1, %c7, %c0_24] : memref<2x18x32x128xf32, #tpu.memory_space<vmem>>, vector<2x16x1x128xf32>
    tpu.vector_store %arg9[%c0_23, %c1, %c7, %c0_24], %33 {strides = array<i32>} : memref<2x18x32x128xf32, #tpu.memory_space<vmem>>, vector<2x16x1x128xf32>,
    %c0_25 = arith.constant 0 : index
    %c1_26 = arith.constant 1 : index
    %c24 = arith.constant 24 : index
    %c0_27 = arith.constant 0 : index
    %37 = vector.load %arg9[%c0_25, %c1_26, %c24, %c0_27] : memref<2x18x32x128xf32, #tpu.memory_space<vmem>>, vector<2x16x1x128xf32>
    tpu.vector_store %arg9[%c0_25, %c1_26, %c24, %c0_27], %33 {strides = array<i32>} : memref<2x18x32x128xf32, #tpu.memory_space<vmem>>, vector<2x16x1x128xf32>,
    %38 = vector.shape_cast %31 : vector<512x128xf32> to vector<2x16x16x128xf32>
    %c0_28 = arith.constant 0 : index
    %c1_29 = arith.constant 1 : index
    %c8 = arith.constant 8 : index
    %c0_30 = arith.constant 0 : index
    %39 = vector.load %arg9[%c0_28, %c1_29, %c8, %c0_30] : memref<2x18x32x128xf32, #tpu.memory_space<vmem>>, vector<2x16x16x128xf32>
    tpu.vector_store %arg9[%c0_28, %c1_29, %c8, %c0_30], %38 {strides = array<i32>} : memref<2x18x32x128xf32, #tpu.memory_space<vmem>>, vector<2x16x16x128xf32>,
    %c0_31 = arith.constant 0 : index
    %c0_32 = arith.constant 0 : index
    %c7_33 = arith.constant 7 : index
    %c0_34 = arith.constant 0 : index
    %40 = vector.load %arg9[%c0_31, %c0_32, %c7_33, %c0_34] : memref<2x18x32x128xf32, #tpu.memory_space<vmem>>, vector<2x16x16x128xf32>
    %c0_35 = arith.constant 0 : index
    %c0_36 = arith.constant 0 : index
    %c0_37 = arith.constant 0 : index
    %c0_38 = arith.constant 0 : index
    %41 = vector.load %arg10[%c0_35, %c0_36, %c0_37, %c0_38] : memref<2x16x16x1152xf32, #tpu.memory_space<vmem>>, vector<2x16x16x128xf32>
    tpu.vector_store %arg10[%c0_35, %c0_36, %c0_37, %c0_38], %40 {strides = array<i32>} : memref<2x16x16x1152xf32, #tpu.memory_space<vmem>>, vector<2x16x16x128xf32>,
    %c0_39 = arith.constant 0 : index
    %c0_40 = arith.constant 0 : index
    %c8_41 = arith.constant 8 : index
    %c0_42 = arith.constant 0 : index
    %42 = vector.load %arg9[%c0_39, %c0_40, %c8_41, %c0_42] : memref<2x18x32x128xf32, #tpu.memory_space<vmem>>, vector<2x16x16x128xf32>
    %c0_43 = arith.constant 0 : index
    %c0_44 = arith.constant 0 : index
    %c0_45 = arith.constant 0 : index
    %c128 = arith.constant 128 : index
    %43 = vector.load %arg10[%c0_43, %c0_44, %c0_45, %c128] : memref<2x16x16x1152xf32, #tpu.memory_space<vmem>>, vector<2x16x16x128xf32>
    tpu.vector_store %arg10[%c0_43, %c0_44, %c0_45, %c128], %42 {strides = array<i32>} : memref<2x16x16x1152xf32, #tpu.memory_space<vmem>>, vector<2x16x16x128xf32>,
    %c0_46 = arith.constant 0 : index
    %c0_47 = arith.constant 0 : index
    %c9 = arith.constant 9 : index
    %c0_48 = arith.constant 0 : index
    %44 = vector.load %arg9[%c0_46, %c0_47, %c9, %c0_48] : memref<2x18x32x128xf32, #tpu.memory_space<vmem>>, vector<2x16x16x128xf32>
    %c0_49 = arith.constant 0 : index
    %c0_50 = arith.constant 0 : index
    %c0_51 = arith.constant 0 : index
    %c256 = arith.constant 256 : index
    %45 = vector.load %arg10[%c0_49, %c0_50, %c0_51, %c256] : memref<2x16x16x1152xf32, #tpu.memory_space<vmem>>, vector<2x16x16x128xf32>
    tpu.vector_store %arg10[%c0_49, %c0_50, %c0_51, %c256], %44 {strides = array<i32>} : memref<2x16x16x1152xf32, #tpu.memory_space<vmem>>, vector<2x16x16x128xf32>,
    %c0_52 = arith.constant 0 : index
    %c1_53 = arith.constant 1 : index
    %c7_54 = arith.constant 7 : index
    %c0_55 = arith.constant 0 : index
    %46 = vector.load %arg9[%c0_52, %c1_53, %c7_54, %c0_55] : memref<2x18x32x128xf32, #tpu.memory_space<vmem>>, vector<2x16x16x128xf32>
    %c0_56 = arith.constant 0 : index
    %c0_57 = arith.constant 0 : index
    %c0_58 = arith.constant 0 : index
    %c384 = arith.constant 384 : index
    %47 = vector.load %arg10[%c0_56, %c0_57, %c0_58, %c384] : memref<2x16x16x1152xf32, #tpu.memory_space<vmem>>, vector<2x16x16x128xf32>
    tpu.vector_store %arg10[%c0_56, %c0_57, %c0_58, %c384], %46 {strides = array<i32>} : memref<2x16x16x1152xf32, #tpu.memory_space<vmem>>, vector<2x16x16x128xf32>,
    %c0_59 = arith.constant 0 : index
    %c1_60 = arith.constant 1 : index
    %c8_61 = arith.constant 8 : index
    %c0_62 = arith.constant 0 : index
    %48 = vector.load %arg9[%c0_59, %c1_60, %c8_61, %c0_62] : memref<2x18x32x128xf32, #tpu.memory_space<vmem>>, vector<2x16x16x128xf32>
    %c0_63 = arith.constant 0 : index
    %c0_64 = arith.constant 0 : index
    %c0_65 = arith.constant 0 : index
    %c512 = arith.constant 512 : index
    %49 = vector.load %arg10[%c0_63, %c0_64, %c0_65, %c512] : memref<2x16x16x1152xf32, #tpu.memory_space<vmem>>, vector<2x16x16x128xf32>
    tpu.vector_store %arg10[%c0_63, %c0_64, %c0_65, %c512], %48 {strides = array<i32>} : memref<2x16x16x1152xf32, #tpu.memory_space<vmem>>, vector<2x16x16x128xf32>,
    %c0_66 = arith.constant 0 : index
    %c1_67 = arith.constant 1 : index
    %c9_68 = arith.constant 9 : index
    %c0_69 = arith.constant 0 : index
    %50 = vector.load %arg9[%c0_66, %c1_67, %c9_68, %c0_69] : memref<2x18x32x128xf32, #tpu.memory_space<vmem>>, vector<2x16x16x128xf32>
    %c0_70 = arith.constant 0 : index
    %c0_71 = arith.constant 0 : index
    %c0_72 = arith.constant 0 : index
    %c640 = arith.constant 640 : index
    %51 = vector.load %arg10[%c0_70, %c0_71, %c0_72, %c640] : memref<2x16x16x1152xf32, #tpu.memory_space<vmem>>, vector<2x16x16x128xf32>
    tpu.vector_store %arg10[%c0_70, %c0_71, %c0_72, %c640], %50 {strides = array<i32>} : memref<2x16x16x1152xf32, #tpu.memory_space<vmem>>, vector<2x16x16x128xf32>,
    %c0_73 = arith.constant 0 : index
    %c2 = arith.constant 2 : index
    %c7_74 = arith.constant 7 : index
    %c0_75 = arith.constant 0 : index
    %52 = vector.load %arg9[%c0_73, %c2, %c7_74, %c0_75] : memref<2x18x32x128xf32, #tpu.memory_space<vmem>>, vector<2x16x16x128xf32>
    %c0_76 = arith.constant 0 : index
    %c0_77 = arith.constant 0 : index
    %c0_78 = arith.constant 0 : index
    %c768 = arith.constant 768 : index
    %53 = vector.load %arg10[%c0_76, %c0_77, %c0_78, %c768] : memref<2x16x16x1152xf32, #tpu.memory_space<vmem>>, vector<2x16x16x128xf32>
    tpu.vector_store %arg10[%c0_76, %c0_77, %c0_78, %c768], %52 {strides = array<i32>} : memref<2x16x16x1152xf32, #tpu.memory_space<vmem>>, vector<2x16x16x128xf32>,
    %c0_79 = arith.constant 0 : index
    %c2_80 = arith.constant 2 : index
    %c8_81 = arith.constant 8 : index
    %c0_82 = arith.constant 0 : index
    %54 = vector.load %arg9[%c0_79, %c2_80, %c8_81, %c0_82] : memref<2x18x32x128xf32, #tpu.memory_space<vmem>>, vector<2x16x16x128xf32>
    %c0_83 = arith.constant 0 : index
    %c0_84 = arith.constant 0 : index
    %c0_85 = arith.constant 0 : index
    %c896 = arith.constant 896 : index
    %55 = vector.load %arg10[%c0_83, %c0_84, %c0_85, %c896] : memref<2x16x16x1152xf32, #tpu.memory_space<vmem>>, vector<2x16x16x128xf32>
    tpu.vector_store %arg10[%c0_83, %c0_84, %c0_85, %c896], %54 {strides = array<i32>} : memref<2x16x16x1152xf32, #tpu.memory_space<vmem>>, vector<2x16x16x128xf32>,
    %c0_86 = arith.constant 0 : index
    %c2_87 = arith.constant 2 : index
    %c9_88 = arith.constant 9 : index
    %c0_89 = arith.constant 0 : index
    %56 = vector.load %arg9[%c0_86, %c2_87, %c9_88, %c0_89] : memref<2x18x32x128xf32, #tpu.memory_space<vmem>>, vector<2x16x16x128xf32>
    %c0_90 = arith.constant 0 : index
    %c0_91 = arith.constant 0 : index
    %c0_92 = arith.constant 0 : index
    %c1024 = arith.constant 1024 : index
    %57 = vector.load %arg10[%c0_90, %c0_91, %c0_92, %c1024] : memref<2x16x16x1152xf32, #tpu.memory_space<vmem>>, vector<2x16x16x128xf32>
    tpu.vector_store %arg10[%c0_90, %c0_91, %c0_92, %c1024], %56 {strides = array<i32>} : memref<2x16x16x1152xf32, #tpu.memory_space<vmem>>, vector<2x16x16x128xf32>,
    %c0_93 = arith.constant 0 : index
    %c0_94 = arith.constant 0 : index
    %c0_95 = arith.constant 0 : index
    %c0_96 = arith.constant 0 : index
    %58 = vector.load %arg10[%c0_93, %c0_94, %c0_95, %c0_96] : memref<2x16x16x1152xf32, #tpu.memory_space<vmem>>, vector<2x16x16x1152xf32>
    %59 = vector.shape_cast %58 : vector<2x16x16x1152xf32> to vector<512x1152xf32>
    %c0_97 = arith.constant 0 : index
    %c0_98 = arith.constant 0 : index
    %60 = vector.load %arg4[%c0_97, %c0_98] : memref<1152x64xf32, #tpu.memory_space<vmem>>, vector<1152x64xf32>
    %cst_99 = arith.constant dense<0.000000e+00> : vector<512x64xf32>
    %61 = tpu.matmul %59, %60, %cst_99 {dimension_numbers = #tpu.dot_dimension_numbers<[1], [0], [0], [1], [0, 0, 1, 1], [], []>} : vector<512x1152xf32>, vector<1152x64xf32>, vector<512x64xf32> -> vector<512x64xf32>
    %c0_100 = arith.constant 0 : index
    %c0_101 = arith.constant 0 : index
    %62 = vector.load %arg5[%c0_100, %c0_101] : memref<1x64xf32, #tpu.memory_space<vmem>>, vector<1x64xf32>
    %c0_102 = arith.constant 0 : index
    %c0_103 = arith.constant 0 : index
    %63 = vector.load %arg6[%c0_102, %c0_103] : memref<1x64xf32, #tpu.memory_space<vmem>>, vector<1x64xf32>
    %cst_104 = arith.constant dense<0.000000e+00> : vector<64xf32>
    %64 = vector.multi_reduction <add>, %61, %cst_104 [0] : vector<512x64xf32> to vector<64xf32>
    %65 = vector.shape_cast %64 : vector<64xf32> to vector<1x64xf32>
    %cst_105 = arith.constant 5.120000e+02 : f32
    %66 = vector.broadcast %cst_105 : f32 to vector<1x64xf32>
    %67 = arith.divf %65, %66 : vector<1x64xf32>
    %68 = vector.broadcast %67 : vector<1x64xf32> to vector<512x64xf32>
    %69 = arith.subf %61, %68 : vector<512x64xf32>
    %70 = arith.mulf %69, %69 : vector<512x64xf32>
    %cst_106 = arith.constant dense<0.000000e+00> : vector<64xf32>
    %71 = vector.multi_reduction <add>, %70, %cst_106 [0] : vector<512x64xf32> to vector<64xf32>
    %72 = vector.shape_cast %71 : vector<64xf32> to vector<1x64xf32>
    %cst_107 = arith.constant 5.120000e+02 : f32
    %73 = vector.broadcast %cst_107 : f32 to vector<1x64xf32>
    %74 = arith.divf %72, %73 : vector<1x64xf32>
    %75 = vector.broadcast %67 : vector<1x64xf32> to vector<512x64xf32>
    %76 = arith.subf %61, %75 : vector<512x64xf32>
    %cst_108 = arith.constant 9.99999974E-6 : f32
    %77 = vector.broadcast %cst_108 : f32 to vector<1x64xf32>
    %78 = arith.addf %74, %77 : vector<1x64xf32>
    %79 = math.rsqrt %78 : vector<1x64xf32>
    %80 = vector.broadcast %79 : vector<1x64xf32> to vector<512x64xf32>
    %81 = arith.mulf %76, %80 : vector<512x64xf32>
    %82 = vector.broadcast %62 : vector<1x64xf32> to vector<512x64xf32>
    %83 = arith.mulf %81, %82 : vector<512x64xf32>
    %84 = vector.broadcast %63 : vector<1x64xf32> to vector<512x64xf32>
    %85 = arith.addf %83, %84 : vector<512x64xf32>
    %cst_109 = arith.constant 0.000000e+00 : f32
    %86 = vector.broadcast %cst_109 : f32 to vector<512x64xf32>
    %87 = arith.cmpf ogt, %85, %86 : vector<512x64xf32>
    %cst_110 = arith.constant 2.000000e-01 : f32
    %88 = vector.broadcast %cst_110 : f32 to vector<512x64xf32>
    %89 = arith.mulf %88, %85 : vector<512x64xf32>
    %90 = arith.select %87, %85, %89 : vector<512x64xi1>, vector<512x64xf32>
    %cst_111 = arith.constant 0.000000e+00 : f32
    %91 = vector.broadcast %cst_111 : f32 to vector<2x1x32x64xf32>
    %cst_112 = arith.constant 0.000000e+00 : f32
    %92 = vector.broadcast %cst_112 : f32 to vector<2x16x1x64xf32>
    %c0_113 = arith.constant 0 : index
    %c0_114 = arith.constant 0 : index
    %c0_115 = arith.constant 0 : index
    %c0_116 = arith.constant 0 : index
    %93 = vector.load %arg11[%c0_113, %c0_114, %c0_115, %c0_116] : memref<2x18x32x64xf32, #tpu.memory_space<vmem>>, vector<2x1x32x64xf32>
    tpu.vector_store %arg11[%c0_113, %c0_114, %c0_115, %c0_116], %91 {strides = array<i32>} : memref<2x18x32x64xf32, #tpu.memory_space<vmem>>, vector<2x1x32x64xf32>,
    %c0_117 = arith.constant 0 : index
    %c17_118 = arith.constant 17 : index
    %c0_119 = arith.constant 0 : index
    %c0_120 = arith.constant 0 : index
    %94 = vector.load %arg11[%c0_117, %c17_118, %c0_119, %c0_120] : memref<2x18x32x64xf32, #tpu.memory_space<vmem>>, vector<2x1x32x64xf32>
    tpu.vector_store %arg11[%c0_117, %c17_118, %c0_119, %c0_120], %91 {strides = array<i32>} : memref<2x18x32x64xf32, #tpu.memory_space<vmem>>, vector<2x1x32x64xf32>,
    %c0_121 = arith.constant 0 : index
    %c1_122 = arith.constant 1 : index
    %c7_123 = arith.constant 7 : index
    %c0_124 = arith.constant 0 : index
    %95 = vector.load %arg11[%c0_121, %c1_122, %c7_123, %c0_124] : memref<2x18x32x64xf32, #tpu.memory_space<vmem>>, vector<2x16x1x64xf32>
    tpu.vector_store %arg11[%c0_121, %c1_122, %c7_123, %c0_124], %92 {strides = array<i32>} : memref<2x18x32x64xf32, #tpu.memory_space<vmem>>, vector<2x16x1x64xf32>,
    %c0_125 = arith.constant 0 : index
    %c1_126 = arith.constant 1 : index
    %c24_127 = arith.constant 24 : index
    %c0_128 = arith.constant 0 : index
    %96 = vector.load %arg11[%c0_125, %c1_126, %c24_127, %c0_128] : memref<2x18x32x64xf32, #tpu.memory_space<vmem>>, vector<2x16x1x64xf32>
    tpu.vector_store %arg11[%c0_125, %c1_126, %c24_127, %c0_128], %92 {strides = array<i32>} : memref<2x18x32x64xf32, #tpu.memory_space<vmem>>, vector<2x16x1x64xf32>,
    %97 = vector.shape_cast %90 : vector<512x64xf32> to vector<2x16x16x64xf32>
    %c0_129 = arith.constant 0 : index
    %c1_130 = arith.constant 1 : index
    %c8_131 = arith.constant 8 : index
    %c0_132 = arith.constant 0 : index
    %98 = vector.load %arg11[%c0_129, %c1_130, %c8_131, %c0_132] : memref<2x18x32x64xf32, #tpu.memory_space<vmem>>, vector<2x16x16x64xf32>
    tpu.vector_store %arg11[%c0_129, %c1_130, %c8_131, %c0_132], %97 {strides = array<i32>} : memref<2x18x32x64xf32, #tpu.memory_space<vmem>>, vector<2x16x16x64xf32>,
    %c0_133 = arith.constant 0 : index
    %c0_134 = arith.constant 0 : index
    %99 = vector.load %arg7[%c0_133, %c0_134] : memref<9x64xf32, #tpu.memory_space<vmem>>, vector<9x64xf32>
    %cst_135 = arith.constant 0.000000e+00 : f32
    %100 = vector.broadcast %cst_135 : f32 to vector<2x16x16xf32>
    %c0_136 = arith.constant 0 : index
    %c0_137 = arith.constant 0 : index
    %c7_138 = arith.constant 7 : index
    %c0_139 = arith.constant 0 : index
    %101 = vector.load %arg11[%c0_136, %c0_137, %c7_138, %c0_139] : memref<2x18x32x64xf32, #tpu.memory_space<vmem>>, vector<2x16x16x64xf32>
    %102 = vector.extract_strided_slice %99 {offsets = [0, 0], sizes = [1, 64], strides = [1, 1]} : vector<9x64xf32> to vector<1x64xf32>
    %103 = vector.shape_cast %102 : vector<1x64xf32> to vector<64xf32>
    %104 = vector.shape_cast %103 : vector<64xf32> to vector<1x1x1x64xf32>
    %105 = vector.broadcast %104 : vector<1x1x1x64xf32> to vector<2x16x16x64xf32>
    %106 = arith.mulf %101, %105 : vector<2x16x16x64xf32>
    %cst_140 = arith.constant dense<0.000000e+00> : vector<2x16x16xf32>
    %107 = vector.multi_reduction <add>, %106, %cst_140 [3] : vector<2x16x16x64xf32> to vector<2x16x16xf32>
    %108 = arith.addf %100, %107 : vector<2x16x16xf32>
    %c0_141 = arith.constant 0 : index
    %c0_142 = arith.constant 0 : index
    %c8_143 = arith.constant 8 : index
    %c0_144 = arith.constant 0 : index
    %109 = vector.load %arg11[%c0_141, %c0_142, %c8_143, %c0_144] : memref<2x18x32x64xf32, #tpu.memory_space<vmem>>, vector<2x16x16x64xf32>
    %110 = vector.extract_strided_slice %99 {offsets = [1, 0], sizes = [1, 64], strides = [1, 1]} : vector<9x64xf32> to vector<1x64xf32>
    %111 = vector.shape_cast %110 : vector<1x64xf32> to vector<64xf32>
    %112 = vector.shape_cast %111 : vector<64xf32> to vector<1x1x1x64xf32>
    %113 = vector.broadcast %112 : vector<1x1x1x64xf32> to vector<2x16x16x64xf32>
    %114 = arith.mulf %109, %113 : vector<2x16x16x64xf32>
    %cst_145 = arith.constant dense<0.000000e+00> : vector<2x16x16xf32>
    %115 = vector.multi_reduction <add>, %114, %cst_145 [3] : vector<2x16x16x64xf32> to vector<2x16x16xf32>
    %116 = arith.addf %108, %115 : vector<2x16x16xf32>
    %c0_146 = arith.constant 0 : index
    %c0_147 = arith.constant 0 : index
    %c9_148 = arith.constant 9 : index
    %c0_149 = arith.constant 0 : index
    %117 = vector.load %arg11[%c0_146, %c0_147, %c9_148, %c0_149] : memref<2x18x32x64xf32, #tpu.memory_space<vmem>>, vector<2x16x16x64xf32>
    %118 = vector.extract_strided_slice %99 {offsets = [2, 0], sizes = [1, 64], strides = [1, 1]} : vector<9x64xf32> to vector<1x64xf32>
    %119 = vector.shape_cast %118 : vector<1x64xf32> to vector<64xf32>
    %120 = vector.shape_cast %119 : vector<64xf32> to vector<1x1x1x64xf32>
    %121 = vector.broadcast %120 : vector<1x1x1x64xf32> to vector<2x16x16x64xf32>
    %122 = arith.mulf %117, %121 : vector<2x16x16x64xf32>
    %cst_150 = arith.constant dense<0.000000e+00> : vector<2x16x16xf32>
    %123 = vector.multi_reduction <add>, %122, %cst_150 [3] : vector<2x16x16x64xf32> to vector<2x16x16xf32>
    %124 = arith.addf %116, %123 : vector<2x16x16xf32>
    %c0_151 = arith.constant 0 : index
    %c1_152 = arith.constant 1 : index
    %c7_153 = arith.constant 7 : index
    %c0_154 = arith.constant 0 : index
    %125 = vector.load %arg11[%c0_151, %c1_152, %c7_153, %c0_154] : memref<2x18x32x64xf32, #tpu.memory_space<vmem>>, vector<2x16x16x64xf32>
    %126 = vector.extract_strided_slice %99 {offsets = [3, 0], sizes = [1, 64], strides = [1, 1]} : vector<9x64xf32> to vector<1x64xf32>
    %127 = vector.shape_cast %126 : vector<1x64xf32> to vector<64xf32>
    %128 = vector.shape_cast %127 : vector<64xf32> to vector<1x1x1x64xf32>
    %129 = vector.broadcast %128 : vector<1x1x1x64xf32> to vector<2x16x16x64xf32>
    %130 = arith.mulf %125, %129 : vector<2x16x16x64xf32>
    %cst_155 = arith.constant dense<0.000000e+00> : vector<2x16x16xf32>
    %131 = vector.multi_reduction <add>, %130, %cst_155 [3] : vector<2x16x16x64xf32> to vector<2x16x16xf32>
    %132 = arith.addf %124, %131 : vector<2x16x16xf32>
    %c0_156 = arith.constant 0 : index
    %c1_157 = arith.constant 1 : index
    %c8_158 = arith.constant 8 : index
    %c0_159 = arith.constant 0 : index
    %133 = vector.load %arg11[%c0_156, %c1_157, %c8_158, %c0_159] : memref<2x18x32x64xf32, #tpu.memory_space<vmem>>, vector<2x16x16x64xf32>
    %134 = vector.extract_strided_slice %99 {offsets = [4, 0], sizes = [1, 64], strides = [1, 1]} : vector<9x64xf32> to vector<1x64xf32>
    %135 = vector.shape_cast %134 : vector<1x64xf32> to vector<64xf32>
    %136 = vector.shape_cast %135 : vector<64xf32> to vector<1x1x1x64xf32>
    %137 = vector.broadcast %136 : vector<1x1x1x64xf32> to vector<2x16x16x64xf32>
    %138 = arith.mulf %133, %137 : vector<2x16x16x64xf32>
    %cst_160 = arith.constant dense<0.000000e+00> : vector<2x16x16xf32>
    %139 = vector.multi_reduction <add>, %138, %cst_160 [3] : vector<2x16x16x64xf32> to vector<2x16x16xf32>
    %140 = arith.addf %132, %139 : vector<2x16x16xf32>
    %c0_161 = arith.constant 0 : index
    %c1_162 = arith.constant 1 : index
    %c9_163 = arith.constant 9 : index
    %c0_164 = arith.constant 0 : index
    %141 = vector.load %arg11[%c0_161, %c1_162, %c9_163, %c0_164] : memref<2x18x32x64xf32, #tpu.memory_space<vmem>>, vector<2x16x16x64xf32>
    %142 = vector.extract_strided_slice %99 {offsets = [5, 0], sizes = [1, 64], strides = [1, 1]} : vector<9x64xf32> to vector<1x64xf32>
    %143 = vector.shape_cast %142 : vector<1x64xf32> to vector<64xf32>
    %144 = vector.shape_cast %143 : vector<64xf32> to vector<1x1x1x64xf32>
    %145 = vector.broadcast %144 : vector<1x1x1x64xf32> to vector<2x16x16x64xf32>
    %146 = arith.mulf %141, %145 : vector<2x16x16x64xf32>
    %cst_165 = arith.constant dense<0.000000e+00> : vector<2x16x16xf32>
    %147 = vector.multi_reduction <add>, %146, %cst_165 [3] : vector<2x16x16x64xf32> to vector<2x16x16xf32>
    %148 = arith.addf %140, %147 : vector<2x16x16xf32>
    %c0_166 = arith.constant 0 : index
    %c2_167 = arith.constant 2 : index
    %c7_168 = arith.constant 7 : index
    %c0_169 = arith.constant 0 : index
    %149 = vector.load %arg11[%c0_166, %c2_167, %c7_168, %c0_169] : memref<2x18x32x64xf32, #tpu.memory_space<vmem>>, vector<2x16x16x64xf32>
    %150 = vector.extract_strided_slice %99 {offsets = [6, 0], sizes = [1, 64], strides = [1, 1]} : vector<9x64xf32> to vector<1x64xf32>
    %151 = vector.shape_cast %150 : vector<1x64xf32> to vector<64xf32>
    %152 = vector.shape_cast %151 : vector<64xf32> to vector<1x1x1x64xf32>
    %153 = vector.broadcast %152 : vector<1x1x1x64xf32> to vector<2x16x16x64xf32>
    %154 = arith.mulf %149, %153 : vector<2x16x16x64xf32>
    %cst_170 = arith.constant dense<0.000000e+00> : vector<2x16x16xf32>
    %155 = vector.multi_reduction <add>, %154, %cst_170 [3] : vector<2x16x16x64xf32> to vector<2x16x16xf32>
    %156 = arith.addf %148, %155 : vector<2x16x16xf32>
    %c0_171 = arith.constant 0 : index
    %c2_172 = arith.constant 2 : index
    %c8_173 = arith.constant 8 : index
    %c0_174 = arith.constant 0 : index
    %157 = vector.load %arg11[%c0_171, %c2_172, %c8_173, %c0_174] : memref<2x18x32x64xf32, #tpu.memory_space<vmem>>, vector<2x16x16x64xf32>
    %158 = vector.extract_strided_slice %99 {offsets = [7, 0], sizes = [1, 64], strides = [1, 1]} : vector<9x64xf32> to vector<1x64xf32>
    %159 = vector.shape_cast %158 : vector<1x64xf32> to vector<64xf32>
    %160 = vector.shape_cast %159 : vector<64xf32> to vector<1x1x1x64xf32>
    %161 = vector.broadcast %160 : vector<1x1x1x64xf32> to vector<2x16x16x64xf32>
    %162 = arith.mulf %157, %161 : vector<2x16x16x64xf32>
    %cst_175 = arith.constant dense<0.000000e+00> : vector<2x16x16xf32>
    %163 = vector.multi_reduction <add>, %162, %cst_175 [3] : vector<2x16x16x64xf32> to vector<2x16x16xf32>
    %164 = arith.addf %156, %163 : vector<2x16x16xf32>
    %c0_176 = arith.constant 0 : index
    %c2_177 = arith.constant 2 : index
    %c9_178 = arith.constant 9 : index
    %c0_179 = arith.constant 0 : index
    %165 = vector.load %arg11[%c0_176, %c2_177, %c9_178, %c0_179] : memref<2x18x32x64xf32, #tpu.memory_space<vmem>>, vector<2x16x16x64xf32>
    %166 = vector.extract_strided_slice %99 {offsets = [8, 0], sizes = [1, 64], strides = [1, 1]} : vector<9x64xf32> to vector<1x64xf32>
    %167 = vector.shape_cast %166 : vector<1x64xf32> to vector<64xf32>
    %168 = vector.shape_cast %167 : vector<64xf32> to vector<1x1x1x64xf32>
    %169 = vector.broadcast %168 : vector<1x1x1x64xf32> to vector<2x16x16x64xf32>
    %170 = arith.mulf %165, %169 : vector<2x16x16x64xf32>
    %cst_180 = arith.constant dense<0.000000e+00> : vector<2x16x16xf32>
    %171 = vector.multi_reduction <add>, %170, %cst_180 [3] : vector<2x16x16x64xf32> to vector<2x16x16xf32>
    %172 = arith.addf %164, %171 : vector<2x16x16xf32>
    %173 = math.tanh %172 : vector<2x16x16xf32>
    %c0_181 = arith.constant 0 : index
    %c0_182 = arith.constant 0 : index
    %c0_183 = arith.constant 0 : index
    %174 = vector.load %arg8[%c0_181, %c0_182, %c0_183] : memref<2x16x16xf32, #tpu.memory_space<vmem>>, vector<2x16x16xf32>
    tpu.vector_store %arg8[%c0_181, %c0_182, %c0_183], %173 {strides = array<i32>} : memref<2x16x16xf32, #tpu.memory_space<vmem>>, vector<2x16x16xf32>,
    return
  }
}

</mosaic_0001>

<llo_original>
// kernel: squeeze.1
$region0: #{squeeze.1}
  %s0 = inlined_call_operand.vmem [shape: f32[3,3,64], index: 0, kind: input, shape index: {}]
  %s1 = inlined_call_operand.vmem [shape: f32[9,64], index: 1, kind: output, shape index: {}]
  $region1: #{squeeze.1} parent=0
    #allocation0 [shape = 'u8[12288]{0}', space=vmem, size = 0x3000, scoped, tag = 'scoped mem for input reshape']
    %s3 = ssub.s32 16, 1
    %s4 = scalar_lea.vmem %s0, 8
    %v5 = vld [vmem:[%s4] sm:%s3]
    %s6 = scalar_lea.vmem [#allocation0], 16
    %7 = vst [vmem:[%s6] sm:%s3] %v5
    %s8 = scalar_lea.vmem %s0, 4
    %v9 = vld [vmem:[%s8] sm:%s3]
    %s10 = scalar_lea.vmem [#allocation0], 8
    %11 = vst [vmem:[%s10] sm:%s3] %v9
    %v12 = vld [vmem:[%s0] sm:%s3]
    %13 = vst [vmem:[#allocation0] sm:%s3] %v12
    %v14 = vld [vmem:[#allocation0] sm:$0x7]
    %vm15 = vcmask 523264
    %16 = vst.msk [vmem:[%s1] sm:$0x7] %vm15, %v14
    %s17 = scalar_lea.vmem [#allocation0], 8
    %v18 = vld [vmem:[%s17] sm:$0x7]
    %vm19 = vcmask 523264
    %s20 = scalar_lea.vmem %s1, 3
    %21 = vst.msk [vmem:[%s20] sm:$0x7] %vm19, %v18
    %s22 = scalar_lea.vmem [#allocation0], 16
    %v23 = vld [vmem:[%s22] sm:$0x7]
    %vm24 = vcmask 523264
    %s25 = scalar_lea.vmem %s1, 6
    %26 = vst.msk [vmem:[%s25] sm:$0x7] %vm24, %v23

// kernel: gen_one_forward.1
$region0: #{gen_one_forward.1}
  #allocation0 [shape = 'u32[]', space=smem, size = 0x4, offset = 0x4, fixed_abs, tag = 'smem constant byte address 0x4 - core index']
  #allocation1 [shape = 'u32[72,128]{1,0:T(1,128)}', space=vmem, size = 0x9000, scoped, tag = 'internal scratch']
  #allocation2 [shape = 'f32[2,18,32,128]{3,2,1,0:T(8,128)}', space=vmem, size = 0x90000, scoped, tag = 'scratch operand']
  #allocation3 [shape = 'f32[2,16,16,1152]{3,2,1,0:T(8,128)}', space=vmem, size = 0x240000, scoped, tag = 'scratch operand']
  #allocation4 [shape = 'f32[2,18,32,64]{3,2,1,0:T(8,128)}', space=vmem, size = 0x90000, scoped, tag = 'scratch operand']
  %s0 = inlined_call_operand.vmem [shape: f32[512,128], index: 0, kind: input, shape index: {}]
  %s1 = inlined_call_operand.vmem [shape: f32[128,128], index: 1, kind: input, shape index: {}]
  %s2 = inlined_call_operand.vmem [shape: f32[1,128], index: 2, kind: input, shape index: {}]
  %s3 = inlined_call_operand.vmem [shape: f32[1,128], index: 3, kind: input, shape index: {}]
  %s4 = inlined_call_operand.vmem [shape: f32[1152,64], index: 4, kind: input, shape index: {}]
  %s5 = inlined_call_operand.vmem [shape: f32[1,64], index: 5, kind: input, shape index: {}]
  %s6 = inlined_call_operand.vmem [shape: f32[1,64], index: 6, kind: input, shape index: {}]
  %s7 = inlined_call_operand.vmem [shape: f32[9,64], index: 7, kind: input, shape index: {}]
  %s8 = inlined_call_operand.hbm [shape: f32[2,16,16], index: 8, kind: output, shape index: {}]
  %s9 = sld [smem:[#allocation0]]
  $region42: #{gen_one_forward.1} parent=0
    _
  %s11 = ssub.s32 1, %s9
  %s12 = scalar_select 0, %s11, %s9
  $region1: #{gen_one_forward.1} parent=0
    #allocation5 [shape = 'u8[16384]{0}', space=vmem, size = 0x4000, scoped, tag = 'output window, operand 0, single buffered']
    #allocation6 [shape = 's32[1]{0}', space=sflag, size = 0x4, scoped, tag = 'scoped memory for gen_one_forward.1']
    %13 = vsyncpa [#allocation6], 0
    // Predicated region
    $region2: #{gen_one_forward.1} parent=1 // pred_check
      _
    $region3: #{gen_one_forward.1} parent=1 // pred_check_branch
      %15 = sbr.rel (0) target = $region5
    $region4: #{gen_one_forward.1} parent=1 // pred_region
      _
    $region5: #{gen_one_forward.1} parent=1 // pred_fallthru
      _
    // Predicated region
    $region6: #{gen_one_forward.1} parent=1 // pred_check
      _
    $region7: #{gen_one_forward.1} parent=1 // pred_check_branch
      %17 = sbr.rel (0) target = $region9
    $region8: #{gen_one_forward.1} parent=1 // pred_region
      _
    $region9: #{gen_one_forward.1} parent=1 // pred_fallthru
      _
    // Predicated region
    $region10: #{gen_one_forward.1} parent=1 // pred_check
      _
    $region11: #{gen_one_forward.1} parent=1 // pred_check_branch
      %19 = sbr.rel (0) target = $region13
    $region12: #{gen_one_forward.1} parent=1 // pred_region
      _
    $region13: #{gen_one_forward.1} parent=1 // pred_fallthru
      _
    // Predicated region
    $region14: #{gen_one_forward.1} parent=1 // pred_check
      _
    $region15: #{gen_one_forward.1} parent=1 // pred_check_branch
      %21 = sbr.rel (0) target = $region17
    $region16: #{gen_one_forward.1} parent=1 // pred_region
      _
    $region17: #{gen_one_forward.1} parent=1 // pred_fallthru
      _
    // Predicated region
    $region18: #{gen_one_forward.1} parent=1 // pred_check
      _
    $region19: #{gen_one_forward.1} parent=1 // pred_check_branch
      %23 = sbr.rel (0) target = $region21
    $region20: #{gen_one_forward.1} parent=1 // pred_region
      _
    $region21: #{gen_one_forward.1} parent=1 // pred_fallthru
      _
    // Predicated region
    $region22: #{gen_one_forward.1} parent=1 // pred_check
      _
    $region23: #{gen_one_forward.1} parent=1 // pred_check_branch
      %25 = sbr.rel (0) target = $region25
    $region24: #{gen_one_forward.1} parent=1 // pred_region
      _
    $region25: #{gen_one_forward.1} parent=1 // pred_fallthru
      _
    // Predicated region
    $region26: #{gen_one_forward.1} parent=1 // pred_check
      _
    $region27: #{gen_one_forward.1} parent=1 // pred_check_branch
      %27 = sbr.rel (0) target = $region29
    $region28: #{gen_one_forward.1} parent=1 // pred_region
      _
    $region29: #{gen_one_forward.1} parent=1 // pred_fallthru
      _
    // Predicated region
    $region30: #{gen_one_forward.1} parent=1 // pred_check
      _
    $region31: #{gen_one_forward.1} parent=1 // pred_check_branch
      %29 = sbr.rel (0) target = $region33
    $region32: #{gen_one_forward.1} parent=1 // pred_region
      _
    $region33: #{gen_one_forward.1} parent=1 // pred_fallthru
      _
    %v30 = vld [vmem:[%s0] sm:$0xff]
    %v31 = vld [vmem:[%s0 + $0x8] sm:$0xff]
    %v32 = vld [vmem:[%s0 + $0x10] sm:$0xff]
    %v33 = vld [vmem:[%s0 + $0x18] sm:$0xff]
    %v34 = vld [vmem:[%s0 + $0x20] sm:$0xff]
    %v35 = vld [vmem:[%s0 + $0x28] sm:$0xff]
    %v36 = vld [vmem:[%s0 + $0x30] sm:$0xff]
    %v37 = vld [vmem:[%s0 + $0x38] sm:$0xff]
    %v38 = vld [vmem:[%s0 + $0x40] sm:$0xff]
    %v39 = vld [vmem:[%s0 + $0x48] sm:$0xff]
    %v40 = vld [vmem:[%s0 + $0x50] sm:$0xff]
    %v41 = vld [vmem:[%s0 + $0x58] sm:$0xff]
    %v42 = vld [vmem:[%s0 + $0x60] sm:$0xff]
    %v43 = vld [vmem:[%s0 + $0x68] sm:$0xff]
    %v44 = vld [vmem:[%s0 + $0x70] sm:$0xff]
    %v45 = vld [vmem:[%s0 + $0x78] sm:$0xff]
    %v46 = vld [vmem:[%s0 + $0x80] sm:$0xff]
    %v47 = vld [vmem:[%s0 + $0x88] sm:$0xff]
    %v48 = vld [vmem:[%s0 + $0x90] sm:$0xff]
    %v49 = vld [vmem:[%s0 + $0x98] sm:$0xff]
    %v50 = vld [vmem:[%s0 + $0xa0] sm:$0xff]
    %v51 = vld [vmem:[%s0 + $0xa8] sm:$0xff]
    %v52 = vld [vmem:[%s0 + $0xb0] sm:$0xff]
    %v53 = vld [vmem:[%s0 + $0xb8] sm:$0xff]
    %v54 = vld [vmem:[%s0 + $0xc0] sm:$0xff]
    %v55 = vld [vmem:[%s0 + $0xc8] sm:$0xff]
    %v56 = vld [vmem:[%s0 + $0xd0] sm:$0xff]
    %v57 = vld [vmem:[%s0 + $0xd8] sm:$0xff]
    %v58 = vld [vmem:[%s0 + $0xe0] sm:$0xff]
    %v59 = vld [vmem:[%s0 + $0xe8] sm:$0xff]
    %v60 = vld [vmem:[%s0 + $0xf0] sm:$0xff]
    %v61 = vld [vmem:[%s0 + $0xf8] sm:$0xff]
    %v62 = vld [vmem:[%s0 + $0x100] sm:$0xff]
    %v63 = vld [vmem:[%s0 + $0x108] sm:$0xff]
    %v64 = vld [vmem:[%s0 + $0x110] sm:$0xff]
    %v65 = vld [vmem:[%s0 + $0x118] sm:$0xff]
    %v66 = vld [vmem:[%s0 + $0x120] sm:$0xff]
    %v67 = vld [vmem:[%s0 + $0x128] sm:$0xff]
    %v68 = vld [vmem:[%s0 + $0x130] sm:$0xff]
    %v69 = vld [vmem:[%s0 + $0x138] sm:$0xff]
    %v70 = vld [vmem:[%s0 + $0x140] sm:$0xff]
    %v71 = vld [vmem:[%s0 + $0x148] sm:$0xff]
    %v72 = vld [vmem:[%s0 + $0x150] sm:$0xff]
    %v73 = vld [vmem:[%s0 + $0x158] sm:$0xff]
    %v74 = vld [vmem:[%s0 + $0x160] sm:$0xff]
    %v75 = vld [vmem:[%s0 + $0x168] sm:$0xff]
    %v76 = vld [vmem:[%s0 + $0x170] sm:$0xff]
    %v77 = vld [vmem:[%s0 + $0x178] sm:$0xff]
    %v78 = vld [vmem:[%s0 + $0x180] sm:$0xff]
    %v79 = vld [vmem:[%s0 + $0x188] sm:$0xff]
    %v80 = vld [vmem:[%s0 + $0x190] sm:$0xff]
    %v81 = vld [vmem:[%s0 + $0x198] sm:$0xff]
    %v82 = vld [vmem:[%s0 + $0x1a0] sm:$0xff]
    %v83 = vld [vmem:[%s0 + $0x1a8] sm:$0xff]
    %v84 = vld [vmem:[%s0 + $0x1b0] sm:$0xff]
    %v85 = vld [vmem:[%s0 + $0x1b8] sm:$0xff]
    %v86 = vld [vmem:[%s0 + $0x1c0] sm:$0xff]
    %v87 = vld [vmem:[%s0 + $0x1c8] sm:$0xff]
    %v88 = vld [vmem:[%s0 + $0x1d0] sm:$0xff]
    %v89 = vld [vmem:[%s0 + $0x1d8] sm:$0xff]
    %v90 = vld [vmem:[%s0 + $0x1e0] sm:$0xff]
    %v91 = vld [vmem:[%s0 + $0x1e8] sm:$0xff]
    %v92 = vld [vmem:[%s0 + $0x1f0] sm:$0xff]
    %v93 = vld [vmem:[%s0 + $0x1f8] sm:$0xff]
    %v94 = vld [vmem:[%s1] sm:$0xff]
    %v95 = vld [vmem:[%s1 + $0x8] sm:$0xff]
    %v96 = vld [vmem:[%s1 + $0x10] sm:$0xff]
    %v97 = vld [vmem:[%s1 + $0x18] sm:$0xff]
    %v98 = vld [vmem:[%s1 + $0x20] sm:$0xff]
    %v99 = vld [vmem:[%s1 + $0x28] sm:$0xff]
    %v100 = vld [vmem:[%s1 + $0x30] sm:$0xff]
    %v101 = vld [vmem:[%s1 + $0x38] sm:$0xff]
    %v102 = vld [vmem:[%s1 + $0x40] sm:$0xff]
    %v103 = vld [vmem:[%s1 + $0x48] sm:$0xff]
    %v104 = vld [vmem:[%s1 + $0x50] sm:$0xff]
    %v105 = vld [vmem:[%s1 + $0x58] sm:$0xff]
    %v106 = vld [vmem:[%s1 + $0x60] sm:$0xff]
    %v107 = vld [vmem:[%s1 + $0x68] sm:$0xff]
    %v108 = vld [vmem:[%s1 + $0x70] sm:$0xff]
    %v109 = vld [vmem:[%s1 + $0x78] sm:$0xff]
    %110 = vmatpush.msra.mxu0 %v109
    %111 = vmatpush.msra.mxu0 %v108
    %112 = vmatpush.msra.mxu0 %v107
    %113 = vmatpush.msra.mxu0 %v106
    %114 = vmatpush.msra.mxu0 %v105
    %115 = vmatpush.msra.mxu0 %v104
    %116 = vmatpush.msra.mxu0 %v103
    %117 = vmatpush.msra.mxu0 %v102
    %118 = vmatpush.msra.mxu0 %v101
    %119 = vmatpush.msra.mxu0 %v100
    %120 = vmatpush.msra.mxu0 %v99
    %121 = vmatpush.msra.mxu0 %v98
    %122 = vmatpush.msra.mxu0 %v97
    %123 = vmatpush.msra.mxu0 %v96
    %124 = vmatpush.msra.mxu0 %v95
    %125 = vmatpush.msra.mxu0 %v94
    %126 = vmatmul.f32.gmra.mxu0 %v30
    %v127 = vpop.f32.mrf.mxu0
    %v128 = vadd.f32 0.0, %v127
    %129 = vmatmul.f32.gmra.mxu0 %v31
    %v130 = vpop.f32.mrf.mxu0
    %v131 = vadd.f32 0.0, %v130
    %132 = vmatmul.f32.gmra.mxu0 %v32
    %v133 = vpop.f32.mrf.mxu0
    %v134 = vadd.f32 0.0, %v133
    %135 = vmatmul.f32.gmra.mxu0 %v33
    %v136 = vpop.f32.mrf.mxu0
    %v137 = vadd.f32 0.0, %v136
    %138 = vmatmul.f32.gmra.mxu0 %v34
    %v139 = vpop.f32.mrf.mxu0
    %v140 = vadd.f32 0.0, %v139
    %141 = vmatmul.f32.gmra.mxu0 %v35
    %v142 = vpop.f32.mrf.mxu0
    %v143 = vadd.f32 0.0, %v142
    %144 = vmatmul.f32.gmra.mxu0 %v36
    %v145 = vpop.f32.mrf.mxu0
    %v146 = vadd.f32 0.0, %v145
    %147 = vmatmul.f32.gmra.mxu0 %v37
    %v148 = vpop.f32.mrf.mxu0
    %v149 = vadd.f32 0.0, %v148
    %150 = vmatmul.f32.gmra.mxu0 %v38
    %v151 = vpop.f32.mrf.mxu0
    %v152 = vadd.f32 0.0, %v151
    %153 = vmatmul.f32.gmra.mxu0 %v39
    %v154 = vpop.f32.mrf.mxu0
    %v155 = vadd.f32 0.0, %v154
    %156 = vmatmul.f32.gmra.mxu0 %v40
    %v157 = vpop.f32.mrf.mxu0
    %v158 = vadd.f32 0.0, %v157
    %159 = vmatmul.f32.gmra.mxu0 %v41
    %v160 = vpop.f32.mrf.mxu0
    %v161 = vadd.f32 0.0, %v160
    %162 = vmatmul.f32.gmra.mxu0 %v42
    %v163 = vpop.f32.mrf.mxu0
    %v164 = vadd.f32 0.0, %v163
    %165 = vmatmul.f32.gmra.mxu0 %v43
    %v166 = vpop.f32.mrf.mxu0
    %v167 = vadd.f32 0.0, %v166
    %168 = vmatmul.f32.gmra.mxu0 %v44
    %v169 = vpop.f32.mrf.mxu0
    %v170 = vadd.f32 0.0, %v169
    %171 = vmatmul.f32.gmra.mxu0 %v45
    %v172 = vpop.f32.mrf.mxu0
    %v173 = vadd.f32 0.0, %v172
    %174 = vmatmul.f32.gmra.mxu0 %v46
    %v175 = vpop.f32.mrf.mxu0
    %v176 = vadd.f32 0.0, %v175
    %177 = vmatmul.f32.gmra.mxu0 %v47
    %v178 = vpop.f32.mrf.mxu0
    %v179 = vadd.f32 0.0, %v178
    %180 = vmatmul.f32.gmra.mxu0 %v48
    %v181 = vpop.f32.mrf.mxu0
    %v182 = vadd.f32 0.0, %v181
    %183 = vmatmul.f32.gmra.mxu0 %v49
    %v184 = vpop.f32.mrf.mxu0
    %v185 = vadd.f32 0.0, %v184
    %186 = vmatmul.f32.gmra.mxu0 %v50
    %v187 = vpop.f32.mrf.mxu0
    %v188 = vadd.f32 0.0, %v187
    %189 = vmatmul.f32.gmra.mxu0 %v51
    %v190 = vpop.f32.mrf.mxu0
    %v191 = vadd.f32 0.0, %v190
    %192 = vmatmul.f32.gmra.mxu0 %v52
    %v193 = vpop.f32.mrf.mxu0
    %v194 = vadd.f32 0.0, %v193
    %195 = vmatmul.f32.gmra.mxu0 %v53
    %v196 = vpop.f32.mrf.mxu0
    %v197 = vadd.f32 0.0, %v196
    %198 = vmatmul.f32.gmra.mxu0 %v54
    %v199 = vpop.f32.mrf.mxu0
    %v200 = vadd.f32 0.0, %v199
    %201 = vmatmul.f32.gmra.mxu0 %v55
    %v202 = vpop.f32.mrf.mxu0
    %v203 = vadd.f32 0.0, %v202
    %204 = vmatmul.f32.gmra.mxu0 %v56
    %v205 = vpop.f32.mrf.mxu0
    %v206 = vadd.f32 0.0, %v205
    %207 = vmatmul.f32.gmra.mxu0 %v57
    %v208 = vpop.f32.mrf.mxu0
    %v209 = vadd.f32 0.0, %v208
    %210 = vmatmul.f32.gmra.mxu0 %v58
    %v211 = vpop.f32.mrf.mxu0
    %v212 = vadd.f32 0.0, %v211
    %213 = vmatmul.f32.gmra.mxu0 %v59
    %v214 = vpop.f32.mrf.mxu0
    %v215 = vadd.f32 0.0, %v214
    %216 = vmatmul.f32.gmra.mxu0 %v60
    %v217 = vpop.f32.mrf.mxu0
    %v218 = vadd.f32 0.0, %v217
    %219 = vmatmul.f32.gmra.mxu0 %v61
    %v220 = vpop.f32.mrf.mxu0
    %v221 = vadd.f32 0.0, %v220
    %222 = vmatmul.f32.gmra.mxu0 %v62
    %v223 = vpop.f32.mrf.mxu0
    %v224 = vadd.f32 0.0, %v223
    %225 = vmatmul.f32.gmra.mxu0 %v63
    %v226 = vpop.f32.mrf.mxu0
    %v227 = vadd.f32 0.0, %v226
    %228 = vmatmul.f32.gmra.mxu0 %v64
    %v229 = vpop.f32.mrf.mxu0
    %v230 = vadd.f32 0.0, %v229
    %231 = vmatmul.f32.gmra.mxu0 %v65
    %v232 = vpop.f32.mrf.mxu0
    %v233 = vadd.f32 0.0, %v232
    %234 = vmatmul.f32.gmra.mxu0 %v66
    %v235 = vpop.f32.mrf.mxu0
    %v236 = vadd.f32 0.0, %v235
    %237 = vmatmul.f32.gmra.mxu0 %v67
    %v238 = vpop.f32.mrf.mxu0
    %v239 = vadd.f32 0.0, %v238
    %240 = vmatmul.f32.gmra.mxu0 %v68
    %v241 = vpop.f32.mrf.mxu0
    %v242 = vadd.f32 0.0, %v241
    %243 = vmatmul.f32.gmra.mxu0 %v69
    %v244 = vpop.f32.mrf.mxu0
    %v245 = vadd.f32 0.0, %v244
    %246 = vmatmul.f32.gmra.mxu0 %v70
    %v247 = vpop.f32.mrf.mxu0
    %v248 = vadd.f32 0.0, %v247
    %249 = vmatmul.f32.gmra.mxu0 %v71
    %v250 = vpop.f32.mrf.mxu0
    %v251 = vadd.f32 0.0, %v250
    %252 = vmatmul.f32.gmra.mxu0 %v72
    %v253 = vpop.f32.mrf.mxu0
    %v254 = vadd.f32 0.0, %v253
    %255 = vmatmul.f32.gmra.mxu0 %v73
    %v256 = vpop.f32.mrf.mxu0
    %v257 = vadd.f32 0.0, %v256
    %258 = vmatmul.f32.gmra.mxu0 %v74
    %v259 = vpop.f32.mrf.mxu0
    %v260 = vadd.f32 0.0, %v259
    %261 = vmatmul.f32.gmra.mxu0 %v75
    %v262 = vpop.f32.mrf.mxu0
    %v263 = vadd.f32 0.0, %v262
    %264 = vmatmul.f32.gmra.mxu0 %v76
    %v265 = vpop.f32.mrf.mxu0
    %v266 = vadd.f32 0.0, %v265
    %267 = vmatmul.f32.gmra.mxu0 %v77
    %v268 = vpop.f32.mrf.mxu0
    %v269 = vadd.f32 0.0, %v268
    %270 = vmatmul.f32.gmra.mxu0 %v78
    %v271 = vpop.f32.mrf.mxu0
    %v272 = vadd.f32 0.0, %v271
    %273 = vmatmul.f32.gmra.mxu0 %v79
    %v274 = vpop.f32.mrf.mxu0
    %v275 = vadd.f32 0.0, %v274
    %276 = vmatmul.f32.gmra.mxu0 %v80
    %v277 = vpop.f32.mrf.mxu0
    %v278 = vadd.f32 0.0, %v277
    %279 = vmatmul.f32.gmra.mxu0 %v81
    %v280 = vpop.f32.mrf.mxu0
    %v281 = vadd.f32 0.0, %v280
    %282 = vmatmul.f32.gmra.mxu0 %v82
    %v283 = vpop.f32.mrf.mxu0
    %v284 = vadd.f32 0.0, %v283
    %285 = vmatmul.f32.gmra.mxu0 %v83
    %v286 = vpop.f32.mrf.mxu0
    %v287 = vadd.f32 0.0, %v286
    %288 = vmatmul.f32.gmra.mxu0 %v84
    %v289 = vpop.f32.mrf.mxu0
    %v290 = vadd.f32 0.0, %v289
    %291 = vmatmul.f32.gmra.mxu0 %v85
    %v292 = vpop.f32.mrf.mxu0
    %v293 = vadd.f32 0.0, %v292
    %294 = vmatmul.f32.gmra.mxu0 %v86
    %v295 = vpop.f32.mrf.mxu0
    %v296 = vadd.f32 0.0, %v295
    %297 = vmatmul.f32.gmra.mxu0 %v87
    %v298 = vpop.f32.mrf.mxu0
    %v299 = vadd.f32 0.0, %v298
    %300 = vmatmul.f32.gmra.mxu0 %v88
    %v301 = vpop.f32.mrf.mxu0
    %v302 = vadd.f32 0.0, %v301
    %303 = vmatmul.f32.gmra.mxu0 %v89
    %v304 = vpop.f32.mrf.mxu0
    %v305 = vadd.f32 0.0, %v304
    %306 = vmatmul.f32.gmra.mxu0 %v90
    %v307 = vpop.f32.mrf.mxu0
    %v308 = vadd.f32 0.0, %v307
    %309 = vmatmul.f32.gmra.mxu0 %v91
    %v310 = vpop.f32.mrf.mxu0
    %v311 = vadd.f32 0.0, %v310
    %312 = vmatmul.f32.gmra.mxu0 %v92
    %v313 = vpop.f32.mrf.mxu0
    %v314 = vadd.f32 0.0, %v313
    %315 = vmatmul.f32.gmra.mxu0 %v93
    %v316 = vpop.f32.mrf.mxu0
    %v317 = vadd.f32 0.0, %v316
    %318 = vdwg.mxu0
    %v319 = vld [vmem:[%s2] sm:$0x1]
    %v320 = vld [vmem:[%s3] sm:$0x1]
    %v321 = vadd.f32 %v128, %v131
    %v322 = vadd.f32 %v321, %v134
    %v323 = vadd.f32 %v322, %v137
    %v324 = vadd.f32 %v323, %v140
    %v325 = vadd.f32 %v324, %v143
    %v326 = vadd.f32 %v325, %v146
    %v327 = vadd.f32 %v326, %v149
    %v328 = vadd.f32 %v327, %v152
    %v329 = vadd.f32 %v328, %v155
    %v330 = vadd.f32 %v329, %v158
    %v331 = vadd.f32 %v330, %v161
    %v332 = vadd.f32 %v331, %v164
    %v333 = vadd.f32 %v332, %v167
    %v334 = vadd.f32 %v333, %v170
    %v335 = vadd.f32 %v334, %v173
    %v336 = vadd.f32 %v335, %v176
    %v337 = vadd.f32 %v336, %v179
    %v338 = vadd.f32 %v337, %v182
    %v339 = vadd.f32 %v338, %v185
    %v340 = vadd.f32 %v339, %v188
    %v341 = vadd.f32 %v340, %v191
    %v342 = vadd.f32 %v341, %v194
    %v343 = vadd.f32 %v342, %v197
    %v344 = vadd.f32 %v343, %v200
    %v345 = vadd.f32 %v344, %v203
    %v346 = vadd.f32 %v345, %v206
    %v347 = vadd.f32 %v346, %v209
    %v348 = vadd.f32 %v347, %v212
    %v349 = vadd.f32 %v348, %v215
    %v350 = vadd.f32 %v349, %v218
    %v351 = vadd.f32 %v350, %v221
    %v352 = vadd.f32 %v351, %v224
    %v353 = vadd.f32 %v352, %v227
    %v354 = vadd.f32 %v353, %v230
    %v355 = vadd.f32 %v354, %v233
    %v356 = vadd.f32 %v355, %v236
    %v357 = vadd.f32 %v356, %v239
    %v358 = vadd.f32 %v357, %v242
    %v359 = vadd.f32 %v358, %v245
    %v360 = vadd.f32 %v359, %v248
    %v361 = vadd.f32 %v360, %v251
    %v362 = vadd.f32 %v361, %v254
    %v363 = vadd.f32 %v362, %v257
    %v364 = vadd.f32 %v363, %v260
    %v365 = vadd.f32 %v364, %v263
    %v366 = vadd.f32 %v365, %v266
    %v367 = vadd.f32 %v366, %v269
    %v368 = vadd.f32 %v367, %v272
    %v369 = vadd.f32 %v368, %v275
    %v370 = vadd.f32 %v369, %v278
    %v371 = vadd.f32 %v370, %v281
    %v372 = vadd.f32 %v371, %v284
    %v373 = vadd.f32 %v372, %v287
    %v374 = vadd.f32 %v373, %v290
    %v375 = vadd.f32 %v374, %v293
    %v376 = vadd.f32 %v375, %v296
    %v377 = vadd.f32 %v376, %v299
    %v378 = vadd.f32 %v377, %v302
    %v379 = vadd.f32 %v378, %v305
    %v380 = vadd.f32 %v379, %v308
    %v381 = vadd.f32 %v380, %v311
    %v382 = vadd.f32 %v381, %v314
    %v383 = vadd.f32 %v382, %v317
    %v384 = vrot.slane %v383, 4
    %v385 = vadd.f32 %v383, %v384
    %v386 = vrot.slane %v385, 2
    %v387 = vadd.f32 %v385, %v386
    %v388 = vrot.slane %v387, 1
    %v389 = vadd.f32 %v387, %v388
    %v390 = vrcp.pop 512.0
    %v391 = vmul.f32 512.0, %v390
    %v392 = vsub.f32 1.0, %v391
    %v393 = vmul.f32 %v390, %v392
    %v394 = vadd.f32 %v390, %v393
    %vm395 = vweird.f32 %v390
    %v396 = vsel %vm395, %v390, %v394
    %v397 = vmul.f32 %v389, %v396
    %v398 = vsub.f32 %v128, %v397
    %v399 = vsub.f32 %v131, %v397
    %v400 = vsub.f32 %v134, %v397
    %v401 = vsub.f32 %v137, %v397
    %v402 = vsub.f32 %v140, %v397
    %v403 = vsub.f32 %v143, %v397
    %v404 = vsub.f32 %v146, %v397
    %v405 = vsub.f32 %v149, %v397
    %v406 = vsub.f32 %v152, %v397
    %v407 = vsub.f32 %v155, %v397
    %v408 = vsub.f32 %v158, %v397
    %v409 = vsub.f32 %v161, %v397
    %v410 = vsub.f32 %v164, %v397
    %v411 = vsub.f32 %v167, %v397
    %v412 = vsub.f32 %v170, %v397
    %v413 = vsub.f32 %v173, %v397
    %v414 = vsub.f32 %v176, %v397
    %v415 = vsub.f32 %v179, %v397
    %v416 = vsub.f32 %v182, %v397
    %v417 = vsub.f32 %v185, %v397
    %v418 = vsub.f32 %v188, %v397
    %v419 = vsub.f32 %v191, %v397
    %v420 = vsub.f32 %v194, %v397
    %v421 = vsub.f32 %v197, %v397
    %v422 = vsub.f32 %v200, %v397
    %v423 = vsub.f32 %v203, %v397
    %v424 = vsub.f32 %v206, %v397
    %v425 = vsub.f32 %v209, %v397
    %v426 = vsub.f32 %v212, %v397
    %v427 = vsub.f32 %v215, %v397
    %v428 = vsub.f32 %v218, %v397
    %v429 = vsub.f32 %v221, %v397
    %v430 = vsub.f32 %v224, %v397
    %v431 = vsub.f32 %v227, %v397
    %v432 = vsub.f32 %v230, %v397
    %v433 = vsub.f32 %v233, %v397
    %v434 = vsub.f32 %v236, %v397
    %v435 = vsub.f32 %v239, %v397
    %v436 = vsub.f32 %v242, %v397
    %v437 = vsub.f32 %v245, %v397
    %v438 = vsub.f32 %v248, %v397
    %v439 = vsub.f32 %v251, %v397
    %v440 = vsub.f32 %v254, %v397
    %v441 = vsub.f32 %v257, %v397
    %v442 = vsub.f32 %v260, %v397
    %v443 = vsub.f32 %v263, %v397
    %v444 = vsub.f32 %v266, %v397
    %v445 = vsub.f32 %v269, %v397
    %v446 = vsub.f32 %v272, %v397
    %v447 = vsub.f32 %v275, %v397
    %v448 = vsub.f32 %v278, %v397
    %v449 = vsub.f32 %v281, %v397
    %v450 = vsub.f32 %v284, %v397
    %v451 = vsub.f32 %v287, %v397
    %v452 = vsub.f32 %v290, %v397
    %v453 = vsub.f32 %v293, %v397
    %v454 = vsub.f32 %v296, %v397
    %v455 = vsub.f32 %v299, %v397
    %v456 = vsub.f32 %v302, %v397
    %v457 = vsub.f32 %v305, %v397
    %v458 = vsub.f32 %v308, %v397
    %v459 = vsub.f32 %v311, %v397
    %v460 = vsub.f32 %v314, %v397
    %v461 = vsub.f32 %v317, %v397
    %v462 = vmul.f32 %v398, %v398
    %v463 = vmul.f32 %v399, %v399
    %v464 = vmul.f32 %v400, %v400
    %v465 = vmul.f32 %v401, %v401
    %v466 = vmul.f32 %v402, %v402
    %v467 = vmul.f32 %v403, %v403
    %v468 = vmul.f32 %v404, %v404
    %v469 = vmul.f32 %v405, %v405
    %v470 = vmul.f32 %v406, %v406
    %v471 = vmul.f32 %v407, %v407
    %v472 = vmul.f32 %v408, %v408
    %v473 = vmul.f32 %v409, %v409
    %v474 = vmul.f32 %v410, %v410
    %v475 = vmul.f32 %v411, %v411
    %v476 = vmul.f32 %v412, %v412
    %v477 = vmul.f32 %v413, %v413
    %v478 = vmul.f32 %v414, %v414
    %v479 = vmul.f32 %v415, %v415
    %v480 = vmul.f32 %v416, %v416
    %v481 = vmul.f32 %v417, %v417
    %v482 = vmul.f32 %v418, %v418
    %v483 = vmul.f32 %v419, %v419
    %v484 = vmul.f32 %v420, %v420
    %v485 = vmul.f32 %v421, %v421
    %v486 = vmul.f32 %v422, %v422
    %v487 = vmul.f32 %v423, %v423
    %v488 = vmul.f32 %v424, %v424
    %v489 = vmul.f32 %v425, %v425
    %v490 = vmul.f32 %v426, %v426
    %v491 = vmul.f32 %v427, %v427
    %v492 = vmul.f32 %v428, %v428
    %v493 = vmul.f32 %v429, %v429
    %v494 = vmul.f32 %v430, %v430
    %v495 = vmul.f32 %v431, %v431
    %v496 = vmul.f32 %v432, %v432
    %v497 = vmul.f32 %v433, %v433
    %v498 = vmul.f32 %v434, %v434
    %v499 = vmul.f32 %v435, %v435
    %v500 = vmul.f32 %v436, %v436
    %v501 = vmul.f32 %v437, %v437
    %v502 = vmul.f32 %v438, %v438
    %v503 = vmul.f32 %v439, %v439
    %v504 = vmul.f32 %v440, %v440
    %v505 = vmul.f32 %v441, %v441
    %v506 = vmul.f32 %v442, %v442
    %v507 = vmul.f32 %v443, %v443
    %v508 = vmul.f32 %v444, %v444
    %v509 = vmul.f32 %v445, %v445
    %v510 = vmul.f32 %v446, %v446
    %v511 = vmul.f32 %v447, %v447
    %v512 = vmul.f32 %v448, %v448
    %v513 = vmul.f32 %v449, %v449
    %v514 = vmul.f32 %v450, %v450
    %v515 = vmul.f32 %v451, %v451
    %v516 = vmul.f32 %v452, %v452
    %v517 = vmul.f32 %v453, %v453
    %v518 = vmul.f32 %v454, %v454
    %v519 = vmul.f32 %v455, %v455
    %v520 = vmul.f32 %v456, %v456
    %v521 = vmul.f32 %v457, %v457
    %v522 = vmul.f32 %v458, %v458
    %v523 = vmul.f32 %v459, %v459
    %v524 = vmul.f32 %v460, %v460
    %v525 = vmul.f32 %v461, %v461
    %v526 = vadd.f32 %v462, %v463
    %v527 = vadd.f32 %v526, %v464
    %v528 = vadd.f32 %v527, %v465
    %v529 = vadd.f32 %v528, %v466
    %v530 = vadd.f32 %v529, %v467
    %v531 = vadd.f32 %v530, %v468
    %v532 = vadd.f32 %v531, %v469
    %v533 = vadd.f32 %v532, %v470
    %v534 = vadd.f32 %v533, %v471
    %v535 = vadd.f32 %v534, %v472
    %v536 = vadd.f32 %v535, %v473
    %v537 = vadd.f32 %v536, %v474
    %v538 = vadd.f32 %v537, %v475
    %v539 = vadd.f32 %v538, %v476
    %v540 = vadd.f32 %v539, %v477
    %v541 = vadd.f32 %v540, %v478
    %v542 = vadd.f32 %v541, %v479
    %v543 = vadd.f32 %v542, %v480
    %v544 = vadd.f32 %v543, %v481
    %v545 = vadd.f32 %v544, %v482
    %v546 = vadd.f32 %v545, %v483
    %v547 = vadd.f32 %v546, %v484
    %v548 = vadd.f32 %v547, %v485
    %v549 = vadd.f32 %v548, %v486
    %v550 = vadd.f32 %v549, %v487
    %v551 = vadd.f32 %v550, %v488
    %v552 = vadd.f32 %v551, %v489
    %v553 = vadd.f32 %v552, %v490
    %v554 = vadd.f32 %v553, %v491
    %v555 = vadd.f32 %v554, %v492
    %v556 = vadd.f32 %v555, %v493
    %v557 = vadd.f32 %v556, %v494
    %v558 = vadd.f32 %v557, %v495
    %v559 = vadd.f32 %v558, %v496
    %v560 = vadd.f32 %v559, %v497
    %v561 = vadd.f32 %v560, %v498
    %v562 = vadd.f32 %v561, %v499
    %v563 = vadd.f32 %v562, %v500
    %v564 = vadd.f32 %v563, %v501
    %v565 = vadd.f32 %v564, %v502
    %v566 = vadd.f32 %v565, %v503
    %v567 = vadd.f32 %v566, %v504
    %v568 = vadd.f32 %v567, %v505
    %v569 = vadd.f32 %v568, %v506
    %v570 = vadd.f32 %v569, %v507
    %v571 = vadd.f32 %v570, %v508
    %v572 = vadd.f32 %v571, %v509
    %v573 = vadd.f32 %v572, %v510
    %v574 = vadd.f32 %v573, %v511
    %v575 = vadd.f32 %v574, %v512
    %v576 = vadd.f32 %v575, %v513
    %v577 = vadd.f32 %v576, %v514
    %v578 = vadd.f32 %v577, %v515
    %v579 = vadd.f32 %v578, %v516
    %v580 = vadd.f32 %v579, %v517
    %v581 = vadd.f32 %v580, %v518
    %v582 = vadd.f32 %v581, %v519
    %v583 = vadd.f32 %v582, %v520
    %v584 = vadd.f32 %v583, %v521
    %v585 = vadd.f32 %v584, %v522
    %v586 = vadd.f32 %v585, %v523
    %v587 = vadd.f32 %v586, %v524
    %v588 = vadd.f32 %v587, %v525
    %v589 = vrot.slane %v588, 4
    %v590 = vadd.f32 %v588, %v589
    %v591 = vrot.slane %v590, 2
    %v592 = vadd.f32 %v590, %v591
    %v593 = vrot.slane %v592, 1
    %v594 = vadd.f32 %v592, %v593
    %v595 = vmul.f32 %v594, %v396
    %v596 = vadd.f32 %v595, 1e-05
    %v597 = vrsqrt.pop %v596
    %v598 = vmul.f32 %v597, %v596
    %v599 = vmul.f32 %v598, %v597
    %v600 = vmul.f32 0.5, %v599
    %v601 = vsub.f32 1.5, %v600
    %v602 = vmul.f32 %v597, %v601
    %vm603 = vweird.f32 %v596
    %vm604 = vweird.f32 %v597
    %vm605 = vmor %vm603, %vm604
    %v606 = vsel %vm605, %v597, %v602
    %v607 = vmul.f32 %v398, %v606
    %v608 = vmul.f32 %v399, %v606
    %v609 = vmul.f32 %v400, %v606
    %v610 = vmul.f32 %v401, %v606
    %v611 = vmul.f32 %v402, %v606
    %v612 = vmul.f32 %v403, %v606
    %v613 = vmul.f32 %v404, %v606
    %v614 = vmul.f32 %v405, %v606
    %v615 = vmul.f32 %v406, %v606
    %v616 = vmul.f32 %v407, %v606
    %v617 = vmul.f32 %v408, %v606
    %v618 = vmul.f32 %v409, %v606
    %v619 = vmul.f32 %v410, %v606
    %v620 = vmul.f32 %v411, %v606
    %v621 = vmul.f32 %v412, %v606
    %v622 = vmul.f32 %v413, %v606
    %v623 = vmul.f32 %v414, %v606
    %v624 = vmul.f32 %v415, %v606
    %v625 = vmul.f32 %v416, %v606
    %v626 = vmul.f32 %v417, %v606
    %v627 = vmul.f32 %v418, %v606
    %v628 = vmul.f32 %v419, %v606
    %v629 = vmul.f32 %v420, %v606
    %v630 = vmul.f32 %v421, %v606
    %v631 = vmul.f32 %v422, %v606
    %v632 = vmul.f32 %v423, %v606
    %v633 = vmul.f32 %v424, %v606
    %v634 = vmul.f32 %v425, %v606
    %v635 = vmul.f32 %v426, %v606
    %v636 = vmul.f32 %v427, %v606
    %v637 = vmul.f32 %v428, %v606
    %v638 = vmul.f32 %v429, %v606
    %v639 = vmul.f32 %v430, %v606
    %v640 = vmul.f32 %v431, %v606
    %v641 = vmul.f32 %v432, %v606
    %v642 = vmul.f32 %v433, %v606
    %v643 = vmul.f32 %v434, %v606
    %v644 = vmul.f32 %v435, %v606
    %v645 = vmul.f32 %v436, %v606
    %v646 = vmul.f32 %v437, %v606
    %v647 = vmul.f32 %v438, %v606
    %v648 = vmul.f32 %v439, %v606
    %v649 = vmul.f32 %v440, %v606
    %v650 = vmul.f32 %v441, %v606
    %v651 = vmul.f32 %v442, %v606
    %v652 = vmul.f32 %v443, %v606
    %v653 = vmul.f32 %v444, %v606
    %v654 = vmul.f32 %v445, %v606
    %v655 = vmul.f32 %v446, %v606
    %v656 = vmul.f32 %v447, %v606
    %v657 = vmul.f32 %v448, %v606
    %v658 = vmul.f32 %v449, %v606
    %v659 = vmul.f32 %v450, %v606
    %v660 = vmul.f32 %v451, %v606
    %v661 = vmul.f32 %v452, %v606
    %v662 = vmul.f32 %v453, %v606
    %v663 = vmul.f32 %v454, %v606
    %v664 = vmul.f32 %v455, %v606
    %v665 = vmul.f32 %v456, %v606
    %v666 = vmul.f32 %v457, %v606
    %v667 = vmul.f32 %v458, %v606
    %v668 = vmul.f32 %v459, %v606
    %v669 = vmul.f32 %v460, %v606
    %v670 = vmul.f32 %v461, %v606
    %v672 = vperm.slane %v319, 0
    %v674 = vmul.f32 %v607, %v672
    %v675 = vmul.f32 %v608, %v672
    %v676 = vmul.f32 %v609, %v672
    %v677 = vmul.f32 %v610, %v672
    %v678 = vmul.f32 %v611, %v672
    %v679 = vmul.f32 %v612, %v672
    %v680 = vmul.f32 %v613, %v672
    %v681 = vmul.f32 %v614, %v672
    %v682 = vmul.f32 %v615, %v672
    %v683 = vmul.f32 %v616, %v672
    %v684 = vmul.f32 %v617, %v672
    %v685 = vmul.f32 %v618, %v672
    %v686 = vmul.f32 %v619, %v672
    %v687 = vmul.f32 %v620, %v672
    %v688 = vmul.f32 %v621, %v672
    %v689 = vmul.f32 %v622, %v672
    %v690 = vmul.f32 %v623, %v672
    %v691 = vmul.f32 %v624, %v672
    %v692 = vmul.f32 %v625, %v672
    %v693 = vmul.f32 %v626, %v672
    %v694 = vmul.f32 %v627, %v672
    %v695 = vmul.f32 %v628, %v672
    %v696 = vmul.f32 %v629, %v672
    %v697 = vmul.f32 %v630, %v672
    %v698 = vmul.f32 %v631, %v672
    %v699 = vmul.f32 %v632, %v672
    %v700 = vmul.f32 %v633, %v672
    %v701 = vmul.f32 %v634, %v672
    %v702 = vmul.f32 %v635, %v672
    %v703 = vmul.f32 %v636, %v672
    %v704 = vmul.f32 %v637, %v672
    %v705 = vmul.f32 %v638, %v672
    %v706 = vmul.f32 %v639, %v672
    %v707 = vmul.f32 %v640, %v672
    %v708 = vmul.f32 %v641, %v672
    %v709 = vmul.f32 %v642, %v672
    %v710 = vmul.f32 %v643, %v672
    %v711 = vmul.f32 %v644, %v672
    %v712 = vmul.f32 %v645, %v672
    %v713 = vmul.f32 %v646, %v672
    %v714 = vmul.f32 %v647, %v672
    %v715 = vmul.f32 %v648, %v672
    %v716 = vmul.f32 %v649, %v672
    %v717 = vmul.f32 %v650, %v672
    %v718 = vmul.f32 %v651, %v672
    %v719 = vmul.f32 %v652, %v672
    %v720 = vmul.f32 %v653, %v672
    %v721 = vmul.f32 %v654, %v672
    %v722 = vmul.f32 %v655, %v672
    %v723 = vmul.f32 %v656, %v672
    %v724 = vmul.f32 %v657, %v672
    %v725 = vmul.f32 %v658, %v672
    %v726 = vmul.f32 %v659, %v672
    %v727 = vmul.f32 %v660, %v672
    %v728 = vmul.f32 %v661, %v672
    %v729 = vmul.f32 %v662, %v672
    %v730 = vmul.f32 %v663, %v672
    %v731 = vmul.f32 %v664, %v672
    %v732 = vmul.f32 %v665, %v672
    %v733 = vmul.f32 %v666, %v672
    %v734 = vmul.f32 %v667, %v672
    %v735 = vmul.f32 %v668, %v672
    %v736 = vmul.f32 %v669, %v672
    %v737 = vmul.f32 %v670, %v672
    %v739 = vperm.slane %v320, 0
    %v741 = vadd.f32 %v674, %v739
    %v742 = vadd.f32 %v675, %v739
    %v743 = vadd.f32 %v676, %v739
    %v744 = vadd.f32 %v677, %v739
    %v745 = vadd.f32 %v678, %v739
    %v746 = vadd.f32 %v679, %v739
    %v747 = vadd.f32 %v680, %v739
    %v748 = vadd.f32 %v681, %v739
    %v749 = vadd.f32 %v682, %v739
    %v750 = vadd.f32 %v683, %v739
    %v751 = vadd.f32 %v684, %v739
    %v752 = vadd.f32 %v685, %v739
    %v753 = vadd.f32 %v686, %v739
    %v754 = vadd.f32 %v687, %v739
    %v755 = vadd.f32 %v688, %v739
    %v756 = vadd.f32 %v689, %v739
    %v757 = vadd.f32 %v690, %v739
    %v758 = vadd.f32 %v691, %v739
    %v759 = vadd.f32 %v692, %v739
    %v760 = vadd.f32 %v693, %v739
    %v761 = vadd.f32 %v694, %v739
    %v762 = vadd.f32 %v695, %v739
    %v763 = vadd.f32 %v696, %v739
    %v764 = vadd.f32 %v697, %v739
    %v765 = vadd.f32 %v698, %v739
    %v766 = vadd.f32 %v699, %v739
    %v767 = vadd.f32 %v700, %v739
    %v768 = vadd.f32 %v701, %v739
    %v769 = vadd.f32 %v702, %v739
    %v770 = vadd.f32 %v703, %v739
    %v771 = vadd.f32 %v704, %v739
    %v772 = vadd.f32 %v705, %v739
    %v773 = vadd.f32 %v706, %v739
    %v774 = vadd.f32 %v707, %v739
    %v775 = vadd.f32 %v708, %v739
    %v776 = vadd.f32 %v709, %v739
    %v777 = vadd.f32 %v710, %v739
    %v778 = vadd.f32 %v711, %v739
    %v779 = vadd.f32 %v712, %v739
    %v780 = vadd.f32 %v713, %v739
    %v781 = vadd.f32 %v714, %v739
    %v782 = vadd.f32 %v715, %v739
    %v783 = vadd.f32 %v716, %v739
    %v784 = vadd.f32 %v717, %v739
    %v785 = vadd.f32 %v718, %v739
    %v786 = vadd.f32 %v719, %v739
    %v787 = vadd.f32 %v720, %v739
    %v788 = vadd.f32 %v721, %v739
    %v789 = vadd.f32 %v722, %v739
    %v790 = vadd.f32 %v723, %v739
    %v791 = vadd.f32 %v724, %v739
    %v792 = vadd.f32 %v725, %v739
    %v793 = vadd.f32 %v726, %v739
    %v794 = vadd.f32 %v727, %v739
    %v795 = vadd.f32 %v728, %v739
    %v796 = vadd.f32 %v729, %v739
    %v797 = vadd.f32 %v730, %v739
    %v798 = vadd.f32 %v731, %v739
    %v799 = vadd.f32 %v732, %v739
    %v800 = vadd.f32 %v733, %v739
    %v801 = vadd.f32 %v734, %v739
    %v802 = vadd.f32 %v735, %v739
    %v803 = vadd.f32 %v736, %v739
    %v804 = vadd.f32 %v737, %v739
    %vm805 = vcmp.gt.f32.partialorder %v741, 0.0
    %vm806 = vcmp.gt.f32.partialorder %v742, 0.0
    %vm807 = vcmp.gt.f32.partialorder %v743, 0.0
    %vm808 = vcmp.gt.f32.partialorder %v744, 0.0
    %vm809 = vcmp.gt.f32.partialorder %v745, 0.0
    %vm810 = vcmp.gt.f32.partialorder %v746, 0.0
    %vm811 = vcmp.gt.f32.partialorder %v747, 0.0
    %vm812 = vcmp.gt.f32.partialorder %v748, 0.0
    %vm813 = vcmp.gt.f32.partialorder %v749, 0.0
    %vm814 = vcmp.gt.f32.partialorder %v750, 0.0
    %vm815 = vcmp.gt.f32.partialorder %v751, 0.0
    %vm816 = vcmp.gt.f32.partialorder %v752, 0.0
    %vm817 = vcmp.gt.f32.partialorder %v753, 0.0
    %vm818 = vcmp.gt.f32.partialorder %v754, 0.0
    %vm819 = vcmp.gt.f32.partialorder %v755, 0.0
    %vm820 = vcmp.gt.f32.partialorder %v756, 0.0
    %vm821 = vcmp.gt.f32.partialorder %v757, 0.0
    %vm822 = vcmp.gt.f32.partialorder %v758, 0.0
    %vm823 = vcmp.gt.f32.partialorder %v759, 0.0
    %vm824 = vcmp.gt.f32.partialorder %v760, 0.0
    %vm825 = vcmp.gt.f32.partialorder %v761, 0.0
    %vm826 = vcmp.gt.f32.partialorder %v762, 0.0
    %vm827 = vcmp.gt.f32.partialorder %v763, 0.0
    %vm828 = vcmp.gt.f32.partialorder %v764, 0.0
    %vm829 = vcmp.gt.f32.partialorder %v765, 0.0
    %vm830 = vcmp.gt.f32.partialorder %v766, 0.0
    %vm831 = vcmp.gt.f32.partialorder %v767, 0.0
    %vm832 = vcmp.gt.f32.partialorder %v768, 0.0
    %vm833 = vcmp.gt.f32.partialorder %v769, 0.0
    %vm834 = vcmp.gt.f32.partialorder %v770, 0.0
    %vm835 = vcmp.gt.f32.partialorder %v771, 0.0
    %vm836 = vcmp.gt.f32.partialorder %v772, 0.0
    %vm837 = vcmp.gt.f32.partialorder %v773, 0.0
    %vm838 = vcmp.gt.f32.partialorder %v774, 0.0
    %vm839 = vcmp.gt.f32.partialorder %v775, 0.0
    %vm840 = vcmp.gt.f32.partialorder %v776, 0.0
    %vm841 = vcmp.gt.f32.partialorder %v777, 0.0
    %vm842 = vcmp.gt.f32.partialorder %v778, 0.0
    %vm843 = vcmp.gt.f32.partialorder %v779, 0.0
    %vm844 = vcmp.gt.f32.partialorder %v780, 0.0
    %vm845 = vcmp.gt.f32.partialorder %v781, 0.0
    %vm846 = vcmp.gt.f32.partialorder %v782, 0.0
    %vm847 = vcmp.gt.f32.partialorder %v783, 0.0
    %vm848 = vcmp.gt.f32.partialorder %v784, 0.0
    %vm849 = vcmp.gt.f32.partialorder %v785, 0.0
    %vm850 = vcmp.gt.f32.partialorder %v786, 0.0
    %vm851 = vcmp.gt.f32.partialorder %v787, 0.0
    %vm852 = vcmp.gt.f32.partialorder %v788, 0.0
    %vm853 = vcmp.gt.f32.partialorder %v789, 0.0
    %vm854 = vcmp.gt.f32.partialorder %v790, 0.0
    %vm855 = vcmp.gt.f32.partialorder %v791, 0.0
    %vm856 = vcmp.gt.f32.partialorder %v792, 0.0
    %vm857 = vcmp.gt.f32.partialorder %v793, 0.0
    %vm858 = vcmp.gt.f32.partialorder %v794, 0.0
    %vm859 = vcmp.gt.f32.partialorder %v795, 0.0
    %vm860 = vcmp.gt.f32.partialorder %v796, 0.0
    %vm861 = vcmp.gt.f32.partialorder %v797, 0.0
    %vm862 = vcmp.gt.f32.partialorder %v798, 0.0
    %vm863 = vcmp.gt.f32.partialorder %v799, 0.0
    %vm864 = vcmp.gt.f32.partialorder %v800, 0.0
    %vm865 = vcmp.gt.f32.partialorder %v801, 0.0
    %vm866 = vcmp.gt.f32.partialorder %v802, 0.0
    %vm867 = vcmp.gt.f32.partialorder %v803, 0.0
    %vm868 = vcmp.gt.f32.partialorder %v804, 0.0
    %v869 = vmul.f32 %v741, 0.2
    %v870 = vmul.f32 %v742, 0.2
    %v871 = vmul.f32 %v743, 0.2
    %v872 = vmul.f32 %v744, 0.2
    %v873 = vmul.f32 %v745, 0.2
    %v874 = vmul.f32 %v746, 0.2
    %v875 = vmul.f32 %v747, 0.2
    %v876 = vmul.f32 %v748, 0.2
    %v877 = vmul.f32 %v749, 0.2
    %v878 = vmul.f32 %v750, 0.2
    %v879 = vmul.f32 %v751, 0.2
    %v880 = vmul.f32 %v752, 0.2
    %v881 = vmul.f32 %v753, 0.2
    %v882 = vmul.f32 %v754, 0.2
    %v883 = vmul.f32 %v755, 0.2
    %v884 = vmul.f32 %v756, 0.2
    %v885 = vmul.f32 %v757, 0.2
    %v886 = vmul.f32 %v758, 0.2
    %v887 = vmul.f32 %v759, 0.2
    %v888 = vmul.f32 %v760, 0.2
    %v889 = vmul.f32 %v761, 0.2
    %v890 = vmul.f32 %v762, 0.2
    %v891 = vmul.f32 %v763, 0.2
    %v892 = vmul.f32 %v764, 0.2
    %v893 = vmul.f32 %v765, 0.2
    %v894 = vmul.f32 %v766, 0.2
    %v895 = vmul.f32 %v767, 0.2
    %v896 = vmul.f32 %v768, 0.2
    %v897 = vmul.f32 %v769, 0.2
    %v898 = vmul.f32 %v770, 0.2
    %v899 = vmul.f32 %v771, 0.2
    %v900 = vmul.f32 %v772, 0.2
    %v901 = vmul.f32 %v773, 0.2
    %v902 = vmul.f32 %v774, 0.2
    %v903 = vmul.f32 %v775, 0.2
    %v904 = vmul.f32 %v776, 0.2
    %v905 = vmul.f32 %v777, 0.2
    %v906 = vmul.f32 %v778, 0.2
    %v907 = vmul.f32 %v779, 0.2
    %v908 = vmul.f32 %v780, 0.2
    %v909 = vmul.f32 %v781, 0.2
    %v910 = vmul.f32 %v782, 0.2
    %v911 = vmul.f32 %v783, 0.2
    %v912 = vmul.f32 %v784, 0.2
    %v913 = vmul.f32 %v785, 0.2
    %v914 = vmul.f32 %v786, 0.2
    %v915 = vmul.f32 %v787, 0.2
    %v916 = vmul.f32 %v788, 0.2
    %v917 = vmul.f32 %v789, 0.2
    %v918 = vmul.f32 %v790, 0.2
    %v919 = vmul.f32 %v791, 0.2
    %v920 = vmul.f32 %v792, 0.2
    %v921 = vmul.f32 %v793, 0.2
    %v922 = vmul.f32 %v794, 0.2
    %v923 = vmul.f32 %v795, 0.2
    %v924 = vmul.f32 %v796, 0.2
    %v925 = vmul.f32 %v797, 0.2
    %v926 = vmul.f32 %v798, 0.2
    %v927 = vmul.f32 %v799, 0.2
    %v928 = vmul.f32 %v800, 0.2
    %v929 = vmul.f32 %v801, 0.2
    %v930 = vmul.f32 %v802, 0.2
    %v931 = vmul.f32 %v803, 0.2
    %v932 = vmul.f32 %v804, 0.2
    %v933 = vsel %vm805, %v741, %v869
    %v934 = vsel %vm806, %v742, %v870
    %v935 = vsel %vm807, %v743, %v871
    %v936 = vsel %vm808, %v744, %v872
    %v937 = vsel %vm809, %v745, %v873
    %v938 = vsel %vm810, %v746, %v874
    %v939 = vsel %vm811, %v747, %v875
    %v940 = vsel %vm812, %v748, %v876
    %v941 = vsel %vm813, %v749, %v877
    %v942 = vsel %vm814, %v750, %v878
    %v943 = vsel %vm815, %v751, %v879
    %v944 = vsel %vm816, %v752, %v880
    %v945 = vsel %vm817, %v753, %v881
    %v946 = vsel %vm818, %v754, %v882
    %v947 = vsel %vm819, %v755, %v883
    %v948 = vsel %vm820, %v756, %v884
    %v949 = vsel %vm821, %v757, %v885
    %v950 = vsel %vm822, %v758, %v886
    %v951 = vsel %vm823, %v759, %v887
    %v952 = vsel %vm824, %v760, %v888
    %v953 = vsel %vm825, %v761, %v889
    %v954 = vsel %vm826, %v762, %v890
    %v955 = vsel %vm827, %v763, %v891
    %v956 = vsel %vm828, %v764, %v892
    %v957 = vsel %vm829, %v765, %v893
    %v958 = vsel %vm830, %v766, %v894
    %v959 = vsel %vm831, %v767, %v895
    %v960 = vsel %vm832, %v768, %v896
    %v961 = vsel %vm833, %v769, %v897
    %v962 = vsel %vm834, %v770, %v898
    %v963 = vsel %vm835, %v771, %v899
    %v964 = vsel %vm836, %v772, %v900
    %v965 = vsel %vm837, %v773, %v901
    %v966 = vsel %vm838, %v774, %v902
    %v967 = vsel %vm839, %v775, %v903
    %v968 = vsel %vm840, %v776, %v904
    %v969 = vsel %vm841, %v777, %v905
    %v970 = vsel %vm842, %v778, %v906
    %v971 = vsel %vm843, %v779, %v907
    %v972 = vsel %vm844, %v780, %v908
    %v973 = vsel %vm845, %v781, %v909
    %v974 = vsel %vm846, %v782, %v910
    %v975 = vsel %vm847, %v783, %v911
    %v976 = vsel %vm848, %v784, %v912
    %v977 = vsel %vm849, %v785, %v913
    %v978 = vsel %vm850, %v786, %v914
    %v979 = vsel %vm851, %v787, %v915
    %v980 = vsel %vm852, %v788, %v916
    %v981 = vsel %vm853, %v789, %v917
    %v982 = vsel %vm854, %v790, %v918
    %v983 = vsel %vm855, %v791, %v919
    %v984 = vsel %vm856, %v792, %v920
    %v985 = vsel %vm857, %v793, %v921
    %v986 = vsel %vm858, %v794, %v922
    %v987 = vsel %vm859, %v795, %v923
    %v988 = vsel %vm860, %v796, %v924
    %v989 = vsel %vm861, %v797, %v925
    %v990 = vsel %vm862, %v798, %v926
    %v991 = vsel %vm863, %v799, %v927
    %v992 = vsel %vm864, %v800, %v928
    %v993 = vsel %vm865, %v801, %v929
    %v994 = vsel %vm866, %v802, %v930
    %v995 = vsel %vm867, %v803, %v931
    %v996 = vsel %vm868, %v804, %v932
    %997 = vst [vmem:[#allocation2] sm:$0xff] 0.0
    %998 = vst [vmem:[#allocation2 + $0x8] sm:$0xff] 0.0
    %999 = vst [vmem:[#allocation2 + $0x10] sm:$0xff] 0.0
    %1000 = vst [vmem:[#allocation2 + $0x18] sm:$0xff] 0.0
    %1001 = vst [vmem:[#allocation2 + $0x240] sm:$0xff] 0.0
    %1002 = vst [vmem:[#allocation2 + $0x248] sm:$0xff] 0.0
    %1003 = vst [vmem:[#allocation2 + $0x250] sm:$0xff] 0.0
    %1004 = vst [vmem:[#allocation2 + $0x258] sm:$0xff] 0.0
    %s1005 = scalar_lea.vmem [#allocation2], 544
    %1006 = vst [vmem:[%s1005] sm:$0xff] 0.0
    %1007 = vst [vmem:[%s1005 + $0x8] sm:$0xff] 0.0
    %1008 = vst [vmem:[%s1005 + $0x10] sm:$0xff] 0.0
    %1009 = vst [vmem:[%s1005 + $0x18] sm:$0xff] 0.0
    %1010 = vst [vmem:[%s1005 + $0x240] sm:$0xff] 0.0
    %1011 = vst [vmem:[%s1005 + $0x248] sm:$0xff] 0.0
    %1012 = vst [vmem:[%s1005 + $0x250] sm:$0xff] 0.0
    %1013 = vst [vmem:[%s1005 + $0x258] sm:$0xff] 0.0
    %s1014 = scalar_lea.vmem [#allocation2], 32
    %1015 = vst [vmem:[%s1014 + $0x7] sm:$0x1] 0.0
    %1016 = vst [vmem:[%s1014 + $0x27] sm:$0x1] 0.0
    %1017 = vst [vmem:[%s1014 + $0x47] sm:$0x1] 0.0
    %1018 = vst [vmem:[%s1014 + $0x67] sm:$0x1] 0.0
    %1019 = vst [vmem:[%s1014 + $0x87] sm:$0x1] 0.0
    %1020 = vst [vmem:[%s1014 + $0xa7] sm:$0x1] 0.0
    %1021 = vst [vmem:[%s1014 + $0xc7] sm:$0x1] 0.0
    %1022 = vst [vmem:[%s1014 + $0xe7] sm:$0x1] 0.0
    %1023 = vst [vmem:[%s1014 + $0x107] sm:$0x1] 0.0
    %1024 = vst [vmem:[%s1014 + $0x127] sm:$0x1] 0.0
    %1025 = vst [vmem:[%s1014 + $0x147] sm:$0x1] 0.0
    %1026 = vst [vmem:[%s1014 + $0x167] sm:$0x1] 0.0
    %1027 = vst [vmem:[%s1014 + $0x187] sm:$0x1] 0.0
    %1028 = vst [vmem:[%s1014 + $0x1a7] sm:$0x1] 0.0
    %1029 = vst [vmem:[%s1014 + $0x1c7] sm:$0x1] 0.0
    %1030 = vst [vmem:[%s1014 + $0x1e7] sm:$0x1] 0.0
    %1031 = vst [vmem:[%s1014 + $0x247] sm:$0x1] 0.0
    %1032 = vst [vmem:[%s1014 + $0x267] sm:$0x1] 0.0
    %1033 = vst [vmem:[%s1014 + $0x287] sm:$0x1] 0.0
    %1034 = vst [vmem:[%s1014 + $0x2a7] sm:$0x1] 0.0
    %1035 = vst [vmem:[%s1014 + $0x2c7] sm:$0x1] 0.0
    %1036 = vst [vmem:[%s1014 + $0x2e7] sm:$0x1] 0.0
    %1037 = vst [vmem:[%s1014 + $0x307] sm:$0x1] 0.0
    %1038 = vst [vmem:[%s1014 + $0x327] sm:$0x1] 0.0
    %1039 = vst [vmem:[%s1014 + $0x347] sm:$0x1] 0.0
    %1040 = vst [vmem:[%s1014 + $0x367] sm:$0x1] 0.0
    %1041 = vst [vmem:[%s1014 + $0x387] sm:$0x1] 0.0
    %1042 = vst [vmem:[%s1014 + $0x3a7] sm:$0x1] 0.0
    %1043 = vst [vmem:[%s1014 + $0x3c7] sm:$0x1] 0.0
    %1044 = vst [vmem:[%s1014 + $0x3e7] sm:$0x1] 0.0
    %1045 = vst [vmem:[%s1014 + $0x407] sm:$0x1] 0.0
    %1046 = vst [vmem:[%s1014 + $0x427] sm:$0x1] 0.0
    %1047 = vst [vmem:[%s1014 + $0x18] sm:$0x1] 0.0
    %1048 = vst [vmem:[%s1014 + $0x38] sm:$0x1] 0.0
    %1049 = vst [vmem:[%s1014 + $0x58] sm:$0x1] 0.0
    %1050 = vst [vmem:[%s1014 + $0x78] sm:$0x1] 0.0
    %1051 = vst [vmem:[%s1014 + $0x98] sm:$0x1] 0.0
    %1052 = vst [vmem:[%s1014 + $0xb8] sm:$0x1] 0.0
    %1053 = vst [vmem:[%s1014 + $0xd8] sm:$0x1] 0.0
    %1054 = vst [vmem:[%s1014 + $0xf8] sm:$0x1] 0.0
    %1055 = vst [vmem:[%s1014 + $0x118] sm:$0x1] 0.0
    %1056 = vst [vmem:[%s1014 + $0x138] sm:$0x1] 0.0
    %1057 = vst [vmem:[%s1014 + $0x158] sm:$0x1] 0.0
    %1058 = vst [vmem:[%s1014 + $0x178] sm:$0x1] 0.0
    %1059 = vst [vmem:[%s1014 + $0x198] sm:$0x1] 0.0
    %1060 = vst [vmem:[%s1014 + $0x1b8] sm:$0x1] 0.0
    %1061 = vst [vmem:[%s1014 + $0x1d8] sm:$0x1] 0.0
    %1062 = vst [vmem:[%s1014 + $0x1f8] sm:$0x1] 0.0
    %1063 = vst [vmem:[%s1014 + $0x258] sm:$0x1] 0.0
    %1064 = vst [vmem:[%s1014 + $0x278] sm:$0x1] 0.0
    %1065 = vst [vmem:[%s1014 + $0x298] sm:$0x1] 0.0
    %1066 = vst [vmem:[%s1014 + $0x2b8] sm:$0x1] 0.0
    %1067 = vst [vmem:[%s1014 + $0x2d8] sm:$0x1] 0.0
    %1068 = vst [vmem:[%s1014 + $0x2f8] sm:$0x1] 0.0
    %1069 = vst [vmem:[%s1014 + $0x318] sm:$0x1] 0.0
    %1070 = vst [vmem:[%s1014 + $0x338] sm:$0x1] 0.0
    %1071 = vst [vmem:[%s1014 + $0x358] sm:$0x1] 0.0
    %1072 = vst [vmem:[%s1014 + $0x378] sm:$0x1] 0.0
    %1073 = vst [vmem:[%s1014 + $0x398] sm:$0x1] 0.0
    %1074 = vst [vmem:[%s1014 + $0x3b8] sm:$0x1] 0.0
    %1075 = vst [vmem:[%s1014 + $0x3d8] sm:$0x1] 0.0
    %1076 = vst [vmem:[%s1014 + $0x3f8] sm:$0x1] 0.0
    %1077 = vst [vmem:[%s1014 + $0x418] sm:$0x1] 0.0
    %1078 = vst [vmem:[%s1014 + $0x438] sm:$0x1] 0.0
    %1079 = vst [vmem:[%s1014 + $0x8] sm:$0xff] %v933
    %1080 = vst [vmem:[%s1014 + $0x10] sm:$0xff] %v934
    %1081 = vst [vmem:[%s1014 + $0x28] sm:$0xff] %v935
    %1082 = vst [vmem:[%s1014 + $0x30] sm:$0xff] %v936
    %1083 = vst [vmem:[%s1014 + $0x48] sm:$0xff] %v937
    %1084 = vst [vmem:[%s1014 + $0x50] sm:$0xff] %v938
    %1085 = vst [vmem:[%s1014 + $0x68] sm:$0xff] %v939
    %1086 = vst [vmem:[%s1014 + $0x70] sm:$0xff] %v940
    %1087 = vst [vmem:[%s1014 + $0x88] sm:$0xff] %v941
    %1088 = vst [vmem:[%s1014 + $0x90] sm:$0xff] %v942
    %1089 = vst [vmem:[%s1014 + $0xa8] sm:$0xff] %v943
    %1090 = vst [vmem:[%s1014 + $0xb0] sm:$0xff] %v944
    %1091 = vst [vmem:[%s1014 + $0xc8] sm:$0xff] %v945
    %1092 = vst [vmem:[%s1014 + $0xd0] sm:$0xff] %v946
    %1093 = vst [vmem:[%s1014 + $0xe8] sm:$0xff] %v947
    %1094 = vst [vmem:[%s1014 + $0xf0] sm:$0xff] %v948
    %1095 = vst [vmem:[%s1014 + $0x108] sm:$0xff] %v949
    %1096 = vst [vmem:[%s1014 + $0x110] sm:$0xff] %v950
    %1097 = vst [vmem:[%s1014 + $0x128] sm:$0xff] %v951
    %1098 = vst [vmem:[%s1014 + $0x130] sm:$0xff] %v952
    %1099 = vst [vmem:[%s1014 + $0x148] sm:$0xff] %v953
    %1100 = vst [vmem:[%s1014 + $0x150] sm:$0xff] %v954
    %1101 = vst [vmem:[%s1014 + $0x168] sm:$0xff] %v955
    %1102 = vst [vmem:[%s1014 + $0x170] sm:$0xff] %v956
    %1103 = vst [vmem:[%s1014 + $0x188] sm:$0xff] %v957
    %1104 = vst [vmem:[%s1014 + $0x190] sm:$0xff] %v958
    %1105 = vst [vmem:[%s1014 + $0x1a8] sm:$0xff] %v959
    %1106 = vst [vmem:[%s1014 + $0x1b0] sm:$0xff] %v960
    %1107 = vst [vmem:[%s1014 + $0x1c8] sm:$0xff] %v961
    %1108 = vst [vmem:[%s1014 + $0x1d0] sm:$0xff] %v962
    %1109 = vst [vmem:[%s1014 + $0x1e8] sm:$0xff] %v963
    %1110 = vst [vmem:[%s1014 + $0x1f0] sm:$0xff] %v964
    %1111 = vst [vmem:[%s1014 + $0x248] sm:$0xff] %v965
    %1112 = vst [vmem:[%s1014 + $0x250] sm:$0xff] %v966
    %1113 = vst [vmem:[%s1014 + $0x268] sm:$0xff] %v967
    %1114 = vst [vmem:[%s1014 + $0x270] sm:$0xff] %v968
    %1115 = vst [vmem:[%s1014 + $0x288] sm:$0xff] %v969
    %1116 = vst [vmem:[%s1014 + $0x290] sm:$0xff] %v970
    %1117 = vst [vmem:[%s1014 + $0x2a8] sm:$0xff] %v971
    %1118 = vst [vmem:[%s1014 + $0x2b0] sm:$0xff] %v972
    %1119 = vst [vmem:[%s1014 + $0x2c8] sm:$0xff] %v973
    %1120 = vst [vmem:[%s1014 + $0x2d0] sm:$0xff] %v974
    %1121 = vst [vmem:[%s1014 + $0x2e8] sm:$0xff] %v975
    %1122 = vst [vmem:[%s1014 + $0x2f0] sm:$0xff] %v976
    %1123 = vst [vmem:[%s1014 + $0x308] sm:$0xff] %v977
    %1124 = vst [vmem:[%s1014 + $0x310] sm:$0xff] %v978
    %1125 = vst [vmem:[%s1014 + $0x328] sm:$0xff] %v979
    %1126 = vst [vmem:[%s1014 + $0x330] sm:$0xff] %v980
    %1127 = vst [vmem:[%s1014 + $0x348] sm:$0xff] %v981
    %1128 = vst [vmem:[%s1014 + $0x350] sm:$0xff] %v982
    %1129 = vst [vmem:[%s1014 + $0x368] sm:$0xff] %v983
    %1130 = vst [vmem:[%s1014 + $0x370] sm:$0xff] %v984
    %1131 = vst [vmem:[%s1014 + $0x388] sm:$0xff] %v985
    %1132 = vst [vmem:[%s1014 + $0x390] sm:$0xff] %v986
    %1133 = vst [vmem:[%s1014 + $0x3a8] sm:$0xff] %v987
    %1134 = vst [vmem:[%s1014 + $0x3b0] sm:$0xff] %v988
    %1135 = vst [vmem:[%s1014 + $0x3c8] sm:$0xff] %v989
    %1136 = vst [vmem:[%s1014 + $0x3d0] sm:$0xff] %v990
    %1137 = vst [vmem:[%s1014 + $0x3e8] sm:$0xff] %v991
    %1138 = vst [vmem:[%s1014 + $0x3f0] sm:$0xff] %v992
    %1139 = vst [vmem:[%s1014 + $0x408] sm:$0xff] %v993
    %1140 = vst [vmem:[%s1014 + $0x410] sm:$0xff] %v994
    %1141 = vst [vmem:[%s1014 + $0x428] sm:$0xff] %v995
    %1142 = vst [vmem:[%s1014 + $0x430] sm:$0xff] %v996
    %v1143 = vld [vmem:[#allocation2 + $0x7] sm:$0xff]
    %v1144 = vld [vmem:[#allocation2 + $0xf] sm:$0xff]
    %v1145 = vld [vmem:[#allocation2 + $0x27] sm:$0xff]
    %v1146 = vld [vmem:[#allocation2 + $0x2f] sm:$0xff]
    %v1147 = vld [vmem:[#allocation2 + $0x47] sm:$0xff]
    %v1148 = vld [vmem:[#allocation2 + $0x4f] sm:$0xff]
    %v1149 = vld [vmem:[#allocation2 + $0x67] sm:$0xff]
    %v1150 = vld [vmem:[#allocation2 + $0x6f] sm:$0xff]
    %v1151 = vld [vmem:[#allocation2 + $0x87] sm:$0xff]
    %v1152 = vld [vmem:[#allocation2 + $0x8f] sm:$0xff]
    %v1153 = vld [vmem:[#allocation2 + $0xa7] sm:$0xff]
    %v1154 = vld [vmem:[#allocation2 + $0xaf] sm:$0xff]
    %v1155 = vld [vmem:[#allocation2 + $0xc7] sm:$0xff]
    %v1156 = vld [vmem:[#allocation2 + $0xcf] sm:$0xff]
    %v1157 = vld [vmem:[#allocation2 + $0xe7] sm:$0xff]
    %v1158 = vld [vmem:[#allocation2 + $0xef] sm:$0xff]
    %v1159 = vld [vmem:[#allocation2 + $0x107] sm:$0xff]
    %v1160 = vld [vmem:[#allocation2 + $0x10f] sm:$0xff]
    %v1161 = vld [vmem:[#allocation2 + $0x127] sm:$0xff]
    %v1162 = vld [vmem:[#allocation2 + $0x12f] sm:$0xff]
    %v1163 = vld [vmem:[#allocation2 + $0x147] sm:$0xff]
    %v1164 = vld [vmem:[#allocation2 + $0x14f] sm:$0xff]
    %v1165 = vld [vmem:[#allocation2 + $0x167] sm:$0xff]
    %v1166 = vld [vmem:[#allocation2 + $0x16f] sm:$0xff]
    %v1167 = vld [vmem:[#allocation2 + $0x187] sm:$0xff]
    %v1168 = vld [vmem:[#allocation2 + $0x18f] sm:$0xff]
    %v1169 = vld [vmem:[#allocation2 + $0x1a7] sm:$0xff]
    %v1170 = vld [vmem:[#allocation2 + $0x1af] sm:$0xff]
    %v1171 = vld [vmem:[#allocation2 + $0x1c7] sm:$0xff]
    %v1172 = vld [vmem:[#allocation2 + $0x1cf] sm:$0xff]
    %v1173 = vld [vmem:[#allocation2 + $0x1e7] sm:$0xff]
    %v1174 = vld [vmem:[#allocation2 + $0x1ef] sm:$0xff]
    %v1175 = vld [vmem:[#allocation2 + $0x247] sm:$0xff]
    %v1176 = vld [vmem:[#allocation2 + $0x24f] sm:$0xff]
    %v1177 = vld [vmem:[#allocation2 + $0x267] sm:$0xff]
    %v1178 = vld [vmem:[#allocation2 + $0x26f] sm:$0xff]
    %v1179 = vld [vmem:[#allocation2 + $0x287] sm:$0xff]
    %v1180 = vld [vmem:[#allocation2 + $0x28f] sm:$0xff]
    %v1181 = vld [vmem:[#allocation2 + $0x2a7] sm:$0xff]
    %v1182 = vld [vmem:[#allocation2 + $0x2af] sm:$0xff]
    %v1183 = vld [vmem:[#allocation2 + $0x2c7] sm:$0xff]
    %v1184 = vld [vmem:[#allocation2 + $0x2cf] sm:$0xff]
    %v1185 = vld [vmem:[#allocation2 + $0x2e7] sm:$0xff]
    %v1186 = vld [vmem:[#allocation2 + $0x2ef] sm:$0xff]
    %v1187 = vld [vmem:[#allocation2 + $0x307] sm:$0xff]
    %v1188 = vld [vmem:[#allocation2 + $0x30f] sm:$0xff]
    %v1189 = vld [vmem:[#allocation2 + $0x327] sm:$0xff]
    %v1190 = vld [vmem:[#allocation2 + $0x32f] sm:$0xff]
    %v1191 = vld [vmem:[#allocation2 + $0x347] sm:$0xff]
    %v1192 = vld [vmem:[#allocation2 + $0x34f] sm:$0xff]
    %v1193 = vld [vmem:[#allocation2 + $0x367] sm:$0xff]
    %v1194 = vld [vmem:[#allocation2 + $0x36f] sm:$0xff]
    %v1195 = vld [vmem:[#allocation2 + $0x387] sm:$0xff]
    %v1196 = vld [vmem:[#allocation2 + $0x38f] sm:$0xff]
    %v1197 = vld [vmem:[#allocation2 + $0x3a7] sm:$0xff]
    %v1198 = vld [vmem:[#allocation2 + $0x3af] sm:$0xff]
    %v1199 = vld [vmem:[#allocation2 + $0x3c7] sm:$0xff]
    %v1200 = vld [vmem:[#allocation2 + $0x3cf] sm:$0xff]
    %v1201 = vld [vmem:[#allocation2 + $0x3e7] sm:$0xff]
    %v1202 = vld [vmem:[#allocation2 + $0x3ef] sm:$0xff]
    %v1203 = vld [vmem:[#allocation2 + $0x407] sm:$0xff]
    %v1204 = vld [vmem:[#allocation2 + $0x40f] sm:$0xff]
    %v1205 = vld [vmem:[#allocation2 + $0x427] sm:$0xff]
    %v1206 = vld [vmem:[#allocation2 + $0x42f] sm:$0xff]
    %1207 = vst [vmem:[#allocation3] sm:$0xff] %v1143
    %1208 = vst [vmem:[#allocation3 + $0x48] sm:$0xff] %v1144
    %1209 = vst [vmem:[#allocation3 + $0x90] sm:$0xff] %v1145
    %1210 = vst [vmem:[#allocation3 + $0xd8] sm:$0xff] %v1146
    %1211 = vst [vmem:[#allocation3 + $0x120] sm:$0xff] %v1147
    %1212 = vst [vmem:[#allocation3 + $0x168] sm:$0xff] %v1148
    %1213 = vst [vmem:[#allocation3 + $0x1b0] sm:$0xff] %v1149
    %1214 = vst [vmem:[#allocation3 + $0x1f8] sm:$0xff] %v1150
    %1215 = vst [vmem:[#allocation3 + $0x240] sm:$0xff] %v1151
    %1216 = vst [vmem:[#allocation3 + $0x288] sm:$0xff] %v1152
    %1217 = vst [vmem:[#allocation3 + $0x2d0] sm:$0xff] %v1153
    %1218 = vst [vmem:[#allocation3 + $0x318] sm:$0xff] %v1154
    %1219 = vst [vmem:[#allocation3 + $0x360] sm:$0xff] %v1155
    %1220 = vst [vmem:[#allocation3 + $0x3a8] sm:$0xff] %v1156
    %1221 = vst [vmem:[#allocation3 + $0x3f0] sm:$0xff] %v1157
    %1222 = vst [vmem:[#allocation3 + $0x438] sm:$0xff] %v1158
    %1223 = vst [vmem:[#allocation3 + $0x480] sm:$0xff] %v1159
    %1224 = vst [vmem:[#allocation3 + $0x4c8] sm:$0xff] %v1160
    %1225 = vst [vmem:[#allocation3 + $0x510] sm:$0xff] %v1161
    %1226 = vst [vmem:[#allocation3 + $0x558] sm:$0xff] %v1162
    %1227 = vst [vmem:[#allocation3 + $0x5a0] sm:$0xff] %v1163
    %1228 = vst [vmem:[#allocation3 + $0x5e8] sm:$0xff] %v1164
    %1229 = vst [vmem:[#allocation3 + $0x630] sm:$0xff] %v1165
    %1230 = vst [vmem:[#allocation3 + $0x678] sm:$0xff] %v1166
    %1231 = vst [vmem:[#allocation3 + $0x6c0] sm:$0xff] %v1167
    %1232 = vst [vmem:[#allocation3 + $0x708] sm:$0xff] %v1168
    %1233 = vst [vmem:[#allocation3 + $0x750] sm:$0xff] %v1169
    %1234 = vst [vmem:[#allocation3 + $0x798] sm:$0xff] %v1170
    %1235 = vst [vmem:[#allocation3 + $0x7e0] sm:$0xff] %v1171
    %1236 = vst [vmem:[#allocation3 + $0x828] sm:$0xff] %v1172
    %1237 = vst [vmem:[#allocation3 + $0x870] sm:$0xff] %v1173
    %1238 = vst [vmem:[#allocation3 + $0x8b8] sm:$0xff] %v1174
    %1239 = vst [vmem:[#allocation3 + $0x900] sm:$0xff] %v1175
    %1240 = vst [vmem:[#allocation3 + $0x948] sm:$0xff] %v1176
    %1241 = vst [vmem:[#allocation3 + $0x990] sm:$0xff] %v1177
    %1242 = vst [vmem:[#allocation3 + $0x9d8] sm:$0xff] %v1178
    %1243 = vst [vmem:[#allocation3 + $0xa20] sm:$0xff] %v1179
    %1244 = vst [vmem:[#allocation3 + $0xa68] sm:$0xff] %v1180
    %1245 = vst [vmem:[#allocation3 + $0xab0] sm:$0xff] %v1181
    %1246 = vst [vmem:[#allocation3 + $0xaf8] sm:$0xff] %v1182
    %1247 = vst [vmem:[#allocation3 + $0xb40] sm:$0xff] %v1183
    %1248 = vst [vmem:[#allocation3 + $0xb88] sm:$0xff] %v1184
    %1249 = vst [vmem:[#allocation3 + $0xbd0] sm:$0xff] %v1185
    %1250 = vst [vmem:[#allocation3 + $0xc18] sm:$0xff] %v1186
    %1251 = vst [vmem:[#allocation3 + $0xc60] sm:$0xff] %v1187
    %1252 = vst [vmem:[#allocation3 + $0xca8] sm:$0xff] %v1188
    %1253 = vst [vmem:[#allocation3 + $0xcf0] sm:$0xff] %v1189
    %1254 = vst [vmem:[#allocation3 + $0xd38] sm:$0xff] %v1190
    %1255 = vst [vmem:[#allocation3 + $0xd80] sm:$0xff] %v1191
    %1256 = vst [vmem:[#allocation3 + $0xdc8] sm:$0xff] %v1192
    %1257 = vst [vmem:[#allocation3 + $0xe10] sm:$0xff] %v1193
    %1258 = vst [vmem:[#allocation3 + $0xe58] sm:$0xff] %v1194
    %1259 = vst [vmem:[#allocation3 + $0xea0] sm:$0xff] %v1195
    %1260 = vst [vmem:[#allocation3 + $0xee8] sm:$0xff] %v1196
    %1261 = vst [vmem:[#allocation3 + $0xf30] sm:$0xff] %v1197
    %1262 = vst [vmem:[#allocation3 + $0xf78] sm:$0xff] %v1198
    %1263 = vst [vmem:[#allocation3 + $0xfc0] sm:$0xff] %v1199
    %1264 = vst [vmem:[#allocation3 + $0x1008] sm:$0xff] %v1200
    %1265 = vst [vmem:[#allocation3 + $0x1050] sm:$0xff] %v1201
    %1266 = vst [vmem:[#allocation3 + $0x1098] sm:$0xff] %v1202
    %1267 = vst [vmem:[#allocation3 + $0x10e0] sm:$0xff] %v1203
    %1268 = vst [vmem:[#allocation3 + $0x1128] sm:$0xff] %v1204
    %1269 = vst [vmem:[#allocation3 + $0x1170] sm:$0xff] %v1205
    %1270 = vst [vmem:[#allocation3 + $0x11b8] sm:$0xff] %v1206
    %v1271 = vld [vmem:[#allocation2 + $0x8] sm:$0xff]
    %v1272 = vld [vmem:[#allocation2 + $0x10] sm:$0xff]
    %v1273 = vld [vmem:[#allocation2 + $0x28] sm:$0xff]
    %v1274 = vld [vmem:[#allocation2 + $0x30] sm:$0xff]
    %v1275 = vld [vmem:[#allocation2 + $0x48] sm:$0xff]
    %v1276 = vld [vmem:[#allocation2 + $0x50] sm:$0xff]
    %v1277 = vld [vmem:[#allocation2 + $0x68] sm:$0xff]
    %v1278 = vld [vmem:[#allocation2 + $0x70] sm:$0xff]
    %v1279 = vld [vmem:[#allocation2 + $0x88] sm:$0xff]
    %v1280 = vld [vmem:[#allocation2 + $0x90] sm:$0xff]
    %v1281 = vld [vmem:[#allocation2 + $0xa8] sm:$0xff]
    %v1282 = vld [vmem:[#allocation2 + $0xb0] sm:$0xff]
    %v1283 = vld [vmem:[#allocation2 + $0xc8] sm:$0xff]
    %v1284 = vld [vmem:[#allocation2 + $0xd0] sm:$0xff]
    %v1285 = vld [vmem:[#allocation2 + $0xe8] sm:$0xff]
    %v1286 = vld [vmem:[#allocation2 + $0xf0] sm:$0xff]
    %v1287 = vld [vmem:[#allocation2 + $0x108] sm:$0xff]
    %v1288 = vld [vmem:[#allocation2 + $0x110] sm:$0xff]
    %v1289 = vld [vmem:[#allocation2 + $0x128] sm:$0xff]
    %v1290 = vld [vmem:[#allocation2 + $0x130] sm:$0xff]
    %v1291 = vld [vmem:[#allocation2 + $0x148] sm:$0xff]
    %v1292 = vld [vmem:[#allocation2 + $0x150] sm:$0xff]
    %v1293 = vld [vmem:[#allocation2 + $0x168] sm:$0xff]
    %v1294 = vld [vmem:[#allocation2 + $0x170] sm:$0xff]
    %v1295 = vld [vmem:[#allocation2 + $0x188] sm:$0xff]
    %v1296 = vld [vmem:[#allocation2 + $0x190] sm:$0xff]
    %v1297 = vld [vmem:[#allocation2 + $0x1a8] sm:$0xff]
    %v1298 = vld [vmem:[#allocation2 + $0x1b0] sm:$0xff]
    %v1299 = vld [vmem:[#allocation2 + $0x1c8] sm:$0xff]
    %v1300 = vld [vmem:[#allocation2 + $0x1d0] sm:$0xff]
    %v1301 = vld [vmem:[#allocation2 + $0x1e8] sm:$0xff]
    %v1302 = vld [vmem:[#allocation2 + $0x1f0] sm:$0xff]
    %v1303 = vld [vmem:[#allocation2 + $0x248] sm:$0xff]
    %v1304 = vld [vmem:[#allocation2 + $0x250] sm:$0xff]
    %v1305 = vld [vmem:[#allocation2 + $0x268] sm:$0xff]
    %v1306 = vld [vmem:[#allocation2 + $0x270] sm:$0xff]
    %v1307 = vld [vmem:[#allocation2 + $0x288] sm:$0xff]
    %v1308 = vld [vmem:[#allocation2 + $0x290] sm:$0xff]
    %v1309 = vld [vmem:[#allocation2 + $0x2a8] sm:$0xff]
    %v1310 = vld [vmem:[#allocation2 + $0x2b0] sm:$0xff]
    %v1311 = vld [vmem:[#allocation2 + $0x2c8] sm:$0xff]
    %v1312 = vld [vmem:[#allocation2 + $0x2d0] sm:$0xff]
    %v1313 = vld [vmem:[#allocation2 + $0x2e8] sm:$0xff]
    %v1314 = vld [vmem:[#allocation2 + $0x2f0] sm:$0xff]
    %v1315 = vld [vmem:[#allocation2 + $0x308] sm:$0xff]
    %v1316 = vld [vmem:[#allocation2 + $0x310] sm:$0xff]
    %v1317 = vld [vmem:[#allocation2 + $0x328] sm:$0xff]
    %v1318 = vld [vmem:[#allocation2 + $0x330] sm:$0xff]
    %v1319 = vld [vmem:[#allocation2 + $0x348] sm:$0xff]
    %v1320 = vld [vmem:[#allocation2 + $0x350] sm:$0xff]
    %v1321 = vld [vmem:[#allocation2 + $0x368] sm:$0xff]
    %v1322 = vld [vmem:[#allocation2 + $0x370] sm:$0xff]
    %v1323 = vld [vmem:[#allocation2 + $0x388] sm:$0xff]
    %v1324 = vld [vmem:[#allocation2 + $0x390] sm:$0xff]
    %v1325 = vld [vmem:[#allocation2 + $0x3a8] sm:$0xff]
    %v1326 = vld [vmem:[#allocation2 + $0x3b0] sm:$0xff]
    %v1327 = vld [vmem:[#allocation2 + $0x3c8] sm:$0xff]
    %v1328 = vld [vmem:[#allocation2 + $0x3d0] sm:$0xff]
    %v1329 = vld [vmem:[#allocation2 + $0x3e8] sm:$0xff]
    %v1330 = vld [vmem:[#allocation2 + $0x3f0] sm:$0xff]
    %v1331 = vld [vmem:[#allocation2 + $0x408] sm:$0xff]
    %v1332 = vld [vmem:[#allocation2 + $0x410] sm:$0xff]
    %v1333 = vld [vmem:[#allocation2 + $0x428] sm:$0xff]
    %v1334 = vld [vmem:[#allocation2 + $0x430] sm:$0xff]
    %1335 = vst [vmem:[#allocation3 + $0x8] sm:$0xff] %v1271
    %1336 = vst [vmem:[#allocation3 + $0x50] sm:$0xff] %v1272
    %1337 = vst [vmem:[#allocation3 + $0x98] sm:$0xff] %v1273
    %1338 = vst [vmem:[#allocation3 + $0xe0] sm:$0xff] %v1274
    %1339 = vst [vmem:[#allocation3 + $0x128] sm:$0xff] %v1275
    %1340 = vst [vmem:[#allocation3 + $0x170] sm:$0xff] %v1276
    %1341 = vst [vmem:[#allocation3 + $0x1b8] sm:$0xff] %v1277
    %1342 = vst [vmem:[#allocation3 + $0x200] sm:$0xff] %v1278
    %1343 = vst [vmem:[#allocation3 + $0x248] sm:$0xff] %v1279
    %1344 = vst [vmem:[#allocation3 + $0x290] sm:$0xff] %v1280
    %1345 = vst [vmem:[#allocation3 + $0x2d8] sm:$0xff] %v1281
    %1346 = vst [vmem:[#allocation3 + $0x320] sm:$0xff] %v1282
    %1347 = vst [vmem:[#allocation3 + $0x368] sm:$0xff] %v1283
    %1348 = vst [vmem:[#allocation3 + $0x3b0] sm:$0xff] %v1284
    %1349 = vst [vmem:[#allocation3 + $0x3f8] sm:$0xff] %v1285
    %1350 = vst [vmem:[#allocation3 + $0x440] sm:$0xff] %v1286
    %1351 = vst [vmem:[#allocation3 + $0x488] sm:$0xff] %v1287
    %1352 = vst [vmem:[#allocation3 + $0x4d0] sm:$0xff] %v1288
    %1353 = vst [vmem:[#allocation3 + $0x518] sm:$0xff] %v1289
    %1354 = vst [vmem:[#allocation3 + $0x560] sm:$0xff] %v1290
    %1355 = vst [vmem:[#allocation3 + $0x5a8] sm:$0xff] %v1291
    %1356 = vst [vmem:[#allocation3 + $0x5f0] sm:$0xff] %v1292
    %1357 = vst [vmem:[#allocation3 + $0x638] sm:$0xff] %v1293
    %1358 = vst [vmem:[#allocation3 + $0x680] sm:$0xff] %v1294
    %1359 = vst [vmem:[#allocation3 + $0x6c8] sm:$0xff] %v1295
    %1360 = vst [vmem:[#allocation3 + $0x710] sm:$0xff] %v1296
    %1361 = vst [vmem:[#allocation3 + $0x758] sm:$0xff] %v1297
    %1362 = vst [vmem:[#allocation3 + $0x7a0] sm:$0xff] %v1298
    %1363 = vst [vmem:[#allocation3 + $0x7e8] sm:$0xff] %v1299
    %1364 = vst [vmem:[#allocation3 + $0x830] sm:$0xff] %v1300
    %1365 = vst [vmem:[#allocation3 + $0x878] sm:$0xff] %v1301
    %1366 = vst [vmem:[#allocation3 + $0x8c0] sm:$0xff] %v1302
    %1367 = vst [vmem:[#allocation3 + $0x908] sm:$0xff] %v1303
    %1368 = vst [vmem:[#allocation3 + $0x950] sm:$0xff] %v1304
    %1369 = vst [vmem:[#allocation3 + $0x998] sm:$0xff] %v1305
    %1370 = vst [vmem:[#allocation3 + $0x9e0] sm:$0xff] %v1306
    %1371 = vst [vmem:[#allocation3 + $0xa28] sm:$0xff] %v1307
    %1372 = vst [vmem:[#allocation3 + $0xa70] sm:$0xff] %v1308
    %1373 = vst [vmem:[#allocation3 + $0xab8] sm:$0xff] %v1309
    %1374 = vst [vmem:[#allocation3 + $0xb00] sm:$0xff] %v1310
    %1375 = vst [vmem:[#allocation3 + $0xb48] sm:$0xff] %v1311
    %1376 = vst [vmem:[#allocation3 + $0xb90] sm:$0xff] %v1312
    %1377 = vst [vmem:[#allocation3 + $0xbd8] sm:$0xff] %v1313
    %1378 = vst [vmem:[#allocation3 + $0xc20] sm:$0xff] %v1314
    %1379 = vst [vmem:[#allocation3 + $0xc68] sm:$0xff] %v1315
    %1380 = vst [vmem:[#allocation3 + $0xcb0] sm:$0xff] %v1316
    %1381 = vst [vmem:[#allocation3 + $0xcf8] sm:$0xff] %v1317
    %1382 = vst [vmem:[#allocation3 + $0xd40] sm:$0xff] %v1318
    %1383 = vst [vmem:[#allocation3 + $0xd88] sm:$0xff] %v1319
    %1384 = vst [vmem:[#allocation3 + $0xdd0] sm:$0xff] %v1320
    %1385 = vst [vmem:[#allocation3 + $0xe18] sm:$0xff] %v1321
    %1386 = vst [vmem:[#allocation3 + $0xe60] sm:$0xff] %v1322
    %1387 = vst [vmem:[#allocation3 + $0xea8] sm:$0xff] %v1323
    %1388 = vst [vmem:[#allocation3 + $0xef0] sm:$0xff] %v1324
    %1389 = vst [vmem:[#allocation3 + $0xf38] sm:$0xff] %v1325
    %1390 = vst [vmem:[#allocation3 + $0xf80] sm:$0xff] %v1326
    %1391 = vst [vmem:[#allocation3 + $0xfc8] sm:$0xff] %v1327
    %1392 = vst [vmem:[#allocation3 + $0x1010] sm:$0xff] %v1328
    %1393 = vst [vmem:[#allocation3 + $0x1058] sm:$0xff] %v1329
    %1394 = vst [vmem:[#allocation3 + $0x10a0] sm:$0xff] %v1330
    %1395 = vst [vmem:[#allocation3 + $0x10e8] sm:$0xff] %v1331
    %1396 = vst [vmem:[#allocation3 + $0x1130] sm:$0xff] %v1332
    %1397 = vst [vmem:[#allocation3 + $0x1178] sm:$0xff] %v1333
    %1398 = vst [vmem:[#allocation3 + $0x11c0] sm:$0xff] %v1334
    %v1399 = vld [vmem:[#allocation2 + $0x9] sm:$0xff]
    %v1400 = vld [vmem:[#allocation2 + $0x11] sm:$0xff]
    %v1401 = vld [vmem:[#allocation2 + $0x29] sm:$0xff]
    %v1402 = vld [vmem:[#allocation2 + $0x31] sm:$0xff]
    %v1403 = vld [vmem:[#allocation2 + $0x49] sm:$0xff]
    %v1404 = vld [vmem:[#allocation2 + $0x51] sm:$0xff]
    %v1405 = vld [vmem:[#allocation2 + $0x69] sm:$0xff]
    %v1406 = vld [vmem:[#allocation2 + $0x71] sm:$0xff]
    %v1407 = vld [vmem:[#allocation2 + $0x89] sm:$0xff]
    %v1408 = vld [vmem:[#allocation2 + $0x91] sm:$0xff]
    %v1409 = vld [vmem:[#allocation2 + $0xa9] sm:$0xff]
    %v1410 = vld [vmem:[#allocation2 + $0xb1] sm:$0xff]
    %v1411 = vld [vmem:[#allocation2 + $0xc9] sm:$0xff]
    %v1412 = vld [vmem:[#allocation2 + $0xd1] sm:$0xff]
    %v1413 = vld [vmem:[#allocation2 + $0xe9] sm:$0xff]
    %v1414 = vld [vmem:[#allocation2 + $0xf1] sm:$0xff]
    %v1415 = vld [vmem:[#allocation2 + $0x109] sm:$0xff]
    %v1416 = vld [vmem:[#allocation2 + $0x111] sm:$0xff]
    %v1417 = vld [vmem:[#allocation2 + $0x129] sm:$0xff]
    %v1418 = vld [vmem:[#allocation2 + $0x131] sm:$0xff]
    %v1419 = vld [vmem:[#allocation2 + $0x149] sm:$0xff]
    %v1420 = vld [vmem:[#allocation2 + $0x151] sm:$0xff]
    %v1421 = vld [vmem:[#allocation2 + $0x169] sm:$0xff]
    %v1422 = vld [vmem:[#allocation2 + $0x171] sm:$0xff]
    %v1423 = vld [vmem:[#allocation2 + $0x189] sm:$0xff]
    %v1424 = vld [vmem:[#allocation2 + $0x191] sm:$0xff]
    %v1425 = vld [vmem:[#allocation2 + $0x1a9] sm:$0xff]
    %v1426 = vld [vmem:[#allocation2 + $0x1b1] sm:$0xff]
    %v1427 = vld [vmem:[#allocation2 + $0x1c9] sm:$0xff]
    %v1428 = vld [vmem:[#allocation2 + $0x1d1] sm:$0xff]
    %v1429 = vld [vmem:[#allocation2 + $0x1e9] sm:$0xff]
    %v1430 = vld [vmem:[#allocation2 + $0x1f1] sm:$0xff]
    %v1431 = vld [vmem:[#allocation2 + $0x249] sm:$0xff]
    %v1432 = vld [vmem:[#allocation2 + $0x251] sm:$0xff]
    %v1433 = vld [vmem:[#allocation2 + $0x269] sm:$0xff]
    %v1434 = vld [vmem:[#allocation2 + $0x271] sm:$0xff]
    %v1435 = vld [vmem:[#allocation2 + $0x289] sm:$0xff]
    %v1436 = vld [vmem:[#allocation2 + $0x291] sm:$0xff]
    %v1437 = vld [vmem:[#allocation2 + $0x2a9] sm:$0xff]
    %v1438 = vld [vmem:[#allocation2 + $0x2b1] sm:$0xff]
    %v1439 = vld [vmem:[#allocation2 + $0x2c9] sm:$0xff]
    %v1440 = vld [vmem:[#allocation2 + $0x2d1] sm:$0xff]
    %v1441 = vld [vmem:[#allocation2 + $0x2e9] sm:$0xff]
    %v1442 = vld [vmem:[#allocation2 + $0x2f1] sm:$0xff]
    %v1443 = vld [vmem:[#allocation2 + $0x309] sm:$0xff]
    %v1444 = vld [vmem:[#allocation2 + $0x311] sm:$0xff]
    %v1445 = vld [vmem:[#allocation2 + $0x329] sm:$0xff]
    %v1446 = vld [vmem:[#allocation2 + $0x331] sm:$0xff]
    %v1447 = vld [vmem:[#allocation2 + $0x349] sm:$0xff]
    %v1448 = vld [vmem:[#allocation2 + $0x351] sm:$0xff]
    %v1449 = vld [vmem:[#allocation2 + $0x369] sm:$0xff]
    %v1450 = vld [vmem:[#allocation2 + $0x371] sm:$0xff]
    %v1451 = vld [vmem:[#allocation2 + $0x389] sm:$0xff]
    %v1452 = vld [vmem:[#allocation2 + $0x391] sm:$0xff]
    %v1453 = vld [vmem:[#allocation2 + $0x3a9] sm:$0xff]
    %v1454 = vld [vmem:[#allocation2 + $0x3b1] sm:$0xff]
    %v1455 = vld [vmem:[#allocation2 + $0x3c9] sm:$0xff]
    %v1456 = vld [vmem:[#allocation2 + $0x3d1] sm:$0xff]
    %v1457 = vld [vmem:[#allocation2 + $0x3e9] sm:$0xff]
    %v1458 = vld [vmem:[#allocation2 + $0x3f1] sm:$0xff]
    %v1459 = vld [vmem:[#allocation2 + $0x409] sm:$0xff]
    %v1460 = vld [vmem:[#allocation2 + $0x411] sm:$0xff]
    %v1461 = vld [vmem:[#allocation2 + $0x429] sm:$0xff]
    %v1462 = vld [vmem:[#allocation2 + $0x431] sm:$0xff]
    %1463 = vst [vmem:[#allocation3 + $0x10] sm:$0xff] %v1399
    %1464 = vst [vmem:[#allocation3 + $0x58] sm:$0xff] %v1400
    %1465 = vst [vmem:[#allocation3 + $0xa0] sm:$0xff] %v1401
    %1466 = vst [vmem:[#allocation3 + $0xe8] sm:$0xff] %v1402
    %1467 = vst [vmem:[#allocation3 + $0x130] sm:$0xff] %v1403
    %1468 = vst [vmem:[#allocation3 + $0x178] sm:$0xff] %v1404
    %1469 = vst [vmem:[#allocation3 + $0x1c0] sm:$0xff] %v1405
    %1470 = vst [vmem:[#allocation3 + $0x208] sm:$0xff] %v1406
    %1471 = vst [vmem:[#allocation3 + $0x250] sm:$0xff] %v1407
    %1472 = vst [vmem:[#allocation3 + $0x298] sm:$0xff] %v1408
    %1473 = vst [vmem:[#allocation3 + $0x2e0] sm:$0xff] %v1409
    %1474 = vst [vmem:[#allocation3 + $0x328] sm:$0xff] %v1410
    %1475 = vst [vmem:[#allocation3 + $0x370] sm:$0xff] %v1411
    %1476 = vst [vmem:[#allocation3 + $0x3b8] sm:$0xff] %v1412
    %1477 = vst [vmem:[#allocation3 + $0x400] sm:$0xff] %v1413
    %1478 = vst [vmem:[#allocation3 + $0x448] sm:$0xff] %v1414
    %1479 = vst [vmem:[#allocation3 + $0x490] sm:$0xff] %v1415
    %1480 = vst [vmem:[#allocation3 + $0x4d8] sm:$0xff] %v1416
    %1481 = vst [vmem:[#allocation3 + $0x520] sm:$0xff] %v1417
    %1482 = vst [vmem:[#allocation3 + $0x568] sm:$0xff] %v1418
    %1483 = vst [vmem:[#allocation3 + $0x5b0] sm:$0xff] %v1419
    %1484 = vst [vmem:[#allocation3 + $0x5f8] sm:$0xff] %v1420
    %1485 = vst [vmem:[#allocation3 + $0x640] sm:$0xff] %v1421
    %1486 = vst [vmem:[#allocation3 + $0x688] sm:$0xff] %v1422
    %1487 = vst [vmem:[#allocation3 + $0x6d0] sm:$0xff] %v1423
    %1488 = vst [vmem:[#allocation3 + $0x718] sm:$0xff] %v1424
    %1489 = vst [vmem:[#allocation3 + $0x760] sm:$0xff] %v1425
    %1490 = vst [vmem:[#allocation3 + $0x7a8] sm:$0xff] %v1426
    %1491 = vst [vmem:[#allocation3 + $0x7f0] sm:$0xff] %v1427
    %1492 = vst [vmem:[#allocation3 + $0x838] sm:$0xff] %v1428
    %1493 = vst [vmem:[#allocation3 + $0x880] sm:$0xff] %v1429
    %1494 = vst [vmem:[#allocation3 + $0x8c8] sm:$0xff] %v1430
    %1495 = vst [vmem:[#allocation3 + $0x910] sm:$0xff] %v1431
    %1496 = vst [vmem:[#allocation3 + $0x958] sm:$0xff] %v1432
    %1497 = vst [vmem:[#allocation3 + $0x9a0] sm:$0xff] %v1433
    %1498 = vst [vmem:[#allocation3 + $0x9e8] sm:$0xff] %v1434
    %1499 = vst [vmem:[#allocation3 + $0xa30] sm:$0xff] %v1435
    %1500 = vst [vmem:[#allocation3 + $0xa78] sm:$0xff] %v1436
    %1501 = vst [vmem:[#allocation3 + $0xac0] sm:$0xff] %v1437
    %1502 = vst [vmem:[#allocation3 + $0xb08] sm:$0xff] %v1438
    %1503 = vst [vmem:[#allocation3 + $0xb50] sm:$0xff] %v1439
    %1504 = vst [vmem:[#allocation3 + $0xb98] sm:$0xff] %v1440
    %1505 = vst [vmem:[#allocation3 + $0xbe0] sm:$0xff] %v1441
    %1506 = vst [vmem:[#allocation3 + $0xc28] sm:$0xff] %v1442
    %1507 = vst [vmem:[#allocation3 + $0xc70] sm:$0xff] %v1443
    %1508 = vst [vmem:[#allocation3 + $0xcb8] sm:$0xff] %v1444
    %1509 = vst [vmem:[#allocation3 + $0xd00] sm:$0xff] %v1445
    %1510 = vst [vmem:[#allocation3 + $0xd48] sm:$0xff] %v1446
    %1511 = vst [vmem:[#allocation3 + $0xd90] sm:$0xff] %v1447
    %1512 = vst [vmem:[#allocation3 + $0xdd8] sm:$0xff] %v1448
    %1513 = vst [vmem:[#allocation3 + $0xe20] sm:$0xff] %v1449
    %1514 = vst [vmem:[#allocation3 + $0xe68] sm:$0xff] %v1450
    %1515 = vst [vmem:[#allocation3 + $0xeb0] sm:$0xff] %v1451
    %1516 = vst [vmem:[#allocation3 + $0xef8] sm:$0xff] %v1452
    %1517 = vst [vmem:[#allocation3 + $0xf40] sm:$0xff] %v1453
    %1518 = vst [vmem:[#allocation3 + $0xf88] sm:$0xff] %v1454
    %1519 = vst [vmem:[#allocation3 + $0xfd0] sm:$0xff] %v1455
    %1520 = vst [vmem:[#allocation3 + $0x1018] sm:$0xff] %v1456
    %1521 = vst [vmem:[#allocation3 + $0x1060] sm:$0xff] %v1457
    %1522 = vst [vmem:[#allocation3 + $0x10a8] sm:$0xff] %v1458
    %1523 = vst [vmem:[#allocation3 + $0x10f0] sm:$0xff] %v1459
    %1524 = vst [vmem:[#allocation3 + $0x1138] sm:$0xff] %v1460
    %1525 = vst [vmem:[#allocation3 + $0x1180] sm:$0xff] %v1461
    %1526 = vst [vmem:[#allocation3 + $0x11c8] sm:$0xff] %v1462
    %v1527 = vld [vmem:[%s1014 + $0x7] sm:$0xff]
    %v1528 = vld [vmem:[%s1014 + $0xf] sm:$0xff]
    %v1529 = vld [vmem:[%s1014 + $0x27] sm:$0xff]
    %v1530 = vld [vmem:[%s1014 + $0x2f] sm:$0xff]
    %v1531 = vld [vmem:[%s1014 + $0x47] sm:$0xff]
    %v1532 = vld [vmem:[%s1014 + $0x4f] sm:$0xff]
    %v1533 = vld [vmem:[%s1014 + $0x67] sm:$0xff]
    %v1534 = vld [vmem:[%s1014 + $0x6f] sm:$0xff]
    %v1535 = vld [vmem:[%s1014 + $0x87] sm:$0xff]
    %v1536 = vld [vmem:[%s1014 + $0x8f] sm:$0xff]
    %v1537 = vld [vmem:[%s1014 + $0xa7] sm:$0xff]
    %v1538 = vld [vmem:[%s1014 + $0xaf] sm:$0xff]
    %v1539 = vld [vmem:[%s1014 + $0xc7] sm:$0xff]
    %v1540 = vld [vmem:[%s1014 + $0xcf] sm:$0xff]
    %v1541 = vld [vmem:[%s1014 + $0xe7] sm:$0xff]
    %v1542 = vld [vmem:[%s1014 + $0xef] sm:$0xff]
    %v1543 = vld [vmem:[%s1014 + $0x107] sm:$0xff]
    %v1544 = vld [vmem:[%s1014 + $0x10f] sm:$0xff]
    %v1545 = vld [vmem:[%s1014 + $0x127] sm:$0xff]
    %v1546 = vld [vmem:[%s1014 + $0x12f] sm:$0xff]
    %v1547 = vld [vmem:[%s1014 + $0x147] sm:$0xff]
    %v1548 = vld [vmem:[%s1014 + $0x14f] sm:$0xff]
    %v1549 = vld [vmem:[%s1014 + $0x167] sm:$0xff]
    %v1550 = vld [vmem:[%s1014 + $0x16f] sm:$0xff]
    %v1551 = vld [vmem:[%s1014 + $0x187] sm:$0xff]
    %v1552 = vld [vmem:[%s1014 + $0x18f] sm:$0xff]
    %v1553 = vld [vmem:[%s1014 + $0x1a7] sm:$0xff]
    %v1554 = vld [vmem:[%s1014 + $0x1af] sm:$0xff]
    %v1555 = vld [vmem:[%s1014 + $0x1c7] sm:$0xff]
    %v1556 = vld [vmem:[%s1014 + $0x1cf] sm:$0xff]
    %v1557 = vld [vmem:[%s1014 + $0x1e7] sm:$0xff]
    %v1558 = vld [vmem:[%s1014 + $0x1ef] sm:$0xff]
    %v1559 = vld [vmem:[%s1014 + $0x247] sm:$0xff]
    %v1560 = vld [vmem:[%s1014 + $0x24f] sm:$0xff]
    %v1561 = vld [vmem:[%s1014 + $0x267] sm:$0xff]
    %v1562 = vld [vmem:[%s1014 + $0x26f] sm:$0xff]
    %v1563 = vld [vmem:[%s1014 + $0x287] sm:$0xff]
    %v1564 = vld [vmem:[%s1014 + $0x28f] sm:$0xff]
    %v1565 = vld [vmem:[%s1014 + $0x2a7] sm:$0xff]
    %v1566 = vld [vmem:[%s1014 + $0x2af] sm:$0xff]
    %v1567 = vld [vmem:[%s1014 + $0x2c7] sm:$0xff]
    %v1568 = vld [vmem:[%s1014 + $0x2cf] sm:$0xff]
    %v1569 = vld [vmem:[%s1014 + $0x2e7] sm:$0xff]
    %v1570 = vld [vmem:[%s1014 + $0x2ef] sm:$0xff]
    %v1571 = vld [vmem:[%s1014 + $0x307] sm:$0xff]
    %v1572 = vld [vmem:[%s1014 + $0x30f] sm:$0xff]
    %v1573 = vld [vmem:[%s1014 + $0x327] sm:$0xff]
    %v1574 = vld [vmem:[%s1014 + $0x32f] sm:$0xff]
    %v1575 = vld [vmem:[%s1014 + $0x347] sm:$0xff]
    %v1576 = vld [vmem:[%s1014 + $0x34f] sm:$0xff]
    %v1577 = vld [vmem:[%s1014 + $0x367] sm:$0xff]
    %v1578 = vld [vmem:[%s1014 + $0x36f] sm:$0xff]
    %v1579 = vld [vmem:[%s1014 + $0x387] sm:$0xff]
    %v1580 = vld [vmem:[%s1014 + $0x38f] sm:$0xff]
    %v1581 = vld [vmem:[%s1014 + $0x3a7] sm:$0xff]
    %v1582 = vld [vmem:[%s1014 + $0x3af] sm:$0xff]
    %v1583 = vld [vmem:[%s1014 + $0x3c7] sm:$0xff]
    %v1584 = vld [vmem:[%s1014 + $0x3cf] sm:$0xff]
    %v1585 = vld [vmem:[%s1014 + $0x3e7] sm:$0xff]
    %v1586 = vld [vmem:[%s1014 + $0x3ef] sm:$0xff]
    %v1587 = vld [vmem:[%s1014 + $0x407] sm:$0xff]
    %v1588 = vld [vmem:[%s1014 + $0x40f] sm:$0xff]
    %v1589 = vld [vmem:[%s1014 + $0x427] sm:$0xff]
    %v1590 = vld [vmem:[%s1014 + $0x42f] sm:$0xff]
    %1591 = vst [vmem:[#allocation3 + $0x18] sm:$0xff] %v1527
    %1592 = vst [vmem:[#allocation3 + $0x60] sm:$0xff] %v1528
    %1593 = vst [vmem:[#allocation3 + $0xa8] sm:$0xff] %v1529
    %1594 = vst [vmem:[#allocation3 + $0xf0] sm:$0xff] %v1530
    %1595 = vst [vmem:[#allocation3 + $0x138] sm:$0xff] %v1531
    %1596 = vst [vmem:[#allocation3 + $0x180] sm:$0xff] %v1532
    %1597 = vst [vmem:[#allocation3 + $0x1c8] sm:$0xff] %v1533
    %1598 = vst [vmem:[#allocation3 + $0x210] sm:$0xff] %v1534
    %1599 = vst [vmem:[#allocation3 + $0x258] sm:$0xff] %v1535
    %1600 = vst [vmem:[#allocation3 + $0x2a0] sm:$0xff] %v1536
    %1601 = vst [vmem:[#allocation3 + $0x2e8] sm:$0xff] %v1537
    %1602 = vst [vmem:[#allocation3 + $0x330] sm:$0xff] %v1538
    %1603 = vst [vmem:[#allocation3 + $0x378] sm:$0xff] %v1539
    %1604 = vst [vmem:[#allocation3 + $0x3c0] sm:$0xff] %v1540
    %1605 = vst [vmem:[#allocation3 + $0x408] sm:$0xff] %v1541
    %1606 = vst [vmem:[#allocation3 + $0x450] sm:$0xff] %v1542
    %1607 = vst [vmem:[#allocation3 + $0x498] sm:$0xff] %v1543
    %1608 = vst [vmem:[#allocation3 + $0x4e0] sm:$0xff] %v1544
    %1609 = vst [vmem:[#allocation3 + $0x528] sm:$0xff] %v1545
    %1610 = vst [vmem:[#allocation3 + $0x570] sm:$0xff] %v1546
    %1611 = vst [vmem:[#allocation3 + $0x5b8] sm:$0xff] %v1547
    %1612 = vst [vmem:[#allocation3 + $0x600] sm:$0xff] %v1548
    %1613 = vst [vmem:[#allocation3 + $0x648] sm:$0xff] %v1549
    %1614 = vst [vmem:[#allocation3 + $0x690] sm:$0xff] %v1550
    %1615 = vst [vmem:[#allocation3 + $0x6d8] sm:$0xff] %v1551
    %1616 = vst [vmem:[#allocation3 + $0x720] sm:$0xff] %v1552
    %1617 = vst [vmem:[#allocation3 + $0x768] sm:$0xff] %v1553
    %1618 = vst [vmem:[#allocation3 + $0x7b0] sm:$0xff] %v1554
    %1619 = vst [vmem:[#allocation3 + $0x7f8] sm:$0xff] %v1555
    %1620 = vst [vmem:[#allocation3 + $0x840] sm:$0xff] %v1556
    %1621 = vst [vmem:[#allocation3 + $0x888] sm:$0xff] %v1557
    %1622 = vst [vmem:[#allocation3 + $0x8d0] sm:$0xff] %v1558
    %1623 = vst [vmem:[#allocation3 + $0x918] sm:$0xff] %v1559
    %1624 = vst [vmem:[#allocation3 + $0x960] sm:$0xff] %v1560
    %1625 = vst [vmem:[#allocation3 + $0x9a8] sm:$0xff] %v1561
    %1626 = vst [vmem:[#allocation3 + $0x9f0] sm:$0xff] %v1562
    %1627 = vst [vmem:[#allocation3 + $0xa38] sm:$0xff] %v1563
    %1628 = vst [vmem:[#allocation3 + $0xa80] sm:$0xff] %v1564
    %1629 = vst [vmem:[#allocation3 + $0xac8] sm:$0xff] %v1565
    %1630 = vst [vmem:[#allocation3 + $0xb10] sm:$0xff] %v1566
    %1631 = vst [vmem:[#allocation3 + $0xb58] sm:$0xff] %v1567
    %1632 = vst [vmem:[#allocation3 + $0xba0] sm:$0xff] %v1568
    %1633 = vst [vmem:[#allocation3 + $0xbe8] sm:$0xff] %v1569
    %1634 = vst [vmem:[#allocation3 + $0xc30] sm:$0xff] %v1570
    %1635 = vst [vmem:[#allocation3 + $0xc78] sm:$0xff] %v1571
    %1636 = vst [vmem:[#allocation3 + $0xcc0] sm:$0xff] %v1572
    %1637 = vst [vmem:[#allocation3 + $0xd08] sm:$0xff] %v1573
    %1638 = vst [vmem:[#allocation3 + $0xd50] sm:$0xff] %v1574
    %1639 = vst [vmem:[#allocation3 + $0xd98] sm:$0xff] %v1575
    %1640 = vst [vmem:[#allocation3 + $0xde0] sm:$0xff] %v1576
    %1641 = vst [vmem:[#allocation3 + $0xe28] sm:$0xff] %v1577
    %1642 = vst [vmem:[#allocation3 + $0xe70] sm:$0xff] %v1578
    %1643 = vst [vmem:[#allocation3 + $0xeb8] sm:$0xff] %v1579
    %1644 = vst [vmem:[#allocation3 + $0xf00] sm:$0xff] %v1580
    %1645 = vst [vmem:[#allocation3 + $0xf48] sm:$0xff] %v1581
    %1646 = vst [vmem:[#allocation3 + $0xf90] sm:$0xff] %v1582
    %1647 = vst [vmem:[#allocation3 + $0xfd8] sm:$0xff] %v1583
    %1648 = vst [vmem:[#allocation3 + $0x1020] sm:$0xff] %v1584
    %1649 = vst [vmem:[#allocation3 + $0x1068] sm:$0xff] %v1585
    %1650 = vst [vmem:[#allocation3 + $0x10b0] sm:$0xff] %v1586
    %1651 = vst [vmem:[#allocation3 + $0x10f8] sm:$0xff] %v1587
    %1652 = vst [vmem:[#allocation3 + $0x1140] sm:$0xff] %v1588
    %1653 = vst [vmem:[#allocation3 + $0x1188] sm:$0xff] %v1589
    %1654 = vst [vmem:[#allocation3 + $0x11d0] sm:$0xff] %v1590
    %v1655 = vld [vmem:[%s1014 + $0x8] sm:$0xff]
    %v1656 = vld [vmem:[%s1014 + $0x10] sm:$0xff]
    %v1657 = vld [vmem:[%s1014 + $0x28] sm:$0xff]
    %v1658 = vld [vmem:[%s1014 + $0x30] sm:$0xff]
    %v1659 = vld [vmem:[%s1014 + $0x48] sm:$0xff]
    %v1660 = vld [vmem:[%s1014 + $0x50] sm:$0xff]
    %v1661 = vld [vmem:[%s1014 + $0x68] sm:$0xff]
    %v1662 = vld [vmem:[%s1014 + $0x70] sm:$0xff]
    %v1663 = vld [vmem:[%s1014 + $0x88] sm:$0xff]
    %v1664 = vld [vmem:[%s1014 + $0x90] sm:$0xff]
    %v1665 = vld [vmem:[%s1014 + $0xa8] sm:$0xff]
    %v1666 = vld [vmem:[%s1014 + $0xb0] sm:$0xff]
    %v1667 = vld [vmem:[%s1014 + $0xc8] sm:$0xff]
    %v1668 = vld [vmem:[%s1014 + $0xd0] sm:$0xff]
    %v1669 = vld [vmem:[%s1014 + $0xe8] sm:$0xff]
    %v1670 = vld [vmem:[%s1014 + $0xf0] sm:$0xff]
    %v1671 = vld [vmem:[%s1014 + $0x108] sm:$0xff]
    %v1672 = vld [vmem:[%s1014 + $0x110] sm:$0xff]
    %v1673 = vld [vmem:[%s1014 + $0x128] sm:$0xff]
    %v1674 = vld [vmem:[%s1014 + $0x130] sm:$0xff]
    %v1675 = vld [vmem:[%s1014 + $0x148] sm:$0xff]
    %v1676 = vld [vmem:[%s1014 + $0x150] sm:$0xff]
    %v1677 = vld [vmem:[%s1014 + $0x168] sm:$0xff]
    %v1678 = vld [vmem:[%s1014 + $0x170] sm:$0xff]
    %v1679 = vld [vmem:[%s1014 + $0x188] sm:$0xff]
    %v1680 = vld [vmem:[%s1014 + $0x190] sm:$0xff]
    %v1681 = vld [vmem:[%s1014 + $0x1a8] sm:$0xff]
    %v1682 = vld [vmem:[%s1014 + $0x1b0] sm:$0xff]
    %v1683 = vld [vmem:[%s1014 + $0x1c8] sm:$0xff]
    %v1684 = vld [vmem:[%s1014 + $0x1d0] sm:$0xff]
    %v1685 = vld [vmem:[%s1014 + $0x1e8] sm:$0xff]
    %v1686 = vld [vmem:[%s1014 + $0x1f0] sm:$0xff]
    %v1687 = vld [vmem:[%s1014 + $0x248] sm:$0xff]
    %v1688 = vld [vmem:[%s1014 + $0x250] sm:$0xff]
    %v1689 = vld [vmem:[%s1014 + $0x268] sm:$0xff]
    %v1690 = vld [vmem:[%s1014 + $0x270] sm:$0xff]
    %v1691 = vld [vmem:[%s1014 + $0x288] sm:$0xff]
    %v1692 = vld [vmem:[%s1014 + $0x290] sm:$0xff]
    %v1693 = vld [vmem:[%s1014 + $0x2a8] sm:$0xff]
    %v1694 = vld [vmem:[%s1014 + $0x2b0] sm:$0xff]
    %v1695 = vld [vmem:[%s1014 + $0x2c8] sm:$0xff]
    %v1696 = vld [vmem:[%s1014 + $0x2d0] sm:$0xff]
    %v1697 = vld [vmem:[%s1014 + $0x2e8] sm:$0xff]
    %v1698 = vld [vmem:[%s1014 + $0x2f0] sm:$0xff]
    %v1699 = vld [vmem:[%s1014 + $0x308] sm:$0xff]
    %v1700 = vld [vmem:[%s1014 + $0x310] sm:$0xff]
    %v1701 = vld [vmem:[%s1014 + $0x328] sm:$0xff]
    %v1702 = vld [vmem:[%s1014 + $0x330] sm:$0xff]
    %v1703 = vld [vmem:[%s1014 + $0x348] sm:$0xff]
    %v1704 = vld [vmem:[%s1014 + $0x350] sm:$0xff]
    %v1705 = vld [vmem:[%s1014 + $0x368] sm:$0xff]
    %v1706 = vld [vmem:[%s1014 + $0x370] sm:$0xff]
    %v1707 = vld [vmem:[%s1014 + $0x388] sm:$0xff]
    %v1708 = vld [vmem:[%s1014 + $0x390] sm:$0xff]
    %v1709 = vld [vmem:[%s1014 + $0x3a8] sm:$0xff]
    %v1710 = vld [vmem:[%s1014 + $0x3b0] sm:$0xff]
    %v1711 = vld [vmem:[%s1014 + $0x3c8] sm:$0xff]
    %v1712 = vld [vmem:[%s1014 + $0x3d0] sm:$0xff]
    %v1713 = vld [vmem:[%s1014 + $0x3e8] sm:$0xff]
    %v1714 = vld [vmem:[%s1014 + $0x3f0] sm:$0xff]
    %v1715 = vld [vmem:[%s1014 + $0x408] sm:$0xff]
    %v1716 = vld [vmem:[%s1014 + $0x410] sm:$0xff]
    %v1717 = vld [vmem:[%s1014 + $0x428] sm:$0xff]
    %v1718 = vld [vmem:[%s1014 + $0x430] sm:$0xff]
    %1719 = vst [vmem:[#allocation3 + $0x20] sm:$0xff] %v1655
    %1720 = vst [vmem:[#allocation3 + $0x68] sm:$0xff] %v1656
    %1721 = vst [vmem:[#allocation3 + $0xb0] sm:$0xff] %v1657
    %1722 = vst [vmem:[#allocation3 + $0xf8] sm:$0xff] %v1658
    %1723 = vst [vmem:[#allocation3 + $0x140] sm:$0xff] %v1659
    %1724 = vst [vmem:[#allocation3 + $0x188] sm:$0xff] %v1660
    %1725 = vst [vmem:[#allocation3 + $0x1d0] sm:$0xff] %v1661
    %1726 = vst [vmem:[#allocation3 + $0x218] sm:$0xff] %v1662
    %1727 = vst [vmem:[#allocation3 + $0x260] sm:$0xff] %v1663
    %1728 = vst [vmem:[#allocation3 + $0x2a8] sm:$0xff] %v1664
    %1729 = vst [vmem:[#allocation3 + $0x2f0] sm:$0xff] %v1665
    %1730 = vst [vmem:[#allocation3 + $0x338] sm:$0xff] %v1666
    %1731 = vst [vmem:[#allocation3 + $0x380] sm:$0xff] %v1667
    %1732 = vst [vmem:[#allocation3 + $0x3c8] sm:$0xff] %v1668
    %1733 = vst [vmem:[#allocation3 + $0x410] sm:$0xff] %v1669
    %1734 = vst [vmem:[#allocation3 + $0x458] sm:$0xff] %v1670
    %1735 = vst [vmem:[#allocation3 + $0x4a0] sm:$0xff] %v1671
    %1736 = vst [vmem:[#allocation3 + $0x4e8] sm:$0xff] %v1672
    %1737 = vst [vmem:[#allocation3 + $0x530] sm:$0xff] %v1673
    %1738 = vst [vmem:[#allocation3 + $0x578] sm:$0xff] %v1674
    %1739 = vst [vmem:[#allocation3 + $0x5c0] sm:$0xff] %v1675
    %1740 = vst [vmem:[#allocation3 + $0x608] sm:$0xff] %v1676
    %1741 = vst [vmem:[#allocation3 + $0x650] sm:$0xff] %v1677
    %1742 = vst [vmem:[#allocation3 + $0x698] sm:$0xff] %v1678
    %1743 = vst [vmem:[#allocation3 + $0x6e0] sm:$0xff] %v1679
    %1744 = vst [vmem:[#allocation3 + $0x728] sm:$0xff] %v1680
    %1745 = vst [vmem:[#allocation3 + $0x770] sm:$0xff] %v1681
    %1746 = vst [vmem:[#allocation3 + $0x7b8] sm:$0xff] %v1682
    %1747 = vst [vmem:[#allocation3 + $0x800] sm:$0xff] %v1683
    %1748 = vst [vmem:[#allocation3 + $0x848] sm:$0xff] %v1684
    %1749 = vst [vmem:[#allocation3 + $0x890] sm:$0xff] %v1685
    %1750 = vst [vmem:[#allocation3 + $0x8d8] sm:$0xff] %v1686
    %1751 = vst [vmem:[#allocation3 + $0x920] sm:$0xff] %v1687
    %1752 = vst [vmem:[#allocation3 + $0x968] sm:$0xff] %v1688
    %1753 = vst [vmem:[#allocation3 + $0x9b0] sm:$0xff] %v1689
    %1754 = vst [vmem:[#allocation3 + $0x9f8] sm:$0xff] %v1690
    %1755 = vst [vmem:[#allocation3 + $0xa40] sm:$0xff] %v1691
    %1756 = vst [vmem:[#allocation3 + $0xa88] sm:$0xff] %v1692
    %1757 = vst [vmem:[#allocation3 + $0xad0] sm:$0xff] %v1693
    %1758 = vst [vmem:[#allocation3 + $0xb18] sm:$0xff] %v1694
    %1759 = vst [vmem:[#allocation3 + $0xb60] sm:$0xff] %v1695
    %1760 = vst [vmem:[#allocation3 + $0xba8] sm:$0xff] %v1696
    %1761 = vst [vmem:[#allocation3 + $0xbf0] sm:$0xff] %v1697
    %1762 = vst [vmem:[#allocation3 + $0xc38] sm:$0xff] %v1698
    %1763 = vst [vmem:[#allocation3 + $0xc80] sm:$0xff] %v1699
    %1764 = vst [vmem:[#allocation3 + $0xcc8] sm:$0xff] %v1700
    %1765 = vst [vmem:[#allocation3 + $0xd10] sm:$0xff] %v1701
    %1766 = vst [vmem:[#allocation3 + $0xd58] sm:$0xff] %v1702
    %1767 = vst [vmem:[#allocation3 + $0xda0] sm:$0xff] %v1703
    %1768 = vst [vmem:[#allocation3 + $0xde8] sm:$0xff] %v1704
    %1769 = vst [vmem:[#allocation3 + $0xe30] sm:$0xff] %v1705
    %1770 = vst [vmem:[#allocation3 + $0xe78] sm:$0xff] %v1706
    %1771 = vst [vmem:[#allocation3 + $0xec0] sm:$0xff] %v1707
    %1772 = vst [vmem:[#allocation3 + $0xf08] sm:$0xff] %v1708
    %1773 = vst [vmem:[#allocation3 + $0xf50] sm:$0xff] %v1709
    %1774 = vst [vmem:[#allocation3 + $0xf98] sm:$0xff] %v1710
    %1775 = vst [vmem:[#allocation3 + $0xfe0] sm:$0xff] %v1711
    %1776 = vst [vmem:[#allocation3 + $0x1028] sm:$0xff] %v1712
    %1777 = vst [vmem:[#allocation3 + $0x1070] sm:$0xff] %v1713
    %1778 = vst [vmem:[#allocation3 + $0x10b8] sm:$0xff] %v1714
    %1779 = vst [vmem:[#allocation3 + $0x1100] sm:$0xff] %v1715
    %1780 = vst [vmem:[#allocation3 + $0x1148] sm:$0xff] %v1716
    %1781 = vst [vmem:[#allocation3 + $0x1190] sm:$0xff] %v1717
    %1782 = vst [vmem:[#allocation3 + $0x11d8] sm:$0xff] %v1718
    %v1783 = vld [vmem:[%s1014 + $0x9] sm:$0xff]
    %v1784 = vld [vmem:[%s1014 + $0x11] sm:$0xff]
    %v1785 = vld [vmem:[%s1014 + $0x29] sm:$0xff]
    %v1786 = vld [vmem:[%s1014 + $0x31] sm:$0xff]
    %v1787 = vld [vmem:[%s1014 + $0x49] sm:$0xff]
    %v1788 = vld [vmem:[%s1014 + $0x51] sm:$0xff]
    %v1789 = vld [vmem:[%s1014 + $0x69] sm:$0xff]
    %v1790 = vld [vmem:[%s1014 + $0x71] sm:$0xff]
    %v1791 = vld [vmem:[%s1014 + $0x89] sm:$0xff]
    %v1792 = vld [vmem:[%s1014 + $0x91] sm:$0xff]
    %v1793 = vld [vmem:[%s1014 + $0xa9] sm:$0xff]
    %v1794 = vld [vmem:[%s1014 + $0xb1] sm:$0xff]
    %v1795 = vld [vmem:[%s1014 + $0xc9] sm:$0xff]
    %v1796 = vld [vmem:[%s1014 + $0xd1] sm:$0xff]
    %v1797 = vld [vmem:[%s1014 + $0xe9] sm:$0xff]
    %v1798 = vld [vmem:[%s1014 + $0xf1] sm:$0xff]
    %v1799 = vld [vmem:[%s1014 + $0x109] sm:$0xff]
    %v1800 = vld [vmem:[%s1014 + $0x111] sm:$0xff]
    %v1801 = vld [vmem:[%s1014 + $0x129] sm:$0xff]
    %v1802 = vld [vmem:[%s1014 + $0x131] sm:$0xff]
    %v1803 = vld [vmem:[%s1014 + $0x149] sm:$0xff]
    %v1804 = vld [vmem:[%s1014 + $0x151] sm:$0xff]
    %v1805 = vld [vmem:[%s1014 + $0x169] sm:$0xff]
    %v1806 = vld [vmem:[%s1014 + $0x171] sm:$0xff]
    %v1807 = vld [vmem:[%s1014 + $0x189] sm:$0xff]
    %v1808 = vld [vmem:[%s1014 + $0x191] sm:$0xff]
    %v1809 = vld [vmem:[%s1014 + $0x1a9] sm:$0xff]
    %v1810 = vld [vmem:[%s1014 + $0x1b1] sm:$0xff]
    %v1811 = vld [vmem:[%s1014 + $0x1c9] sm:$0xff]
    %v1812 = vld [vmem:[%s1014 + $0x1d1] sm:$0xff]
    %v1813 = vld [vmem:[%s1014 + $0x1e9] sm:$0xff]
    %v1814 = vld [vmem:[%s1014 + $0x1f1] sm:$0xff]
    %v1815 = vld [vmem:[%s1014 + $0x249] sm:$0xff]
    %v1816 = vld [vmem:[%s1014 + $0x251] sm:$0xff]
    %v1817 = vld [vmem:[%s1014 + $0x269] sm:$0xff]
    %v1818 = vld [vmem:[%s1014 + $0x271] sm:$0xff]
    %v1819 = vld [vmem:[%s1014 + $0x289] sm:$0xff]
    %v1820 = vld [vmem:[%s1014 + $0x291] sm:$0xff]
    %v1821 = vld [vmem:[%s1014 + $0x2a9] sm:$0xff]
    %v1822 = vld [vmem:[%s1014 + $0x2b1] sm:$0xff]
    %v1823 = vld [vmem:[%s1014 + $0x2c9] sm:$0xff]
    %v1824 = vld [vmem:[%s1014 + $0x2d1] sm:$0xff]
    %v1825 = vld [vmem:[%s1014 + $0x2e9] sm:$0xff]
    %v1826 = vld [vmem:[%s1014 + $0x2f1] sm:$0xff]
    %v1827 = vld [vmem:[%s1014 + $0x309] sm:$0xff]
    %v1828 = vld [vmem:[%s1014 + $0x311] sm:$0xff]
    %v1829 = vld [vmem:[%s1014 + $0x329] sm:$0xff]
    %v1830 = vld [vmem:[%s1014 + $0x331] sm:$0xff]
    %v1831 = vld [vmem:[%s1014 + $0x349] sm:$0xff]
    %v1832 = vld [vmem:[%s1014 + $0x351] sm:$0xff]
    %v1833 = vld [vmem:[%s1014 + $0x369] sm:$0xff]
    %v1834 = vld [vmem:[%s1014 + $0x371] sm:$0xff]
    %v1835 = vld [vmem:[%s1014 + $0x389] sm:$0xff]
    %v1836 = vld [vmem:[%s1014 + $0x391] sm:$0xff]
    %v1837 = vld [vmem:[%s1014 + $0x3a9] sm:$0xff]
    %v1838 = vld [vmem:[%s1014 + $0x3b1] sm:$0xff]
    %v1839 = vld [vmem:[%s1014 + $0x3c9] sm:$0xff]
    %v1840 = vld [vmem:[%s1014 + $0x3d1] sm:$0xff]
    %v1841 = vld [vmem:[%s1014 + $0x3e9] sm:$0xff]
    %v1842 = vld [vmem:[%s1014 + $0x3f1] sm:$0xff]
    %v1843 = vld [vmem:[%s1014 + $0x409] sm:$0xff]
    %v1844 = vld [vmem:[%s1014 + $0x411] sm:$0xff]
    %v1845 = vld [vmem:[%s1014 + $0x429] sm:$0xff]
    %v1846 = vld [vmem:[%s1014 + $0x431] sm:$0xff]
    %1847 = vst [vmem:[#allocation3 + $0x28] sm:$0xff] %v1783
    %1848 = vst [vmem:[#allocation3 + $0x70] sm:$0xff] %v1784
    %1849 = vst [vmem:[#allocation3 + $0xb8] sm:$0xff] %v1785
    %1850 = vst [vmem:[#allocation3 + $0x100] sm:$0xff] %v1786
    %1851 = vst [vmem:[#allocation3 + $0x148] sm:$0xff] %v1787
    %1852 = vst [vmem:[#allocation3 + $0x190] sm:$0xff] %v1788
    %1853 = vst [vmem:[#allocation3 + $0x1d8] sm:$0xff] %v1789
    %1854 = vst [vmem:[#allocation3 + $0x220] sm:$0xff] %v1790
    %1855 = vst [vmem:[#allocation3 + $0x268] sm:$0xff] %v1791
    %1856 = vst [vmem:[#allocation3 + $0x2b0] sm:$0xff] %v1792
    %1857 = vst [vmem:[#allocation3 + $0x2f8] sm:$0xff] %v1793
    %1858 = vst [vmem:[#allocation3 + $0x340] sm:$0xff] %v1794
    %1859 = vst [vmem:[#allocation3 + $0x388] sm:$0xff] %v1795
    %1860 = vst [vmem:[#allocation3 + $0x3d0] sm:$0xff] %v1796
    %1861 = vst [vmem:[#allocation3 + $0x418] sm:$0xff] %v1797
    %1862 = vst [vmem:[#allocation3 + $0x460] sm:$0xff] %v1798
    %1863 = vst [vmem:[#allocation3 + $0x4a8] sm:$0xff] %v1799
    %1864 = vst [vmem:[#allocation3 + $0x4f0] sm:$0xff] %v1800
    %1865 = vst [vmem:[#allocation3 + $0x538] sm:$0xff] %v1801
    %1866 = vst [vmem:[#allocation3 + $0x580] sm:$0xff] %v1802
    %1867 = vst [vmem:[#allocation3 + $0x5c8] sm:$0xff] %v1803
    %1868 = vst [vmem:[#allocation3 + $0x610] sm:$0xff] %v1804
    %1869 = vst [vmem:[#allocation3 + $0x658] sm:$0xff] %v1805
    %1870 = vst [vmem:[#allocation3 + $0x6a0] sm:$0xff] %v1806
    %1871 = vst [vmem:[#allocation3 + $0x6e8] sm:$0xff] %v1807
    %1872 = vst [vmem:[#allocation3 + $0x730] sm:$0xff] %v1808
    %1873 = vst [vmem:[#allocation3 + $0x778] sm:$0xff] %v1809
    %1874 = vst [vmem:[#allocation3 + $0x7c0] sm:$0xff] %v1810
    %1875 = vst [vmem:[#allocation3 + $0x808] sm:$0xff] %v1811
    %1876 = vst [vmem:[#allocation3 + $0x850] sm:$0xff] %v1812
    %1877 = vst [vmem:[#allocation3 + $0x898] sm:$0xff] %v1813
    %1878 = vst [vmem:[#allocation3 + $0x8e0] sm:$0xff] %v1814
    %1879 = vst [vmem:[#allocation3 + $0x928] sm:$0xff] %v1815
    %1880 = vst [vmem:[#allocation3 + $0x970] sm:$0xff] %v1816
    %1881 = vst [vmem:[#allocation3 + $0x9b8] sm:$0xff] %v1817
    %1882 = vst [vmem:[#allocation3 + $0xa00] sm:$0xff] %v1818
    %1883 = vst [vmem:[#allocation3 + $0xa48] sm:$0xff] %v1819
    %1884 = vst [vmem:[#allocation3 + $0xa90] sm:$0xff] %v1820
    %1885 = vst [vmem:[#allocation3 + $0xad8] sm:$0xff] %v1821
    %1886 = vst [vmem:[#allocation3 + $0xb20] sm:$0xff] %v1822
    %1887 = vst [vmem:[#allocation3 + $0xb68] sm:$0xff] %v1823
    %1888 = vst [vmem:[#allocation3 + $0xbb0] sm:$0xff] %v1824
    %1889 = vst [vmem:[#allocation3 + $0xbf8] sm:$0xff] %v1825
    %1890 = vst [vmem:[#allocation3 + $0xc40] sm:$0xff] %v1826
    %1891 = vst [vmem:[#allocation3 + $0xc88] sm:$0xff] %v1827
    %1892 = vst [vmem:[#allocation3 + $0xcd0] sm:$0xff] %v1828
    %1893 = vst [vmem:[#allocation3 + $0xd18] sm:$0xff] %v1829
    %1894 = vst [vmem:[#allocation3 + $0xd60] sm:$0xff] %v1830
    %1895 = vst [vmem:[#allocation3 + $0xda8] sm:$0xff] %v1831
    %1896 = vst [vmem:[#allocation3 + $0xdf0] sm:$0xff] %v1832
    %1897 = vst [vmem:[#allocation3 + $0xe38] sm:$0xff] %v1833
    %1898 = vst [vmem:[#allocation3 + $0xe80] sm:$0xff] %v1834
    %1899 = vst [vmem:[#allocation3 + $0xec8] sm:$0xff] %v1835
    %1900 = vst [vmem:[#allocation3 + $0xf10] sm:$0xff] %v1836
    %1901 = vst [vmem:[#allocation3 + $0xf58] sm:$0xff] %v1837
    %1902 = vst [vmem:[#allocation3 + $0xfa0] sm:$0xff] %v1838
    %1903 = vst [vmem:[#allocation3 + $0xfe8] sm:$0xff] %v1839
    %1904 = vst [vmem:[#allocation3 + $0x1030] sm:$0xff] %v1840
    %1905 = vst [vmem:[#allocation3 + $0x1078] sm:$0xff] %v1841
    %1906 = vst [vmem:[#allocation3 + $0x10c0] sm:$0xff] %v1842
    %1907 = vst [vmem:[#allocation3 + $0x1108] sm:$0xff] %v1843
    %1908 = vst [vmem:[#allocation3 + $0x1150] sm:$0xff] %v1844
    %1909 = vst [vmem:[#allocation3 + $0x1198] sm:$0xff] %v1845
    %1910 = vst [vmem:[#allocation3 + $0x11e0] sm:$0xff] %v1846
    %s1911 = scalar_lea.vmem [#allocation2], 64
    %v1912 = vld [vmem:[%s1911 + $0x7] sm:$0xff]
    %v1913 = vld [vmem:[%s1911 + $0xf] sm:$0xff]
    %v1914 = vld [vmem:[%s1911 + $0x27] sm:$0xff]
    %v1915 = vld [vmem:[%s1911 + $0x2f] sm:$0xff]
    %v1916 = vld [vmem:[%s1911 + $0x47] sm:$0xff]
    %v1917 = vld [vmem:[%s1911 + $0x4f] sm:$0xff]
    %v1918 = vld [vmem:[%s1911 + $0x67] sm:$0xff]
    %v1919 = vld [vmem:[%s1911 + $0x6f] sm:$0xff]
    %v1920 = vld [vmem:[%s1911 + $0x87] sm:$0xff]
    %v1921 = vld [vmem:[%s1911 + $0x8f] sm:$0xff]
    %v1922 = vld [vmem:[%s1911 + $0xa7] sm:$0xff]
    %v1923 = vld [vmem:[%s1911 + $0xaf] sm:$0xff]
    %v1924 = vld [vmem:[%s1911 + $0xc7] sm:$0xff]
    %v1925 = vld [vmem:[%s1911 + $0xcf] sm:$0xff]
    %v1926 = vld [vmem:[%s1911 + $0xe7] sm:$0xff]
    %v1927 = vld [vmem:[%s1911 + $0xef] sm:$0xff]
    %v1928 = vld [vmem:[%s1911 + $0x107] sm:$0xff]
    %v1929 = vld [vmem:[%s1911 + $0x10f] sm:$0xff]
    %v1930 = vld [vmem:[%s1911 + $0x127] sm:$0xff]
    %v1931 = vld [vmem:[%s1911 + $0x12f] sm:$0xff]
    %v1932 = vld [vmem:[%s1911 + $0x147] sm:$0xff]
    %v1933 = vld [vmem:[%s1911 + $0x14f] sm:$0xff]
    %v1934 = vld [vmem:[%s1911 + $0x167] sm:$0xff]
    %v1935 = vld [vmem:[%s1911 + $0x16f] sm:$0xff]
    %v1936 = vld [vmem:[%s1911 + $0x187] sm:$0xff]
    %v1937 = vld [vmem:[%s1911 + $0x18f] sm:$0xff]
    %v1938 = vld [vmem:[%s1911 + $0x1a7] sm:$0xff]
    %v1939 = vld [vmem:[%s1911 + $0x1af] sm:$0xff]
    %v1940 = vld [vmem:[%s1911 + $0x1c7] sm:$0xff]
    %v1941 = vld [vmem:[%s1911 + $0x1cf] sm:$0xff]
    %v1942 = vld [vmem:[%s1911 + $0x1e7] sm:$0xff]
    %v1943 = vld [vmem:[%s1911 + $0x1ef] sm:$0xff]
    %v1944 = vld [vmem:[%s1911 + $0x247] sm:$0xff]
    %v1945 = vld [vmem:[%s1911 + $0x24f] sm:$0xff]
    %v1946 = vld [vmem:[%s1911 + $0x267] sm:$0xff]
    %v1947 = vld [vmem:[%s1911 + $0x26f] sm:$0xff]
    %v1948 = vld [vmem:[%s1911 + $0x287] sm:$0xff]
    %v1949 = vld [vmem:[%s1911 + $0x28f] sm:$0xff]
    %v1950 = vld [vmem:[%s1911 + $0x2a7] sm:$0xff]
    %v1951 = vld [vmem:[%s1911 + $0x2af] sm:$0xff]
    %v1952 = vld [vmem:[%s1911 + $0x2c7] sm:$0xff]
    %v1953 = vld [vmem:[%s1911 + $0x2cf] sm:$0xff]
    %v1954 = vld [vmem:[%s1911 + $0x2e7] sm:$0xff]
    %v1955 = vld [vmem:[%s1911 + $0x2ef] sm:$0xff]
    %v1956 = vld [vmem:[%s1911 + $0x307] sm:$0xff]
    %v1957 = vld [vmem:[%s1911 + $0x30f] sm:$0xff]
    %v1958 = vld [vmem:[%s1911 + $0x327] sm:$0xff]
    %v1959 = vld [vmem:[%s1911 + $0x32f] sm:$0xff]
    %v1960 = vld [vmem:[%s1911 + $0x347] sm:$0xff]
    %v1961 = vld [vmem:[%s1911 + $0x34f] sm:$0xff]
    %v1962 = vld [vmem:[%s1911 + $0x367] sm:$0xff]
    %v1963 = vld [vmem:[%s1911 + $0x36f] sm:$0xff]
    %v1964 = vld [vmem:[%s1911 + $0x387] sm:$0xff]
    %v1965 = vld [vmem:[%s1911 + $0x38f] sm:$0xff]
    %v1966 = vld [vmem:[%s1911 + $0x3a7] sm:$0xff]
    %v1967 = vld [vmem:[%s1911 + $0x3af] sm:$0xff]
    %v1968 = vld [vmem:[%s1911 + $0x3c7] sm:$0xff]
    %v1969 = vld [vmem:[%s1911 + $0x3cf] sm:$0xff]
    %v1970 = vld [vmem:[%s1911 + $0x3e7] sm:$0xff]
    %v1971 = vld [vmem:[%s1911 + $0x3ef] sm:$0xff]
    %v1972 = vld [vmem:[%s1911 + $0x407] sm:$0xff]
    %v1973 = vld [vmem:[%s1911 + $0x40f] sm:$0xff]
    %v1974 = vld [vmem:[%s1911 + $0x427] sm:$0xff]
    %v1975 = vld [vmem:[%s1911 + $0x42f] sm:$0xff]
    %1976 = vst [vmem:[#allocation3 + $0x30] sm:$0xff] %v1912
    %1977 = vst [vmem:[#allocation3 + $0x78] sm:$0xff] %v1913
    %1978 = vst [vmem:[#allocation3 + $0xc0] sm:$0xff] %v1914
    %1979 = vst [vmem:[#allocation3 + $0x108] sm:$0xff] %v1915
    %1980 = vst [vmem:[#allocation3 + $0x150] sm:$0xff] %v1916
    %1981 = vst [vmem:[#allocation3 + $0x198] sm:$0xff] %v1917
    %1982 = vst [vmem:[#allocation3 + $0x1e0] sm:$0xff] %v1918
    %1983 = vst [vmem:[#allocation3 + $0x228] sm:$0xff] %v1919
    %1984 = vst [vmem:[#allocation3 + $0x270] sm:$0xff] %v1920
    %1985 = vst [vmem:[#allocation3 + $0x2b8] sm:$0xff] %v1921
    %1986 = vst [vmem:[#allocation3 + $0x300] sm:$0xff] %v1922
    %1987 = vst [vmem:[#allocation3 + $0x348] sm:$0xff] %v1923
    %1988 = vst [vmem:[#allocation3 + $0x390] sm:$0xff] %v1924
    %1989 = vst [vmem:[#allocation3 + $0x3d8] sm:$0xff] %v1925
    %1990 = vst [vmem:[#allocation3 + $0x420] sm:$0xff] %v1926
    %1991 = vst [vmem:[#allocation3 + $0x468] sm:$0xff] %v1927
    %1992 = vst [vmem:[#allocation3 + $0x4b0] sm:$0xff] %v1928
    %1993 = vst [vmem:[#allocation3 + $0x4f8] sm:$0xff] %v1929
    %1994 = vst [vmem:[#allocation3 + $0x540] sm:$0xff] %v1930
    %1995 = vst [vmem:[#allocation3 + $0x588] sm:$0xff] %v1931
    %1996 = vst [vmem:[#allocation3 + $0x5d0] sm:$0xff] %v1932
    %1997 = vst [vmem:[#allocation3 + $0x618] sm:$0xff] %v1933
    %1998 = vst [vmem:[#allocation3 + $0x660] sm:$0xff] %v1934
    %1999 = vst [vmem:[#allocation3 + $0x6a8] sm:$0xff] %v1935
    %2000 = vst [vmem:[#allocation3 + $0x6f0] sm:$0xff] %v1936
    %2001 = vst [vmem:[#allocation3 + $0x738] sm:$0xff] %v1937
    %2002 = vst [vmem:[#allocation3 + $0x780] sm:$0xff] %v1938
    %2003 = vst [vmem:[#allocation3 + $0x7c8] sm:$0xff] %v1939
    %2004 = vst [vmem:[#allocation3 + $0x810] sm:$0xff] %v1940
    %2005 = vst [vmem:[#allocation3 + $0x858] sm:$0xff] %v1941
    %2006 = vst [vmem:[#allocation3 + $0x8a0] sm:$0xff] %v1942
    %2007 = vst [vmem:[#allocation3 + $0x8e8] sm:$0xff] %v1943
    %2008 = vst [vmem:[#allocation3 + $0x930] sm:$0xff] %v1944
    %2009 = vst [vmem:[#allocation3 + $0x978] sm:$0xff] %v1945
    %2010 = vst [vmem:[#allocation3 + $0x9c0] sm:$0xff] %v1946
    %2011 = vst [vmem:[#allocation3 + $0xa08] sm:$0xff] %v1947
    %2012 = vst [vmem:[#allocation3 + $0xa50] sm:$0xff] %v1948
    %2013 = vst [vmem:[#allocation3 + $0xa98] sm:$0xff] %v1949
    %2014 = vst [vmem:[#allocation3 + $0xae0] sm:$0xff] %v1950
    %2015 = vst [vmem:[#allocation3 + $0xb28] sm:$0xff] %v1951
    %2016 = vst [vmem:[#allocation3 + $0xb70] sm:$0xff] %v1952
    %2017 = vst [vmem:[#allocation3 + $0xbb8] sm:$0xff] %v1953
    %2018 = vst [vmem:[#allocation3 + $0xc00] sm:$0xff] %v1954
    %2019 = vst [vmem:[#allocation3 + $0xc48] sm:$0xff] %v1955
    %2020 = vst [vmem:[#allocation3 + $0xc90] sm:$0xff] %v1956
    %2021 = vst [vmem:[#allocation3 + $0xcd8] sm:$0xff] %v1957
    %2022 = vst [vmem:[#allocation3 + $0xd20] sm:$0xff] %v1958
    %2023 = vst [vmem:[#allocation3 + $0xd68] sm:$0xff] %v1959
    %2024 = vst [vmem:[#allocation3 + $0xdb0] sm:$0xff] %v1960
    %2025 = vst [vmem:[#allocation3 + $0xdf8] sm:$0xff] %v1961
    %2026 = vst [vmem:[#allocation3 + $0xe40] sm:$0xff] %v1962
    %2027 = vst [vmem:[#allocation3 + $0xe88] sm:$0xff] %v1963
    %2028 = vst [vmem:[#allocation3 + $0xed0] sm:$0xff] %v1964
    %2029 = vst [vmem:[#allocation3 + $0xf18] sm:$0xff] %v1965
    %2030 = vst [vmem:[#allocation3 + $0xf60] sm:$0xff] %v1966
    %2031 = vst [vmem:[#allocation3 + $0xfa8] sm:$0xff] %v1967
    %2032 = vst [vmem:[#allocation3 + $0xff0] sm:$0xff] %v1968
    %2033 = vst [vmem:[#allocation3 + $0x1038] sm:$0xff] %v1969
    %2034 = vst [vmem:[#allocation3 + $0x1080] sm:$0xff] %v1970
    %2035 = vst [vmem:[#allocation3 + $0x10c8] sm:$0xff] %v1971
    %2036 = vst [vmem:[#allocation3 + $0x1110] sm:$0xff] %v1972
    %2037 = vst [vmem:[#allocation3 + $0x1158] sm:$0xff] %v1973
    %2038 = vst [vmem:[#allocation3 + $0x11a0] sm:$0xff] %v1974
    %2039 = vst [vmem:[#allocation3 + $0x11e8] sm:$0xff] %v1975
    %v2040 = vld [vmem:[%s1911 + $0x8] sm:$0xff]
    %v2041 = vld [vmem:[%s1911 + $0x10] sm:$0xff]
    %v2042 = vld [vmem:[%s1911 + $0x28] sm:$0xff]
    %v2043 = vld [vmem:[%s1911 + $0x30] sm:$0xff]
    %v2044 = vld [vmem:[%s1911 + $0x48] sm:$0xff]
    %v2045 = vld [vmem:[%s1911 + $0x50] sm:$0xff]
    %v2046 = vld [vmem:[%s1911 + $0x68] sm:$0xff]
    %v2047 = vld [vmem:[%s1911 + $0x70] sm:$0xff]
    %v2048 = vld [vmem:[%s1911 + $0x88] sm:$0xff]
    %v2049 = vld [vmem:[%s1911 + $0x90] sm:$0xff]
    %v2050 = vld [vmem:[%s1911 + $0xa8] sm:$0xff]
    %v2051 = vld [vmem:[%s1911 + $0xb0] sm:$0xff]
    %v2052 = vld [vmem:[%s1911 + $0xc8] sm:$0xff]
    %v2053 = vld [vmem:[%s1911 + $0xd0] sm:$0xff]
    %v2054 = vld [vmem:[%s1911 + $0xe8] sm:$0xff]
    %v2055 = vld [vmem:[%s1911 + $0xf0] sm:$0xff]
    %v2056 = vld [vmem:[%s1911 + $0x108] sm:$0xff]
    %v2057 = vld [vmem:[%s1911 + $0x110] sm:$0xff]
    %v2058 = vld [vmem:[%s1911 + $0x128] sm:$0xff]
    %v2059 = vld [vmem:[%s1911 + $0x130] sm:$0xff]
    %v2060 = vld [vmem:[%s1911 + $0x148] sm:$0xff]
    %v2061 = vld [vmem:[%s1911 + $0x150] sm:$0xff]
    %v2062 = vld [vmem:[%s1911 + $0x168] sm:$0xff]
    %v2063 = vld [vmem:[%s1911 + $0x170] sm:$0xff]
    %v2064 = vld [vmem:[%s1911 + $0x188] sm:$0xff]
    %v2065 = vld [vmem:[%s1911 + $0x190] sm:$0xff]
    %v2066 = vld [vmem:[%s1911 + $0x1a8] sm:$0xff]
    %v2067 = vld [vmem:[%s1911 + $0x1b0] sm:$0xff]
    %v2068 = vld [vmem:[%s1911 + $0x1c8] sm:$0xff]
    %v2069 = vld [vmem:[%s1911 + $0x1d0] sm:$0xff]
    %v2070 = vld [vmem:[%s1911 + $0x1e8] sm:$0xff]
    %v2071 = vld [vmem:[%s1911 + $0x1f0] sm:$0xff]
    %v2072 = vld [vmem:[%s1911 + $0x248] sm:$0xff]
    %v2073 = vld [vmem:[%s1911 + $0x250] sm:$0xff]
    %v2074 = vld [vmem:[%s1911 + $0x268] sm:$0xff]
    %v2075 = vld [vmem:[%s1911 + $0x270] sm:$0xff]
    %v2076 = vld [vmem:[%s1911 + $0x288] sm:$0xff]
    %v2077 = vld [vmem:[%s1911 + $0x290] sm:$0xff]
    %v2078 = vld [vmem:[%s1911 + $0x2a8] sm:$0xff]
    %v2079 = vld [vmem:[%s1911 + $0x2b0] sm:$0xff]
    %v2080 = vld [vmem:[%s1911 + $0x2c8] sm:$0xff]
    %v2081 = vld [vmem:[%s1911 + $0x2d0] sm:$0xff]
    %v2082 = vld [vmem:[%s1911 + $0x2e8] sm:$0xff]
    %v2083 = vld [vmem:[%s1911 + $0x2f0] sm:$0xff]
    %v2084 = vld [vmem:[%s1911 + $0x308] sm:$0xff]
    %v2085 = vld [vmem:[%s1911 + $0x310] sm:$0xff]
    %v2086 = vld [vmem:[%s1911 + $0x328] sm:$0xff]
    %v2087 = vld [vmem:[%s1911 + $0x330] sm:$0xff]
    %v2088 = vld [vmem:[%s1911 + $0x348] sm:$0xff]
    %v2089 = vld [vmem:[%s1911 + $0x350] sm:$0xff]
    %v2090 = vld [vmem:[%s1911 + $0x368] sm:$0xff]
    %v2091 = vld [vmem:[%s1911 + $0x370] sm:$0xff]
    %v2092 = vld [vmem:[%s1911 + $0x388] sm:$0xff]
    %v2093 = vld [vmem:[%s1911 + $0x390] sm:$0xff]
    %v2094 = vld [vmem:[%s1911 + $0x3a8] sm:$0xff]
    %v2095 = vld [vmem:[%s1911 + $0x3b0] sm:$0xff]
    %v2096 = vld [vmem:[%s1911 + $0x3c8] sm:$0xff]
    %v2097 = vld [vmem:[%s1911 + $0x3d0] sm:$0xff]
    %v2098 = vld [vmem:[%s1911 + $0x3e8] sm:$0xff]
    %v2099 = vld [vmem:[%s1911 + $0x3f0] sm:$0xff]
    %v2100 = vld [vmem:[%s1911 + $0x408] sm:$0xff]
    %v2101 = vld [vmem:[%s1911 + $0x410] sm:$0xff]
    %v2102 = vld [vmem:[%s1911 + $0x428] sm:$0xff]
    %v2103 = vld [vmem:[%s1911 + $0x430] sm:$0xff]
    %2104 = vst [vmem:[#allocation3 + $0x38] sm:$0xff] %v2040
    %2105 = vst [vmem:[#allocation3 + $0x80] sm:$0xff] %v2041
    %2106 = vst [vmem:[#allocation3 + $0xc8] sm:$0xff] %v2042
    %2107 = vst [vmem:[#allocation3 + $0x110] sm:$0xff] %v2043
    %2108 = vst [vmem:[#allocation3 + $0x158] sm:$0xff] %v2044
    %2109 = vst [vmem:[#allocation3 + $0x1a0] sm:$0xff] %v2045
    %2110 = vst [vmem:[#allocation3 + $0x1e8] sm:$0xff] %v2046
    %2111 = vst [vmem:[#allocation3 + $0x230] sm:$0xff] %v2047
    %2112 = vst [vmem:[#allocation3 + $0x278] sm:$0xff] %v2048
    %2113 = vst [vmem:[#allocation3 + $0x2c0] sm:$0xff] %v2049
    %2114 = vst [vmem:[#allocation3 + $0x308] sm:$0xff] %v2050
    %2115 = vst [vmem:[#allocation3 + $0x350] sm:$0xff] %v2051
    %2116 = vst [vmem:[#allocation3 + $0x398] sm:$0xff] %v2052
    %2117 = vst [vmem:[#allocation3 + $0x3e0] sm:$0xff] %v2053
    %2118 = vst [vmem:[#allocation3 + $0x428] sm:$0xff] %v2054
    %2119 = vst [vmem:[#allocation3 + $0x470] sm:$0xff] %v2055
    %2120 = vst [vmem:[#allocation3 + $0x4b8] sm:$0xff] %v2056
    %2121 = vst [vmem:[#allocation3 + $0x500] sm:$0xff] %v2057
    %2122 = vst [vmem:[#allocation3 + $0x548] sm:$0xff] %v2058
    %2123 = vst [vmem:[#allocation3 + $0x590] sm:$0xff] %v2059
    %2124 = vst [vmem:[#allocation3 + $0x5d8] sm:$0xff] %v2060
    %2125 = vst [vmem:[#allocation3 + $0x620] sm:$0xff] %v2061
    %2126 = vst [vmem:[#allocation3 + $0x668] sm:$0xff] %v2062
    %2127 = vst [vmem:[#allocation3 + $0x6b0] sm:$0xff] %v2063
    %2128 = vst [vmem:[#allocation3 + $0x6f8] sm:$0xff] %v2064
    %2129 = vst [vmem:[#allocation3 + $0x740] sm:$0xff] %v2065
    %2130 = vst [vmem:[#allocation3 + $0x788] sm:$0xff] %v2066
    %2131 = vst [vmem:[#allocation3 + $0x7d0] sm:$0xff] %v2067
    %2132 = vst [vmem:[#allocation3 + $0x818] sm:$0xff] %v2068
    %2133 = vst [vmem:[#allocation3 + $0x860] sm:$0xff] %v2069
    %2134 = vst [vmem:[#allocation3 + $0x8a8] sm:$0xff] %v2070
    %2135 = vst [vmem:[#allocation3 + $0x8f0] sm:$0xff] %v2071
    %2136 = vst [vmem:[#allocation3 + $0x938] sm:$0xff] %v2072
    %2137 = vst [vmem:[#allocation3 + $0x980] sm:$0xff] %v2073
    %2138 = vst [vmem:[#allocation3 + $0x9c8] sm:$0xff] %v2074
    %2139 = vst [vmem:[#allocation3 + $0xa10] sm:$0xff] %v2075
    %2140 = vst [vmem:[#allocation3 + $0xa58] sm:$0xff] %v2076
    %2141 = vst [vmem:[#allocation3 + $0xaa0] sm:$0xff] %v2077
    %2142 = vst [vmem:[#allocation3 + $0xae8] sm:$0xff] %v2078
    %2143 = vst [vmem:[#allocation3 + $0xb30] sm:$0xff] %v2079
    %2144 = vst [vmem:[#allocation3 + $0xb78] sm:$0xff] %v2080
    %2145 = vst [vmem:[#allocation3 + $0xbc0] sm:$0xff] %v2081
    %2146 = vst [vmem:[#allocation3 + $0xc08] sm:$0xff] %v2082
    %2147 = vst [vmem:[#allocation3 + $0xc50] sm:$0xff] %v2083
    %2148 = vst [vmem:[#allocation3 + $0xc98] sm:$0xff] %v2084
    %2149 = vst [vmem:[#allocation3 + $0xce0] sm:$0xff] %v2085
    %2150 = vst [vmem:[#allocation3 + $0xd28] sm:$0xff] %v2086
    %2151 = vst [vmem:[#allocation3 + $0xd70] sm:$0xff] %v2087
    %2152 = vst [vmem:[#allocation3 + $0xdb8] sm:$0xff] %v2088
    %2153 = vst [vmem:[#allocation3 + $0xe00] sm:$0xff] %v2089
    %2154 = vst [vmem:[#allocation3 + $0xe48] sm:$0xff] %v2090
    %2155 = vst [vmem:[#allocation3 + $0xe90] sm:$0xff] %v2091
    %2156 = vst [vmem:[#allocation3 + $0xed8] sm:$0xff] %v2092
    %2157 = vst [vmem:[#allocation3 + $0xf20] sm:$0xff] %v2093
    %2158 = vst [vmem:[#allocation3 + $0xf68] sm:$0xff] %v2094
    %2159 = vst [vmem:[#allocation3 + $0xfb0] sm:$0xff] %v2095
    %2160 = vst [vmem:[#allocation3 + $0xff8] sm:$0xff] %v2096
    %2161 = vst [vmem:[#allocation3 + $0x1040] sm:$0xff] %v2097
    %2162 = vst [vmem:[#allocation3 + $0x1088] sm:$0xff] %v2098
    %2163 = vst [vmem:[#allocation3 + $0x10d0] sm:$0xff] %v2099
    %2164 = vst [vmem:[#allocation3 + $0x1118] sm:$0xff] %v2100
    %2165 = vst [vmem:[#allocation3 + $0x1160] sm:$0xff] %v2101
    %2166 = vst [vmem:[#allocation3 + $0x11a8] sm:$0xff] %v2102
    %2167 = vst [vmem:[#allocation3 + $0x11f0] sm:$0xff] %v2103
    %v2168 = vld [vmem:[%s1911 + $0x9] sm:$0xff]
    %v2169 = vld [vmem:[%s1911 + $0x11] sm:$0xff]
    %v2170 = vld [vmem:[%s1911 + $0x29] sm:$0xff]
    %v2171 = vld [vmem:[%s1911 + $0x31] sm:$0xff]
    %v2172 = vld [vmem:[%s1911 + $0x49] sm:$0xff]
    %v2173 = vld [vmem:[%s1911 + $0x51] sm:$0xff]
    %v2174 = vld [vmem:[%s1911 + $0x69] sm:$0xff]
    %v2175 = vld [vmem:[%s1911 + $0x71] sm:$0xff]
    %v2176 = vld [vmem:[%s1911 + $0x89] sm:$0xff]
    %v2177 = vld [vmem:[%s1911 + $0x91] sm:$0xff]
    %v2178 = vld [vmem:[%s1911 + $0xa9] sm:$0xff]
    %v2179 = vld [vmem:[%s1911 + $0xb1] sm:$0xff]
    %v2180 = vld [vmem:[%s1911 + $0xc9] sm:$0xff]
    %v2181 = vld [vmem:[%s1911 + $0xd1] sm:$0xff]
    %v2182 = vld [vmem:[%s1911 + $0xe9] sm:$0xff]
    %v2183 = vld [vmem:[%s1911 + $0xf1] sm:$0xff]
    %v2184 = vld [vmem:[%s1911 + $0x109] sm:$0xff]
    %v2185 = vld [vmem:[%s1911 + $0x111] sm:$0xff]
    %v2186 = vld [vmem:[%s1911 + $0x129] sm:$0xff]
    %v2187 = vld [vmem:[%s1911 + $0x131] sm:$0xff]
    %v2188 = vld [vmem:[%s1911 + $0x149] sm:$0xff]
    %v2189 = vld [vmem:[%s1911 + $0x151] sm:$0xff]
    %v2190 = vld [vmem:[%s1911 + $0x169] sm:$0xff]
    %v2191 = vld [vmem:[%s1911 + $0x171] sm:$0xff]
    %v2192 = vld [vmem:[%s1911 + $0x189] sm:$0xff]
    %v2193 = vld [vmem:[%s1911 + $0x191] sm:$0xff]
    %v2194 = vld [vmem:[%s1911 + $0x1a9] sm:$0xff]
    %v2195 = vld [vmem:[%s1911 + $0x1b1] sm:$0xff]
    %v2196 = vld [vmem:[%s1911 + $0x1c9] sm:$0xff]
    %v2197 = vld [vmem:[%s1911 + $0x1d1] sm:$0xff]
    %v2198 = vld [vmem:[%s1911 + $0x1e9] sm:$0xff]
    %v2199 = vld [vmem:[%s1911 + $0x1f1] sm:$0xff]
    %v2200 = vld [vmem:[%s1911 + $0x249] sm:$0xff]
    %v2201 = vld [vmem:[%s1911 + $0x251] sm:$0xff]
    %v2202 = vld [vmem:[%s1911 + $0x269] sm:$0xff]
    %v2203 = vld [vmem:[%s1911 + $0x271] sm:$0xff]
    %v2204 = vld [vmem:[%s1911 + $0x289] sm:$0xff]
    %v2205 = vld [vmem:[%s1911 + $0x291] sm:$0xff]
    %v2206 = vld [vmem:[%s1911 + $0x2a9] sm:$0xff]
    %v2207 = vld [vmem:[%s1911 + $0x2b1] sm:$0xff]
    %v2208 = vld [vmem:[%s1911 + $0x2c9] sm:$0xff]
    %v2209 = vld [vmem:[%s1911 + $0x2d1] sm:$0xff]
    %v2210 = vld [vmem:[%s1911 + $0x2e9] sm:$0xff]
    %v2211 = vld [vmem:[%s1911 + $0x2f1] sm:$0xff]
    %v2212 = vld [vmem:[%s1911 + $0x309] sm:$0xff]
    %v2213 = vld [vmem:[%s1911 + $0x311] sm:$0xff]
    %v2214 = vld [vmem:[%s1911 + $0x329] sm:$0xff]
    %v2215 = vld [vmem:[%s1911 + $0x331] sm:$0xff]
    %v2216 = vld [vmem:[%s1911 + $0x349] sm:$0xff]
    %v2217 = vld [vmem:[%s1911 + $0x351] sm:$0xff]
    %v2218 = vld [vmem:[%s1911 + $0x369] sm:$0xff]
    %v2219 = vld [vmem:[%s1911 + $0x371] sm:$0xff]
    %v2220 = vld [vmem:[%s1911 + $0x389] sm:$0xff]
    %v2221 = vld [vmem:[%s1911 + $0x391] sm:$0xff]
    %v2222 = vld [vmem:[%s1911 + $0x3a9] sm:$0xff]
    %v2223 = vld [vmem:[%s1911 + $0x3b1] sm:$0xff]
    %v2224 = vld [vmem:[%s1911 + $0x3c9] sm:$0xff]
    %v2225 = vld [vmem:[%s1911 + $0x3d1] sm:$0xff]
    %v2226 = vld [vmem:[%s1911 + $0x3e9] sm:$0xff]
    %v2227 = vld [vmem:[%s1911 + $0x3f1] sm:$0xff]
    %v2228 = vld [vmem:[%s1911 + $0x409] sm:$0xff]
    %v2229 = vld [vmem:[%s1911 + $0x411] sm:$0xff]
    %v2230 = vld [vmem:[%s1911 + $0x429] sm:$0xff]
    %v2231 = vld [vmem:[%s1911 + $0x431] sm:$0xff]
    %2232 = vst [vmem:[#allocation3 + $0x40] sm:$0xff] %v2168
    %2233 = vst [vmem:[#allocation3 + $0x88] sm:$0xff] %v2169
    %2234 = vst [vmem:[#allocation3 + $0xd0] sm:$0xff] %v2170
    %2235 = vst [vmem:[#allocation3 + $0x118] sm:$0xff] %v2171
    %2236 = vst [vmem:[#allocation3 + $0x160] sm:$0xff] %v2172
    %2237 = vst [vmem:[#allocation3 + $0x1a8] sm:$0xff] %v2173
    %2238 = vst [vmem:[#allocation3 + $0x1f0] sm:$0xff] %v2174
    %2239 = vst [vmem:[#allocation3 + $0x238] sm:$0xff] %v2175
    %2240 = vst [vmem:[#allocation3 + $0x280] sm:$0xff] %v2176
    %2241 = vst [vmem:[#allocation3 + $0x2c8] sm:$0xff] %v2177
    %2242 = vst [vmem:[#allocation3 + $0x310] sm:$0xff] %v2178
    %2243 = vst [vmem:[#allocation3 + $0x358] sm:$0xff] %v2179
    %2244 = vst [vmem:[#allocation3 + $0x3a0] sm:$0xff] %v2180
    %2245 = vst [vmem:[#allocation3 + $0x3e8] sm:$0xff] %v2181
    %2246 = vst [vmem:[#allocation3 + $0x430] sm:$0xff] %v2182
    %2247 = vst [vmem:[#allocation3 + $0x478] sm:$0xff] %v2183
    %2248 = vst [vmem:[#allocation3 + $0x4c0] sm:$0xff] %v2184
    %2249 = vst [vmem:[#allocation3 + $0x508] sm:$0xff] %v2185
    %2250 = vst [vmem:[#allocation3 + $0x550] sm:$0xff] %v2186
    %2251 = vst [vmem:[#allocation3 + $0x598] sm:$0xff] %v2187
    %2252 = vst [vmem:[#allocation3 + $0x5e0] sm:$0xff] %v2188
    %2253 = vst [vmem:[#allocation3 + $0x628] sm:$0xff] %v2189
    %2254 = vst [vmem:[#allocation3 + $0x670] sm:$0xff] %v2190
    %2255 = vst [vmem:[#allocation3 + $0x6b8] sm:$0xff] %v2191
    %2256 = vst [vmem:[#allocation3 + $0x700] sm:$0xff] %v2192
    %2257 = vst [vmem:[#allocation3 + $0x748] sm:$0xff] %v2193
    %2258 = vst [vmem:[#allocation3 + $0x790] sm:$0xff] %v2194
    %2259 = vst [vmem:[#allocation3 + $0x7d8] sm:$0xff] %v2195
    %2260 = vst [vmem:[#allocation3 + $0x820] sm:$0xff] %v2196
    %2261 = vst [vmem:[#allocation3 + $0x868] sm:$0xff] %v2197
    %2262 = vst [vmem:[#allocation3 + $0x8b0] sm:$0xff] %v2198
    %2263 = vst [vmem:[#allocation3 + $0x8f8] sm:$0xff] %v2199
    %2264 = vst [vmem:[#allocation3 + $0x940] sm:$0xff] %v2200
    %2265 = vst [vmem:[#allocation3 + $0x988] sm:$0xff] %v2201
    %2266 = vst [vmem:[#allocation3 + $0x9d0] sm:$0xff] %v2202
    %2267 = vst [vmem:[#allocation3 + $0xa18] sm:$0xff] %v2203
    %2268 = vst [vmem:[#allocation3 + $0xa60] sm:$0xff] %v2204
    %2269 = vst [vmem:[#allocation3 + $0xaa8] sm:$0xff] %v2205
    %2270 = vst [vmem:[#allocation3 + $0xaf0] sm:$0xff] %v2206
    %2271 = vst [vmem:[#allocation3 + $0xb38] sm:$0xff] %v2207
    %2272 = vst [vmem:[#allocation3 + $0xb80] sm:$0xff] %v2208
    %2273 = vst [vmem:[#allocation3 + $0xbc8] sm:$0xff] %v2209
    %2274 = vst [vmem:[#allocation3 + $0xc10] sm:$0xff] %v2210
    %2275 = vst [vmem:[#allocation3 + $0xc58] sm:$0xff] %v2211
    %2276 = vst [vmem:[#allocation3 + $0xca0] sm:$0xff] %v2212
    %2277 = vst [vmem:[#allocation3 + $0xce8] sm:$0xff] %v2213
    %2278 = vst [vmem:[#allocation3 + $0xd30] sm:$0xff] %v2214
    %2279 = vst [vmem:[#allocation3 + $0xd78] sm:$0xff] %v2215
    %2280 = vst [vmem:[#allocation3 + $0xdc0] sm:$0xff] %v2216
    %2281 = vst [vmem:[#allocation3 + $0xe08] sm:$0xff] %v2217
    %2282 = vst [vmem:[#allocation3 + $0xe50] sm:$0xff] %v2218
    %2283 = vst [vmem:[#allocation3 + $0xe98] sm:$0xff] %v2219
    %2284 = vst [vmem:[#allocation3 + $0xee0] sm:$0xff] %v2220
    %2285 = vst [vmem:[#allocation3 + $0xf28] sm:$0xff] %v2221
    %2286 = vst [vmem:[#allocation3 + $0xf70] sm:$0xff] %v2222
    %2287 = vst [vmem:[#allocation3 + $0xfb8] sm:$0xff] %v2223
    %2288 = vst [vmem:[#allocation3 + $0x1000] sm:$0xff] %v2224
    %2289 = vst [vmem:[#allocation3 + $0x1048] sm:$0xff] %v2225
    %2290 = vst [vmem:[#allocation3 + $0x1090] sm:$0xff] %v2226
    %2291 = vst [vmem:[#allocation3 + $0x10d8] sm:$0xff] %v2227
    %2292 = vst [vmem:[#allocation3 + $0x1120] sm:$0xff] %v2228
    %2293 = vst [vmem:[#allocation3 + $0x1168] sm:$0xff] %v2229
    %2294 = vst [vmem:[#allocation3 + $0x11b0] sm:$0xff] %v2230
    %2295 = vst [vmem:[#allocation3 + $0x11f8] sm:$0xff] %v2231
    %v2296 = vld [vmem:[#allocation3] sm:$0xff]
    %v2297 = vld [vmem:[#allocation3 + $0x8] sm:$0xff]
    %v2298 = vld [vmem:[#allocation3 + $0x10] sm:$0xff]
    %v2299 = vld [vmem:[#allocation3 + $0x18] sm:$0xff]
    %v2300 = vld [vmem:[#allocation3 + $0x20] sm:$0xff]
    %v2301 = vld [vmem:[#allocation3 + $0x28] sm:$0xff]
    %v2302 = vld [vmem:[#allocation3 + $0x30] sm:$0xff]
    %v2303 = vld [vmem:[#allocation3 + $0x38] sm:$0xff]
    %v2304 = vld [vmem:[#allocation3 + $0x40] sm:$0xff]
    %v2305 = vld [vmem:[#allocation3 + $0x48] sm:$0xff]
    %v2306 = vld [vmem:[#allocation3 + $0x50] sm:$0xff]
    %v2307 = vld [vmem:[#allocation3 + $0x58] sm:$0xff]
    %v2308 = vld [vmem:[#allocation3 + $0x60] sm:$0xff]
    %v2309 = vld [vmem:[#allocation3 + $0x68] sm:$0xff]
    %v2310 = vld [vmem:[#allocation3 + $0x70] sm:$0xff]
    %v2311 = vld [vmem:[#allocation3 + $0x78] sm:$0xff]
    %v2312 = vld [vmem:[#allocation3 + $0x80] sm:$0xff]
    %v2313 = vld [vmem:[#allocation3 + $0x88] sm:$0xff]
    %v2314 = vld [vmem:[#allocation3 + $0x90] sm:$0xff]
    %v2315 = vld [vmem:[#allocation3 + $0x98] sm:$0xff]
    %v2316 = vld [vmem:[#allocation3 + $0xa0] sm:$0xff]
    %v2317 = vld [vmem:[#allocation3 + $0xa8] sm:$0xff]
    %v2318 = vld [vmem:[#allocation3 + $0xb0] sm:$0xff]
    %v2319 = vld [vmem:[#allocation3 + $0xb8] sm:$0xff]
    %v2320 = vld [vmem:[#allocation3 + $0xc0] sm:$0xff]
    %v2321 = vld [vmem:[#allocation3 + $0xc8] sm:$0xff]
    %v2322 = vld [vmem:[#allocation3 + $0xd0] sm:$0xff]
    %v2323 = vld [vmem:[#allocation3 + $0xd8] sm:$0xff]
    %v2324 = vld [vmem:[#allocation3 + $0xe0] sm:$0xff]
    %v2325 = vld [vmem:[#allocation3 + $0xe8] sm:$0xff]
    %v2326 = vld [vmem:[#allocation3 + $0xf0] sm:$0xff]
    %v2327 = vld [vmem:[#allocation3 + $0xf8] sm:$0xff]
    %v2328 = vld [vmem:[#allocation3 + $0x100] sm:$0xff]
    %v2329 = vld [vmem:[#allocation3 + $0x108] sm:$0xff]
    %v2330 = vld [vmem:[#allocation3 + $0x110] sm:$0xff]
    %v2331 = vld [vmem:[#allocation3 + $0x118] sm:$0xff]
    %v2332 = vld [vmem:[#allocation3 + $0x120] sm:$0xff]
    %v2333 = vld [vmem:[#allocation3 + $0x128] sm:$0xff]
    %v2334 = vld [vmem:[#allocation3 + $0x130] sm:$0xff]
    %v2335 = vld [vmem:[#allocation3 + $0x138] sm:$0xff]
    %v2336 = vld [vmem:[#allocation3 + $0x140] sm:$0xff]
    %v2337 = vld [vmem:[#allocation3 + $0x148] sm:$0xff]
    %v2338 = vld [vmem:[#allocation3 + $0x150] sm:$0xff]
    %v2339 = vld [vmem:[#allocation3 + $0x158] sm:$0xff]
    %v2340 = vld [vmem:[#allocation3 + $0x160] sm:$0xff]
    %v2341 = vld [vmem:[#allocation3 + $0x168] sm:$0xff]
    %v2342 = vld [vmem:[#allocation3 + $0x170] sm:$0xff]
    %v2343 = vld [vmem:[#allocation3 + $0x178] sm:$0xff]
    %v2344 = vld [vmem:[#allocation3 + $0x180] sm:$0xff]
    %v2345 = vld [vmem:[#allocation3 + $0x188] sm:$0xff]
    %v2346 = vld [vmem:[#allocation3 + $0x190] sm:$0xff]
    %v2347 = vld [vmem:[#allocation3 + $0x198] sm:$0xff]
    %v2348 = vld [vmem:[#allocation3 + $0x1a0] sm:$0xff]
    %v2349 = vld [vmem:[#allocation3 + $0x1a8] sm:$0xff]
    %v2350 = vld [vmem:[#allocation3 + $0x1b0] sm:$0xff]
    %v2351 = vld [vmem:[#allocation3 + $0x1b8] sm:$0xff]
    %v2352 = vld [vmem:[#allocation3 + $0x1c0] sm:$0xff]
    %v2353 = vld [vmem:[#allocation3 + $0x1c8] sm:$0xff]
    %v2354 = vld [vmem:[#allocation3 + $0x1d0] sm:$0xff]
    %v2355 = vld [vmem:[#allocation3 + $0x1d8] sm:$0xff]
    %v2356 = vld [vmem:[#allocation3 + $0x1e0] sm:$0xff]
    %v2357 = vld [vmem:[#allocation3 + $0x1e8] sm:$0xff]
    %v2358 = vld [vmem:[#allocation3 + $0x1f0] sm:$0xff]
    %v2359 = vld [vmem:[#allocation3 + $0x1f8] sm:$0xff]
    %v2360 = vld [vmem:[#allocation3 + $0x200] sm:$0xff]
    %v2361 = vld [vmem:[#allocation3 + $0x208] sm:$0xff]
    %v2362 = vld [vmem:[#allocation3 + $0x210] sm:$0xff]
    %v2363 = vld [vmem:[#allocation3 + $0x218] sm:$0xff]
    %v2364 = vld [vmem:[#allocation3 + $0x220] sm:$0xff]
    %v2365 = vld [vmem:[#allocation3 + $0x228] sm:$0xff]
    %v2366 = vld [vmem:[#allocation3 + $0x230] sm:$0xff]
    %v2367 = vld [vmem:[#allocation3 + $0x238] sm:$0xff]
    %v2368 = vld [vmem:[#allocation3 + $0x240] sm:$0xff]
    %v2369 = vld [vmem:[#allocation3 + $0x248] sm:$0xff]
    %v2370 = vld [vmem:[#allocation3 + $0x250] sm:$0xff]
    %v2371 = vld [vmem:[#allocation3 + $0x258] sm:$0xff]
    %v2372 = vld [vmem:[#allocation3 + $0x260] sm:$0xff]
    %v2373 = vld [vmem:[#allocation3 + $0x268] sm:$0xff]
    %v2374 = vld [vmem:[#allocation3 + $0x270] sm:$0xff]
    %v2375 = vld [vmem:[#allocation3 + $0x278] sm:$0xff]
    %v2376 = vld [vmem:[#allocation3 + $0x280] sm:$0xff]
    %v2377 = vld [vmem:[#allocation3 + $0x288] sm:$0xff]
    %v2378 = vld [vmem:[#allocation3 + $0x290] sm:$0xff]
    %v2379 = vld [vmem:[#allocation3 + $0x298] sm:$0xff]
    %v2380 = vld [vmem:[#allocation3 + $0x2a0] sm:$0xff]
    %v2381 = vld [vmem:[#allocation3 + $0x2a8] sm:$0xff]
    %v2382 = vld [vmem:[#allocation3 + $0x2b0] sm:$0xff]
    %v2383 = vld [vmem:[#allocation3 + $0x2b8] sm:$0xff]
    %v2384 = vld [vmem:[#allocation3 + $0x2c0] sm:$0xff]
    %v2385 = vld [vmem:[#allocation3 + $0x2c8] sm:$0xff]
    %v2386 = vld [vmem:[#allocation3 + $0x2d0] sm:$0xff]
    %v2387 = vld [vmem:[#allocation3 + $0x2d8] sm:$0xff]
    %v2388 = vld [vmem:[#allocation3 + $0x2e0] sm:$0xff]
    %v2389 = vld [vmem:[#allocation3 + $0x2e8] sm:$0xff]
    %v2390 = vld [vmem:[#allocation3 + $0x2f0] sm:$0xff]
    %v2391 = vld [vmem:[#allocation3 + $0x2f8] sm:$0xff]
    %v2392 = vld [vmem:[#allocation3 + $0x300] sm:$0xff]
    %v2393 = vld [vmem:[#allocation3 + $0x308] sm:$0xff]
    %v2394 = vld [vmem:[#allocation3 + $0x310] sm:$0xff]
    %v2395 = vld [vmem:[#allocation3 + $0x318] sm:$0xff]
    %v2396 = vld [vmem:[#allocation3 + $0x320] sm:$0xff]
    %v2397 = vld [vmem:[#allocation3 + $0x328] sm:$0xff]
    %v2398 = vld [vmem:[#allocation3 + $0x330] sm:$0xff]
    %v2399 = vld [vmem:[#allocation3 + $0x338] sm:$0xff]
    %v2400 = vld [vmem:[#allocation3 + $0x340] sm:$0xff]
    %v2401 = vld [vmem:[#allocation3 + $0x348] sm:$0xff]
    %v2402 = vld [vmem:[#allocation3 + $0x350] sm:$0xff]
    %v2403 = vld [vmem:[#allocation3 + $0x358] sm:$0xff]
    %v2404 = vld [vmem:[#allocation3 + $0x360] sm:$0xff]
    %v2405 = vld [vmem:[#allocation3 + $0x368] sm:$0xff]
    %v2406 = vld [vmem:[#allocation3 + $0x370] sm:$0xff]
    %v2407 = vld [vmem:[#allocation3 + $0x378] sm:$0xff]
    %v2408 = vld [vmem:[#allocation3 + $0x380] sm:$0xff]
    %v2409 = vld [vmem:[#allocation3 + $0x388] sm:$0xff]
    %v2410 = vld [vmem:[#allocation3 + $0x390] sm:$0xff]
    %v2411 = vld [vmem:[#allocation3 + $0x398] sm:$0xff]
    %v2412 = vld [vmem:[#allocation3 + $0x3a0] sm:$0xff]
    %v2413 = vld [vmem:[#allocation3 + $0x3a8] sm:$0xff]
    %v2414 = vld [vmem:[#allocation3 + $0x3b0] sm:$0xff]
    %v2415 = vld [vmem:[#allocation3 + $0x3b8] sm:$0xff]
    %v2416 = vld [vmem:[#allocation3 + $0x3c0] sm:$0xff]
    %v2417 = vld [vmem:[#allocation3 + $0x3c8] sm:$0xff]
    %v2418 = vld [vmem:[#allocation3 + $0x3d0] sm:$0xff]
    %v2419 = vld [vmem:[#allocation3 + $0x3d8] sm:$0xff]
    %v2420 = vld [vmem:[#allocation3 + $0x3e0] sm:$0xff]
    %v2421 = vld [vmem:[#allocation3 + $0x3e8] sm:$0xff]
    %v2422 = vld [vmem:[#allocation3 + $0x3f0] sm:$0xff]
    %v2423 = vld [vmem:[#allocation3 + $0x3f8] sm:$0xff]
    %v2424 = vld [vmem:[#allocation3 + $0x400] sm:$0xff]
    %v2425 = vld [vmem:[#allocation3 + $0x408] sm:$0xff]
    %v2426 = vld [vmem:[#allocation3 + $0x410] sm:$0xff]
    %v2427 = vld [vmem:[#allocation3 + $0x418] sm:$0xff]
    %v2428 = vld [vmem:[#allocation3 + $0x420] sm:$0xff]
    %v2429 = vld [vmem:[#allocation3 + $0x428] sm:$0xff]
    %v2430 = vld [vmem:[#allocation3 + $0x430] sm:$0xff]
    %v2431 = vld [vmem:[#allocation3 + $0x438] sm:$0xff]
    %v2432 = vld [vmem:[#allocation3 + $0x440] sm:$0xff]
    %v2433 = vld [vmem:[#allocation3 + $0x448] sm:$0xff]
    %v2434 = vld [vmem:[#allocation3 + $0x450] sm:$0xff]
    %v2435 = vld [vmem:[#allocation3 + $0x458] sm:$0xff]
    %v2436 = vld [vmem:[#allocation3 + $0x460] sm:$0xff]
    %v2437 = vld [vmem:[#allocation3 + $0x468] sm:$0xff]
    %v2438 = vld [vmem:[#allocation3 + $0x470] sm:$0xff]
    %v2439 = vld [vmem:[#allocation3 + $0x478] sm:$0xff]
    %v2440 = vld [vmem:[#allocation3 + $0x480] sm:$0xff]
    %v2441 = vld [vmem:[#allocation3 + $0x488] sm:$0xff]
    %v2442 = vld [vmem:[#allocation3 + $0x490] sm:$0xff]
    %v2443 = vld [vmem:[#allocation3 + $0x498] sm:$0xff]
    %v2444 = vld [vmem:[#allocation3 + $0x4a0] sm:$0xff]
    %v2445 = vld [vmem:[#allocation3 + $0x4a8] sm:$0xff]
    %v2446 = vld [vmem:[#allocation3 + $0x4b0] sm:$0xff]
    %v2447 = vld [vmem:[#allocation3 + $0x4b8] sm:$0xff]
    %v2448 = vld [vmem:[#allocation3 + $0x4c0] sm:$0xff]
    %v2449 = vld [vmem:[#allocation3 + $0x4c8] sm:$0xff]
    %v2450 = vld [vmem:[#allocation3 + $0x4d0] sm:$0xff]
    %v2451 = vld [vmem:[#allocation3 + $0x4d8] sm:$0xff]
    %v2452 = vld [vmem:[#allocation3 + $0x4e0] sm:$0xff]
    %v2453 = vld [vmem:[#allocation3 + $0x4e8] sm:$0xff]
    %v2454 = vld [vmem:[#allocation3 + $0x4f0] sm:$0xff]
    %v2455 = vld [vmem:[#allocation3 + $0x4f8] sm:$0xff]
    %v2456 = vld [vmem:[#allocation3 + $0x500] sm:$0xff]
    %v2457 = vld [vmem:[#allocation3 + $0x508] sm:$0xff]
    %v2458 = vld [vmem:[#allocation3 + $0x510] sm:$0xff]
    %v2459 = vld [vmem:[#allocation3 + $0x518] sm:$0xff]
    %v2460 = vld [vmem:[#allocation3 + $0x520] sm:$0xff]
    %v2461 = vld [vmem:[#allocation3 + $0x528] sm:$0xff]
    %v2462 = vld [vmem:[#allocation3 + $0x530] sm:$0xff]
    %v2463 = vld [vmem:[#allocation3 + $0x538] sm:$0xff]
    %v2464 = vld [vmem:[#allocation3 + $0x540] sm:$0xff]
    %v2465 = vld [vmem:[#allocation3 + $0x548] sm:$0xff]
    %v2466 = vld [vmem:[#allocation3 + $0x550] sm:$0xff]
    %v2467 = vld [vmem:[#allocation3 + $0x558] sm:$0xff]
    %v2468 = vld [vmem:[#allocation3 + $0x560] sm:$0xff]
    %v2469 = vld [vmem:[#allocation3 + $0x568] sm:$0xff]
    %v2470 = vld [vmem:[#allocation3 + $0x570] sm:$0xff]
    %v2471 = vld [vmem:[#allocation3 + $0x578] sm:$0xff]
    %v2472 = vld [vmem:[#allocation3 + $0x580] sm:$0xff]
    %v2473 = vld [vmem:[#allocation3 + $0x588] sm:$0xff]
    %v2474 = vld [vmem:[#allocation3 + $0x590] sm:$0xff]
    %v2475 = vld [vmem:[#allocation3 + $0x598] sm:$0xff]
    %v2476 = vld [vmem:[#allocation3 + $0x5a0] sm:$0xff]
    %v2477 = vld [vmem:[#allocation3 + $0x5a8] sm:$0xff]
    %v2478 = vld [vmem:[#allocation3 + $0x5b0] sm:$0xff]
    %v2479 = vld [vmem:[#allocation3 + $0x5b8] sm:$0xff]
    %v2480 = vld [vmem:[#allocation3 + $0x5c0] sm:$0xff]
    %v2481 = vld [vmem:[#allocation3 + $0x5c8] sm:$0xff]
    %v2482 = vld [vmem:[#allocation3 + $0x5d0] sm:$0xff]
    %v2483 = vld [vmem:[#allocation3 + $0x5d8] sm:$0xff]
    %v2484 = vld [vmem:[#allocation3 + $0x5e0] sm:$0xff]
    %v2485 = vld [vmem:[#allocation3 + $0x5e8] sm:$0xff]
    %v2486 = vld [vmem:[#allocation3 + $0x5f0] sm:$0xff]
    %v2487 = vld [vmem:[#allocation3 + $0x5f8] sm:$0xff]
    %v2488 = vld [vmem:[#allocation3 + $0x600] sm:$0xff]
    %v2489 = vld [vmem:[#allocation3 + $0x608] sm:$0xff]
    %v2490 = vld [vmem:[#allocation3 + $0x610] sm:$0xff]
    %v2491 = vld [vmem:[#allocation3 + $0x618] sm:$0xff]
    %v2492 = vld [vmem:[#allocation3 + $0x620] sm:$0xff]
    %v2493 = vld [vmem:[#allocation3 + $0x628] sm:$0xff]
    %v2494 = vld [vmem:[#allocation3 + $0x630] sm:$0xff]
    %v2495 = vld [vmem:[#allocation3 + $0x638] sm:$0xff]
    %v2496 = vld [vmem:[#allocation3 + $0x640] sm:$0xff]
    %v2497 = vld [vmem:[#allocation3 + $0x648] sm:$0xff]
    %v2498 = vld [vmem:[#allocation3 + $0x650] sm:$0xff]
    %v2499 = vld [vmem:[#allocation3 + $0x658] sm:$0xff]
    %v2500 = vld [vmem:[#allocation3 + $0x660] sm:$0xff]
    %v2501 = vld [vmem:[#allocation3 + $0x668] sm:$0xff]
    %v2502 = vld [vmem:[#allocation3 + $0x670] sm:$0xff]
    %v2503 = vld [vmem:[#allocation3 + $0x678] sm:$0xff]
    %v2504 = vld [vmem:[#allocation3 + $0x680] sm:$0xff]
    %v2505 = vld [vmem:[#allocation3 + $0x688] sm:$0xff]
    %v2506 = vld [vmem:[#allocation3 + $0x690] sm:$0xff]
    %v2507 = vld [vmem:[#allocation3 + $0x698] sm:$0xff]
    %v2508 = vld [vmem:[#allocation3 + $0x6a0] sm:$0xff]
    %v2509 = vld [vmem:[#allocation3 + $0x6a8] sm:$0xff]
    %v2510 = vld [vmem:[#allocation3 + $0x6b0] sm:$0xff]
    %v2511 = vld [vmem:[#allocation3 + $0x6b8] sm:$0xff]
    %v2512 = vld [vmem:[#allocation3 + $0x6c0] sm:$0xff]
    %v2513 = vld [vmem:[#allocation3 + $0x6c8] sm:$0xff]
    %v2514 = vld [vmem:[#allocation3 + $0x6d0] sm:$0xff]
    %v2515 = vld [vmem:[#allocation3 + $0x6d8] sm:$0xff]
    %v2516 = vld [vmem:[#allocation3 + $0x6e0] sm:$0xff]
    %v2517 = vld [vmem:[#allocation3 + $0x6e8] sm:$0xff]
    %v2518 = vld [vmem:[#allocation3 + $0x6f0] sm:$0xff]
    %v2519 = vld [vmem:[#allocation3 + $0x6f8] sm:$0xff]
    %v2520 = vld [vmem:[#allocation3 + $0x700] sm:$0xff]
    %v2521 = vld [vmem:[#allocation3 + $0x708] sm:$0xff]
    %v2522 = vld [vmem:[#allocation3 + $0x710] sm:$0xff]
    %v2523 = vld [vmem:[#allocation3 + $0x718] sm:$0xff]
    %v2524 = vld [vmem:[#allocation3 + $0x720] sm:$0xff]
    %v2525 = vld [vmem:[#allocation3 + $0x728] sm:$0xff]
    %v2526 = vld [vmem:[#allocation3 + $0x730] sm:$0xff]
    %v2527 = vld [vmem:[#allocation3 + $0x738] sm:$0xff]
    %v2528 = vld [vmem:[#allocation3 + $0x740] sm:$0xff]
    %v2529 = vld [vmem:[#allocation3 + $0x748] sm:$0xff]
    %v2530 = vld [vmem:[#allocation3 + $0x750] sm:$0xff]
    %v2531 = vld [vmem:[#allocation3 + $0x758] sm:$0xff]
    %v2532 = vld [vmem:[#allocation3 + $0x760] sm:$0xff]
    %v2533 = vld [vmem:[#allocation3 + $0x768] sm:$0xff]
    %v2534 = vld [vmem:[#allocation3 + $0x770] sm:$0xff]
    %v2535 = vld [vmem:[#allocation3 + $0x778] sm:$0xff]
    %v2536 = vld [vmem:[#allocation3 + $0x780] sm:$0xff]
    %v2537 = vld [vmem:[#allocation3 + $0x788] sm:$0xff]
    %v2538 = vld [vmem:[#allocation3 + $0x790] sm:$0xff]
    %v2539 = vld [vmem:[#allocation3 + $0x798] sm:$0xff]
    %v2540 = vld [vmem:[#allocation3 + $0x7a0] sm:$0xff]
    %v2541 = vld [vmem:[#allocation3 + $0x7a8] sm:$0xff]
    %v2542 = vld [vmem:[#allocation3 + $0x7b0] sm:$0xff]
    %v2543 = vld [vmem:[#allocation3 + $0x7b8] sm:$0xff]
    %v2544 = vld [vmem:[#allocation3 + $0x7c0] sm:$0xff]
    %v2545 = vld [vmem:[#allocation3 + $0x7c8] sm:$0xff]
    %v2546 = vld [vmem:[#allocation3 + $0x7d0] sm:$0xff]
    %v2547 = vld [vmem:[#allocation3 + $0x7d8] sm:$0xff]
    %v2548 = vld [vmem:[#allocation3 + $0x7e0] sm:$0xff]
    %v2549 = vld [vmem:[#allocation3 + $0x7e8] sm:$0xff]
    %v2550 = vld [vmem:[#allocation3 + $0x7f0] sm:$0xff]
    %v2551 = vld [vmem:[#allocation3 + $0x7f8] sm:$0xff]
    %v2552 = vld [vmem:[#allocation3 + $0x800] sm:$0xff]
    %v2553 = vld [vmem:[#allocation3 + $0x808] sm:$0xff]
    %v2554 = vld [vmem:[#allocation3 + $0x810] sm:$0xff]
    %v2555 = vld [vmem:[#allocation3 + $0x818] sm:$0xff]
    %v2556 = vld [vmem:[#allocation3 + $0x820] sm:$0xff]
    %v2557 = vld [vmem:[#allocation3 + $0x828] sm:$0xff]
    %v2558 = vld [vmem:[#allocation3 + $0x830] sm:$0xff]
    %v2559 = vld [vmem:[#allocation3 + $0x838] sm:$0xff]
    %v2560 = vld [vmem:[#allocation3 + $0x840] sm:$0xff]
    %v2561 = vld [vmem:[#allocation3 + $0x848] sm:$0xff]
    %v2562 = vld [vmem:[#allocation3 + $0x850] sm:$0xff]
    %v2563 = vld [vmem:[#allocation3 + $0x858] sm:$0xff]
    %v2564 = vld [vmem:[#allocation3 + $0x860] sm:$0xff]
    %v2565 = vld [vmem:[#allocation3 + $0x868] sm:$0xff]
    %v2566 = vld [vmem:[#allocation3 + $0x870] sm:$0xff]
    %v2567 = vld [vmem:[#allocation3 + $0x878] sm:$0xff]
    %v2568 = vld [vmem:[#allocation3 + $0x880] sm:$0xff]
    %v2569 = vld [vmem:[#allocation3 + $0x888] sm:$0xff]
    %v2570 = vld [vmem:[#allocation3 + $0x890] sm:$0xff]
    %v2571 = vld [vmem:[#allocation3 + $0x898] sm:$0xff]
    %v2572 = vld [vmem:[#allocation3 + $0x8a0] sm:$0xff]
    %v2573 = vld [vmem:[#allocation3 + $0x8a8] sm:$0xff]
    %v2574 = vld [vmem:[#allocation3 + $0x8b0] sm:$0xff]
    %v2575 = vld [vmem:[#allocation3 + $0x8b8] sm:$0xff]
    %v2576 = vld [vmem:[#allocation3 + $0x8c0] sm:$0xff]
    %v2577 = vld [vmem:[#allocation3 + $0x8c8] sm:$0xff]
    %v2578 = vld [vmem:[#allocation3 + $0x8d0] sm:$0xff]
    %v2579 = vld [vmem:[#allocation3 + $0x8d8] sm:$0xff]
    %v2580 = vld [vmem:[#allocation3 + $0x8e0] sm:$0xff]
    %v2581 = vld [vmem:[#allocation3 + $0x8e8] sm:$0xff]
    %v2582 = vld [vmem:[#allocation3 + $0x8f0] sm:$0xff]
    %v2583 = vld [vmem:[#allocation3 + $0x8f8] sm:$0xff]
    %v2584 = vld [vmem:[#allocation3 + $0x900] sm:$0xff]
    %v2585 = vld [vmem:[#allocation3 + $0x908] sm:$0xff]
    %v2586 = vld [vmem:[#allocation3 + $0x910] sm:$0xff]
    %v2587 = vld [vmem:[#allocation3 + $0x918] sm:$0xff]
    %v2588 = vld [vmem:[#allocation3 + $0x920] sm:$0xff]
    %v2589 = vld [vmem:[#allocation3 + $0x928] sm:$0xff]
    %v2590 = vld [vmem:[#allocation3 + $0x930] sm:$0xff]
    %v2591 = vld [vmem:[#allocation3 + $0x938] sm:$0xff]
    %v2592 = vld [vmem:[#allocation3 + $0x940] sm:$0xff]
    %v2593 = vld [vmem:[#allocation3 + $0x948] sm:$0xff]
    %v2594 = vld [vmem:[#allocation3 + $0x950] sm:$0xff]
    %v2595 = vld [vmem:[#allocation3 + $0x958] sm:$0xff]
    %v2596 = vld [vmem:[#allocation3 + $0x960] sm:$0xff]
    %v2597 = vld [vmem:[#allocation3 + $0x968] sm:$0xff]
    %v2598 = vld [vmem:[#allocation3 + $0x970] sm:$0xff]
    %v2599 = vld [vmem:[#allocation3 + $0x978] sm:$0xff]
    %v2600 = vld [vmem:[#allocation3 + $0x980] sm:$0xff]
    %v2601 = vld [vmem:[#allocation3 + $0x988] sm:$0xff]
    %v2602 = vld [vmem:[#allocation3 + $0x990] sm:$0xff]
    %v2603 = vld [vmem:[#allocation3 + $0x998] sm:$0xff]
    %v2604 = vld [vmem:[#allocation3 + $0x9a0] sm:$0xff]
    %v2605 = vld [vmem:[#allocation3 + $0x9a8] sm:$0xff]
    %v2606 = vld [vmem:[#allocation3 + $0x9b0] sm:$0xff]
    %v2607 = vld [vmem:[#allocation3 + $0x9b8] sm:$0xff]
    %v2608 = vld [vmem:[#allocation3 + $0x9c0] sm:$0xff]
    %v2609 = vld [vmem:[#allocation3 + $0x9c8] sm:$0xff]
    %v2610 = vld [vmem:[#allocation3 + $0x9d0] sm:$0xff]
    %v2611 = vld [vmem:[#allocation3 + $0x9d8] sm:$0xff]
    %v2612 = vld [vmem:[#allocation3 + $0x9e0] sm:$0xff]
    %v2613 = vld [vmem:[#allocation3 + $0x9e8] sm:$0xff]
    %v2614 = vld [vmem:[#allocation3 + $0x9f0] sm:$0xff]
    %v2615 = vld [vmem:[#allocation3 + $0x9f8] sm:$0xff]
    %v2616 = vld [vmem:[#allocation3 + $0xa00] sm:$0xff]
    %v2617 = vld [vmem:[#allocation3 + $0xa08] sm:$0xff]
    %v2618 = vld [vmem:[#allocation3 + $0xa10] sm:$0xff]
    %v2619 = vld [vmem:[#allocation3 + $0xa18] sm:$0xff]
    %v2620 = vld [vmem:[#allocation3 + $0xa20] sm:$0xff]
    %v2621 = vld [vmem:[#allocation3 + $0xa28] sm:$0xff]
    %v2622 = vld [vmem:[#allocation3 + $0xa30] sm:$0xff]
    %v2623 = vld [vmem:[#allocation3 + $0xa38] sm:$0xff]
    %v2624 = vld [vmem:[#allocation3 + $0xa40] sm:$0xff]
    %v2625 = vld [vmem:[#allocation3 + $0xa48] sm:$0xff]
    %v2626 = vld [vmem:[#allocation3 + $0xa50] sm:$0xff]
    %v2627 = vld [vmem:[#allocation3 + $0xa58] sm:$0xff]
    %v2628 = vld [vmem:[#allocation3 + $0xa60] sm:$0xff]
    %v2629 = vld [vmem:[#allocation3 + $0xa68] sm:$0xff]
    %v2630 = vld [vmem:[#allocation3 + $0xa70] sm:$0xff]
    %v2631 = vld [vmem:[#allocation3 + $0xa78] sm:$0xff]
    %v2632 = vld [vmem:[#allocation3 + $0xa80] sm:$0xff]
    %v2633 = vld [vmem:[#allocation3 + $0xa88] sm:$0xff]
    %v2634 = vld [vmem:[#allocation3 + $0xa90] sm:$0xff]
    %v2635 = vld [vmem:[#allocation3 + $0xa98] sm:$0xff]
    %v2636 = vld [vmem:[#allocation3 + $0xaa0] sm:$0xff]
    %v2637 = vld [vmem:[#allocation3 + $0xaa8] sm:$0xff]
    %v2638 = vld [vmem:[#allocation3 + $0xab0] sm:$0xff]
    %v2639 = vld [vmem:[#allocation3 + $0xab8] sm:$0xff]
    %v2640 = vld [vmem:[#allocation3 + $0xac0] sm:$0xff]
    %v2641 = vld [vmem:[#allocation3 + $0xac8] sm:$0xff]
    %v2642 = vld [vmem:[#allocation3 + $0xad0] sm:$0xff]
    %v2643 = vld [vmem:[#allocation3 + $0xad8] sm:$0xff]
    %v2644 = vld [vmem:[#allocation3 + $0xae0] sm:$0xff]
    %v2645 = vld [vmem:[#allocation3 + $0xae8] sm:$0xff]
    %v2646 = vld [vmem:[#allocation3 + $0xaf0] sm:$0xff]
    %v2647 = vld [vmem:[#allocation3 + $0xaf8] sm:$0xff]
    %v2648 = vld [vmem:[#allocation3 + $0xb00] sm:$0xff]
    %v2649 = vld [vmem:[#allocation3 + $0xb08] sm:$0xff]
    %v2650 = vld [vmem:[#allocation3 + $0xb10] sm:$0xff]
    %v2651 = vld [vmem:[#allocation3 + $0xb18] sm:$0xff]
    %v2652 = vld [vmem:[#allocation3 + $0xb20] sm:$0xff]
    %v2653 = vld [vmem:[#allocation3 + $0xb28] sm:$0xff]
    %v2654 = vld [vmem:[#allocation3 + $0xb30] sm:$0xff]
    %v2655 = vld [vmem:[#allocation3 + $0xb38] sm:$0xff]
    %v2656 = vld [vmem:[#allocation3 + $0xb40] sm:$0xff]
    %v2657 = vld [vmem:[#allocation3 + $0xb48] sm:$0xff]
    %v2658 = vld [vmem:[#allocation3 + $0xb50] sm:$0xff]
    %v2659 = vld [vmem:[#allocation3 + $0xb58] sm:$0xff]
    %v2660 = vld [vmem:[#allocation3 + $0xb60] sm:$0xff]
    %v2661 = vld [vmem:[#allocation3 + $0xb68] sm:$0xff]
    %v2662 = vld [vmem:[#allocation3 + $0xb70] sm:$0xff]
    %v2663 = vld [vmem:[#allocation3 + $0xb78] sm:$0xff]
    %v2664 = vld [vmem:[#allocation3 + $0xb80] sm:$0xff]
    %v2665 = vld [vmem:[#allocation3 + $0xb88] sm:$0xff]
    %v2666 = vld [vmem:[#allocation3 + $0xb90] sm:$0xff]
    %v2667 = vld [vmem:[#allocation3 + $0xb98] sm:$0xff]
    %v2668 = vld [vmem:[#allocation3 + $0xba0] sm:$0xff]
    %v2669 = vld [vmem:[#allocation3 + $0xba8] sm:$0xff]
    %v2670 = vld [vmem:[#allocation3 + $0xbb0] sm:$0xff]
    %v2671 = vld [vmem:[#allocation3 + $0xbb8] sm:$0xff]
    %v2672 = vld [vmem:[#allocation3 + $0xbc0] sm:$0xff]
    %v2673 = vld [vmem:[#allocation3 + $0xbc8] sm:$0xff]
    %v2674 = vld [vmem:[#allocation3 + $0xbd0] sm:$0xff]
    %v2675 = vld [vmem:[#allocation3 + $0xbd8] sm:$0xff]
    %v2676 = vld [vmem:[#allocation3 + $0xbe0] sm:$0xff]
    %v2677 = vld [vmem:[#allocation3 + $0xbe8] sm:$0xff]
    %v2678 = vld [vmem:[#allocation3 + $0xbf0] sm:$0xff]
    %v2679 = vld [vmem:[#allocation3 + $0xbf8] sm:$0xff]
    %v2680 = vld [vmem:[#allocation3 + $0xc00] sm:$0xff]
    %v2681 = vld [vmem:[#allocation3 + $0xc08] sm:$0xff]
    %v2682 = vld [vmem:[#allocation3 + $0xc10] sm:$0xff]
    %v2683 = vld [vmem:[#allocation3 + $0xc18] sm:$0xff]
    %v2684 = vld [vmem:[#allocation3 + $0xc20] sm:$0xff]
    %v2685 = vld [vmem:[#allocation3 + $0xc28] sm:$0xff]
    %v2686 = vld [vmem:[#allocation3 + $0xc30] sm:$0xff]
    %v2687 = vld [vmem:[#allocation3 + $0xc38] sm:$0xff]
    %v2688 = vld [vmem:[#allocation3 + $0xc40] sm:$0xff]
    %v2689 = vld [vmem:[#allocation3 + $0xc48] sm:$0xff]
    %v2690 = vld [vmem:[#allocation3 + $0xc50] sm:$0xff]
    %v2691 = vld [vmem:[#allocation3 + $0xc58] sm:$0xff]
    %v2692 = vld [vmem:[#allocation3 + $0xc60] sm:$0xff]
    %v2693 = vld [vmem:[#allocation3 + $0xc68] sm:$0xff]
    %v2694 = vld [vmem:[#allocation3 + $0xc70] sm:$0xff]
    %v2695 = vld [vmem:[#allocation3 + $0xc78] sm:$0xff]
    %v2696 = vld [vmem:[#allocation3 + $0xc80] sm:$0xff]
    %v2697 = vld [vmem:[#allocation3 + $0xc88] sm:$0xff]
    %v2698 = vld [vmem:[#allocation3 + $0xc90] sm:$0xff]
    %v2699 = vld [vmem:[#allocation3 + $0xc98] sm:$0xff]
    %v2700 = vld [vmem:[#allocation3 + $0xca0] sm:$0xff]
    %v2701 = vld [vmem:[#allocation3 + $0xca8] sm:$0xff]
    %v2702 = vld [vmem:[#allocation3 + $0xcb0] sm:$0xff]
    %v2703 = vld [vmem:[#allocation3 + $0xcb8] sm:$0xff]
    %v2704 = vld [vmem:[#allocation3 + $0xcc0] sm:$0xff]
    %v2705 = vld [vmem:[#allocation3 + $0xcc8] sm:$0xff]
    %v2706 = vld [vmem:[#allocation3 + $0xcd0] sm:$0xff]
    %v2707 = vld [vmem:[#allocation3 + $0xcd8] sm:$0xff]
    %v2708 = vld [vmem:[#allocation3 + $0xce0] sm:$0xff]
    %v2709 = vld [vmem:[#allocation3 + $0xce8] sm:$0xff]
    %v2710 = vld [vmem:[#allocation3 + $0xcf0] sm:$0xff]
    %v2711 = vld [vmem:[#allocation3 + $0xcf8] sm:$0xff]
    %v2712 = vld [vmem:[#allocation3 + $0xd00] sm:$0xff]
    %v2713 = vld [vmem:[#allocation3 + $0xd08] sm:$0xff]
    %v2714 = vld [vmem:[#allocation3 + $0xd10] sm:$0xff]
    %v2715 = vld [vmem:[#allocation3 + $0xd18] sm:$0xff]
    %v2716 = vld [vmem:[#allocation3 + $0xd20] sm:$0xff]
    %v2717 = vld [vmem:[#allocation3 + $0xd28] sm:$0xff]
    %v2718 = vld [vmem:[#allocation3 + $0xd30] sm:$0xff]
    %v2719 = vld [vmem:[#allocation3 + $0xd38] sm:$0xff]
    %v2720 = vld [vmem:[#allocation3 + $0xd40] sm:$0xff]
    %v2721 = vld [vmem:[#allocation3 + $0xd48] sm:$0xff]
    %v2722 = vld [vmem:[#allocation3 + $0xd50] sm:$0xff]
    %v2723 = vld [vmem:[#allocation3 + $0xd58] sm:$0xff]
    %v2724 = vld [vmem:[#allocation3 + $0xd60] sm:$0xff]
    %v2725 = vld [vmem:[#allocation3 + $0xd68] sm:$0xff]
    %v2726 = vld [vmem:[#allocation3 + $0xd70] sm:$0xff]
    %v2727 = vld [vmem:[#allocation3 + $0xd78] sm:$0xff]
    %v2728 = vld [vmem:[#allocation3 + $0xd80] sm:$0xff]
    %v2729 = vld [vmem:[#allocation3 + $0xd88] sm:$0xff]
    %v2730 = vld [vmem:[#allocation3 + $0xd90] sm:$0xff]
    %v2731 = vld [vmem:[#allocation3 + $0xd98] sm:$0xff]
    %v2732 = vld [vmem:[#allocation3 + $0xda0] sm:$0xff]
    %v2733 = vld [vmem:[#allocation3 + $0xda8] sm:$0xff]
    %v2734 = vld [vmem:[#allocation3 + $0xdb0] sm:$0xff]
    %v2735 = vld [vmem:[#allocation3 + $0xdb8] sm:$0xff]
    %v2736 = vld [vmem:[#allocation3 + $0xdc0] sm:$0xff]
    %v2737 = vld [vmem:[#allocation3 + $0xdc8] sm:$0xff]
    %v2738 = vld [vmem:[#allocation3 + $0xdd0] sm:$0xff]
    %v2739 = vld [vmem:[#allocation3 + $0xdd8] sm:$0xff]
    %v2740 = vld [vmem:[#allocation3 + $0xde0] sm:$0xff]
    %v2741 = vld [vmem:[#allocation3 + $0xde8] sm:$0xff]
    %v2742 = vld [vmem:[#allocation3 + $0xdf0] sm:$0xff]
    %v2743 = vld [vmem:[#allocation3 + $0xdf8] sm:$0xff]
    %v2744 = vld [vmem:[#allocation3 + $0xe00] sm:$0xff]
    %v2745 = vld [vmem:[#allocation3 + $0xe08] sm:$0xff]
    %v2746 = vld [vmem:[#allocation3 + $0xe10] sm:$0xff]
    %v2747 = vld [vmem:[#allocation3 + $0xe18] sm:$0xff]
    %v2748 = vld [vmem:[#allocation3 + $0xe20] sm:$0xff]
    %v2749 = vld [vmem:[#allocation3 + $0xe28] sm:$0xff]
    %v2750 = vld [vmem:[#allocation3 + $0xe30] sm:$0xff]
    %v2751 = vld [vmem:[#allocation3 + $0xe38] sm:$0xff]
    %v2752 = vld [vmem:[#allocation3 + $0xe40] sm:$0xff]
    %v2753 = vld [vmem:[#allocation3 + $0xe48] sm:$0xff]
    %v2754 = vld [vmem:[#allocation3 + $0xe50] sm:$0xff]
    %v2755 = vld [vmem:[#allocation3 + $0xe58] sm:$0xff]
    %v2756 = vld [vmem:[#allocation3 + $0xe60] sm:$0xff]
    %v2757 = vld [vmem:[#allocation3 + $0xe68] sm:$0xff]
    %v2758 = vld [vmem:[#allocation3 + $0xe70] sm:$0xff]
    %v2759 = vld [vmem:[#allocation3 + $0xe78] sm:$0xff]
    %v2760 = vld [vmem:[#allocation3 + $0xe80] sm:$0xff]
    %v2761 = vld [vmem:[#allocation3 + $0xe88] sm:$0xff]
    %v2762 = vld [vmem:[#allocation3 + $0xe90] sm:$0xff]
    %v2763 = vld [vmem:[#allocation3 + $0xe98] sm:$0xff]
    %v2764 = vld [vmem:[#allocation3 + $0xea0] sm:$0xff]
    %v2765 = vld [vmem:[#allocation3 + $0xea8] sm:$0xff]
    %v2766 = vld [vmem:[#allocation3 + $0xeb0] sm:$0xff]
    %v2767 = vld [vmem:[#allocation3 + $0xeb8] sm:$0xff]
    %v2768 = vld [vmem:[#allocation3 + $0xec0] sm:$0xff]
    %v2769 = vld [vmem:[#allocation3 + $0xec8] sm:$0xff]
    %v2770 = vld [vmem:[#allocation3 + $0xed0] sm:$0xff]
    %v2771 = vld [vmem:[#allocation3 + $0xed8] sm:$0xff]
    %v2772 = vld [vmem:[#allocation3 + $0xee0] sm:$0xff]
    %v2773 = vld [vmem:[#allocation3 + $0xee8] sm:$0xff]
    %v2774 = vld [vmem:[#allocation3 + $0xef0] sm:$0xff]
    %v2775 = vld [vmem:[#allocation3 + $0xef8] sm:$0xff]
    %v2776 = vld [vmem:[#allocation3 + $0xf00] sm:$0xff]
    %v2777 = vld [vmem:[#allocation3 + $0xf08] sm:$0xff]
    %v2778 = vld [vmem:[#allocation3 + $0xf10] sm:$0xff]
    %v2779 = vld [vmem:[#allocation3 + $0xf18] sm:$0xff]
    %v2780 = vld [vmem:[#allocation3 + $0xf20] sm:$0xff]
    %v2781 = vld [vmem:[#allocation3 + $0xf28] sm:$0xff]
    %v2782 = vld [vmem:[#allocation3 + $0xf30] sm:$0xff]
    %v2783 = vld [vmem:[#allocation3 + $0xf38] sm:$0xff]
    %v2784 = vld [vmem:[#allocation3 + $0xf40] sm:$0xff]
    %v2785 = vld [vmem:[#allocation3 + $0xf48] sm:$0xff]
    %v2786 = vld [vmem:[#allocation3 + $0xf50] sm:$0xff]
    %v2787 = vld [vmem:[#allocation3 + $0xf58] sm:$0xff]
    %v2788 = vld [vmem:[#allocation3 + $0xf60] sm:$0xff]
    %v2789 = vld [vmem:[#allocation3 + $0xf68] sm:$0xff]
    %v2790 = vld [vmem:[#allocation3 + $0xf70] sm:$0xff]
    %v2791 = vld [vmem:[#allocation3 + $0xf78] sm:$0xff]
    %v2792 = vld [vmem:[#allocation3 + $0xf80] sm:$0xff]
    %v2793 = vld [vmem:[#allocation3 + $0xf88] sm:$0xff]
    %v2794 = vld [vmem:[#allocation3 + $0xf90] sm:$0xff]
    %v2795 = vld [vmem:[#allocation3 + $0xf98] sm:$0xff]
    %v2796 = vld [vmem:[#allocation3 + $0xfa0] sm:$0xff]
    %v2797 = vld [vmem:[#allocation3 + $0xfa8] sm:$0xff]
    %v2798 = vld [vmem:[#allocation3 + $0xfb0] sm:$0xff]
    %v2799 = vld [vmem:[#allocation3 + $0xfb8] sm:$0xff]
    %v2800 = vld [vmem:[#allocation3 + $0xfc0] sm:$0xff]
    %v2801 = vld [vmem:[#allocation3 + $0xfc8] sm:$0xff]
    %v2802 = vld [vmem:[#allocation3 + $0xfd0] sm:$0xff]
    %v2803 = vld [vmem:[#allocation3 + $0xfd8] sm:$0xff]
    %v2804 = vld [vmem:[#allocation3 + $0xfe0] sm:$0xff]
    %v2805 = vld [vmem:[#allocation3 + $0xfe8] sm:$0xff]
    %v2806 = vld [vmem:[#allocation3 + $0xff0] sm:$0xff]
    %v2807 = vld [vmem:[#allocation3 + $0xff8] sm:$0xff]
    %v2808 = vld [vmem:[#allocation3 + $0x1000] sm:$0xff]
    %v2809 = vld [vmem:[#allocation3 + $0x1008] sm:$0xff]
    %v2810 = vld [vmem:[#allocation3 + $0x1010] sm:$0xff]
    %v2811 = vld [vmem:[#allocation3 + $0x1018] sm:$0xff]
    %v2812 = vld [vmem:[#allocation3 + $0x1020] sm:$0xff]
    %v2813 = vld [vmem:[#allocation3 + $0x1028] sm:$0xff]
    %v2814 = vld [vmem:[#allocation3 + $0x1030] sm:$0xff]
    %v2815 = vld [vmem:[#allocation3 + $0x1038] sm:$0xff]
    %v2816 = vld [vmem:[#allocation3 + $0x1040] sm:$0xff]
    %v2817 = vld [vmem:[#allocation3 + $0x1048] sm:$0xff]
    %v2818 = vld [vmem:[#allocation3 + $0x1050] sm:$0xff]
    %v2819 = vld [vmem:[#allocation3 + $0x1058] sm:$0xff]
    %v2820 = vld [vmem:[#allocation3 + $0x1060] sm:$0xff]
    %v2821 = vld [vmem:[#allocation3 + $0x1068] sm:$0xff]
    %v2822 = vld [vmem:[#allocation3 + $0x1070] sm:$0xff]
    %v2823 = vld [vmem:[#allocation3 + $0x1078] sm:$0xff]
    %v2824 = vld [vmem:[#allocation3 + $0x1080] sm:$0xff]
    %v2825 = vld [vmem:[#allocation3 + $0x1088] sm:$0xff]
    %v2826 = vld [vmem:[#allocation3 + $0x1090] sm:$0xff]
    %v2827 = vld [vmem:[#allocation3 + $0x1098] sm:$0xff]
    %v2828 = vld [vmem:[#allocation3 + $0x10a0] sm:$0xff]
    %v2829 = vld [vmem:[#allocation3 + $0x10a8] sm:$0xff]
    %v2830 = vld [vmem:[#allocation3 + $0x10b0] sm:$0xff]
    %v2831 = vld [vmem:[#allocation3 + $0x10b8] sm:$0xff]
    %v2832 = vld [vmem:[#allocation3 + $0x10c0] sm:$0xff]
    %v2833 = vld [vmem:[#allocation3 + $0x10c8] sm:$0xff]
    %v2834 = vld [vmem:[#allocation3 + $0x10d0] sm:$0xff]
    %v2835 = vld [vmem:[#allocation3 + $0x10d8] sm:$0xff]
    %v2836 = vld [vmem:[#allocation3 + $0x10e0] sm:$0xff]
    %v2837 = vld [vmem:[#allocation3 + $0x10e8] sm:$0xff]
    %v2838 = vld [vmem:[#allocation3 + $0x10f0] sm:$0xff]
    %v2839 = vld [vmem:[#allocation3 + $0x10f8] sm:$0xff]
    %v2840 = vld [vmem:[#allocation3 + $0x1100] sm:$0xff]
    %v2841 = vld [vmem:[#allocation3 + $0x1108] sm:$0xff]
    %v2842 = vld [vmem:[#allocation3 + $0x1110] sm:$0xff]
    %v2843 = vld [vmem:[#allocation3 + $0x1118] sm:$0xff]
    %v2844 = vld [vmem:[#allocation3 + $0x1120] sm:$0xff]
    %v2845 = vld [vmem:[#allocation3 + $0x1128] sm:$0xff]
    %v2846 = vld [vmem:[#allocation3 + $0x1130] sm:$0xff]
    %v2847 = vld [vmem:[#allocation3 + $0x1138] sm:$0xff]
    %v2848 = vld [vmem:[#allocation3 + $0x1140] sm:$0xff]
    %v2849 = vld [vmem:[#allocation3 + $0x1148] sm:$0xff]
    %v2850 = vld [vmem:[#allocation3 + $0x1150] sm:$0xff]
    %v2851 = vld [vmem:[#allocation3 + $0x1158] sm:$0xff]
    %v2852 = vld [vmem:[#allocation3 + $0x1160] sm:$0xff]
    %v2853 = vld [vmem:[#allocation3 + $0x1168] sm:$0xff]
    %v2854 = vld [vmem:[#allocation3 + $0x1170] sm:$0xff]
    %v2855 = vld [vmem:[#allocation3 + $0x1178] sm:$0xff]
    %v2856 = vld [vmem:[#allocation3 + $0x1180] sm:$0xff]
    %v2857 = vld [vmem:[#allocation3 + $0x1188] sm:$0xff]
    %v2858 = vld [vmem:[#allocation3 + $0x1190] sm:$0xff]
    %v2859 = vld [vmem:[#allocation3 + $0x1198] sm:$0xff]
    %v2860 = vld [vmem:[#allocation3 + $0x11a0] sm:$0xff]
    %v2861 = vld [vmem:[#allocation3 + $0x11a8] sm:$0xff]
    %v2862 = vld [vmem:[#allocation3 + $0x11b0] sm:$0xff]
    %v2863 = vld [vmem:[#allocation3 + $0x11b8] sm:$0xff]
    %v2864 = vld [vmem:[#allocation3 + $0x11c0] sm:$0xff]
    %v2865 = vld [vmem:[#allocation3 + $0x11c8] sm:$0xff]
    %v2866 = vld [vmem:[#allocation3 + $0x11d0] sm:$0xff]
    %v2867 = vld [vmem:[#allocation3 + $0x11d8] sm:$0xff]
    %v2868 = vld [vmem:[#allocation3 + $0x11e0] sm:$0xff]
    %v2869 = vld [vmem:[#allocation3 + $0x11e8] sm:$0xff]
    %v2870 = vld [vmem:[#allocation3 + $0x11f0] sm:$0xff]
    %v2871 = vld [vmem:[#allocation3 + $0x11f8] sm:$0xff]
    %v2872 = vld [vmem:[%s4] sm:$0xff]
    %v2873 = vld [vmem:[%s4 + $0x8] sm:$0xff]
    %v2874 = vld [vmem:[%s4 + $0x10] sm:$0xff]
    %v2875 = vld [vmem:[%s4 + $0x18] sm:$0xff]
    %v2876 = vld [vmem:[%s4 + $0x20] sm:$0xff]
    %v2877 = vld [vmem:[%s4 + $0x28] sm:$0xff]
    %v2878 = vld [vmem:[%s4 + $0x30] sm:$0xff]
    %v2879 = vld [vmem:[%s4 + $0x38] sm:$0xff]
    %v2880 = vld [vmem:[%s4 + $0x40] sm:$0xff]
    %v2881 = vld [vmem:[%s4 + $0x48] sm:$0xff]
    %v2882 = vld [vmem:[%s4 + $0x50] sm:$0xff]
    %v2883 = vld [vmem:[%s4 + $0x58] sm:$0xff]
    %v2884 = vld [vmem:[%s4 + $0x60] sm:$0xff]
    %v2885 = vld [vmem:[%s4 + $0x68] sm:$0xff]
    %v2886 = vld [vmem:[%s4 + $0x70] sm:$0xff]
    %v2887 = vld [vmem:[%s4 + $0x78] sm:$0xff]
    %v2888 = vld [vmem:[%s4 + $0x80] sm:$0xff]
    %v2889 = vld [vmem:[%s4 + $0x88] sm:$0xff]
    %v2890 = vld [vmem:[%s4 + $0x90] sm:$0xff]
    %v2891 = vld [vmem:[%s4 + $0x98] sm:$0xff]
    %v2892 = vld [vmem:[%s4 + $0xa0] sm:$0xff]
    %v2893 = vld [vmem:[%s4 + $0xa8] sm:$0xff]
    %v2894 = vld [vmem:[%s4 + $0xb0] sm:$0xff]
    %v2895 = vld [vmem:[%s4 + $0xb8] sm:$0xff]
    %v2896 = vld [vmem:[%s4 + $0xc0] sm:$0xff]
    %v2897 = vld [vmem:[%s4 + $0xc8] sm:$0xff]
    %v2898 = vld [vmem:[%s4 + $0xd0] sm:$0xff]
    %v2899 = vld [vmem:[%s4 + $0xd8] sm:$0xff]
    %v2900 = vld [vmem:[%s4 + $0xe0] sm:$0xff]
    %v2901 = vld [vmem:[%s4 + $0xe8] sm:$0xff]
    %v2902 = vld [vmem:[%s4 + $0xf0] sm:$0xff]
    %v2903 = vld [vmem:[%s4 + $0xf8] sm:$0xff]
    %v2904 = vld [vmem:[%s4 + $0x100] sm:$0xff]
    %v2905 = vld [vmem:[%s4 + $0x108] sm:$0xff]
    %v2906 = vld [vmem:[%s4 + $0x110] sm:$0xff]
    %v2907 = vld [vmem:[%s4 + $0x118] sm:$0xff]
    %v2908 = vld [vmem:[%s4 + $0x120] sm:$0xff]
    %v2909 = vld [vmem:[%s4 + $0x128] sm:$0xff]
    %v2910 = vld [vmem:[%s4 + $0x130] sm:$0xff]
    %v2911 = vld [vmem:[%s4 + $0x138] sm:$0xff]
    %v2912 = vld [vmem:[%s4 + $0x140] sm:$0xff]
    %v2913 = vld [vmem:[%s4 + $0x148] sm:$0xff]
    %v2914 = vld [vmem:[%s4 + $0x150] sm:$0xff]
    %v2915 = vld [vmem:[%s4 + $0x158] sm:$0xff]
    %v2916 = vld [vmem:[%s4 + $0x160] sm:$0xff]
    %v2917 = vld [vmem:[%s4 + $0x168] sm:$0xff]
    %v2918 = vld [vmem:[%s4 + $0x170] sm:$0xff]
    %v2919 = vld [vmem:[%s4 + $0x178] sm:$0xff]
    %v2920 = vld [vmem:[%s4 + $0x180] sm:$0xff]
    %v2921 = vld [vmem:[%s4 + $0x188] sm:$0xff]
    %v2922 = vld [vmem:[%s4 + $0x190] sm:$0xff]
    %v2923 = vld [vmem:[%s4 + $0x198] sm:$0xff]
    %v2924 = vld [vmem:[%s4 + $0x1a0] sm:$0xff]
    %v2925 = vld [vmem:[%s4 + $0x1a8] sm:$0xff]
    %v2926 = vld [vmem:[%s4 + $0x1b0] sm:$0xff]
    %v2927 = vld [vmem:[%s4 + $0x1b8] sm:$0xff]
    %v2928 = vld [vmem:[%s4 + $0x1c0] sm:$0xff]
    %v2929 = vld [vmem:[%s4 + $0x1c8] sm:$0xff]
    %v2930 = vld [vmem:[%s4 + $0x1d0] sm:$0xff]
    %v2931 = vld [vmem:[%s4 + $0x1d8] sm:$0xff]
    %v2932 = vld [vmem:[%s4 + $0x1e0] sm:$0xff]
    %v2933 = vld [vmem:[%s4 + $0x1e8] sm:$0xff]
    %v2934 = vld [vmem:[%s4 + $0x1f0] sm:$0xff]
    %v2935 = vld [vmem:[%s4 + $0x1f8] sm:$0xff]
    %v2936 = vld [vmem:[%s4 + $0x200] sm:$0xff]
    %v2937 = vld [vmem:[%s4 + $0x208] sm:$0xff]
    %v2938 = vld [vmem:[%s4 + $0x210] sm:$0xff]
    %v2939 = vld [vmem:[%s4 + $0x218] sm:$0xff]
    %v2940 = vld [vmem:[%s4 + $0x220] sm:$0xff]
    %v2941 = vld [vmem:[%s4 + $0x228] sm:$0xff]
    %v2942 = vld [vmem:[%s4 + $0x230] sm:$0xff]
    %v2943 = vld [vmem:[%s4 + $0x238] sm:$0xff]
    %v2944 = vld [vmem:[%s4 + $0x240] sm:$0xff]
    %v2945 = vld [vmem:[%s4 + $0x248] sm:$0xff]
    %v2946 = vld [vmem:[%s4 + $0x250] sm:$0xff]
    %v2947 = vld [vmem:[%s4 + $0x258] sm:$0xff]
    %v2948 = vld [vmem:[%s4 + $0x260] sm:$0xff]
    %v2949 = vld [vmem:[%s4 + $0x268] sm:$0xff]
    %v2950 = vld [vmem:[%s4 + $0x270] sm:$0xff]
    %v2951 = vld [vmem:[%s4 + $0x278] sm:$0xff]
    %v2952 = vld [vmem:[%s4 + $0x280] sm:$0xff]
    %v2953 = vld [vmem:[%s4 + $0x288] sm:$0xff]
    %v2954 = vld [vmem:[%s4 + $0x290] sm:$0xff]
    %v2955 = vld [vmem:[%s4 + $0x298] sm:$0xff]
    %v2956 = vld [vmem:[%s4 + $0x2a0] sm:$0xff]
    %v2957 = vld [vmem:[%s4 + $0x2a8] sm:$0xff]
    %v2958 = vld [vmem:[%s4 + $0x2b0] sm:$0xff]
    %v2959 = vld [vmem:[%s4 + $0x2b8] sm:$0xff]
    %v2960 = vld [vmem:[%s4 + $0x2c0] sm:$0xff]
    %v2961 = vld [vmem:[%s4 + $0x2c8] sm:$0xff]
    %v2962 = vld [vmem:[%s4 + $0x2d0] sm:$0xff]
    %v2963 = vld [vmem:[%s4 + $0x2d8] sm:$0xff]
    %v2964 = vld [vmem:[%s4 + $0x2e0] sm:$0xff]
    %v2965 = vld [vmem:[%s4 + $0x2e8] sm:$0xff]
    %v2966 = vld [vmem:[%s4 + $0x2f0] sm:$0xff]
    %v2967 = vld [vmem:[%s4 + $0x2f8] sm:$0xff]
    %v2968 = vld [vmem:[%s4 + $0x300] sm:$0xff]
    %v2969 = vld [vmem:[%s4 + $0x308] sm:$0xff]
    %v2970 = vld [vmem:[%s4 + $0x310] sm:$0xff]
    %v2971 = vld [vmem:[%s4 + $0x318] sm:$0xff]
    %v2972 = vld [vmem:[%s4 + $0x320] sm:$0xff]
    %v2973 = vld [vmem:[%s4 + $0x328] sm:$0xff]
    %v2974 = vld [vmem:[%s4 + $0x330] sm:$0xff]
    %v2975 = vld [vmem:[%s4 + $0x338] sm:$0xff]
    %v2976 = vld [vmem:[%s4 + $0x340] sm:$0xff]
    %v2977 = vld [vmem:[%s4 + $0x348] sm:$0xff]
    %v2978 = vld [vmem:[%s4 + $0x350] sm:$0xff]
    %v2979 = vld [vmem:[%s4 + $0x358] sm:$0xff]
    %v2980 = vld [vmem:[%s4 + $0x360] sm:$0xff]
    %v2981 = vld [vmem:[%s4 + $0x368] sm:$0xff]
    %v2982 = vld [vmem:[%s4 + $0x370] sm:$0xff]
    %v2983 = vld [vmem:[%s4 + $0x378] sm:$0xff]
    %v2984 = vld [vmem:[%s4 + $0x380] sm:$0xff]
    %v2985 = vld [vmem:[%s4 + $0x388] sm:$0xff]
    %v2986 = vld [vmem:[%s4 + $0x390] sm:$0xff]
    %v2987 = vld [vmem:[%s4 + $0x398] sm:$0xff]
    %v2988 = vld [vmem:[%s4 + $0x3a0] sm:$0xff]
    %v2989 = vld [vmem:[%s4 + $0x3a8] sm:$0xff]
    %v2990 = vld [vmem:[%s4 + $0x3b0] sm:$0xff]
    %v2991 = vld [vmem:[%s4 + $0x3b8] sm:$0xff]
    %v2992 = vld [vmem:[%s4 + $0x3c0] sm:$0xff]
    %v2993 = vld [vmem:[%s4 + $0x3c8] sm:$0xff]
    %v2994 = vld [vmem:[%s4 + $0x3d0] sm:$0xff]
    %v2995 = vld [vmem:[%s4 + $0x3d8] sm:$0xff]
    %v2996 = vld [vmem:[%s4 + $0x3e0] sm:$0xff]
    %v2997 = vld [vmem:[%s4 + $0x3e8] sm:$0xff]
    %v2998 = vld [vmem:[%s4 + $0x3f0] sm:$0xff]
    %v2999 = vld [vmem:[%s4 + $0x3f8] sm:$0xff]
    %v3000 = vld [vmem:[%s4 + $0x400] sm:$0xff]
    %v3001 = vld [vmem:[%s4 + $0x408] sm:$0xff]
    %v3002 = vld [vmem:[%s4 + $0x410] sm:$0xff]
    %v3003 = vld [vmem:[%s4 + $0x418] sm:$0xff]
    %v3004 = vld [vmem:[%s4 + $0x420] sm:$0xff]
    %v3005 = vld [vmem:[%s4 + $0x428] sm:$0xff]
    %v3006 = vld [vmem:[%s4 + $0x430] sm:$0xff]
    %v3007 = vld [vmem:[%s4 + $0x438] sm:$0xff]
    %v3008 = vld [vmem:[%s4 + $0x440] sm:$0xff]
    %v3009 = vld [vmem:[%s4 + $0x448] sm:$0xff]
    %v3010 = vld [vmem:[%s4 + $0x450] sm:$0xff]
    %v3011 = vld [vmem:[%s4 + $0x458] sm:$0xff]
    %v3012 = vld [vmem:[%s4 + $0x460] sm:$0xff]
    %v3013 = vld [vmem:[%s4 + $0x468] sm:$0xff]
    %v3014 = vld [vmem:[%s4 + $0x470] sm:$0xff]
    %v3015 = vld [vmem:[%s4 + $0x478] sm:$0xff]
    %3016 = vmatpush.msra.mxu0 %v2887
    %3017 = vmatpush.msra.mxu0 %v2886
    %3018 = vmatpush.msra.mxu0 %v2885
    %3019 = vmatpush.msra.mxu0 %v2884
    %3020 = vmatpush.msra.mxu0 %v2883
    %3021 = vmatpush.msra.mxu0 %v2882
    %3022 = vmatpush.msra.mxu0 %v2881
    %3023 = vmatpush.msra.mxu0 %v2880
    %3024 = vmatpush.msra.mxu0 %v2879
    %3025 = vmatpush.msra.mxu0 %v2878
    %3026 = vmatpush.msra.mxu0 %v2877
    %3027 = vmatpush.msra.mxu0 %v2876
    %3028 = vmatpush.msra.mxu0 %v2875
    %3029 = vmatpush.msra.mxu0 %v2874
    %3030 = vmatpush.msra.mxu0 %v2873
    %3031 = vmatpush.msra.mxu0 %v2872
    %3032 = vmatmul.f32.gmra.mxu0 %v2296
    %v3033 = vpop.f32.mrf.mxu0
    %v3034 = vadd.f32 0.0, %v3033
    %3035 = vmatmul.f32.gmra.mxu0 %v2305
    %v3036 = vpop.f32.mrf.mxu0
    %v3037 = vadd.f32 0.0, %v3036
    %3038 = vmatmul.f32.gmra.mxu0 %v2314
    %v3039 = vpop.f32.mrf.mxu0
    %v3040 = vadd.f32 0.0, %v3039
    %3041 = vmatmul.f32.gmra.mxu0 %v2323
    %v3042 = vpop.f32.mrf.mxu0
    %v3043 = vadd.f32 0.0, %v3042
    %3044 = vmatmul.f32.gmra.mxu0 %v2332
    %v3045 = vpop.f32.mrf.mxu0
    %v3046 = vadd.f32 0.0, %v3045
    %3047 = vmatmul.f32.gmra.mxu0 %v2341
    %v3048 = vpop.f32.mrf.mxu0
    %v3049 = vadd.f32 0.0, %v3048
    %3050 = vmatmul.f32.gmra.mxu0 %v2350
    %v3051 = vpop.f32.mrf.mxu0
    %v3052 = vadd.f32 0.0, %v3051
    %3053 = vmatmul.f32.gmra.mxu0 %v2359
    %v3054 = vpop.f32.mrf.mxu0
    %v3055 = vadd.f32 0.0, %v3054
    %3056 = vmatmul.f32.gmra.mxu0 %v2368
    %v3057 = vpop.f32.mrf.mxu0
    %v3058 = vadd.f32 0.0, %v3057
    %3059 = vmatmul.f32.gmra.mxu0 %v2377
    %v3060 = vpop.f32.mrf.mxu0
    %v3061 = vadd.f32 0.0, %v3060
    %3062 = vmatmul.f32.gmra.mxu0 %v2386
    %v3063 = vpop.f32.mrf.mxu0
    %v3064 = vadd.f32 0.0, %v3063
    %3065 = vmatmul.f32.gmra.mxu0 %v2395
    %v3066 = vpop.f32.mrf.mxu0
    %v3067 = vadd.f32 0.0, %v3066
    %3068 = vmatmul.f32.gmra.mxu0 %v2404
    %v3069 = vpop.f32.mrf.mxu0
    %v3070 = vadd.f32 0.0, %v3069
    %3071 = vmatmul.f32.gmra.mxu0 %v2413
    %v3072 = vpop.f32.mrf.mxu0
    %v3073 = vadd.f32 0.0, %v3072
    %3074 = vmatmul.f32.gmra.mxu0 %v2422
    %v3075 = vpop.f32.mrf.mxu0
    %v3076 = vadd.f32 0.0, %v3075
    %3077 = vmatmul.f32.gmra.mxu0 %v2431
    %v3078 = vpop.f32.mrf.mxu0
    %v3079 = vadd.f32 0.0, %v3078
    %3080 = vmatmul.f32.gmra.mxu0 %v2440
    %v3081 = vpop.f32.mrf.mxu0
    %v3082 = vadd.f32 0.0, %v3081
    %3083 = vmatmul.f32.gmra.mxu0 %v2449
    %v3084 = vpop.f32.mrf.mxu0
    %v3085 = vadd.f32 0.0, %v3084
    %3086 = vmatmul.f32.gmra.mxu0 %v2458
    %v3087 = vpop.f32.mrf.mxu0
    %v3088 = vadd.f32 0.0, %v3087
    %3089 = vmatmul.f32.gmra.mxu0 %v2467
    %v3090 = vpop.f32.mrf.mxu0
    %v3091 = vadd.f32 0.0, %v3090
    %3092 = vmatmul.f32.gmra.mxu0 %v2476
    %v3093 = vpop.f32.mrf.mxu0
    %v3094 = vadd.f32 0.0, %v3093
    %3095 = vmatmul.f32.gmra.mxu0 %v2485
    %v3096 = vpop.f32.mrf.mxu0
    %v3097 = vadd.f32 0.0, %v3096
    %3098 = vmatmul.f32.gmra.mxu0 %v2494
    %v3099 = vpop.f32.mrf.mxu0
    %v3100 = vadd.f32 0.0, %v3099
    %3101 = vmatmul.f32.gmra.mxu0 %v2503
    %v3102 = vpop.f32.mrf.mxu0
    %v3103 = vadd.f32 0.0, %v3102
    %3104 = vmatmul.f32.gmra.mxu0 %v2512
    %v3105 = vpop.f32.mrf.mxu0
    %v3106 = vadd.f32 0.0, %v3105
    %3107 = vmatmul.f32.gmra.mxu0 %v2521
    %v3108 = vpop.f32.mrf.mxu0
    %v3109 = vadd.f32 0.0, %v3108
    %3110 = vmatmul.f32.gmra.mxu0 %v2530
    %v3111 = vpop.f32.mrf.mxu0
    %v3112 = vadd.f32 0.0, %v3111
    %3113 = vmatmul.f32.gmra.mxu0 %v2539
    %v3114 = vpop.f32.mrf.mxu0
    %v3115 = vadd.f32 0.0, %v3114
    %3116 = vmatmul.f32.gmra.mxu0 %v2548
    %v3117 = vpop.f32.mrf.mxu0
    %v3118 = vadd.f32 0.0, %v3117
    %3119 = vmatmul.f32.gmra.mxu0 %v2557
    %v3120 = vpop.f32.mrf.mxu0
    %v3121 = vadd.f32 0.0, %v3120
    %3122 = vmatmul.f32.gmra.mxu0 %v2566
    %v3123 = vpop.f32.mrf.mxu0
    %v3124 = vadd.f32 0.0, %v3123
    %3125 = vmatmul.f32.gmra.mxu0 %v2575
    %v3126 = vpop.f32.mrf.mxu0
    %v3127 = vadd.f32 0.0, %v3126
    %3128 = vmatmul.f32.gmra.mxu0 %v2584
    %v3129 = vpop.f32.mrf.mxu0
    %v3130 = vadd.f32 0.0, %v3129
    %3131 = vmatmul.f32.gmra.mxu0 %v2593
    %v3132 = vpop.f32.mrf.mxu0
    %v3133 = vadd.f32 0.0, %v3132
    %3134 = vmatmul.f32.gmra.mxu0 %v2602
    %v3135 = vpop.f32.mrf.mxu0
    %v3136 = vadd.f32 0.0, %v3135
    %3137 = vmatmul.f32.gmra.mxu0 %v2611
    %v3138 = vpop.f32.mrf.mxu0
    %v3139 = vadd.f32 0.0, %v3138
    %3140 = vmatmul.f32.gmra.mxu0 %v2620
    %v3141 = vpop.f32.mrf.mxu0
    %v3142 = vadd.f32 0.0, %v3141
    %3143 = vmatmul.f32.gmra.mxu0 %v2629
    %v3144 = vpop.f32.mrf.mxu0
    %v3145 = vadd.f32 0.0, %v3144
    %3146 = vmatmul.f32.gmra.mxu0 %v2638
    %v3147 = vpop.f32.mrf.mxu0
    %v3148 = vadd.f32 0.0, %v3147
    %3149 = vmatmul.f32.gmra.mxu0 %v2647
    %v3150 = vpop.f32.mrf.mxu0
    %v3151 = vadd.f32 0.0, %v3150
    %3152 = vmatmul.f32.gmra.mxu0 %v2656
    %v3153 = vpop.f32.mrf.mxu0
    %v3154 = vadd.f32 0.0, %v3153
    %3155 = vmatmul.f32.gmra.mxu0 %v2665
    %v3156 = vpop.f32.mrf.mxu0
    %v3157 = vadd.f32 0.0, %v3156
    %3158 = vmatmul.f32.gmra.mxu0 %v2674
    %v3159 = vpop.f32.mrf.mxu0
    %v3160 = vadd.f32 0.0, %v3159
    %3161 = vmatmul.f32.gmra.mxu0 %v2683
    %v3162 = vpop.f32.mrf.mxu0
    %v3163 = vadd.f32 0.0, %v3162
    %3164 = vmatmul.f32.gmra.mxu0 %v2692
    %v3165 = vpop.f32.mrf.mxu0
    %v3166 = vadd.f32 0.0, %v3165
    %3167 = vmatmul.f32.gmra.mxu0 %v2701
    %v3168 = vpop.f32.mrf.mxu0
    %v3169 = vadd.f32 0.0, %v3168
    %3170 = vmatmul.f32.gmra.mxu0 %v2710
    %v3171 = vpop.f32.mrf.mxu0
    %v3172 = vadd.f32 0.0, %v3171
    %3173 = vmatmul.f32.gmra.mxu0 %v2719
    %v3174 = vpop.f32.mrf.mxu0
    %v3175 = vadd.f32 0.0, %v3174
    %3176 = vmatmul.f32.gmra.mxu0 %v2728
    %v3177 = vpop.f32.mrf.mxu0
    %v3178 = vadd.f32 0.0, %v3177
    %3179 = vmatmul.f32.gmra.mxu0 %v2737
    %v3180 = vpop.f32.mrf.mxu0
    %v3181 = vadd.f32 0.0, %v3180
    %3182 = vmatmul.f32.gmra.mxu0 %v2746
    %v3183 = vpop.f32.mrf.mxu0
    %v3184 = vadd.f32 0.0, %v3183
    %3185 = vmatmul.f32.gmra.mxu0 %v2755
    %v3186 = vpop.f32.mrf.mxu0
    %v3187 = vadd.f32 0.0, %v3186
    %3188 = vmatmul.f32.gmra.mxu0 %v2764
    %v3189 = vpop.f32.mrf.mxu0
    %v3190 = vadd.f32 0.0, %v3189
    %3191 = vmatmul.f32.gmra.mxu0 %v2773
    %v3192 = vpop.f32.mrf.mxu0
    %v3193 = vadd.f32 0.0, %v3192
    %3194 = vmatmul.f32.gmra.mxu0 %v2782
    %v3195 = vpop.f32.mrf.mxu0
    %v3196 = vadd.f32 0.0, %v3195
    %3197 = vmatmul.f32.gmra.mxu0 %v2791
    %v3198 = vpop.f32.mrf.mxu0
    %v3199 = vadd.f32 0.0, %v3198
    %3200 = vmatmul.f32.gmra.mxu0 %v2800
    %v3201 = vpop.f32.mrf.mxu0
    %v3202 = vadd.f32 0.0, %v3201
    %3203 = vmatmul.f32.gmra.mxu0 %v2809
    %v3204 = vpop.f32.mrf.mxu0
    %v3205 = vadd.f32 0.0, %v3204
    %3206 = vmatmul.f32.gmra.mxu0 %v2818
    %v3207 = vpop.f32.mrf.mxu0
    %v3208 = vadd.f32 0.0, %v3207
    %3209 = vmatmul.f32.gmra.mxu0 %v2827
    %v3210 = vpop.f32.mrf.mxu0
    %v3211 = vadd.f32 0.0, %v3210
    %3212 = vmatmul.f32.gmra.mxu0 %v2836
    %v3213 = vpop.f32.mrf.mxu0
    %v3214 = vadd.f32 0.0, %v3213
    %3215 = vmatmul.f32.gmra.mxu0 %v2845
    %v3216 = vpop.f32.mrf.mxu0
    %v3217 = vadd.f32 0.0, %v3216
    %3218 = vmatmul.f32.gmra.mxu0 %v2854
    %v3219 = vpop.f32.mrf.mxu0
    %v3220 = vadd.f32 0.0, %v3219
    %3221 = vmatmul.f32.gmra.mxu0 %v2863
    %v3222 = vpop.f32.mrf.mxu0
    %v3223 = vadd.f32 0.0, %v3222
    %3224 = vdwg.mxu0
    %3225 = vmatpush.msra.mxu0 %v2903
    %3226 = vmatpush.msra.mxu0 %v2902
    %3227 = vmatpush.msra.mxu0 %v2901
    %3228 = vmatpush.msra.mxu0 %v2900
    %3229 = vmatpush.msra.mxu0 %v2899
    %3230 = vmatpush.msra.mxu0 %v2898
    %3231 = vmatpush.msra.mxu0 %v2897
    %3232 = vmatpush.msra.mxu0 %v2896
    %3233 = vmatpush.msra.mxu0 %v2895
    %3234 = vmatpush.msra.mxu0 %v2894
    %3235 = vmatpush.msra.mxu0 %v2893
    %3236 = vmatpush.msra.mxu0 %v2892
    %3237 = vmatpush.msra.mxu0 %v2891
    %3238 = vmatpush.msra.mxu0 %v2890
    %3239 = vmatpush.msra.mxu0 %v2889
    %3240 = vmatpush.msra.mxu0 %v2888
    %3241 = vmatmul.f32.gmra.mxu0 %v2297
    %v3242 = vpop.f32.mrf.mxu0
    %v3243 = vadd.f32 %v3034, %v3242
    %3244 = vmatmul.f32.gmra.mxu0 %v2306
    %v3245 = vpop.f32.mrf.mxu0
    %v3246 = vadd.f32 %v3037, %v3245
    %3247 = vmatmul.f32.gmra.mxu0 %v2315
    %v3248 = vpop.f32.mrf.mxu0
    %v3249 = vadd.f32 %v3040, %v3248
    %3250 = vmatmul.f32.gmra.mxu0 %v2324
    %v3251 = vpop.f32.mrf.mxu0
    %v3252 = vadd.f32 %v3043, %v3251
    %3253 = vmatmul.f32.gmra.mxu0 %v2333
    %v3254 = vpop.f32.mrf.mxu0
    %v3255 = vadd.f32 %v3046, %v3254
    %3256 = vmatmul.f32.gmra.mxu0 %v2342
    %v3257 = vpop.f32.mrf.mxu0
    %v3258 = vadd.f32 %v3049, %v3257
    %3259 = vmatmul.f32.gmra.mxu0 %v2351
    %v3260 = vpop.f32.mrf.mxu0
    %v3261 = vadd.f32 %v3052, %v3260
    %3262 = vmatmul.f32.gmra.mxu0 %v2360
    %v3263 = vpop.f32.mrf.mxu0
    %v3264 = vadd.f32 %v3055, %v3263
    %3265 = vmatmul.f32.gmra.mxu0 %v2369
    %v3266 = vpop.f32.mrf.mxu0
    %v3267 = vadd.f32 %v3058, %v3266
    %3268 = vmatmul.f32.gmra.mxu0 %v2378
    %v3269 = vpop.f32.mrf.mxu0
    %v3270 = vadd.f32 %v3061, %v3269
    %3271 = vmatmul.f32.gmra.mxu0 %v2387
    %v3272 = vpop.f32.mrf.mxu0
    %v3273 = vadd.f32 %v3064, %v3272
    %3274 = vmatmul.f32.gmra.mxu0 %v2396
    %v3275 = vpop.f32.mrf.mxu0
    %v3276 = vadd.f32 %v3067, %v3275
    %3277 = vmatmul.f32.gmra.mxu0 %v2405
    %v3278 = vpop.f32.mrf.mxu0
    %v3279 = vadd.f32 %v3070, %v3278
    %3280 = vmatmul.f32.gmra.mxu0 %v2414
    %v3281 = vpop.f32.mrf.mxu0
    %v3282 = vadd.f32 %v3073, %v3281
    %3283 = vmatmul.f32.gmra.mxu0 %v2423
    %v3284 = vpop.f32.mrf.mxu0
    %v3285 = vadd.f32 %v3076, %v3284
    %3286 = vmatmul.f32.gmra.mxu0 %v2432
    %v3287 = vpop.f32.mrf.mxu0
    %v3288 = vadd.f32 %v3079, %v3287
    %3289 = vmatmul.f32.gmra.mxu0 %v2441
    %v3290 = vpop.f32.mrf.mxu0
    %v3291 = vadd.f32 %v3082, %v3290
    %3292 = vmatmul.f32.gmra.mxu0 %v2450
    %v3293 = vpop.f32.mrf.mxu0
    %v3294 = vadd.f32 %v3085, %v3293
    %3295 = vmatmul.f32.gmra.mxu0 %v2459
    %v3296 = vpop.f32.mrf.mxu0
    %v3297 = vadd.f32 %v3088, %v3296
    %3298 = vmatmul.f32.gmra.mxu0 %v2468
    %v3299 = vpop.f32.mrf.mxu0
    %v3300 = vadd.f32 %v3091, %v3299
    %3301 = vmatmul.f32.gmra.mxu0 %v2477
    %v3302 = vpop.f32.mrf.mxu0
    %v3303 = vadd.f32 %v3094, %v3302
    %3304 = vmatmul.f32.gmra.mxu0 %v2486
    %v3305 = vpop.f32.mrf.mxu0
    %v3306 = vadd.f32 %v3097, %v3305
    %3307 = vmatmul.f32.gmra.mxu0 %v2495
    %v3308 = vpop.f32.mrf.mxu0
    %v3309 = vadd.f32 %v3100, %v3308
    %3310 = vmatmul.f32.gmra.mxu0 %v2504
    %v3311 = vpop.f32.mrf.mxu0
    %v3312 = vadd.f32 %v3103, %v3311
    %3313 = vmatmul.f32.gmra.mxu0 %v2513
    %v3314 = vpop.f32.mrf.mxu0
    %v3315 = vadd.f32 %v3106, %v3314
    %3316 = vmatmul.f32.gmra.mxu0 %v2522
    %v3317 = vpop.f32.mrf.mxu0
    %v3318 = vadd.f32 %v3109, %v3317
    %3319 = vmatmul.f32.gmra.mxu0 %v2531
    %v3320 = vpop.f32.mrf.mxu0
    %v3321 = vadd.f32 %v3112, %v3320
    %3322 = vmatmul.f32.gmra.mxu0 %v2540
    %v3323 = vpop.f32.mrf.mxu0
    %v3324 = vadd.f32 %v3115, %v3323
    %3325 = vmatmul.f32.gmra.mxu0 %v2549
    %v3326 = vpop.f32.mrf.mxu0
    %v3327 = vadd.f32 %v3118, %v3326
    %3328 = vmatmul.f32.gmra.mxu0 %v2558
    %v3329 = vpop.f32.mrf.mxu0
    %v3330 = vadd.f32 %v3121, %v3329
    %3331 = vmatmul.f32.gmra.mxu0 %v2567
    %v3332 = vpop.f32.mrf.mxu0
    %v3333 = vadd.f32 %v3124, %v3332
    %3334 = vmatmul.f32.gmra.mxu0 %v2576
    %v3335 = vpop.f32.mrf.mxu0
    %v3336 = vadd.f32 %v3127, %v3335
    %3337 = vmatmul.f32.gmra.mxu0 %v2585
    %v3338 = vpop.f32.mrf.mxu0
    %v3339 = vadd.f32 %v3130, %v3338
    %3340 = vmatmul.f32.gmra.mxu0 %v2594
    %v3341 = vpop.f32.mrf.mxu0
    %v3342 = vadd.f32 %v3133, %v3341
    %3343 = vmatmul.f32.gmra.mxu0 %v2603
    %v3344 = vpop.f32.mrf.mxu0
    %v3345 = vadd.f32 %v3136, %v3344
    %3346 = vmatmul.f32.gmra.mxu0 %v2612
    %v3347 = vpop.f32.mrf.mxu0
    %v3348 = vadd.f32 %v3139, %v3347
    %3349 = vmatmul.f32.gmra.mxu0 %v2621
    %v3350 = vpop.f32.mrf.mxu0
    %v3351 = vadd.f32 %v3142, %v3350
    %3352 = vmatmul.f32.gmra.mxu0 %v2630
    %v3353 = vpop.f32.mrf.mxu0
    %v3354 = vadd.f32 %v3145, %v3353
    %3355 = vmatmul.f32.gmra.mxu0 %v2639
    %v3356 = vpop.f32.mrf.mxu0
    %v3357 = vadd.f32 %v3148, %v3356
    %3358 = vmatmul.f32.gmra.mxu0 %v2648
    %v3359 = vpop.f32.mrf.mxu0
    %v3360 = vadd.f32 %v3151, %v3359
    %3361 = vmatmul.f32.gmra.mxu0 %v2657
    %v3362 = vpop.f32.mrf.mxu0
    %v3363 = vadd.f32 %v3154, %v3362
    %3364 = vmatmul.f32.gmra.mxu0 %v2666
    %v3365 = vpop.f32.mrf.mxu0
    %v3366 = vadd.f32 %v3157, %v3365
    %3367 = vmatmul.f32.gmra.mxu0 %v2675
    %v3368 = vpop.f32.mrf.mxu0
    %v3369 = vadd.f32 %v3160, %v3368
    %3370 = vmatmul.f32.gmra.mxu0 %v2684
    %v3371 = vpop.f32.mrf.mxu0
    %v3372 = vadd.f32 %v3163, %v3371
    %3373 = vmatmul.f32.gmra.mxu0 %v2693
    %v3374 = vpop.f32.mrf.mxu0
    %v3375 = vadd.f32 %v3166, %v3374
    %3376 = vmatmul.f32.gmra.mxu0 %v2702
    %v3377 = vpop.f32.mrf.mxu0
    %v3378 = vadd.f32 %v3169, %v3377
    %3379 = vmatmul.f32.gmra.mxu0 %v2711
    %v3380 = vpop.f32.mrf.mxu0
    %v3381 = vadd.f32 %v3172, %v3380
    %3382 = vmatmul.f32.gmra.mxu0 %v2720
    %v3383 = vpop.f32.mrf.mxu0
    %v3384 = vadd.f32 %v3175, %v3383
    %3385 = vmatmul.f32.gmra.mxu0 %v2729
    %v3386 = vpop.f32.mrf.mxu0
    %v3387 = vadd.f32 %v3178, %v3386
    %3388 = vmatmul.f32.gmra.mxu0 %v2738
    %v3389 = vpop.f32.mrf.mxu0
    %v3390 = vadd.f32 %v3181, %v3389
    %3391 = vmatmul.f32.gmra.mxu0 %v2747
    %v3392 = vpop.f32.mrf.mxu0
    %v3393 = vadd.f32 %v3184, %v3392
    %3394 = vmatmul.f32.gmra.mxu0 %v2756
    %v3395 = vpop.f32.mrf.mxu0
    %v3396 = vadd.f32 %v3187, %v3395
    %3397 = vmatmul.f32.gmra.mxu0 %v2765
    %v3398 = vpop.f32.mrf.mxu0
    %v3399 = vadd.f32 %v3190, %v3398
    %3400 = vmatmul.f32.gmra.mxu0 %v2774
    %v3401 = vpop.f32.mrf.mxu0
    %v3402 = vadd.f32 %v3193, %v3401
    %3403 = vmatmul.f32.gmra.mxu0 %v2783
    %v3404 = vpop.f32.mrf.mxu0
    %v3405 = vadd.f32 %v3196, %v3404
    %3406 = vmatmul.f32.gmra.mxu0 %v2792
    %v3407 = vpop.f32.mrf.mxu0
    %v3408 = vadd.f32 %v3199, %v3407
    %3409 = vmatmul.f32.gmra.mxu0 %v2801
    %v3410 = vpop.f32.mrf.mxu0
    %v3411 = vadd.f32 %v3202, %v3410
    %3412 = vmatmul.f32.gmra.mxu0 %v2810
    %v3413 = vpop.f32.mrf.mxu0
    %v3414 = vadd.f32 %v3205, %v3413
    %3415 = vmatmul.f32.gmra.mxu0 %v2819
    %v3416 = vpop.f32.mrf.mxu0
    %v3417 = vadd.f32 %v3208, %v3416
    %3418 = vmatmul.f32.gmra.mxu0 %v2828
    %v3419 = vpop.f32.mrf.mxu0
    %v3420 = vadd.f32 %v3211, %v3419
    %3421 = vmatmul.f32.gmra.mxu0 %v2837
    %v3422 = vpop.f32.mrf.mxu0
    %v3423 = vadd.f32 %v3214, %v3422
    %3424 = vmatmul.f32.gmra.mxu0 %v2846
    %v3425 = vpop.f32.mrf.mxu0
    %v3426 = vadd.f32 %v3217, %v3425
    %3427 = vmatmul.f32.gmra.mxu0 %v2855
    %v3428 = vpop.f32.mrf.mxu0
    %v3429 = vadd.f32 %v3220, %v3428
    %3430 = vmatmul.f32.gmra.mxu0 %v2864
    %v3431 = vpop.f32.mrf.mxu0
    %v3432 = vadd.f32 %v3223, %v3431
    %3433 = vdwg.mxu0
    %3434 = vmatpush.msra.mxu0 %v2919
    %3435 = vmatpush.msra.mxu0 %v2918
    %3436 = vmatpush.msra.mxu0 %v2917
    %3437 = vmatpush.msra.mxu0 %v2916
    %3438 = vmatpush.msra.mxu0 %v2915
    %3439 = vmatpush.msra.mxu0 %v2914
    %3440 = vmatpush.msra.mxu0 %v2913
    %3441 = vmatpush.msra.mxu0 %v2912
    %3442 = vmatpush.msra.mxu0 %v2911
    %3443 = vmatpush.msra.mxu0 %v2910
    %3444 = vmatpush.msra.mxu0 %v2909
    %3445 = vmatpush.msra.mxu0 %v2908
    %3446 = vmatpush.msra.mxu0 %v2907
    %3447 = vmatpush.msra.mxu0 %v2906
    %3448 = vmatpush.msra.mxu0 %v2905
    %3449 = vmatpush.msra.mxu0 %v2904
    %3450 = vmatmul.f32.gmra.mxu0 %v2298
    %v3451 = vpop.f32.mrf.mxu0
    %v3452 = vadd.f32 %v3243, %v3451
    %3453 = vmatmul.f32.gmra.mxu0 %v2307
    %v3454 = vpop.f32.mrf.mxu0
    %v3455 = vadd.f32 %v3246, %v3454
    %3456 = vmatmul.f32.gmra.mxu0 %v2316
    %v3457 = vpop.f32.mrf.mxu0
    %v3458 = vadd.f32 %v3249, %v3457
    %3459 = vmatmul.f32.gmra.mxu0 %v2325
    %v3460 = vpop.f32.mrf.mxu0
    %v3461 = vadd.f32 %v3252, %v3460
    %3462 = vmatmul.f32.gmra.mxu0 %v2334
    %v3463 = vpop.f32.mrf.mxu0
    %v3464 = vadd.f32 %v3255, %v3463
    %3465 = vmatmul.f32.gmra.mxu0 %v2343
    %v3466 = vpop.f32.mrf.mxu0
    %v3467 = vadd.f32 %v3258, %v3466
    %3468 = vmatmul.f32.gmra.mxu0 %v2352
    %v3469 = vpop.f32.mrf.mxu0
    %v3470 = vadd.f32 %v3261, %v3469
    %3471 = vmatmul.f32.gmra.mxu0 %v2361
    %v3472 = vpop.f32.mrf.mxu0
    %v3473 = vadd.f32 %v3264, %v3472
    %3474 = vmatmul.f32.gmra.mxu0 %v2370
    %v3475 = vpop.f32.mrf.mxu0
    %v3476 = vadd.f32 %v3267, %v3475
    %3477 = vmatmul.f32.gmra.mxu0 %v2379
    %v3478 = vpop.f32.mrf.mxu0
    %v3479 = vadd.f32 %v3270, %v3478
    %3480 = vmatmul.f32.gmra.mxu0 %v2388
    %v3481 = vpop.f32.mrf.mxu0
    %v3482 = vadd.f32 %v3273, %v3481
    %3483 = vmatmul.f32.gmra.mxu0 %v2397
    %v3484 = vpop.f32.mrf.mxu0
    %v3485 = vadd.f32 %v3276, %v3484
    %3486 = vmatmul.f32.gmra.mxu0 %v2406
    %v3487 = vpop.f32.mrf.mxu0
    %v3488 = vadd.f32 %v3279, %v3487
    %3489 = vmatmul.f32.gmra.mxu0 %v2415
    %v3490 = vpop.f32.mrf.mxu0
    %v3491 = vadd.f32 %v3282, %v3490
    %3492 = vmatmul.f32.gmra.mxu0 %v2424
    %v3493 = vpop.f32.mrf.mxu0
    %v3494 = vadd.f32 %v3285, %v3493
    %3495 = vmatmul.f32.gmra.mxu0 %v2433
    %v3496 = vpop.f32.mrf.mxu0
    %v3497 = vadd.f32 %v3288, %v3496
    %3498 = vmatmul.f32.gmra.mxu0 %v2442
    %v3499 = vpop.f32.mrf.mxu0
    %v3500 = vadd.f32 %v3291, %v3499
    %3501 = vmatmul.f32.gmra.mxu0 %v2451
    %v3502 = vpop.f32.mrf.mxu0
    %v3503 = vadd.f32 %v3294, %v3502
    %3504 = vmatmul.f32.gmra.mxu0 %v2460
    %v3505 = vpop.f32.mrf.mxu0
    %v3506 = vadd.f32 %v3297, %v3505
    %3507 = vmatmul.f32.gmra.mxu0 %v2469
    %v3508 = vpop.f32.mrf.mxu0
    %v3509 = vadd.f32 %v3300, %v3508
    %3510 = vmatmul.f32.gmra.mxu0 %v2478
    %v3511 = vpop.f32.mrf.mxu0
    %v3512 = vadd.f32 %v3303, %v3511
    %3513 = vmatmul.f32.gmra.mxu0 %v2487
    %v3514 = vpop.f32.mrf.mxu0
    %v3515 = vadd.f32 %v3306, %v3514
    %3516 = vmatmul.f32.gmra.mxu0 %v2496
    %v3517 = vpop.f32.mrf.mxu0
    %v3518 = vadd.f32 %v3309, %v3517
    %3519 = vmatmul.f32.gmra.mxu0 %v2505
    %v3520 = vpop.f32.mrf.mxu0
    %v3521 = vadd.f32 %v3312, %v3520
    %3522 = vmatmul.f32.gmra.mxu0 %v2514
    %v3523 = vpop.f32.mrf.mxu0
    %v3524 = vadd.f32 %v3315, %v3523
    %3525 = vmatmul.f32.gmra.mxu0 %v2523
    %v3526 = vpop.f32.mrf.mxu0
    %v3527 = vadd.f32 %v3318, %v3526
    %3528 = vmatmul.f32.gmra.mxu0 %v2532
    %v3529 = vpop.f32.mrf.mxu0
    %v3530 = vadd.f32 %v3321, %v3529
    %3531 = vmatmul.f32.gmra.mxu0 %v2541
    %v3532 = vpop.f32.mrf.mxu0
    %v3533 = vadd.f32 %v3324, %v3532
    %3534 = vmatmul.f32.gmra.mxu0 %v2550
    %v3535 = vpop.f32.mrf.mxu0
    %v3536 = vadd.f32 %v3327, %v3535
    %3537 = vmatmul.f32.gmra.mxu0 %v2559
    %v3538 = vpop.f32.mrf.mxu0
    %v3539 = vadd.f32 %v3330, %v3538
    %3540 = vmatmul.f32.gmra.mxu0 %v2568
    %v3541 = vpop.f32.mrf.mxu0
    %v3542 = vadd.f32 %v3333, %v3541
    %3543 = vmatmul.f32.gmra.mxu0 %v2577
    %v3544 = vpop.f32.mrf.mxu0
    %v3545 = vadd.f32 %v3336, %v3544
    %3546 = vmatmul.f32.gmra.mxu0 %v2586
    %v3547 = vpop.f32.mrf.mxu0
    %v3548 = vadd.f32 %v3339, %v3547
    %3549 = vmatmul.f32.gmra.mxu0 %v2595
    %v3550 = vpop.f32.mrf.mxu0
    %v3551 = vadd.f32 %v3342, %v3550
    %3552 = vmatmul.f32.gmra.mxu0 %v2604
    %v3553 = vpop.f32.mrf.mxu0
    %v3554 = vadd.f32 %v3345, %v3553
    %3555 = vmatmul.f32.gmra.mxu0 %v2613
    %v3556 = vpop.f32.mrf.mxu0
    %v3557 = vadd.f32 %v3348, %v3556
    %3558 = vmatmul.f32.gmra.mxu0 %v2622
    %v3559 = vpop.f32.mrf.mxu0
    %v3560 = vadd.f32 %v3351, %v3559
    %3561 = vmatmul.f32.gmra.mxu0 %v2631
    %v3562 = vpop.f32.mrf.mxu0
    %v3563 = vadd.f32 %v3354, %v3562
    %3564 = vmatmul.f32.gmra.mxu0 %v2640
    %v3565 = vpop.f32.mrf.mxu0
    %v3566 = vadd.f32 %v3357, %v3565
    %3567 = vmatmul.f32.gmra.mxu0 %v2649
    %v3568 = vpop.f32.mrf.mxu0
    %v3569 = vadd.f32 %v3360, %v3568
    %3570 = vmatmul.f32.gmra.mxu0 %v2658
    %v3571 = vpop.f32.mrf.mxu0
    %v3572 = vadd.f32 %v3363, %v3571
    %3573 = vmatmul.f32.gmra.mxu0 %v2667
    %v3574 = vpop.f32.mrf.mxu0
    %v3575 = vadd.f32 %v3366, %v3574
    %3576 = vmatmul.f32.gmra.mxu0 %v2676
    %v3577 = vpop.f32.mrf.mxu0
    %v3578 = vadd.f32 %v3369, %v3577
    %3579 = vmatmul.f32.gmra.mxu0 %v2685
    %v3580 = vpop.f32.mrf.mxu0
    %v3581 = vadd.f32 %v3372, %v3580
    %3582 = vmatmul.f32.gmra.mxu0 %v2694
    %v3583 = vpop.f32.mrf.mxu0
    %v3584 = vadd.f32 %v3375, %v3583
    %3585 = vmatmul.f32.gmra.mxu0 %v2703
    %v3586 = vpop.f32.mrf.mxu0
    %v3587 = vadd.f32 %v3378, %v3586
    %3588 = vmatmul.f32.gmra.mxu0 %v2712
    %v3589 = vpop.f32.mrf.mxu0
    %v3590 = vadd.f32 %v3381, %v3589
    %3591 = vmatmul.f32.gmra.mxu0 %v2721
    %v3592 = vpop.f32.mrf.mxu0
    %v3593 = vadd.f32 %v3384, %v3592
    %3594 = vmatmul.f32.gmra.mxu0 %v2730
    %v3595 = vpop.f32.mrf.mxu0
    %v3596 = vadd.f32 %v3387, %v3595
    %3597 = vmatmul.f32.gmra.mxu0 %v2739
    %v3598 = vpop.f32.mrf.mxu0
    %v3599 = vadd.f32 %v3390, %v3598
    %3600 = vmatmul.f32.gmra.mxu0 %v2748
    %v3601 = vpop.f32.mrf.mxu0
    %v3602 = vadd.f32 %v3393, %v3601
    %3603 = vmatmul.f32.gmra.mxu0 %v2757
    %v3604 = vpop.f32.mrf.mxu0
    %v3605 = vadd.f32 %v3396, %v3604
    %3606 = vmatmul.f32.gmra.mxu0 %v2766
    %v3607 = vpop.f32.mrf.mxu0
    %v3608 = vadd.f32 %v3399, %v3607
    %3609 = vmatmul.f32.gmra.mxu0 %v2775
    %v3610 = vpop.f32.mrf.mxu0
    %v3611 = vadd.f32 %v3402, %v3610
    %3612 = vmatmul.f32.gmra.mxu0 %v2784
    %v3613 = vpop.f32.mrf.mxu0
    %v3614 = vadd.f32 %v3405, %v3613
    %3615 = vmatmul.f32.gmra.mxu0 %v2793
    %v3616 = vpop.f32.mrf.mxu0
    %v3617 = vadd.f32 %v3408, %v3616
    %3618 = vmatmul.f32.gmra.mxu0 %v2802
    %v3619 = vpop.f32.mrf.mxu0
    %v3620 = vadd.f32 %v3411, %v3619
    %3621 = vmatmul.f32.gmra.mxu0 %v2811
    %v3622 = vpop.f32.mrf.mxu0
    %v3623 = vadd.f32 %v3414, %v3622
    %3624 = vmatmul.f32.gmra.mxu0 %v2820
    %v3625 = vpop.f32.mrf.mxu0
    %v3626 = vadd.f32 %v3417, %v3625
    %3627 = vmatmul.f32.gmra.mxu0 %v2829
    %v3628 = vpop.f32.mrf.mxu0
    %v3629 = vadd.f32 %v3420, %v3628
    %3630 = vmatmul.f32.gmra.mxu0 %v2838
    %v3631 = vpop.f32.mrf.mxu0
    %v3632 = vadd.f32 %v3423, %v3631
    %3633 = vmatmul.f32.gmra.mxu0 %v2847
    %v3634 = vpop.f32.mrf.mxu0
    %v3635 = vadd.f32 %v3426, %v3634
    %3636 = vmatmul.f32.gmra.mxu0 %v2856
    %v3637 = vpop.f32.mrf.mxu0
    %v3638 = vadd.f32 %v3429, %v3637
    %3639 = vmatmul.f32.gmra.mxu0 %v2865
    %v3640 = vpop.f32.mrf.mxu0
    %v3641 = vadd.f32 %v3432, %v3640
    %3642 = vdwg.mxu0
    %3643 = vmatpush.msra.mxu0 %v2935
    %3644 = vmatpush.msra.mxu0 %v2934
    %3645 = vmatpush.msra.mxu0 %v2933
    %3646 = vmatpush.msra.mxu0 %v2932
    %3647 = vmatpush.msra.mxu0 %v2931
    %3648 = vmatpush.msra.mxu0 %v2930
    %3649 = vmatpush.msra.mxu0 %v2929
    %3650 = vmatpush.msra.mxu0 %v2928
    %3651 = vmatpush.msra.mxu0 %v2927
    %3652 = vmatpush.msra.mxu0 %v2926
    %3653 = vmatpush.msra.mxu0 %v2925
    %3654 = vmatpush.msra.mxu0 %v2924
    %3655 = vmatpush.msra.mxu0 %v2923
    %3656 = vmatpush.msra.mxu0 %v2922
    %3657 = vmatpush.msra.mxu0 %v2921
    %3658 = vmatpush.msra.mxu0 %v2920
    %3659 = vmatmul.f32.gmra.mxu0 %v2299
    %v3660 = vpop.f32.mrf.mxu0
    %v3661 = vadd.f32 %v3452, %v3660
    %3662 = vmatmul.f32.gmra.mxu0 %v2308
    %v3663 = vpop.f32.mrf.mxu0
    %v3664 = vadd.f32 %v3455, %v3663
    %3665 = vmatmul.f32.gmra.mxu0 %v2317
    %v3666 = vpop.f32.mrf.mxu0
    %v3667 = vadd.f32 %v3458, %v3666
    %3668 = vmatmul.f32.gmra.mxu0 %v2326
    %v3669 = vpop.f32.mrf.mxu0
    %v3670 = vadd.f32 %v3461, %v3669
    %3671 = vmatmul.f32.gmra.mxu0 %v2335
    %v3672 = vpop.f32.mrf.mxu0
    %v3673 = vadd.f32 %v3464, %v3672
    %3674 = vmatmul.f32.gmra.mxu0 %v2344
    %v3675 = vpop.f32.mrf.mxu0
    %v3676 = vadd.f32 %v3467, %v3675
    %3677 = vmatmul.f32.gmra.mxu0 %v2353
    %v3678 = vpop.f32.mrf.mxu0
    %v3679 = vadd.f32 %v3470, %v3678
    %3680 = vmatmul.f32.gmra.mxu0 %v2362
    %v3681 = vpop.f32.mrf.mxu0
    %v3682 = vadd.f32 %v3473, %v3681
    %3683 = vmatmul.f32.gmra.mxu0 %v2371
    %v3684 = vpop.f32.mrf.mxu0
    %v3685 = vadd.f32 %v3476, %v3684
    %3686 = vmatmul.f32.gmra.mxu0 %v2380
    %v3687 = vpop.f32.mrf.mxu0
    %v3688 = vadd.f32 %v3479, %v3687
    %3689 = vmatmul.f32.gmra.mxu0 %v2389
    %v3690 = vpop.f32.mrf.mxu0
    %v3691 = vadd.f32 %v3482, %v3690
    %3692 = vmatmul.f32.gmra.mxu0 %v2398
    %v3693 = vpop.f32.mrf.mxu0
    %v3694 = vadd.f32 %v3485, %v3693
    %3695 = vmatmul.f32.gmra.mxu0 %v2407
    %v3696 = vpop.f32.mrf.mxu0
    %v3697 = vadd.f32 %v3488, %v3696
    %3698 = vmatmul.f32.gmra.mxu0 %v2416
    %v3699 = vpop.f32.mrf.mxu0
    %v3700 = vadd.f32 %v3491, %v3699
    %3701 = vmatmul.f32.gmra.mxu0 %v2425
    %v3702 = vpop.f32.mrf.mxu0
    %v3703 = vadd.f32 %v3494, %v3702
    %3704 = vmatmul.f32.gmra.mxu0 %v2434
    %v3705 = vpop.f32.mrf.mxu0
    %v3706 = vadd.f32 %v3497, %v3705
    %3707 = vmatmul.f32.gmra.mxu0 %v2443
    %v3708 = vpop.f32.mrf.mxu0
    %v3709 = vadd.f32 %v3500, %v3708
    %3710 = vmatmul.f32.gmra.mxu0 %v2452
    %v3711 = vpop.f32.mrf.mxu0
    %v3712 = vadd.f32 %v3503, %v3711
    %3713 = vmatmul.f32.gmra.mxu0 %v2461
    %v3714 = vpop.f32.mrf.mxu0
    %v3715 = vadd.f32 %v3506, %v3714
    %3716 = vmatmul.f32.gmra.mxu0 %v2470
    %v3717 = vpop.f32.mrf.mxu0
    %v3718 = vadd.f32 %v3509, %v3717
    %3719 = vmatmul.f32.gmra.mxu0 %v2479
    %v3720 = vpop.f32.mrf.mxu0
    %v3721 = vadd.f32 %v3512, %v3720
    %3722 = vmatmul.f32.gmra.mxu0 %v2488
    %v3723 = vpop.f32.mrf.mxu0
    %v3724 = vadd.f32 %v3515, %v3723
    %3725 = vmatmul.f32.gmra.mxu0 %v2497
    %v3726 = vpop.f32.mrf.mxu0
    %v3727 = vadd.f32 %v3518, %v3726
    %3728 = vmatmul.f32.gmra.mxu0 %v2506
    %v3729 = vpop.f32.mrf.mxu0
    %v3730 = vadd.f32 %v3521, %v3729
    %3731 = vmatmul.f32.gmra.mxu0 %v2515
    %v3732 = vpop.f32.mrf.mxu0
    %v3733 = vadd.f32 %v3524, %v3732
    %3734 = vmatmul.f32.gmra.mxu0 %v2524
    %v3735 = vpop.f32.mrf.mxu0
    %v3736 = vadd.f32 %v3527, %v3735
    %3737 = vmatmul.f32.gmra.mxu0 %v2533
    %v3738 = vpop.f32.mrf.mxu0
    %v3739 = vadd.f32 %v3530, %v3738
    %3740 = vmatmul.f32.gmra.mxu0 %v2542
    %v3741 = vpop.f32.mrf.mxu0
    %v3742 = vadd.f32 %v3533, %v3741
    %3743 = vmatmul.f32.gmra.mxu0 %v2551
    %v3744 = vpop.f32.mrf.mxu0
    %v3745 = vadd.f32 %v3536, %v3744
    %3746 = vmatmul.f32.gmra.mxu0 %v2560
    %v3747 = vpop.f32.mrf.mxu0
    %v3748 = vadd.f32 %v3539, %v3747
    %3749 = vmatmul.f32.gmra.mxu0 %v2569
    %v3750 = vpop.f32.mrf.mxu0
    %v3751 = vadd.f32 %v3542, %v3750
    %3752 = vmatmul.f32.gmra.mxu0 %v2578
    %v3753 = vpop.f32.mrf.mxu0
    %v3754 = vadd.f32 %v3545, %v3753
    %3755 = vmatmul.f32.gmra.mxu0 %v2587
    %v3756 = vpop.f32.mrf.mxu0
    %v3757 = vadd.f32 %v3548, %v3756
    %3758 = vmatmul.f32.gmra.mxu0 %v2596
    %v3759 = vpop.f32.mrf.mxu0
    %v3760 = vadd.f32 %v3551, %v3759
    %3761 = vmatmul.f32.gmra.mxu0 %v2605
    %v3762 = vpop.f32.mrf.mxu0
    %v3763 = vadd.f32 %v3554, %v3762
    %3764 = vmatmul.f32.gmra.mxu0 %v2614
    %v3765 = vpop.f32.mrf.mxu0
    %v3766 = vadd.f32 %v3557, %v3765
    %3767 = vmatmul.f32.gmra.mxu0 %v2623
    %v3768 = vpop.f32.mrf.mxu0
    %v3769 = vadd.f32 %v3560, %v3768
    %3770 = vmatmul.f32.gmra.mxu0 %v2632
    %v3771 = vpop.f32.mrf.mxu0
    %v3772 = vadd.f32 %v3563, %v3771
    %3773 = vmatmul.f32.gmra.mxu0 %v2641
    %v3774 = vpop.f32.mrf.mxu0
    %v3775 = vadd.f32 %v3566, %v3774
    %3776 = vmatmul.f32.gmra.mxu0 %v2650
    %v3777 = vpop.f32.mrf.mxu0
    %v3778 = vadd.f32 %v3569, %v3777
    %3779 = vmatmul.f32.gmra.mxu0 %v2659
    %v3780 = vpop.f32.mrf.mxu0
    %v3781 = vadd.f32 %v3572, %v3780
    %3782 = vmatmul.f32.gmra.mxu0 %v2668
    %v3783 = vpop.f32.mrf.mxu0
    %v3784 = vadd.f32 %v3575, %v3783
    %3785 = vmatmul.f32.gmra.mxu0 %v2677
    %v3786 = vpop.f32.mrf.mxu0
    %v3787 = vadd.f32 %v3578, %v3786
    %3788 = vmatmul.f32.gmra.mxu0 %v2686
    %v3789 = vpop.f32.mrf.mxu0
    %v3790 = vadd.f32 %v3581, %v3789
    %3791 = vmatmul.f32.gmra.mxu0 %v2695
    %v3792 = vpop.f32.mrf.mxu0
    %v3793 = vadd.f32 %v3584, %v3792
    %3794 = vmatmul.f32.gmra.mxu0 %v2704
    %v3795 = vpop.f32.mrf.mxu0
    %v3796 = vadd.f32 %v3587, %v3795
    %3797 = vmatmul.f32.gmra.mxu0 %v2713
    %v3798 = vpop.f32.mrf.mxu0
    %v3799 = vadd.f32 %v3590, %v3798
    %3800 = vmatmul.f32.gmra.mxu0 %v2722
    %v3801 = vpop.f32.mrf.mxu0
    %v3802 = vadd.f32 %v3593, %v3801
    %3803 = vmatmul.f32.gmra.mxu0 %v2731
    %v3804 = vpop.f32.mrf.mxu0
    %v3805 = vadd.f32 %v3596, %v3804
    %3806 = vmatmul.f32.gmra.mxu0 %v2740
    %v3807 = vpop.f32.mrf.mxu0
    %v3808 = vadd.f32 %v3599, %v3807
    %3809 = vmatmul.f32.gmra.mxu0 %v2749
    %v3810 = vpop.f32.mrf.mxu0
    %v3811 = vadd.f32 %v3602, %v3810
    %3812 = vmatmul.f32.gmra.mxu0 %v2758
    %v3813 = vpop.f32.mrf.mxu0
    %v3814 = vadd.f32 %v3605, %v3813
    %3815 = vmatmul.f32.gmra.mxu0 %v2767
    %v3816 = vpop.f32.mrf.mxu0
    %v3817 = vadd.f32 %v3608, %v3816
    %3818 = vmatmul.f32.gmra.mxu0 %v2776
    %v3819 = vpop.f32.mrf.mxu0
    %v3820 = vadd.f32 %v3611, %v3819
    %3821 = vmatmul.f32.gmra.mxu0 %v2785
    %v3822 = vpop.f32.mrf.mxu0
    %v3823 = vadd.f32 %v3614, %v3822
    %3824 = vmatmul.f32.gmra.mxu0 %v2794
    %v3825 = vpop.f32.mrf.mxu0
    %v3826 = vadd.f32 %v3617, %v3825
    %3827 = vmatmul.f32.gmra.mxu0 %v2803
    %v3828 = vpop.f32.mrf.mxu0
    %v3829 = vadd.f32 %v3620, %v3828
    %3830 = vmatmul.f32.gmra.mxu0 %v2812
    %v3831 = vpop.f32.mrf.mxu0
    %v3832 = vadd.f32 %v3623, %v3831
    %3833 = vmatmul.f32.gmra.mxu0 %v2821
    %v3834 = vpop.f32.mrf.mxu0
    %v3835 = vadd.f32 %v3626, %v3834
    %3836 = vmatmul.f32.gmra.mxu0 %v2830
    %v3837 = vpop.f32.mrf.mxu0
    %v3838 = vadd.f32 %v3629, %v3837
    %3839 = vmatmul.f32.gmra.mxu0 %v2839
    %v3840 = vpop.f32.mrf.mxu0
    %v3841 = vadd.f32 %v3632, %v3840
    %3842 = vmatmul.f32.gmra.mxu0 %v2848
    %v3843 = vpop.f32.mrf.mxu0
    %v3844 = vadd.f32 %v3635, %v3843
    %3845 = vmatmul.f32.gmra.mxu0 %v2857
    %v3846 = vpop.f32.mrf.mxu0
    %v3847 = vadd.f32 %v3638, %v3846
    %3848 = vmatmul.f32.gmra.mxu0 %v2866
    %v3849 = vpop.f32.mrf.mxu0
    %v3850 = vadd.f32 %v3641, %v3849
    %3851 = vdwg.mxu0
    %3852 = vmatpush.msra.mxu0 %v2951
    %3853 = vmatpush.msra.mxu0 %v2950
    %3854 = vmatpush.msra.mxu0 %v2949
    %3855 = vmatpush.msra.mxu0 %v2948
    %3856 = vmatpush.msra.mxu0 %v2947
    %3857 = vmatpush.msra.mxu0 %v2946
    %3858 = vmatpush.msra.mxu0 %v2945
    %3859 = vmatpush.msra.mxu0 %v2944
    %3860 = vmatpush.msra.mxu0 %v2943
    %3861 = vmatpush.msra.mxu0 %v2942
    %3862 = vmatpush.msra.mxu0 %v2941
    %3863 = vmatpush.msra.mxu0 %v2940
    %3864 = vmatpush.msra.mxu0 %v2939
    %3865 = vmatpush.msra.mxu0 %v2938
    %3866 = vmatpush.msra.mxu0 %v2937
    %3867 = vmatpush.msra.mxu0 %v2936
    %3868 = vmatmul.f32.gmra.mxu0 %v2300
    %v3869 = vpop.f32.mrf.mxu0
    %v3870 = vadd.f32 %v3661, %v3869
    %3871 = vmatmul.f32.gmra.mxu0 %v2309
    %v3872 = vpop.f32.mrf.mxu0
    %v3873 = vadd.f32 %v3664, %v3872
    %3874 = vmatmul.f32.gmra.mxu0 %v2318
    %v3875 = vpop.f32.mrf.mxu0
    %v3876 = vadd.f32 %v3667, %v3875
    %3877 = vmatmul.f32.gmra.mxu0 %v2327
    %v3878 = vpop.f32.mrf.mxu0
    %v3879 = vadd.f32 %v3670, %v3878
    %3880 = vmatmul.f32.gmra.mxu0 %v2336
    %v3881 = vpop.f32.mrf.mxu0
    %v3882 = vadd.f32 %v3673, %v3881
    %3883 = vmatmul.f32.gmra.mxu0 %v2345
    %v3884 = vpop.f32.mrf.mxu0
    %v3885 = vadd.f32 %v3676, %v3884
    %3886 = vmatmul.f32.gmra.mxu0 %v2354
    %v3887 = vpop.f32.mrf.mxu0
    %v3888 = vadd.f32 %v3679, %v3887
    %3889 = vmatmul.f32.gmra.mxu0 %v2363
    %v3890 = vpop.f32.mrf.mxu0
    %v3891 = vadd.f32 %v3682, %v3890
    %3892 = vmatmul.f32.gmra.mxu0 %v2372
    %v3893 = vpop.f32.mrf.mxu0
    %v3894 = vadd.f32 %v3685, %v3893
    %3895 = vmatmul.f32.gmra.mxu0 %v2381
    %v3896 = vpop.f32.mrf.mxu0
    %v3897 = vadd.f32 %v3688, %v3896
    %3898 = vmatmul.f32.gmra.mxu0 %v2390
    %v3899 = vpop.f32.mrf.mxu0
    %v3900 = vadd.f32 %v3691, %v3899
    %3901 = vmatmul.f32.gmra.mxu0 %v2399
    %v3902 = vpop.f32.mrf.mxu0
    %v3903 = vadd.f32 %v3694, %v3902
    %3904 = vmatmul.f32.gmra.mxu0 %v2408
    %v3905 = vpop.f32.mrf.mxu0
    %v3906 = vadd.f32 %v3697, %v3905
    %3907 = vmatmul.f32.gmra.mxu0 %v2417
    %v3908 = vpop.f32.mrf.mxu0
    %v3909 = vadd.f32 %v3700, %v3908
    %3910 = vmatmul.f32.gmra.mxu0 %v2426
    %v3911 = vpop.f32.mrf.mxu0
    %v3912 = vadd.f32 %v3703, %v3911
    %3913 = vmatmul.f32.gmra.mxu0 %v2435
    %v3914 = vpop.f32.mrf.mxu0
    %v3915 = vadd.f32 %v3706, %v3914
    %3916 = vmatmul.f32.gmra.mxu0 %v2444
    %v3917 = vpop.f32.mrf.mxu0
    %v3918 = vadd.f32 %v3709, %v3917
    %3919 = vmatmul.f32.gmra.mxu0 %v2453
    %v3920 = vpop.f32.mrf.mxu0
    %v3921 = vadd.f32 %v3712, %v3920
    %3922 = vmatmul.f32.gmra.mxu0 %v2462
    %v3923 = vpop.f32.mrf.mxu0
    %v3924 = vadd.f32 %v3715, %v3923
    %3925 = vmatmul.f32.gmra.mxu0 %v2471
    %v3926 = vpop.f32.mrf.mxu0
    %v3927 = vadd.f32 %v3718, %v3926
    %3928 = vmatmul.f32.gmra.mxu0 %v2480
    %v3929 = vpop.f32.mrf.mxu0
    %v3930 = vadd.f32 %v3721, %v3929
    %3931 = vmatmul.f32.gmra.mxu0 %v2489
    %v3932 = vpop.f32.mrf.mxu0
    %v3933 = vadd.f32 %v3724, %v3932
    %3934 = vmatmul.f32.gmra.mxu0 %v2498
    %v3935 = vpop.f32.mrf.mxu0
    %v3936 = vadd.f32 %v3727, %v3935
    %3937 = vmatmul.f32.gmra.mxu0 %v2507
    %v3938 = vpop.f32.mrf.mxu0
    %v3939 = vadd.f32 %v3730, %v3938
    %3940 = vmatmul.f32.gmra.mxu0 %v2516
    %v3941 = vpop.f32.mrf.mxu0
    %v3942 = vadd.f32 %v3733, %v3941
    %3943 = vmatmul.f32.gmra.mxu0 %v2525
    %v3944 = vpop.f32.mrf.mxu0
    %v3945 = vadd.f32 %v3736, %v3944
    %3946 = vmatmul.f32.gmra.mxu0 %v2534
    %v3947 = vpop.f32.mrf.mxu0
    %v3948 = vadd.f32 %v3739, %v3947
    %3949 = vmatmul.f32.gmra.mxu0 %v2543
    %v3950 = vpop.f32.mrf.mxu0
    %v3951 = vadd.f32 %v3742, %v3950
    %3952 = vmatmul.f32.gmra.mxu0 %v2552
    %v3953 = vpop.f32.mrf.mxu0
    %v3954 = vadd.f32 %v3745, %v3953
    %3955 = vmatmul.f32.gmra.mxu0 %v2561
    %v3956 = vpop.f32.mrf.mxu0
    %v3957 = vadd.f32 %v3748, %v3956
    %3958 = vmatmul.f32.gmra.mxu0 %v2570
    %v3959 = vpop.f32.mrf.mxu0
    %v3960 = vadd.f32 %v3751, %v3959
    %3961 = vmatmul.f32.gmra.mxu0 %v2579
    %v3962 = vpop.f32.mrf.mxu0
    %v3963 = vadd.f32 %v3754, %v3962
    %3964 = vmatmul.f32.gmra.mxu0 %v2588
    %v3965 = vpop.f32.mrf.mxu0
    %v3966 = vadd.f32 %v3757, %v3965
    %3967 = vmatmul.f32.gmra.mxu0 %v2597
    %v3968 = vpop.f32.mrf.mxu0
    %v3969 = vadd.f32 %v3760, %v3968
    %3970 = vmatmul.f32.gmra.mxu0 %v2606
    %v3971 = vpop.f32.mrf.mxu0
    %v3972 = vadd.f32 %v3763, %v3971
    %3973 = vmatmul.f32.gmra.mxu0 %v2615
    %v3974 = vpop.f32.mrf.mxu0
    %v3975 = vadd.f32 %v3766, %v3974
    %3976 = vmatmul.f32.gmra.mxu0 %v2624
    %v3977 = vpop.f32.mrf.mxu0
    %v3978 = vadd.f32 %v3769, %v3977
    %3979 = vmatmul.f32.gmra.mxu0 %v2633
    %v3980 = vpop.f32.mrf.mxu0
    %v3981 = vadd.f32 %v3772, %v3980
    %3982 = vmatmul.f32.gmra.mxu0 %v2642
    %v3983 = vpop.f32.mrf.mxu0
    %v3984 = vadd.f32 %v3775, %v3983
    %3985 = vmatmul.f32.gmra.mxu0 %v2651
    %v3986 = vpop.f32.mrf.mxu0
    %v3987 = vadd.f32 %v3778, %v3986
    %3988 = vmatmul.f32.gmra.mxu0 %v2660
    %v3989 = vpop.f32.mrf.mxu0
    %v3990 = vadd.f32 %v3781, %v3989
    %3991 = vmatmul.f32.gmra.mxu0 %v2669
    %v3992 = vpop.f32.mrf.mxu0
    %v3993 = vadd.f32 %v3784, %v3992
    %3994 = vmatmul.f32.gmra.mxu0 %v2678
    %v3995 = vpop.f32.mrf.mxu0
    %v3996 = vadd.f32 %v3787, %v3995
    %3997 = vmatmul.f32.gmra.mxu0 %v2687
    %v3998 = vpop.f32.mrf.mxu0
    %v3999 = vadd.f32 %v3790, %v3998
    %4000 = vmatmul.f32.gmra.mxu0 %v2696
    %v4001 = vpop.f32.mrf.mxu0
    %v4002 = vadd.f32 %v3793, %v4001
    %4003 = vmatmul.f32.gmra.mxu0 %v2705
    %v4004 = vpop.f32.mrf.mxu0
    %v4005 = vadd.f32 %v3796, %v4004
    %4006 = vmatmul.f32.gmra.mxu0 %v2714
    %v4007 = vpop.f32.mrf.mxu0
    %v4008 = vadd.f32 %v3799, %v4007
    %4009 = vmatmul.f32.gmra.mxu0 %v2723
    %v4010 = vpop.f32.mrf.mxu0
    %v4011 = vadd.f32 %v3802, %v4010
    %4012 = vmatmul.f32.gmra.mxu0 %v2732
    %v4013 = vpop.f32.mrf.mxu0
    %v4014 = vadd.f32 %v3805, %v4013
    %4015 = vmatmul.f32.gmra.mxu0 %v2741
    %v4016 = vpop.f32.mrf.mxu0
    %v4017 = vadd.f32 %v3808, %v4016
    %4018 = vmatmul.f32.gmra.mxu0 %v2750
    %v4019 = vpop.f32.mrf.mxu0
    %v4020 = vadd.f32 %v3811, %v4019
    %4021 = vmatmul.f32.gmra.mxu0 %v2759
    %v4022 = vpop.f32.mrf.mxu0
    %v4023 = vadd.f32 %v3814, %v4022
    %4024 = vmatmul.f32.gmra.mxu0 %v2768
    %v4025 = vpop.f32.mrf.mxu0
    %v4026 = vadd.f32 %v3817, %v4025
    %4027 = vmatmul.f32.gmra.mxu0 %v2777
    %v4028 = vpop.f32.mrf.mxu0
    %v4029 = vadd.f32 %v3820, %v4028
    %4030 = vmatmul.f32.gmra.mxu0 %v2786
    %v4031 = vpop.f32.mrf.mxu0
    %v4032 = vadd.f32 %v3823, %v4031
    %4033 = vmatmul.f32.gmra.mxu0 %v2795
    %v4034 = vpop.f32.mrf.mxu0
    %v4035 = vadd.f32 %v3826, %v4034
    %4036 = vmatmul.f32.gmra.mxu0 %v2804
    %v4037 = vpop.f32.mrf.mxu0
    %v4038 = vadd.f32 %v3829, %v4037
    %4039 = vmatmul.f32.gmra.mxu0 %v2813
    %v4040 = vpop.f32.mrf.mxu0
    %v4041 = vadd.f32 %v3832, %v4040
    %4042 = vmatmul.f32.gmra.mxu0 %v2822
    %v4043 = vpop.f32.mrf.mxu0
    %v4044 = vadd.f32 %v3835, %v4043
    %4045 = vmatmul.f32.gmra.mxu0 %v2831
    %v4046 = vpop.f32.mrf.mxu0
    %v4047 = vadd.f32 %v3838, %v4046
    %4048 = vmatmul.f32.gmra.mxu0 %v2840
    %v4049 = vpop.f32.mrf.mxu0
    %v4050 = vadd.f32 %v3841, %v4049
    %4051 = vmatmul.f32.gmra.mxu0 %v2849
    %v4052 = vpop.f32.mrf.mxu0
    %v4053 = vadd.f32 %v3844, %v4052
    %4054 = vmatmul.f32.gmra.mxu0 %v2858
    %v4055 = vpop.f32.mrf.mxu0
    %v4056 = vadd.f32 %v3847, %v4055
    %4057 = vmatmul.f32.gmra.mxu0 %v2867
    %v4058 = vpop.f32.mrf.mxu0
    %v4059 = vadd.f32 %v3850, %v4058
    %4060 = vdwg.mxu0
    %4061 = vmatpush.msra.mxu0 %v2967
    %4062 = vmatpush.msra.mxu0 %v2966
    %4063 = vmatpush.msra.mxu0 %v2965
    %4064 = vmatpush.msra.mxu0 %v2964
    %4065 = vmatpush.msra.mxu0 %v2963
    %4066 = vmatpush.msra.mxu0 %v2962
    %4067 = vmatpush.msra.mxu0 %v2961
    %4068 = vmatpush.msra.mxu0 %v2960
    %4069 = vmatpush.msra.mxu0 %v2959
    %4070 = vmatpush.msra.mxu0 %v2958
    %4071 = vmatpush.msra.mxu0 %v2957
    %4072 = vmatpush.msra.mxu0 %v2956
    %4073 = vmatpush.msra.mxu0 %v2955
    %4074 = vmatpush.msra.mxu0 %v2954
    %4075 = vmatpush.msra.mxu0 %v2953
    %4076 = vmatpush.msra.mxu0 %v2952
    %4077 = vmatmul.f32.gmra.mxu0 %v2301
    %v4078 = vpop.f32.mrf.mxu0
    %v4079 = vadd.f32 %v3870, %v4078
    %4080 = vmatmul.f32.gmra.mxu0 %v2310
    %v4081 = vpop.f32.mrf.mxu0
    %v4082 = vadd.f32 %v3873, %v4081
    %4083 = vmatmul.f32.gmra.mxu0 %v2319
    %v4084 = vpop.f32.mrf.mxu0
    %v4085 = vadd.f32 %v3876, %v4084
    %4086 = vmatmul.f32.gmra.mxu0 %v2328
    %v4087 = vpop.f32.mrf.mxu0
    %v4088 = vadd.f32 %v3879, %v4087
    %4089 = vmatmul.f32.gmra.mxu0 %v2337
    %v4090 = vpop.f32.mrf.mxu0
    %v4091 = vadd.f32 %v3882, %v4090
    %4092 = vmatmul.f32.gmra.mxu0 %v2346
    %v4093 = vpop.f32.mrf.mxu0
    %v4094 = vadd.f32 %v3885, %v4093
    %4095 = vmatmul.f32.gmra.mxu0 %v2355
    %v4096 = vpop.f32.mrf.mxu0
    %v4097 = vadd.f32 %v3888, %v4096
    %4098 = vmatmul.f32.gmra.mxu0 %v2364
    %v4099 = vpop.f32.mrf.mxu0
    %v4100 = vadd.f32 %v3891, %v4099
    %4101 = vmatmul.f32.gmra.mxu0 %v2373
    %v4102 = vpop.f32.mrf.mxu0
    %v4103 = vadd.f32 %v3894, %v4102
    %4104 = vmatmul.f32.gmra.mxu0 %v2382
    %v4105 = vpop.f32.mrf.mxu0
    %v4106 = vadd.f32 %v3897, %v4105
    %4107 = vmatmul.f32.gmra.mxu0 %v2391
    %v4108 = vpop.f32.mrf.mxu0
    %v4109 = vadd.f32 %v3900, %v4108
    %4110 = vmatmul.f32.gmra.mxu0 %v2400
    %v4111 = vpop.f32.mrf.mxu0
    %v4112 = vadd.f32 %v3903, %v4111
    %4113 = vmatmul.f32.gmra.mxu0 %v2409
    %v4114 = vpop.f32.mrf.mxu0
    %v4115 = vadd.f32 %v3906, %v4114
    %4116 = vmatmul.f32.gmra.mxu0 %v2418
    %v4117 = vpop.f32.mrf.mxu0
    %v4118 = vadd.f32 %v3909, %v4117
    %4119 = vmatmul.f32.gmra.mxu0 %v2427
    %v4120 = vpop.f32.mrf.mxu0
    %v4121 = vadd.f32 %v3912, %v4120
    %4122 = vmatmul.f32.gmra.mxu0 %v2436
    %v4123 = vpop.f32.mrf.mxu0
    %v4124 = vadd.f32 %v3915, %v4123
    %4125 = vmatmul.f32.gmra.mxu0 %v2445
    %v4126 = vpop.f32.mrf.mxu0
    %v4127 = vadd.f32 %v3918, %v4126
    %4128 = vmatmul.f32.gmra.mxu0 %v2454
    %v4129 = vpop.f32.mrf.mxu0
    %v4130 = vadd.f32 %v3921, %v4129
    %4131 = vmatmul.f32.gmra.mxu0 %v2463
    %v4132 = vpop.f32.mrf.mxu0
    %v4133 = vadd.f32 %v3924, %v4132
    %4134 = vmatmul.f32.gmra.mxu0 %v2472
    %v4135 = vpop.f32.mrf.mxu0
    %v4136 = vadd.f32 %v3927, %v4135
    %4137 = vmatmul.f32.gmra.mxu0 %v2481
    %v4138 = vpop.f32.mrf.mxu0
    %v4139 = vadd.f32 %v3930, %v4138
    %4140 = vmatmul.f32.gmra.mxu0 %v2490
    %v4141 = vpop.f32.mrf.mxu0
    %v4142 = vadd.f32 %v3933, %v4141
    %4143 = vmatmul.f32.gmra.mxu0 %v2499
    %v4144 = vpop.f32.mrf.mxu0
    %v4145 = vadd.f32 %v3936, %v4144
    %4146 = vmatmul.f32.gmra.mxu0 %v2508
    %v4147 = vpop.f32.mrf.mxu0
    %v4148 = vadd.f32 %v3939, %v4147
    %4149 = vmatmul.f32.gmra.mxu0 %v2517
    %v4150 = vpop.f32.mrf.mxu0
    %v4151 = vadd.f32 %v3942, %v4150
    %4152 = vmatmul.f32.gmra.mxu0 %v2526
    %v4153 = vpop.f32.mrf.mxu0
    %v4154 = vadd.f32 %v3945, %v4153
    %4155 = vmatmul.f32.gmra.mxu0 %v2535
    %v4156 = vpop.f32.mrf.mxu0
    %v4157 = vadd.f32 %v3948, %v4156
    %4158 = vmatmul.f32.gmra.mxu0 %v2544
    %v4159 = vpop.f32.mrf.mxu0
    %v4160 = vadd.f32 %v3951, %v4159
    %4161 = vmatmul.f32.gmra.mxu0 %v2553
    %v4162 = vpop.f32.mrf.mxu0
    %v4163 = vadd.f32 %v3954, %v4162
    %4164 = vmatmul.f32.gmra.mxu0 %v2562
    %v4165 = vpop.f32.mrf.mxu0
    %v4166 = vadd.f32 %v3957, %v4165
    %4167 = vmatmul.f32.gmra.mxu0 %v2571
    %v4168 = vpop.f32.mrf.mxu0
    %v4169 = vadd.f32 %v3960, %v4168
    %4170 = vmatmul.f32.gmra.mxu0 %v2580
    %v4171 = vpop.f32.mrf.mxu0
    %v4172 = vadd.f32 %v3963, %v4171
    %4173 = vmatmul.f32.gmra.mxu0 %v2589
    %v4174 = vpop.f32.mrf.mxu0
    %v4175 = vadd.f32 %v3966, %v4174
    %4176 = vmatmul.f32.gmra.mxu0 %v2598
    %v4177 = vpop.f32.mrf.mxu0
    %v4178 = vadd.f32 %v3969, %v4177
    %4179 = vmatmul.f32.gmra.mxu0 %v2607
    %v4180 = vpop.f32.mrf.mxu0
    %v4181 = vadd.f32 %v3972, %v4180
    %4182 = vmatmul.f32.gmra.mxu0 %v2616
    %v4183 = vpop.f32.mrf.mxu0
    %v4184 = vadd.f32 %v3975, %v4183
    %4185 = vmatmul.f32.gmra.mxu0 %v2625
    %v4186 = vpop.f32.mrf.mxu0
    %v4187 = vadd.f32 %v3978, %v4186
    %4188 = vmatmul.f32.gmra.mxu0 %v2634
    %v4189 = vpop.f32.mrf.mxu0
    %v4190 = vadd.f32 %v3981, %v4189
    %4191 = vmatmul.f32.gmra.mxu0 %v2643
    %v4192 = vpop.f32.mrf.mxu0
    %v4193 = vadd.f32 %v3984, %v4192
    %4194 = vmatmul.f32.gmra.mxu0 %v2652
    %v4195 = vpop.f32.mrf.mxu0
    %v4196 = vadd.f32 %v3987, %v4195
    %4197 = vmatmul.f32.gmra.mxu0 %v2661
    %v4198 = vpop.f32.mrf.mxu0
    %v4199 = vadd.f32 %v3990, %v4198
    %4200 = vmatmul.f32.gmra.mxu0 %v2670
    %v4201 = vpop.f32.mrf.mxu0
    %v4202 = vadd.f32 %v3993, %v4201
    %4203 = vmatmul.f32.gmra.mxu0 %v2679
    %v4204 = vpop.f32.mrf.mxu0
    %v4205 = vadd.f32 %v3996, %v4204
    %4206 = vmatmul.f32.gmra.mxu0 %v2688
    %v4207 = vpop.f32.mrf.mxu0
    %v4208 = vadd.f32 %v3999, %v4207
    %4209 = vmatmul.f32.gmra.mxu0 %v2697
    %v4210 = vpop.f32.mrf.mxu0
    %v4211 = vadd.f32 %v4002, %v4210
    %4212 = vmatmul.f32.gmra.mxu0 %v2706
    %v4213 = vpop.f32.mrf.mxu0
    %v4214 = vadd.f32 %v4005, %v4213
    %4215 = vmatmul.f32.gmra.mxu0 %v2715
    %v4216 = vpop.f32.mrf.mxu0
    %v4217 = vadd.f32 %v4008, %v4216
    %4218 = vmatmul.f32.gmra.mxu0 %v2724
    %v4219 = vpop.f32.mrf.mxu0
    %v4220 = vadd.f32 %v4011, %v4219
    %4221 = vmatmul.f32.gmra.mxu0 %v2733
    %v4222 = vpop.f32.mrf.mxu0
    %v4223 = vadd.f32 %v4014, %v4222
    %4224 = vmatmul.f32.gmra.mxu0 %v2742
    %v4225 = vpop.f32.mrf.mxu0
    %v4226 = vadd.f32 %v4017, %v4225
    %4227 = vmatmul.f32.gmra.mxu0 %v2751
    %v4228 = vpop.f32.mrf.mxu0
    %v4229 = vadd.f32 %v4020, %v4228
    %4230 = vmatmul.f32.gmra.mxu0 %v2760
    %v4231 = vpop.f32.mrf.mxu0
    %v4232 = vadd.f32 %v4023, %v4231
    %4233 = vmatmul.f32.gmra.mxu0 %v2769
    %v4234 = vpop.f32.mrf.mxu0
    %v4235 = vadd.f32 %v4026, %v4234
    %4236 = vmatmul.f32.gmra.mxu0 %v2778
    %v4237 = vpop.f32.mrf.mxu0
    %v4238 = vadd.f32 %v4029, %v4237
    %4239 = vmatmul.f32.gmra.mxu0 %v2787
    %v4240 = vpop.f32.mrf.mxu0
    %v4241 = vadd.f32 %v4032, %v4240
    %4242 = vmatmul.f32.gmra.mxu0 %v2796
    %v4243 = vpop.f32.mrf.mxu0
    %v4244 = vadd.f32 %v4035, %v4243
    %4245 = vmatmul.f32.gmra.mxu0 %v2805
    %v4246 = vpop.f32.mrf.mxu0
    %v4247 = vadd.f32 %v4038, %v4246
    %4248 = vmatmul.f32.gmra.mxu0 %v2814
    %v4249 = vpop.f32.mrf.mxu0
    %v4250 = vadd.f32 %v4041, %v4249
    %4251 = vmatmul.f32.gmra.mxu0 %v2823
    %v4252 = vpop.f32.mrf.mxu0
    %v4253 = vadd.f32 %v4044, %v4252
    %4254 = vmatmul.f32.gmra.mxu0 %v2832
    %v4255 = vpop.f32.mrf.mxu0
    %v4256 = vadd.f32 %v4047, %v4255
    %4257 = vmatmul.f32.gmra.mxu0 %v2841
    %v4258 = vpop.f32.mrf.mxu0
    %v4259 = vadd.f32 %v4050, %v4258
    %4260 = vmatmul.f32.gmra.mxu0 %v2850
    %v4261 = vpop.f32.mrf.mxu0
    %v4262 = vadd.f32 %v4053, %v4261
    %4263 = vmatmul.f32.gmra.mxu0 %v2859
    %v4264 = vpop.f32.mrf.mxu0
    %v4265 = vadd.f32 %v4056, %v4264
    %4266 = vmatmul.f32.gmra.mxu0 %v2868
    %v4267 = vpop.f32.mrf.mxu0
    %v4268 = vadd.f32 %v4059, %v4267
    %4269 = vdwg.mxu0
    %4270 = vmatpush.msra.mxu0 %v2983
    %4271 = vmatpush.msra.mxu0 %v2982
    %4272 = vmatpush.msra.mxu0 %v2981
    %4273 = vmatpush.msra.mxu0 %v2980
    %4274 = vmatpush.msra.mxu0 %v2979
    %4275 = vmatpush.msra.mxu0 %v2978
    %4276 = vmatpush.msra.mxu0 %v2977
    %4277 = vmatpush.msra.mxu0 %v2976
    %4278 = vmatpush.msra.mxu0 %v2975
    %4279 = vmatpush.msra.mxu0 %v2974
    %4280 = vmatpush.msra.mxu0 %v2973
    %4281 = vmatpush.msra.mxu0 %v2972
    %4282 = vmatpush.msra.mxu0 %v2971
    %4283 = vmatpush.msra.mxu0 %v2970
    %4284 = vmatpush.msra.mxu0 %v2969
    %4285 = vmatpush.msra.mxu0 %v2968
    %4286 = vmatmul.f32.gmra.mxu0 %v2302
    %v4287 = vpop.f32.mrf.mxu0
    %v4288 = vadd.f32 %v4079, %v4287
    %4289 = vmatmul.f32.gmra.mxu0 %v2311
    %v4290 = vpop.f32.mrf.mxu0
    %v4291 = vadd.f32 %v4082, %v4290
    %4292 = vmatmul.f32.gmra.mxu0 %v2320
    %v4293 = vpop.f32.mrf.mxu0
    %v4294 = vadd.f32 %v4085, %v4293
    %4295 = vmatmul.f32.gmra.mxu0 %v2329
    %v4296 = vpop.f32.mrf.mxu0
    %v4297 = vadd.f32 %v4088, %v4296
    %4298 = vmatmul.f32.gmra.mxu0 %v2338
    %v4299 = vpop.f32.mrf.mxu0
    %v4300 = vadd.f32 %v4091, %v4299
    %4301 = vmatmul.f32.gmra.mxu0 %v2347
    %v4302 = vpop.f32.mrf.mxu0
    %v4303 = vadd.f32 %v4094, %v4302
    %4304 = vmatmul.f32.gmra.mxu0 %v2356
    %v4305 = vpop.f32.mrf.mxu0
    %v4306 = vadd.f32 %v4097, %v4305
    %4307 = vmatmul.f32.gmra.mxu0 %v2365
    %v4308 = vpop.f32.mrf.mxu0
    %v4309 = vadd.f32 %v4100, %v4308
    %4310 = vmatmul.f32.gmra.mxu0 %v2374
    %v4311 = vpop.f32.mrf.mxu0
    %v4312 = vadd.f32 %v4103, %v4311
    %4313 = vmatmul.f32.gmra.mxu0 %v2383
    %v4314 = vpop.f32.mrf.mxu0
    %v4315 = vadd.f32 %v4106, %v4314
    %4316 = vmatmul.f32.gmra.mxu0 %v2392
    %v4317 = vpop.f32.mrf.mxu0
    %v4318 = vadd.f32 %v4109, %v4317
    %4319 = vmatmul.f32.gmra.mxu0 %v2401
    %v4320 = vpop.f32.mrf.mxu0
    %v4321 = vadd.f32 %v4112, %v4320
    %4322 = vmatmul.f32.gmra.mxu0 %v2410
    %v4323 = vpop.f32.mrf.mxu0
    %v4324 = vadd.f32 %v4115, %v4323
    %4325 = vmatmul.f32.gmra.mxu0 %v2419
    %v4326 = vpop.f32.mrf.mxu0
    %v4327 = vadd.f32 %v4118, %v4326
    %4328 = vmatmul.f32.gmra.mxu0 %v2428
    %v4329 = vpop.f32.mrf.mxu0
    %v4330 = vadd.f32 %v4121, %v4329
    %4331 = vmatmul.f32.gmra.mxu0 %v2437
    %v4332 = vpop.f32.mrf.mxu0
    %v4333 = vadd.f32 %v4124, %v4332
    %4334 = vmatmul.f32.gmra.mxu0 %v2446
    %v4335 = vpop.f32.mrf.mxu0
    %v4336 = vadd.f32 %v4127, %v4335
    %4337 = vmatmul.f32.gmra.mxu0 %v2455
    %v4338 = vpop.f32.mrf.mxu0
    %v4339 = vadd.f32 %v4130, %v4338
    %4340 = vmatmul.f32.gmra.mxu0 %v2464
    %v4341 = vpop.f32.mrf.mxu0
    %v4342 = vadd.f32 %v4133, %v4341
    %4343 = vmatmul.f32.gmra.mxu0 %v2473
    %v4344 = vpop.f32.mrf.mxu0
    %v4345 = vadd.f32 %v4136, %v4344
    %4346 = vmatmul.f32.gmra.mxu0 %v2482
    %v4347 = vpop.f32.mrf.mxu0
    %v4348 = vadd.f32 %v4139, %v4347
    %4349 = vmatmul.f32.gmra.mxu0 %v2491
    %v4350 = vpop.f32.mrf.mxu0
    %v4351 = vadd.f32 %v4142, %v4350
    %4352 = vmatmul.f32.gmra.mxu0 %v2500
    %v4353 = vpop.f32.mrf.mxu0
    %v4354 = vadd.f32 %v4145, %v4353
    %4355 = vmatmul.f32.gmra.mxu0 %v2509
    %v4356 = vpop.f32.mrf.mxu0
    %v4357 = vadd.f32 %v4148, %v4356
    %4358 = vmatmul.f32.gmra.mxu0 %v2518
    %v4359 = vpop.f32.mrf.mxu0
    %v4360 = vadd.f32 %v4151, %v4359
    %4361 = vmatmul.f32.gmra.mxu0 %v2527
    %v4362 = vpop.f32.mrf.mxu0
    %v4363 = vadd.f32 %v4154, %v4362
    %4364 = vmatmul.f32.gmra.mxu0 %v2536
    %v4365 = vpop.f32.mrf.mxu0
    %v4366 = vadd.f32 %v4157, %v4365
    %4367 = vmatmul.f32.gmra.mxu0 %v2545
    %v4368 = vpop.f32.mrf.mxu0
    %v4369 = vadd.f32 %v4160, %v4368
    %4370 = vmatmul.f32.gmra.mxu0 %v2554
    %v4371 = vpop.f32.mrf.mxu0
    %v4372 = vadd.f32 %v4163, %v4371
    %4373 = vmatmul.f32.gmra.mxu0 %v2563
    %v4374 = vpop.f32.mrf.mxu0
    %v4375 = vadd.f32 %v4166, %v4374
    %4376 = vmatmul.f32.gmra.mxu0 %v2572
    %v4377 = vpop.f32.mrf.mxu0
    %v4378 = vadd.f32 %v4169, %v4377
    %4379 = vmatmul.f32.gmra.mxu0 %v2581
    %v4380 = vpop.f32.mrf.mxu0
    %v4381 = vadd.f32 %v4172, %v4380
    %4382 = vmatmul.f32.gmra.mxu0 %v2590
    %v4383 = vpop.f32.mrf.mxu0
    %v4384 = vadd.f32 %v4175, %v4383
    %4385 = vmatmul.f32.gmra.mxu0 %v2599
    %v4386 = vpop.f32.mrf.mxu0
    %v4387 = vadd.f32 %v4178, %v4386
    %4388 = vmatmul.f32.gmra.mxu0 %v2608
    %v4389 = vpop.f32.mrf.mxu0
    %v4390 = vadd.f32 %v4181, %v4389
    %4391 = vmatmul.f32.gmra.mxu0 %v2617
    %v4392 = vpop.f32.mrf.mxu0
    %v4393 = vadd.f32 %v4184, %v4392
    %4394 = vmatmul.f32.gmra.mxu0 %v2626
    %v4395 = vpop.f32.mrf.mxu0
    %v4396 = vadd.f32 %v4187, %v4395
    %4397 = vmatmul.f32.gmra.mxu0 %v2635
    %v4398 = vpop.f32.mrf.mxu0
    %v4399 = vadd.f32 %v4190, %v4398
    %4400 = vmatmul.f32.gmra.mxu0 %v2644
    %v4401 = vpop.f32.mrf.mxu0
    %v4402 = vadd.f32 %v4193, %v4401
    %4403 = vmatmul.f32.gmra.mxu0 %v2653
    %v4404 = vpop.f32.mrf.mxu0
    %v4405 = vadd.f32 %v4196, %v4404
    %4406 = vmatmul.f32.gmra.mxu0 %v2662
    %v4407 = vpop.f32.mrf.mxu0
    %v4408 = vadd.f32 %v4199, %v4407
    %4409 = vmatmul.f32.gmra.mxu0 %v2671
    %v4410 = vpop.f32.mrf.mxu0
    %v4411 = vadd.f32 %v4202, %v4410
    %4412 = vmatmul.f32.gmra.mxu0 %v2680
    %v4413 = vpop.f32.mrf.mxu0
    %v4414 = vadd.f32 %v4205, %v4413
    %4415 = vmatmul.f32.gmra.mxu0 %v2689
    %v4416 = vpop.f32.mrf.mxu0
    %v4417 = vadd.f32 %v4208, %v4416
    %4418 = vmatmul.f32.gmra.mxu0 %v2698
    %v4419 = vpop.f32.mrf.mxu0
    %v4420 = vadd.f32 %v4211, %v4419
    %4421 = vmatmul.f32.gmra.mxu0 %v2707
    %v4422 = vpop.f32.mrf.mxu0
    %v4423 = vadd.f32 %v4214, %v4422
    %4424 = vmatmul.f32.gmra.mxu0 %v2716
    %v4425 = vpop.f32.mrf.mxu0
    %v4426 = vadd.f32 %v4217, %v4425
    %4427 = vmatmul.f32.gmra.mxu0 %v2725
    %v4428 = vpop.f32.mrf.mxu0
    %v4429 = vadd.f32 %v4220, %v4428
    %4430 = vmatmul.f32.gmra.mxu0 %v2734
    %v4431 = vpop.f32.mrf.mxu0
    %v4432 = vadd.f32 %v4223, %v4431
    %4433 = vmatmul.f32.gmra.mxu0 %v2743
    %v4434 = vpop.f32.mrf.mxu0
    %v4435 = vadd.f32 %v4226, %v4434
    %4436 = vmatmul.f32.gmra.mxu0 %v2752
    %v4437 = vpop.f32.mrf.mxu0
    %v4438 = vadd.f32 %v4229, %v4437
    %4439 = vmatmul.f32.gmra.mxu0 %v2761
    %v4440 = vpop.f32.mrf.mxu0
    %v4441 = vadd.f32 %v4232, %v4440
    %4442 = vmatmul.f32.gmra.mxu0 %v2770
    %v4443 = vpop.f32.mrf.mxu0
    %v4444 = vadd.f32 %v4235, %v4443
    %4445 = vmatmul.f32.gmra.mxu0 %v2779
    %v4446 = vpop.f32.mrf.mxu0
    %v4447 = vadd.f32 %v4238, %v4446
    %4448 = vmatmul.f32.gmra.mxu0 %v2788
    %v4449 = vpop.f32.mrf.mxu0
    %v4450 = vadd.f32 %v4241, %v4449
    %4451 = vmatmul.f32.gmra.mxu0 %v2797
    %v4452 = vpop.f32.mrf.mxu0
    %v4453 = vadd.f32 %v4244, %v4452
    %4454 = vmatmul.f32.gmra.mxu0 %v2806
    %v4455 = vpop.f32.mrf.mxu0
    %v4456 = vadd.f32 %v4247, %v4455
    %4457 = vmatmul.f32.gmra.mxu0 %v2815
    %v4458 = vpop.f32.mrf.mxu0
    %v4459 = vadd.f32 %v4250, %v4458
    %4460 = vmatmul.f32.gmra.mxu0 %v2824
    %v4461 = vpop.f32.mrf.mxu0
    %v4462 = vadd.f32 %v4253, %v4461
    %4463 = vmatmul.f32.gmra.mxu0 %v2833
    %v4464 = vpop.f32.mrf.mxu0
    %v4465 = vadd.f32 %v4256, %v4464
    %4466 = vmatmul.f32.gmra.mxu0 %v2842
    %v4467 = vpop.f32.mrf.mxu0
    %v4468 = vadd.f32 %v4259, %v4467
    %4469 = vmatmul.f32.gmra.mxu0 %v2851
    %v4470 = vpop.f32.mrf.mxu0
    %v4471 = vadd.f32 %v4262, %v4470
    %4472 = vmatmul.f32.gmra.mxu0 %v2860
    %v4473 = vpop.f32.mrf.mxu0
    %v4474 = vadd.f32 %v4265, %v4473
    %4475 = vmatmul.f32.gmra.mxu0 %v2869
    %v4476 = vpop.f32.mrf.mxu0
    %v4477 = vadd.f32 %v4268, %v4476
    %4478 = vdwg.mxu0
    %4479 = vmatpush.msra.mxu0 %v2999
    %4480 = vmatpush.msra.mxu0 %v2998
    %4481 = vmatpush.msra.mxu0 %v2997
    %4482 = vmatpush.msra.mxu0 %v2996
    %4483 = vmatpush.msra.mxu0 %v2995
    %4484 = vmatpush.msra.mxu0 %v2994
    %4485 = vmatpush.msra.mxu0 %v2993
    %4486 = vmatpush.msra.mxu0 %v2992
    %4487 = vmatpush.msra.mxu0 %v2991
    %4488 = vmatpush.msra.mxu0 %v2990
    %4489 = vmatpush.msra.mxu0 %v2989
    %4490 = vmatpush.msra.mxu0 %v2988
    %4491 = vmatpush.msra.mxu0 %v2987
    %4492 = vmatpush.msra.mxu0 %v2986
    %4493 = vmatpush.msra.mxu0 %v2985
    %4494 = vmatpush.msra.mxu0 %v2984
    %4495 = vmatmul.f32.gmra.mxu0 %v2303
    %v4496 = vpop.f32.mrf.mxu0
    %v4497 = vadd.f32 %v4288, %v4496
    %4498 = vmatmul.f32.gmra.mxu0 %v2312
    %v4499 = vpop.f32.mrf.mxu0
    %v4500 = vadd.f32 %v4291, %v4499
    %4501 = vmatmul.f32.gmra.mxu0 %v2321
    %v4502 = vpop.f32.mrf.mxu0
    %v4503 = vadd.f32 %v4294, %v4502
    %4504 = vmatmul.f32.gmra.mxu0 %v2330
    %v4505 = vpop.f32.mrf.mxu0
    %v4506 = vadd.f32 %v4297, %v4505
    %4507 = vmatmul.f32.gmra.mxu0 %v2339
    %v4508 = vpop.f32.mrf.mxu0
    %v4509 = vadd.f32 %v4300, %v4508
    %4510 = vmatmul.f32.gmra.mxu0 %v2348
    %v4511 = vpop.f32.mrf.mxu0
    %v4512 = vadd.f32 %v4303, %v4511
    %4513 = vmatmul.f32.gmra.mxu0 %v2357
    %v4514 = vpop.f32.mrf.mxu0
    %v4515 = vadd.f32 %v4306, %v4514
    %4516 = vmatmul.f32.gmra.mxu0 %v2366
    %v4517 = vpop.f32.mrf.mxu0
    %v4518 = vadd.f32 %v4309, %v4517
    %4519 = vmatmul.f32.gmra.mxu0 %v2375
    %v4520 = vpop.f32.mrf.mxu0
    %v4521 = vadd.f32 %v4312, %v4520
    %4522 = vmatmul.f32.gmra.mxu0 %v2384
    %v4523 = vpop.f32.mrf.mxu0
    %v4524 = vadd.f32 %v4315, %v4523
    %4525 = vmatmul.f32.gmra.mxu0 %v2393
    %v4526 = vpop.f32.mrf.mxu0
    %v4527 = vadd.f32 %v4318, %v4526
    %4528 = vmatmul.f32.gmra.mxu0 %v2402
    %v4529 = vpop.f32.mrf.mxu0
    %v4530 = vadd.f32 %v4321, %v4529
    %4531 = vmatmul.f32.gmra.mxu0 %v2411
    %v4532 = vpop.f32.mrf.mxu0
    %v4533 = vadd.f32 %v4324, %v4532
    %4534 = vmatmul.f32.gmra.mxu0 %v2420
    %v4535 = vpop.f32.mrf.mxu0
    %v4536 = vadd.f32 %v4327, %v4535
    %4537 = vmatmul.f32.gmra.mxu0 %v2429
    %v4538 = vpop.f32.mrf.mxu0
    %v4539 = vadd.f32 %v4330, %v4538
    %4540 = vmatmul.f32.gmra.mxu0 %v2438
    %v4541 = vpop.f32.mrf.mxu0
    %v4542 = vadd.f32 %v4333, %v4541
    %4543 = vmatmul.f32.gmra.mxu0 %v2447
    %v4544 = vpop.f32.mrf.mxu0
    %v4545 = vadd.f32 %v4336, %v4544
    %4546 = vmatmul.f32.gmra.mxu0 %v2456
    %v4547 = vpop.f32.mrf.mxu0
    %v4548 = vadd.f32 %v4339, %v4547
    %4549 = vmatmul.f32.gmra.mxu0 %v2465
    %v4550 = vpop.f32.mrf.mxu0
    %v4551 = vadd.f32 %v4342, %v4550
    %4552 = vmatmul.f32.gmra.mxu0 %v2474
    %v4553 = vpop.f32.mrf.mxu0
    %v4554 = vadd.f32 %v4345, %v4553
    %4555 = vmatmul.f32.gmra.mxu0 %v2483
    %v4556 = vpop.f32.mrf.mxu0
    %v4557 = vadd.f32 %v4348, %v4556
    %4558 = vmatmul.f32.gmra.mxu0 %v2492
    %v4559 = vpop.f32.mrf.mxu0
    %v4560 = vadd.f32 %v4351, %v4559
    %4561 = vmatmul.f32.gmra.mxu0 %v2501
    %v4562 = vpop.f32.mrf.mxu0
    %v4563 = vadd.f32 %v4354, %v4562
    %4564 = vmatmul.f32.gmra.mxu0 %v2510
    %v4565 = vpop.f32.mrf.mxu0
    %v4566 = vadd.f32 %v4357, %v4565
    %4567 = vmatmul.f32.gmra.mxu0 %v2519
    %v4568 = vpop.f32.mrf.mxu0
    %v4569 = vadd.f32 %v4360, %v4568
    %4570 = vmatmul.f32.gmra.mxu0 %v2528
    %v4571 = vpop.f32.mrf.mxu0
    %v4572 = vadd.f32 %v4363, %v4571
    %4573 = vmatmul.f32.gmra.mxu0 %v2537
    %v4574 = vpop.f32.mrf.mxu0
    %v4575 = vadd.f32 %v4366, %v4574
    %4576 = vmatmul.f32.gmra.mxu0 %v2546
    %v4577 = vpop.f32.mrf.mxu0
    %v4578 = vadd.f32 %v4369, %v4577
    %4579 = vmatmul.f32.gmra.mxu0 %v2555
    %v4580 = vpop.f32.mrf.mxu0
    %v4581 = vadd.f32 %v4372, %v4580
    %4582 = vmatmul.f32.gmra.mxu0 %v2564
    %v4583 = vpop.f32.mrf.mxu0
    %v4584 = vadd.f32 %v4375, %v4583
    %4585 = vmatmul.f32.gmra.mxu0 %v2573
    %v4586 = vpop.f32.mrf.mxu0
    %v4587 = vadd.f32 %v4378, %v4586
    %4588 = vmatmul.f32.gmra.mxu0 %v2582
    %v4589 = vpop.f32.mrf.mxu0
    %v4590 = vadd.f32 %v4381, %v4589
    %4591 = vmatmul.f32.gmra.mxu0 %v2591
    %v4592 = vpop.f32.mrf.mxu0
    %v4593 = vadd.f32 %v4384, %v4592
    %4594 = vmatmul.f32.gmra.mxu0 %v2600
    %v4595 = vpop.f32.mrf.mxu0
    %v4596 = vadd.f32 %v4387, %v4595
    %4597 = vmatmul.f32.gmra.mxu0 %v2609
    %v4598 = vpop.f32.mrf.mxu0
    %v4599 = vadd.f32 %v4390, %v4598
    %4600 = vmatmul.f32.gmra.mxu0 %v2618
    %v4601 = vpop.f32.mrf.mxu0
    %v4602 = vadd.f32 %v4393, %v4601
    %4603 = vmatmul.f32.gmra.mxu0 %v2627
    %v4604 = vpop.f32.mrf.mxu0
    %v4605 = vadd.f32 %v4396, %v4604
    %4606 = vmatmul.f32.gmra.mxu0 %v2636
    %v4607 = vpop.f32.mrf.mxu0
    %v4608 = vadd.f32 %v4399, %v4607
    %4609 = vmatmul.f32.gmra.mxu0 %v2645
    %v4610 = vpop.f32.mrf.mxu0
    %v4611 = vadd.f32 %v4402, %v4610
    %4612 = vmatmul.f32.gmra.mxu0 %v2654
    %v4613 = vpop.f32.mrf.mxu0
    %v4614 = vadd.f32 %v4405, %v4613
    %4615 = vmatmul.f32.gmra.mxu0 %v2663
    %v4616 = vpop.f32.mrf.mxu0
    %v4617 = vadd.f32 %v4408, %v4616
    %4618 = vmatmul.f32.gmra.mxu0 %v2672
    %v4619 = vpop.f32.mrf.mxu0
    %v4620 = vadd.f32 %v4411, %v4619
    %4621 = vmatmul.f32.gmra.mxu0 %v2681
    %v4622 = vpop.f32.mrf.mxu0
    %v4623 = vadd.f32 %v4414, %v4622
    %4624 = vmatmul.f32.gmra.mxu0 %v2690
    %v4625 = vpop.f32.mrf.mxu0
    %v4626 = vadd.f32 %v4417, %v4625
    %4627 = vmatmul.f32.gmra.mxu0 %v2699
    %v4628 = vpop.f32.mrf.mxu0
    %v4629 = vadd.f32 %v4420, %v4628
    %4630 = vmatmul.f32.gmra.mxu0 %v2708
    %v4631 = vpop.f32.mrf.mxu0
    %v4632 = vadd.f32 %v4423, %v4631
    %4633 = vmatmul.f32.gmra.mxu0 %v2717
    %v4634 = vpop.f32.mrf.mxu0
    %v4635 = vadd.f32 %v4426, %v4634
    %4636 = vmatmul.f32.gmra.mxu0 %v2726
    %v4637 = vpop.f32.mrf.mxu0
    %v4638 = vadd.f32 %v4429, %v4637
    %4639 = vmatmul.f32.gmra.mxu0 %v2735
    %v4640 = vpop.f32.mrf.mxu0
    %v4641 = vadd.f32 %v4432, %v4640
    %4642 = vmatmul.f32.gmra.mxu0 %v2744
    %v4643 = vpop.f32.mrf.mxu0
    %v4644 = vadd.f32 %v4435, %v4643
    %4645 = vmatmul.f32.gmra.mxu0 %v2753
    %v4646 = vpop.f32.mrf.mxu0
    %v4647 = vadd.f32 %v4438, %v4646
    %4648 = vmatmul.f32.gmra.mxu0 %v2762
    %v4649 = vpop.f32.mrf.mxu0
    %v4650 = vadd.f32 %v4441, %v4649
    %4651 = vmatmul.f32.gmra.mxu0 %v2771
    %v4652 = vpop.f32.mrf.mxu0
    %v4653 = vadd.f32 %v4444, %v4652
    %4654 = vmatmul.f32.gmra.mxu0 %v2780
    %v4655 = vpop.f32.mrf.mxu0
    %v4656 = vadd.f32 %v4447, %v4655
    %4657 = vmatmul.f32.gmra.mxu0 %v2789
    %v4658 = vpop.f32.mrf.mxu0
    %v4659 = vadd.f32 %v4450, %v4658
    %4660 = vmatmul.f32.gmra.mxu0 %v2798
    %v4661 = vpop.f32.mrf.mxu0
    %v4662 = vadd.f32 %v4453, %v4661
    %4663 = vmatmul.f32.gmra.mxu0 %v2807
    %v4664 = vpop.f32.mrf.mxu0
    %v4665 = vadd.f32 %v4456, %v4664
    %4666 = vmatmul.f32.gmra.mxu0 %v2816
    %v4667 = vpop.f32.mrf.mxu0
    %v4668 = vadd.f32 %v4459, %v4667
    %4669 = vmatmul.f32.gmra.mxu0 %v2825
    %v4670 = vpop.f32.mrf.mxu0
    %v4671 = vadd.f32 %v4462, %v4670
    %4672 = vmatmul.f32.gmra.mxu0 %v2834
    %v4673 = vpop.f32.mrf.mxu0
    %v4674 = vadd.f32 %v4465, %v4673
    %4675 = vmatmul.f32.gmra.mxu0 %v2843
    %v4676 = vpop.f32.mrf.mxu0
    %v4677 = vadd.f32 %v4468, %v4676
    %4678 = vmatmul.f32.gmra.mxu0 %v2852
    %v4679 = vpop.f32.mrf.mxu0
    %v4680 = vadd.f32 %v4471, %v4679
    %4681 = vmatmul.f32.gmra.mxu0 %v2861
    %v4682 = vpop.f32.mrf.mxu0
    %v4683 = vadd.f32 %v4474, %v4682
    %4684 = vmatmul.f32.gmra.mxu0 %v2870
    %v4685 = vpop.f32.mrf.mxu0
    %v4686 = vadd.f32 %v4477, %v4685
    %4687 = vdwg.mxu0
    %4688 = vmatpush.msra.mxu0 %v3015
    %4689 = vmatpush.msra.mxu0 %v3014
    %4690 = vmatpush.msra.mxu0 %v3013
    %4691 = vmatpush.msra.mxu0 %v3012
    %4692 = vmatpush.msra.mxu0 %v3011
    %4693 = vmatpush.msra.mxu0 %v3010
    %4694 = vmatpush.msra.mxu0 %v3009
    %4695 = vmatpush.msra.mxu0 %v3008
    %4696 = vmatpush.msra.mxu0 %v3007
    %4697 = vmatpush.msra.mxu0 %v3006
    %4698 = vmatpush.msra.mxu0 %v3005
    %4699 = vmatpush.msra.mxu0 %v3004
    %4700 = vmatpush.msra.mxu0 %v3003
    %4701 = vmatpush.msra.mxu0 %v3002
    %4702 = vmatpush.msra.mxu0 %v3001
    %4703 = vmatpush.msra.mxu0 %v3000
    %4704 = vmatmul.f32.gmra.mxu0 %v2304
    %v4705 = vpop.f32.mrf.mxu0
    %v4706 = vadd.f32 %v4497, %v4705
    %4707 = vmatmul.f32.gmra.mxu0 %v2313
    %v4708 = vpop.f32.mrf.mxu0
    %v4709 = vadd.f32 %v4500, %v4708
    %4710 = vmatmul.f32.gmra.mxu0 %v2322
    %v4711 = vpop.f32.mrf.mxu0
    %v4712 = vadd.f32 %v4503, %v4711
    %4713 = vmatmul.f32.gmra.mxu0 %v2331
    %v4714 = vpop.f32.mrf.mxu0
    %v4715 = vadd.f32 %v4506, %v4714
    %4716 = vmatmul.f32.gmra.mxu0 %v2340
    %v4717 = vpop.f32.mrf.mxu0
    %v4718 = vadd.f32 %v4509, %v4717
    %4719 = vmatmul.f32.gmra.mxu0 %v2349
    %v4720 = vpop.f32.mrf.mxu0
    %v4721 = vadd.f32 %v4512, %v4720
    %4722 = vmatmul.f32.gmra.mxu0 %v2358
    %v4723 = vpop.f32.mrf.mxu0
    %v4724 = vadd.f32 %v4515, %v4723
    %4725 = vmatmul.f32.gmra.mxu0 %v2367
    %v4726 = vpop.f32.mrf.mxu0
    %v4727 = vadd.f32 %v4518, %v4726
    %4728 = vmatmul.f32.gmra.mxu0 %v2376
    %v4729 = vpop.f32.mrf.mxu0
    %v4730 = vadd.f32 %v4521, %v4729
    %4731 = vmatmul.f32.gmra.mxu0 %v2385
    %v4732 = vpop.f32.mrf.mxu0
    %v4733 = vadd.f32 %v4524, %v4732
    %4734 = vmatmul.f32.gmra.mxu0 %v2394
    %v4735 = vpop.f32.mrf.mxu0
    %v4736 = vadd.f32 %v4527, %v4735
    %4737 = vmatmul.f32.gmra.mxu0 %v2403
    %v4738 = vpop.f32.mrf.mxu0
    %v4739 = vadd.f32 %v4530, %v4738
    %4740 = vmatmul.f32.gmra.mxu0 %v2412
    %v4741 = vpop.f32.mrf.mxu0
    %v4742 = vadd.f32 %v4533, %v4741
    %4743 = vmatmul.f32.gmra.mxu0 %v2421
    %v4744 = vpop.f32.mrf.mxu0
    %v4745 = vadd.f32 %v4536, %v4744
    %4746 = vmatmul.f32.gmra.mxu0 %v2430
    %v4747 = vpop.f32.mrf.mxu0
    %v4748 = vadd.f32 %v4539, %v4747
    %4749 = vmatmul.f32.gmra.mxu0 %v2439
    %v4750 = vpop.f32.mrf.mxu0
    %v4751 = vadd.f32 %v4542, %v4750
    %4752 = vmatmul.f32.gmra.mxu0 %v2448
    %v4753 = vpop.f32.mrf.mxu0
    %v4754 = vadd.f32 %v4545, %v4753
    %4755 = vmatmul.f32.gmra.mxu0 %v2457
    %v4756 = vpop.f32.mrf.mxu0
    %v4757 = vadd.f32 %v4548, %v4756
    %4758 = vmatmul.f32.gmra.mxu0 %v2466
    %v4759 = vpop.f32.mrf.mxu0
    %v4760 = vadd.f32 %v4551, %v4759
    %4761 = vmatmul.f32.gmra.mxu0 %v2475
    %v4762 = vpop.f32.mrf.mxu0
    %v4763 = vadd.f32 %v4554, %v4762
    %4764 = vmatmul.f32.gmra.mxu0 %v2484
    %v4765 = vpop.f32.mrf.mxu0
    %v4766 = vadd.f32 %v4557, %v4765
    %4767 = vmatmul.f32.gmra.mxu0 %v2493
    %v4768 = vpop.f32.mrf.mxu0
    %v4769 = vadd.f32 %v4560, %v4768
    %4770 = vmatmul.f32.gmra.mxu0 %v2502
    %v4771 = vpop.f32.mrf.mxu0
    %v4772 = vadd.f32 %v4563, %v4771
    %4773 = vmatmul.f32.gmra.mxu0 %v2511
    %v4774 = vpop.f32.mrf.mxu0
    %v4775 = vadd.f32 %v4566, %v4774
    %4776 = vmatmul.f32.gmra.mxu0 %v2520
    %v4777 = vpop.f32.mrf.mxu0
    %v4778 = vadd.f32 %v4569, %v4777
    %4779 = vmatmul.f32.gmra.mxu0 %v2529
    %v4780 = vpop.f32.mrf.mxu0
    %v4781 = vadd.f32 %v4572, %v4780
    %4782 = vmatmul.f32.gmra.mxu0 %v2538
    %v4783 = vpop.f32.mrf.mxu0
    %v4784 = vadd.f32 %v4575, %v4783
    %4785 = vmatmul.f32.gmra.mxu0 %v2547
    %v4786 = vpop.f32.mrf.mxu0
    %v4787 = vadd.f32 %v4578, %v4786
    %4788 = vmatmul.f32.gmra.mxu0 %v2556
    %v4789 = vpop.f32.mrf.mxu0
    %v4790 = vadd.f32 %v4581, %v4789
    %4791 = vmatmul.f32.gmra.mxu0 %v2565
    %v4792 = vpop.f32.mrf.mxu0
    %v4793 = vadd.f32 %v4584, %v4792
    %4794 = vmatmul.f32.gmra.mxu0 %v2574
    %v4795 = vpop.f32.mrf.mxu0
    %v4796 = vadd.f32 %v4587, %v4795
    %4797 = vmatmul.f32.gmra.mxu0 %v2583
    %v4798 = vpop.f32.mrf.mxu0
    %v4799 = vadd.f32 %v4590, %v4798
    %4800 = vmatmul.f32.gmra.mxu0 %v2592
    %v4801 = vpop.f32.mrf.mxu0
    %v4802 = vadd.f32 %v4593, %v4801
    %4803 = vmatmul.f32.gmra.mxu0 %v2601
    %v4804 = vpop.f32.mrf.mxu0
    %v4805 = vadd.f32 %v4596, %v4804
    %4806 = vmatmul.f32.gmra.mxu0 %v2610
    %v4807 = vpop.f32.mrf.mxu0
    %v4808 = vadd.f32 %v4599, %v4807
    %4809 = vmatmul.f32.gmra.mxu0 %v2619
    %v4810 = vpop.f32.mrf.mxu0
    %v4811 = vadd.f32 %v4602, %v4810
    %4812 = vmatmul.f32.gmra.mxu0 %v2628
    %v4813 = vpop.f32.mrf.mxu0
    %v4814 = vadd.f32 %v4605, %v4813
    %4815 = vmatmul.f32.gmra.mxu0 %v2637
    %v4816 = vpop.f32.mrf.mxu0
    %v4817 = vadd.f32 %v4608, %v4816
    %4818 = vmatmul.f32.gmra.mxu0 %v2646
    %v4819 = vpop.f32.mrf.mxu0
    %v4820 = vadd.f32 %v4611, %v4819
    %4821 = vmatmul.f32.gmra.mxu0 %v2655
    %v4822 = vpop.f32.mrf.mxu0
    %v4823 = vadd.f32 %v4614, %v4822
    %4824 = vmatmul.f32.gmra.mxu0 %v2664
    %v4825 = vpop.f32.mrf.mxu0
    %v4826 = vadd.f32 %v4617, %v4825
    %4827 = vmatmul.f32.gmra.mxu0 %v2673
    %v4828 = vpop.f32.mrf.mxu0
    %v4829 = vadd.f32 %v4620, %v4828
    %4830 = vmatmul.f32.gmra.mxu0 %v2682
    %v4831 = vpop.f32.mrf.mxu0
    %v4832 = vadd.f32 %v4623, %v4831
    %4833 = vmatmul.f32.gmra.mxu0 %v2691
    %v4834 = vpop.f32.mrf.mxu0
    %v4835 = vadd.f32 %v4626, %v4834
    %4836 = vmatmul.f32.gmra.mxu0 %v2700
    %v4837 = vpop.f32.mrf.mxu0
    %v4838 = vadd.f32 %v4629, %v4837
    %4839 = vmatmul.f32.gmra.mxu0 %v2709
    %v4840 = vpop.f32.mrf.mxu0
    %v4841 = vadd.f32 %v4632, %v4840
    %4842 = vmatmul.f32.gmra.mxu0 %v2718
    %v4843 = vpop.f32.mrf.mxu0
    %v4844 = vadd.f32 %v4635, %v4843
    %4845 = vmatmul.f32.gmra.mxu0 %v2727
    %v4846 = vpop.f32.mrf.mxu0
    %v4847 = vadd.f32 %v4638, %v4846
    %4848 = vmatmul.f32.gmra.mxu0 %v2736
    %v4849 = vpop.f32.mrf.mxu0
    %v4850 = vadd.f32 %v4641, %v4849
    %4851 = vmatmul.f32.gmra.mxu0 %v2745
    %v4852 = vpop.f32.mrf.mxu0
    %v4853 = vadd.f32 %v4644, %v4852
    %4854 = vmatmul.f32.gmra.mxu0 %v2754
    %v4855 = vpop.f32.mrf.mxu0
    %v4856 = vadd.f32 %v4647, %v4855
    %4857 = vmatmul.f32.gmra.mxu0 %v2763
    %v4858 = vpop.f32.mrf.mxu0
    %v4859 = vadd.f32 %v4650, %v4858
    %4860 = vmatmul.f32.gmra.mxu0 %v2772
    %v4861 = vpop.f32.mrf.mxu0
    %v4862 = vadd.f32 %v4653, %v4861
    %4863 = vmatmul.f32.gmra.mxu0 %v2781
    %v4864 = vpop.f32.mrf.mxu0
    %v4865 = vadd.f32 %v4656, %v4864
    %4866 = vmatmul.f32.gmra.mxu0 %v2790
    %v4867 = vpop.f32.mrf.mxu0
    %v4868 = vadd.f32 %v4659, %v4867
    %4869 = vmatmul.f32.gmra.mxu0 %v2799
    %v4870 = vpop.f32.mrf.mxu0
    %v4871 = vadd.f32 %v4662, %v4870
    %4872 = vmatmul.f32.gmra.mxu0 %v2808
    %v4873 = vpop.f32.mrf.mxu0
    %v4874 = vadd.f32 %v4665, %v4873
    %4875 = vmatmul.f32.gmra.mxu0 %v2817
    %v4876 = vpop.f32.mrf.mxu0
    %v4877 = vadd.f32 %v4668, %v4876
    %4878 = vmatmul.f32.gmra.mxu0 %v2826
    %v4879 = vpop.f32.mrf.mxu0
    %v4880 = vadd.f32 %v4671, %v4879
    %4881 = vmatmul.f32.gmra.mxu0 %v2835
    %v4882 = vpop.f32.mrf.mxu0
    %v4883 = vadd.f32 %v4674, %v4882
    %4884 = vmatmul.f32.gmra.mxu0 %v2844
    %v4885 = vpop.f32.mrf.mxu0
    %v4886 = vadd.f32 %v4677, %v4885
    %4887 = vmatmul.f32.gmra.mxu0 %v2853
    %v4888 = vpop.f32.mrf.mxu0
    %v4889 = vadd.f32 %v4680, %v4888
    %4890 = vmatmul.f32.gmra.mxu0 %v2862
    %v4891 = vpop.f32.mrf.mxu0
    %v4892 = vadd.f32 %v4683, %v4891
    %4893 = vmatmul.f32.gmra.mxu0 %v2871
    %v4894 = vpop.f32.mrf.mxu0
    %v4895 = vadd.f32 %v4686, %v4894
    %4896 = vdwg.mxu0
    %v4897 = vld [vmem:[%s5] sm:$0x1]
    %v4898 = vld [vmem:[%s6] sm:$0x1]
    %vm4899 = vcmask 523264
    %v4900 = vsel %vm4899, %v4706, 0.0
    %v4901 = vsel %vm4899, %v4709, 0.0
    %v4902 = vadd.f32 %v4900, %v4901
    %v4903 = vsel %vm4899, %v4712, 0.0
    %v4904 = vadd.f32 %v4902, %v4903
    %v4905 = vsel %vm4899, %v4715, 0.0
    %v4906 = vadd.f32 %v4904, %v4905
    %v4907 = vsel %vm4899, %v4718, 0.0
    %v4908 = vadd.f32 %v4906, %v4907
    %v4909 = vsel %vm4899, %v4721, 0.0
    %v4910 = vadd.f32 %v4908, %v4909
    %v4911 = vsel %vm4899, %v4724, 0.0
    %v4912 = vadd.f32 %v4910, %v4911
    %v4913 = vsel %vm4899, %v4727, 0.0
    %v4914 = vadd.f32 %v4912, %v4913
    %v4915 = vsel %vm4899, %v4730, 0.0
    %v4916 = vadd.f32 %v4914, %v4915
    %v4917 = vsel %vm4899, %v4733, 0.0
    %v4918 = vadd.f32 %v4916, %v4917
    %v4919 = vsel %vm4899, %v4736, 0.0
    %v4920 = vadd.f32 %v4918, %v4919
    %v4921 = vsel %vm4899, %v4739, 0.0
    %v4922 = vadd.f32 %v4920, %v4921
    %v4923 = vsel %vm4899, %v4742, 0.0
    %v4924 = vadd.f32 %v4922, %v4923
    %v4925 = vsel %vm4899, %v4745, 0.0
    %v4926 = vadd.f32 %v4924, %v4925
    %v4927 = vsel %vm4899, %v4748, 0.0
    %v4928 = vadd.f32 %v4926, %v4927
    %v4929 = vsel %vm4899, %v4751, 0.0
    %v4930 = vadd.f32 %v4928, %v4929
    %v4931 = vsel %vm4899, %v4754, 0.0
    %v4932 = vadd.f32 %v4930, %v4931
    %v4933 = vsel %vm4899, %v4757, 0.0
    %v4934 = vadd.f32 %v4932, %v4933
    %v4935 = vsel %vm4899, %v4760, 0.0
    %v4936 = vadd.f32 %v4934, %v4935
    %v4937 = vsel %vm4899, %v4763, 0.0
    %v4938 = vadd.f32 %v4936, %v4937
    %v4939 = vsel %vm4899, %v4766, 0.0
    %v4940 = vadd.f32 %v4938, %v4939
    %v4941 = vsel %vm4899, %v4769, 0.0
    %v4942 = vadd.f32 %v4940, %v4941
    %v4943 = vsel %vm4899, %v4772, 0.0
    %v4944 = vadd.f32 %v4942, %v4943
    %v4945 = vsel %vm4899, %v4775, 0.0
    %v4946 = vadd.f32 %v4944, %v4945
    %v4947 = vsel %vm4899, %v4778, 0.0
    %v4948 = vadd.f32 %v4946, %v4947
    %v4949 = vsel %vm4899, %v4781, 0.0
    %v4950 = vadd.f32 %v4948, %v4949
    %v4951 = vsel %vm4899, %v4784, 0.0
    %v4952 = vadd.f32 %v4950, %v4951
    %v4953 = vsel %vm4899, %v4787, 0.0
    %v4954 = vadd.f32 %v4952, %v4953
    %v4955 = vsel %vm4899, %v4790, 0.0
    %v4956 = vadd.f32 %v4954, %v4955
    %v4957 = vsel %vm4899, %v4793, 0.0
    %v4958 = vadd.f32 %v4956, %v4957
    %v4959 = vsel %vm4899, %v4796, 0.0
    %v4960 = vadd.f32 %v4958, %v4959
    %v4961 = vsel %vm4899, %v4799, 0.0
    %v4962 = vadd.f32 %v4960, %v4961
    %v4963 = vsel %vm4899, %v4802, 0.0
    %v4964 = vadd.f32 %v4962, %v4963
    %v4965 = vsel %vm4899, %v4805, 0.0
    %v4966 = vadd.f32 %v4964, %v4965
    %v4967 = vsel %vm4899, %v4808, 0.0
    %v4968 = vadd.f32 %v4966, %v4967
    %v4969 = vsel %vm4899, %v4811, 0.0
    %v4970 = vadd.f32 %v4968, %v4969
    %v4971 = vsel %vm4899, %v4814, 0.0
    %v4972 = vadd.f32 %v4970, %v4971
    %v4973 = vsel %vm4899, %v4817, 0.0
    %v4974 = vadd.f32 %v4972, %v4973
    %v4975 = vsel %vm4899, %v4820, 0.0
    %v4976 = vadd.f32 %v4974, %v4975
    %v4977 = vsel %vm4899, %v4823, 0.0
    %v4978 = vadd.f32 %v4976, %v4977
    %v4979 = vsel %vm4899, %v4826, 0.0
    %v4980 = vadd.f32 %v4978, %v4979
    %v4981 = vsel %vm4899, %v4829, 0.0
    %v4982 = vadd.f32 %v4980, %v4981
    %v4983 = vsel %vm4899, %v4832, 0.0
    %v4984 = vadd.f32 %v4982, %v4983
    %v4985 = vsel %vm4899, %v4835, 0.0
    %v4986 = vadd.f32 %v4984, %v4985
    %v4987 = vsel %vm4899, %v4838, 0.0
    %v4988 = vadd.f32 %v4986, %v4987
    %v4989 = vsel %vm4899, %v4841, 0.0
    %v4990 = vadd.f32 %v4988, %v4989
    %v4991 = vsel %vm4899, %v4844, 0.0
    %v4992 = vadd.f32 %v4990, %v4991
    %v4993 = vsel %vm4899, %v4847, 0.0
    %v4994 = vadd.f32 %v4992, %v4993
    %v4995 = vsel %vm4899, %v4850, 0.0
    %v4996 = vadd.f32 %v4994, %v4995
    %v4997 = vsel %vm4899, %v4853, 0.0
    %v4998 = vadd.f32 %v4996, %v4997
    %v4999 = vsel %vm4899, %v4856, 0.0
    %v5000 = vadd.f32 %v4998, %v4999
    %v5001 = vsel %vm4899, %v4859, 0.0
    %v5002 = vadd.f32 %v5000, %v5001
    %v5003 = vsel %vm4899, %v4862, 0.0
    %v5004 = vadd.f32 %v5002, %v5003
    %v5005 = vsel %vm4899, %v4865, 0.0
    %v5006 = vadd.f32 %v5004, %v5005
    %v5007 = vsel %vm4899, %v4868, 0.0
    %v5008 = vadd.f32 %v5006, %v5007
    %v5009 = vsel %vm4899, %v4871, 0.0
    %v5010 = vadd.f32 %v5008, %v5009
    %v5011 = vsel %vm4899, %v4874, 0.0
    %v5012 = vadd.f32 %v5010, %v5011
    %v5013 = vsel %vm4899, %v4877, 0.0
    %v5014 = vadd.f32 %v5012, %v5013
    %v5015 = vsel %vm4899, %v4880, 0.0
    %v5016 = vadd.f32 %v5014, %v5015
    %v5017 = vsel %vm4899, %v4883, 0.0
    %v5018 = vadd.f32 %v5016, %v5017
    %v5019 = vsel %vm4899, %v4886, 0.0
    %v5020 = vadd.f32 %v5018, %v5019
    %v5021 = vsel %vm4899, %v4889, 0.0
    %v5022 = vadd.f32 %v5020, %v5021
    %v5023 = vsel %vm4899, %v4892, 0.0
    %v5024 = vadd.f32 %v5022, %v5023
    %v5025 = vsel %vm4899, %v4895, 0.0
    %v5026 = vadd.f32 %v5024, %v5025
    %v5027 = vrot.slane %v5026, 4
    %v5028 = vadd.f32 %v5026, %v5027
    %v5029 = vrot.slane %v5028, 2
    %v5030 = vadd.f32 %v5028, %v5029
    %v5031 = vrot.slane %v5030, 1
    %v5032 = vadd.f32 %v5030, %v5031
    %v5033 = vmul.f32 %v5032, %v396
    %v5034 = vsub.f32 %v4706, %v5033
    %v5035 = vsub.f32 %v4709, %v5033
    %v5036 = vsub.f32 %v4712, %v5033
    %v5037 = vsub.f32 %v4715, %v5033
    %v5038 = vsub.f32 %v4718, %v5033
    %v5039 = vsub.f32 %v4721, %v5033
    %v5040 = vsub.f32 %v4724, %v5033
    %v5041 = vsub.f32 %v4727, %v5033
    %v5042 = vsub.f32 %v4730, %v5033
    %v5043 = vsub.f32 %v4733, %v5033
    %v5044 = vsub.f32 %v4736, %v5033
    %v5045 = vsub.f32 %v4739, %v5033
    %v5046 = vsub.f32 %v4742, %v5033
    %v5047 = vsub.f32 %v4745, %v5033
    %v5048 = vsub.f32 %v4748, %v5033
    %v5049 = vsub.f32 %v4751, %v5033
    %v5050 = vsub.f32 %v4754, %v5033
    %v5051 = vsub.f32 %v4757, %v5033
    %v5052 = vsub.f32 %v4760, %v5033
    %v5053 = vsub.f32 %v4763, %v5033
    %v5054 = vsub.f32 %v4766, %v5033
    %v5055 = vsub.f32 %v4769, %v5033
    %v5056 = vsub.f32 %v4772, %v5033
    %v5057 = vsub.f32 %v4775, %v5033
    %v5058 = vsub.f32 %v4778, %v5033
    %v5059 = vsub.f32 %v4781, %v5033
    %v5060 = vsub.f32 %v4784, %v5033
    %v5061 = vsub.f32 %v4787, %v5033
    %v5062 = vsub.f32 %v4790, %v5033
    %v5063 = vsub.f32 %v4793, %v5033
    %v5064 = vsub.f32 %v4796, %v5033
    %v5065 = vsub.f32 %v4799, %v5033
    %v5066 = vsub.f32 %v4802, %v5033
    %v5067 = vsub.f32 %v4805, %v5033
    %v5068 = vsub.f32 %v4808, %v5033
    %v5069 = vsub.f32 %v4811, %v5033
    %v5070 = vsub.f32 %v4814, %v5033
    %v5071 = vsub.f32 %v4817, %v5033
    %v5072 = vsub.f32 %v4820, %v5033
    %v5073 = vsub.f32 %v4823, %v5033
    %v5074 = vsub.f32 %v4826, %v5033
    %v5075 = vsub.f32 %v4829, %v5033
    %v5076 = vsub.f32 %v4832, %v5033
    %v5077 = vsub.f32 %v4835, %v5033
    %v5078 = vsub.f32 %v4838, %v5033
    %v5079 = vsub.f32 %v4841, %v5033
    %v5080 = vsub.f32 %v4844, %v5033
    %v5081 = vsub.f32 %v4847, %v5033
    %v5082 = vsub.f32 %v4850, %v5033
    %v5083 = vsub.f32 %v4853, %v5033
    %v5084 = vsub.f32 %v4856, %v5033
    %v5085 = vsub.f32 %v4859, %v5033
    %v5086 = vsub.f32 %v4862, %v5033
    %v5087 = vsub.f32 %v4865, %v5033
    %v5088 = vsub.f32 %v4868, %v5033
    %v5089 = vsub.f32 %v4871, %v5033
    %v5090 = vsub.f32 %v4874, %v5033
    %v5091 = vsub.f32 %v4877, %v5033
    %v5092 = vsub.f32 %v4880, %v5033
    %v5093 = vsub.f32 %v4883, %v5033
    %v5094 = vsub.f32 %v4886, %v5033
    %v5095 = vsub.f32 %v4889, %v5033
    %v5096 = vsub.f32 %v4892, %v5033
    %v5097 = vsub.f32 %v4895, %v5033
    %v5098 = vmul.f32 %v5034, %v5034
    %v5099 = vmul.f32 %v5035, %v5035
    %v5100 = vmul.f32 %v5036, %v5036
    %v5101 = vmul.f32 %v5037, %v5037
    %v5102 = vmul.f32 %v5038, %v5038
    %v5103 = vmul.f32 %v5039, %v5039
    %v5104 = vmul.f32 %v5040, %v5040
    %v5105 = vmul.f32 %v5041, %v5041
    %v5106 = vmul.f32 %v5042, %v5042
    %v5107 = vmul.f32 %v5043, %v5043
    %v5108 = vmul.f32 %v5044, %v5044
    %v5109 = vmul.f32 %v5045, %v5045
    %v5110 = vmul.f32 %v5046, %v5046
    %v5111 = vmul.f32 %v5047, %v5047
    %v5112 = vmul.f32 %v5048, %v5048
    %v5113 = vmul.f32 %v5049, %v5049
    %v5114 = vmul.f32 %v5050, %v5050
    %v5115 = vmul.f32 %v5051, %v5051
    %v5116 = vmul.f32 %v5052, %v5052
    %v5117 = vmul.f32 %v5053, %v5053
    %v5118 = vmul.f32 %v5054, %v5054
    %v5119 = vmul.f32 %v5055, %v5055
    %v5120 = vmul.f32 %v5056, %v5056
    %v5121 = vmul.f32 %v5057, %v5057
    %v5122 = vmul.f32 %v5058, %v5058
    %v5123 = vmul.f32 %v5059, %v5059
    %v5124 = vmul.f32 %v5060, %v5060
    %v5125 = vmul.f32 %v5061, %v5061
    %v5126 = vmul.f32 %v5062, %v5062
    %v5127 = vmul.f32 %v5063, %v5063
    %v5128 = vmul.f32 %v5064, %v5064
    %v5129 = vmul.f32 %v5065, %v5065
    %v5130 = vmul.f32 %v5066, %v5066
    %v5131 = vmul.f32 %v5067, %v5067
    %v5132 = vmul.f32 %v5068, %v5068
    %v5133 = vmul.f32 %v5069, %v5069
    %v5134 = vmul.f32 %v5070, %v5070
    %v5135 = vmul.f32 %v5071, %v5071
    %v5136 = vmul.f32 %v5072, %v5072
    %v5137 = vmul.f32 %v5073, %v5073
    %v5138 = vmul.f32 %v5074, %v5074
    %v5139 = vmul.f32 %v5075, %v5075
    %v5140 = vmul.f32 %v5076, %v5076
    %v5141 = vmul.f32 %v5077, %v5077
    %v5142 = vmul.f32 %v5078, %v5078
    %v5143 = vmul.f32 %v5079, %v5079
    %v5144 = vmul.f32 %v5080, %v5080
    %v5145 = vmul.f32 %v5081, %v5081
    %v5146 = vmul.f32 %v5082, %v5082
    %v5147 = vmul.f32 %v5083, %v5083
    %v5148 = vmul.f32 %v5084, %v5084
    %v5149 = vmul.f32 %v5085, %v5085
    %v5150 = vmul.f32 %v5086, %v5086
    %v5151 = vmul.f32 %v5087, %v5087
    %v5152 = vmul.f32 %v5088, %v5088
    %v5153 = vmul.f32 %v5089, %v5089
    %v5154 = vmul.f32 %v5090, %v5090
    %v5155 = vmul.f32 %v5091, %v5091
    %v5156 = vmul.f32 %v5092, %v5092
    %v5157 = vmul.f32 %v5093, %v5093
    %v5158 = vmul.f32 %v5094, %v5094
    %v5159 = vmul.f32 %v5095, %v5095
    %v5160 = vmul.f32 %v5096, %v5096
    %v5161 = vmul.f32 %v5097, %v5097
    %v5162 = vsel %vm4899, %v5098, 0.0
    %v5163 = vsel %vm4899, %v5099, 0.0
    %v5164 = vadd.f32 %v5162, %v5163
    %v5165 = vsel %vm4899, %v5100, 0.0
    %v5166 = vadd.f32 %v5164, %v5165
    %v5167 = vsel %vm4899, %v5101, 0.0
    %v5168 = vadd.f32 %v5166, %v5167
    %v5169 = vsel %vm4899, %v5102, 0.0
    %v5170 = vadd.f32 %v5168, %v5169
    %v5171 = vsel %vm4899, %v5103, 0.0
    %v5172 = vadd.f32 %v5170, %v5171
    %v5173 = vsel %vm4899, %v5104, 0.0
    %v5174 = vadd.f32 %v5172, %v5173
    %v5175 = vsel %vm4899, %v5105, 0.0
    %v5176 = vadd.f32 %v5174, %v5175
    %v5177 = vsel %vm4899, %v5106, 0.0
    %v5178 = vadd.f32 %v5176, %v5177
    %v5179 = vsel %vm4899, %v5107, 0.0
    %v5180 = vadd.f32 %v5178, %v5179
    %v5181 = vsel %vm4899, %v5108, 0.0
    %v5182 = vadd.f32 %v5180, %v5181
    %v5183 = vsel %vm4899, %v5109, 0.0
    %v5184 = vadd.f32 %v5182, %v5183
    %v5185 = vsel %vm4899, %v5110, 0.0
    %v5186 = vadd.f32 %v5184, %v5185
    %v5187 = vsel %vm4899, %v5111, 0.0
    %v5188 = vadd.f32 %v5186, %v5187
    %v5189 = vsel %vm4899, %v5112, 0.0
    %v5190 = vadd.f32 %v5188, %v5189
    %v5191 = vsel %vm4899, %v5113, 0.0
    %v5192 = vadd.f32 %v5190, %v5191
    %v5193 = vsel %vm4899, %v5114, 0.0
    %v5194 = vadd.f32 %v5192, %v5193
    %v5195 = vsel %vm4899, %v5115, 0.0
    %v5196 = vadd.f32 %v5194, %v5195
    %v5197 = vsel %vm4899, %v5116, 0.0
    %v5198 = vadd.f32 %v5196, %v5197
    %v5199 = vsel %vm4899, %v5117, 0.0
    %v5200 = vadd.f32 %v5198, %v5199
    %v5201 = vsel %vm4899, %v5118, 0.0
    %v5202 = vadd.f32 %v5200, %v5201
    %v5203 = vsel %vm4899, %v5119, 0.0
    %v5204 = vadd.f32 %v5202, %v5203
    %v5205 = vsel %vm4899, %v5120, 0.0
    %v5206 = vadd.f32 %v5204, %v5205
    %v5207 = vsel %vm4899, %v5121, 0.0
    %v5208 = vadd.f32 %v5206, %v5207
    %v5209 = vsel %vm4899, %v5122, 0.0
    %v5210 = vadd.f32 %v5208, %v5209
    %v5211 = vsel %vm4899, %v5123, 0.0
    %v5212 = vadd.f32 %v5210, %v5211
    %v5213 = vsel %vm4899, %v5124, 0.0
    %v5214 = vadd.f32 %v5212, %v5213
    %v5215 = vsel %vm4899, %v5125, 0.0
    %v5216 = vadd.f32 %v5214, %v5215
    %v5217 = vsel %vm4899, %v5126, 0.0
    %v5218 = vadd.f32 %v5216, %v5217
    %v5219 = vsel %vm4899, %v5127, 0.0
    %v5220 = vadd.f32 %v5218, %v5219
    %v5221 = vsel %vm4899, %v5128, 0.0
    %v5222 = vadd.f32 %v5220, %v5221
    %v5223 = vsel %vm4899, %v5129, 0.0
    %v5224 = vadd.f32 %v5222, %v5223
    %v5225 = vsel %vm4899, %v5130, 0.0
    %v5226 = vadd.f32 %v5224, %v5225
    %v5227 = vsel %vm4899, %v5131, 0.0
    %v5228 = vadd.f32 %v5226, %v5227
    %v5229 = vsel %vm4899, %v5132, 0.0
    %v5230 = vadd.f32 %v5228, %v5229
    %v5231 = vsel %vm4899, %v5133, 0.0
    %v5232 = vadd.f32 %v5230, %v5231
    %v5233 = vsel %vm4899, %v5134, 0.0
    %v5234 = vadd.f32 %v5232, %v5233
    %v5235 = vsel %vm4899, %v5135, 0.0
    %v5236 = vadd.f32 %v5234, %v5235
    %v5237 = vsel %vm4899, %v5136, 0.0
    %v5238 = vadd.f32 %v5236, %v5237
    %v5239 = vsel %vm4899, %v5137, 0.0
    %v5240 = vadd.f32 %v5238, %v5239
    %v5241 = vsel %vm4899, %v5138, 0.0
    %v5242 = vadd.f32 %v5240, %v5241
    %v5243 = vsel %vm4899, %v5139, 0.0
    %v5244 = vadd.f32 %v5242, %v5243
    %v5245 = vsel %vm4899, %v5140, 0.0
    %v5246 = vadd.f32 %v5244, %v5245
    %v5247 = vsel %vm4899, %v5141, 0.0
    %v5248 = vadd.f32 %v5246, %v5247
    %v5249 = vsel %vm4899, %v5142, 0.0
    %v5250 = vadd.f32 %v5248, %v5249
    %v5251 = vsel %vm4899, %v5143, 0.0
    %v5252 = vadd.f32 %v5250, %v5251
    %v5253 = vsel %vm4899, %v5144, 0.0
    %v5254 = vadd.f32 %v5252, %v5253
    %v5255 = vsel %vm4899, %v5145, 0.0
    %v5256 = vadd.f32 %v5254, %v5255
    %v5257 = vsel %vm4899, %v5146, 0.0
    %v5258 = vadd.f32 %v5256, %v5257
    %v5259 = vsel %vm4899, %v5147, 0.0
    %v5260 = vadd.f32 %v5258, %v5259
    %v5261 = vsel %vm4899, %v5148, 0.0
    %v5262 = vadd.f32 %v5260, %v5261
    %v5263 = vsel %vm4899, %v5149, 0.0
    %v5264 = vadd.f32 %v5262, %v5263
    %v5265 = vsel %vm4899, %v5150, 0.0
    %v5266 = vadd.f32 %v5264, %v5265
    %v5267 = vsel %vm4899, %v5151, 0.0
    %v5268 = vadd.f32 %v5266, %v5267
    %v5269 = vsel %vm4899, %v5152, 0.0
    %v5270 = vadd.f32 %v5268, %v5269
    %v5271 = vsel %vm4899, %v5153, 0.0
    %v5272 = vadd.f32 %v5270, %v5271
    %v5273 = vsel %vm4899, %v5154, 0.0
    %v5274 = vadd.f32 %v5272, %v5273
    %v5275 = vsel %vm4899, %v5155, 0.0
    %v5276 = vadd.f32 %v5274, %v5275
    %v5277 = vsel %vm4899, %v5156, 0.0
    %v5278 = vadd.f32 %v5276, %v5277
    %v5279 = vsel %vm4899, %v5157, 0.0
    %v5280 = vadd.f32 %v5278, %v5279
    %v5281 = vsel %vm4899, %v5158, 0.0
    %v5282 = vadd.f32 %v5280, %v5281
    %v5283 = vsel %vm4899, %v5159, 0.0
    %v5284 = vadd.f32 %v5282, %v5283
    %v5285 = vsel %vm4899, %v5160, 0.0
    %v5286 = vadd.f32 %v5284, %v5285
    %v5287 = vsel %vm4899, %v5161, 0.0
    %v5288 = vadd.f32 %v5286, %v5287
    %v5289 = vrot.slane %v5288, 4
    %v5290 = vadd.f32 %v5288, %v5289
    %v5291 = vrot.slane %v5290, 2
    %v5292 = vadd.f32 %v5290, %v5291
    %v5293 = vrot.slane %v5292, 1
    %v5294 = vadd.f32 %v5292, %v5293
    %v5295 = vmul.f32 %v5294, %v396
    %v5296 = vadd.f32 %v5295, 1e-05
    %v5297 = vrsqrt.pop %v5296
    %v5298 = vmul.f32 %v5297, %v5296
    %v5299 = vmul.f32 %v5298, %v5297
    %v5300 = vmul.f32 0.5, %v5299
    %v5301 = vsub.f32 1.5, %v5300
    %v5302 = vmul.f32 %v5297, %v5301
    %vm5303 = vweird.f32 %v5296
    %vm5304 = vweird.f32 %v5297
    %vm5305 = vmor %vm5303, %vm5304
    %v5306 = vsel %vm5305, %v5297, %v5302
    %v5307 = vmul.f32 %v5034, %v5306
    %v5308 = vmul.f32 %v5035, %v5306
    %v5309 = vmul.f32 %v5036, %v5306
    %v5310 = vmul.f32 %v5037, %v5306
    %v5311 = vmul.f32 %v5038, %v5306
    %v5312 = vmul.f32 %v5039, %v5306
    %v5313 = vmul.f32 %v5040, %v5306
    %v5314 = vmul.f32 %v5041, %v5306
    %v5315 = vmul.f32 %v5042, %v5306
    %v5316 = vmul.f32 %v5043, %v5306
    %v5317 = vmul.f32 %v5044, %v5306
    %v5318 = vmul.f32 %v5045, %v5306
    %v5319 = vmul.f32 %v5046, %v5306
    %v5320 = vmul.f32 %v5047, %v5306
    %v5321 = vmul.f32 %v5048, %v5306
    %v5322 = vmul.f32 %v5049, %v5306
    %v5323 = vmul.f32 %v5050, %v5306
    %v5324 = vmul.f32 %v5051, %v5306
    %v5325 = vmul.f32 %v5052, %v5306
    %v5326 = vmul.f32 %v5053, %v5306
    %v5327 = vmul.f32 %v5054, %v5306
    %v5328 = vmul.f32 %v5055, %v5306
    %v5329 = vmul.f32 %v5056, %v5306
    %v5330 = vmul.f32 %v5057, %v5306
    %v5331 = vmul.f32 %v5058, %v5306
    %v5332 = vmul.f32 %v5059, %v5306
    %v5333 = vmul.f32 %v5060, %v5306
    %v5334 = vmul.f32 %v5061, %v5306
    %v5335 = vmul.f32 %v5062, %v5306
    %v5336 = vmul.f32 %v5063, %v5306
    %v5337 = vmul.f32 %v5064, %v5306
    %v5338 = vmul.f32 %v5065, %v5306
    %v5339 = vmul.f32 %v5066, %v5306
    %v5340 = vmul.f32 %v5067, %v5306
    %v5341 = vmul.f32 %v5068, %v5306
    %v5342 = vmul.f32 %v5069, %v5306
    %v5343 = vmul.f32 %v5070, %v5306
    %v5344 = vmul.f32 %v5071, %v5306
    %v5345 = vmul.f32 %v5072, %v5306
    %v5346 = vmul.f32 %v5073, %v5306
    %v5347 = vmul.f32 %v5074, %v5306
    %v5348 = vmul.f32 %v5075, %v5306
    %v5349 = vmul.f32 %v5076, %v5306
    %v5350 = vmul.f32 %v5077, %v5306
    %v5351 = vmul.f32 %v5078, %v5306
    %v5352 = vmul.f32 %v5079, %v5306
    %v5353 = vmul.f32 %v5080, %v5306
    %v5354 = vmul.f32 %v5081, %v5306
    %v5355 = vmul.f32 %v5082, %v5306
    %v5356 = vmul.f32 %v5083, %v5306
    %v5357 = vmul.f32 %v5084, %v5306
    %v5358 = vmul.f32 %v5085, %v5306
    %v5359 = vmul.f32 %v5086, %v5306
    %v5360 = vmul.f32 %v5087, %v5306
    %v5361 = vmul.f32 %v5088, %v5306
    %v5362 = vmul.f32 %v5089, %v5306
    %v5363 = vmul.f32 %v5090, %v5306
    %v5364 = vmul.f32 %v5091, %v5306
    %v5365 = vmul.f32 %v5092, %v5306
    %v5366 = vmul.f32 %v5093, %v5306
    %v5367 = vmul.f32 %v5094, %v5306
    %v5368 = vmul.f32 %v5095, %v5306
    %v5369 = vmul.f32 %v5096, %v5306
    %v5370 = vmul.f32 %v5097, %v5306
    %v5372 = vperm.slane %v4897, 0
    %v5374 = vmul.f32 %v5307, %v5372
    %v5375 = vmul.f32 %v5308, %v5372
    %v5376 = vmul.f32 %v5309, %v5372
    %v5377 = vmul.f32 %v5310, %v5372
    %v5378 = vmul.f32 %v5311, %v5372
    %v5379 = vmul.f32 %v5312, %v5372
    %v5380 = vmul.f32 %v5313, %v5372
    %v5381 = vmul.f32 %v5314, %v5372
    %v5382 = vmul.f32 %v5315, %v5372
    %v5383 = vmul.f32 %v5316, %v5372
    %v5384 = vmul.f32 %v5317, %v5372
    %v5385 = vmul.f32 %v5318, %v5372
    %v5386 = vmul.f32 %v5319, %v5372
    %v5387 = vmul.f32 %v5320, %v5372
    %v5388 = vmul.f32 %v5321, %v5372
    %v5389 = vmul.f32 %v5322, %v5372
    %v5390 = vmul.f32 %v5323, %v5372
    %v5391 = vmul.f32 %v5324, %v5372
    %v5392 = vmul.f32 %v5325, %v5372
    %v5393 = vmul.f32 %v5326, %v5372
    %v5394 = vmul.f32 %v5327, %v5372
    %v5395 = vmul.f32 %v5328, %v5372
    %v5396 = vmul.f32 %v5329, %v5372
    %v5397 = vmul.f32 %v5330, %v5372
    %v5398 = vmul.f32 %v5331, %v5372
    %v5399 = vmul.f32 %v5332, %v5372
    %v5400 = vmul.f32 %v5333, %v5372
    %v5401 = vmul.f32 %v5334, %v5372
    %v5402 = vmul.f32 %v5335, %v5372
    %v5403 = vmul.f32 %v5336, %v5372
    %v5404 = vmul.f32 %v5337, %v5372
    %v5405 = vmul.f32 %v5338, %v5372
    %v5406 = vmul.f32 %v5339, %v5372
    %v5407 = vmul.f32 %v5340, %v5372
    %v5408 = vmul.f32 %v5341, %v5372
    %v5409 = vmul.f32 %v5342, %v5372
    %v5410 = vmul.f32 %v5343, %v5372
    %v5411 = vmul.f32 %v5344, %v5372
    %v5412 = vmul.f32 %v5345, %v5372
    %v5413 = vmul.f32 %v5346, %v5372
    %v5414 = vmul.f32 %v5347, %v5372
    %v5415 = vmul.f32 %v5348, %v5372
    %v5416 = vmul.f32 %v5349, %v5372
    %v5417 = vmul.f32 %v5350, %v5372
    %v5418 = vmul.f32 %v5351, %v5372
    %v5419 = vmul.f32 %v5352, %v5372
    %v5420 = vmul.f32 %v5353, %v5372
    %v5421 = vmul.f32 %v5354, %v5372
    %v5422 = vmul.f32 %v5355, %v5372
    %v5423 = vmul.f32 %v5356, %v5372
    %v5424 = vmul.f32 %v5357, %v5372
    %v5425 = vmul.f32 %v5358, %v5372
    %v5426 = vmul.f32 %v5359, %v5372
    %v5427 = vmul.f32 %v5360, %v5372
    %v5428 = vmul.f32 %v5361, %v5372
    %v5429 = vmul.f32 %v5362, %v5372
    %v5430 = vmul.f32 %v5363, %v5372
    %v5431 = vmul.f32 %v5364, %v5372
    %v5432 = vmul.f32 %v5365, %v5372
    %v5433 = vmul.f32 %v5366, %v5372
    %v5434 = vmul.f32 %v5367, %v5372
    %v5435 = vmul.f32 %v5368, %v5372
    %v5436 = vmul.f32 %v5369, %v5372
    %v5437 = vmul.f32 %v5370, %v5372
    %v5439 = vperm.slane %v4898, 0
    %v5441 = vadd.f32 %v5374, %v5439
    %v5442 = vadd.f32 %v5375, %v5439
    %v5443 = vadd.f32 %v5376, %v5439
    %v5444 = vadd.f32 %v5377, %v5439
    %v5445 = vadd.f32 %v5378, %v5439
    %v5446 = vadd.f32 %v5379, %v5439
    %v5447 = vadd.f32 %v5380, %v5439
    %v5448 = vadd.f32 %v5381, %v5439
    %v5449 = vadd.f32 %v5382, %v5439
    %v5450 = vadd.f32 %v5383, %v5439
    %v5451 = vadd.f32 %v5384, %v5439
    %v5452 = vadd.f32 %v5385, %v5439
    %v5453 = vadd.f32 %v5386, %v5439
    %v5454 = vadd.f32 %v5387, %v5439
    %v5455 = vadd.f32 %v5388, %v5439
    %v5456 = vadd.f32 %v5389, %v5439
    %v5457 = vadd.f32 %v5390, %v5439
    %v5458 = vadd.f32 %v5391, %v5439
    %v5459 = vadd.f32 %v5392, %v5439
    %v5460 = vadd.f32 %v5393, %v5439
    %v5461 = vadd.f32 %v5394, %v5439
    %v5462 = vadd.f32 %v5395, %v5439
    %v5463 = vadd.f32 %v5396, %v5439
    %v5464 = vadd.f32 %v5397, %v5439
    %v5465 = vadd.f32 %v5398, %v5439
    %v5466 = vadd.f32 %v5399, %v5439
    %v5467 = vadd.f32 %v5400, %v5439
    %v5468 = vadd.f32 %v5401, %v5439
    %v5469 = vadd.f32 %v5402, %v5439
    %v5470 = vadd.f32 %v5403, %v5439
    %v5471 = vadd.f32 %v5404, %v5439
    %v5472 = vadd.f32 %v5405, %v5439
    %v5473 = vadd.f32 %v5406, %v5439
    %v5474 = vadd.f32 %v5407, %v5439
    %v5475 = vadd.f32 %v5408, %v5439
    %v5476 = vadd.f32 %v5409, %v5439
    %v5477 = vadd.f32 %v5410, %v5439
    %v5478 = vadd.f32 %v5411, %v5439
    %v5479 = vadd.f32 %v5412, %v5439
    %v5480 = vadd.f32 %v5413, %v5439
    %v5481 = vadd.f32 %v5414, %v5439
    %v5482 = vadd.f32 %v5415, %v5439
    %v5483 = vadd.f32 %v5416, %v5439
    %v5484 = vadd.f32 %v5417, %v5439
    %v5485 = vadd.f32 %v5418, %v5439
    %v5486 = vadd.f32 %v5419, %v5439
    %v5487 = vadd.f32 %v5420, %v5439
    %v5488 = vadd.f32 %v5421, %v5439
    %v5489 = vadd.f32 %v5422, %v5439
    %v5490 = vadd.f32 %v5423, %v5439
    %v5491 = vadd.f32 %v5424, %v5439
    %v5492 = vadd.f32 %v5425, %v5439
    %v5493 = vadd.f32 %v5426, %v5439
    %v5494 = vadd.f32 %v5427, %v5439
    %v5495 = vadd.f32 %v5428, %v5439
    %v5496 = vadd.f32 %v5429, %v5439
    %v5497 = vadd.f32 %v5430, %v5439
    %v5498 = vadd.f32 %v5431, %v5439
    %v5499 = vadd.f32 %v5432, %v5439
    %v5500 = vadd.f32 %v5433, %v5439
    %v5501 = vadd.f32 %v5434, %v5439
    %v5502 = vadd.f32 %v5435, %v5439
    %v5503 = vadd.f32 %v5436, %v5439
    %v5504 = vadd.f32 %v5437, %v5439
    %vm5505 = vcmp.gt.f32.partialorder %v5441, 0.0
    %vm5506 = vcmp.gt.f32.partialorder %v5442, 0.0
    %vm5507 = vcmp.gt.f32.partialorder %v5443, 0.0
    %vm5508 = vcmp.gt.f32.partialorder %v5444, 0.0
    %vm5509 = vcmp.gt.f32.partialorder %v5445, 0.0
    %vm5510 = vcmp.gt.f32.partialorder %v5446, 0.0
    %vm5511 = vcmp.gt.f32.partialorder %v5447, 0.0
    %vm5512 = vcmp.gt.f32.partialorder %v5448, 0.0
    %vm5513 = vcmp.gt.f32.partialorder %v5449, 0.0
    %vm5514 = vcmp.gt.f32.partialorder %v5450, 0.0
    %vm5515 = vcmp.gt.f32.partialorder %v5451, 0.0
    %vm5516 = vcmp.gt.f32.partialorder %v5452, 0.0
    %vm5517 = vcmp.gt.f32.partialorder %v5453, 0.0
    %vm5518 = vcmp.gt.f32.partialorder %v5454, 0.0
    %vm5519 = vcmp.gt.f32.partialorder %v5455, 0.0
    %vm5520 = vcmp.gt.f32.partialorder %v5456, 0.0
    %vm5521 = vcmp.gt.f32.partialorder %v5457, 0.0
    %vm5522 = vcmp.gt.f32.partialorder %v5458, 0.0
    %vm5523 = vcmp.gt.f32.partialorder %v5459, 0.0
    %vm5524 = vcmp.gt.f32.partialorder %v5460, 0.0
    %vm5525 = vcmp.gt.f32.partialorder %v5461, 0.0
    %vm5526 = vcmp.gt.f32.partialorder %v5462, 0.0
    %vm5527 = vcmp.gt.f32.partialorder %v5463, 0.0
    %vm5528 = vcmp.gt.f32.partialorder %v5464, 0.0
    %vm5529 = vcmp.gt.f32.partialorder %v5465, 0.0
    %vm5530 = vcmp.gt.f32.partialorder %v5466, 0.0
    %vm5531 = vcmp.gt.f32.partialorder %v5467, 0.0
    %vm5532 = vcmp.gt.f32.partialorder %v5468, 0.0
    %vm5533 = vcmp.gt.f32.partialorder %v5469, 0.0
    %vm5534 = vcmp.gt.f32.partialorder %v5470, 0.0
    %vm5535 = vcmp.gt.f32.partialorder %v5471, 0.0
    %vm5536 = vcmp.gt.f32.partialorder %v5472, 0.0
    %vm5537 = vcmp.gt.f32.partialorder %v5473, 0.0
    %vm5538 = vcmp.gt.f32.partialorder %v5474, 0.0
    %vm5539 = vcmp.gt.f32.partialorder %v5475, 0.0
    %vm5540 = vcmp.gt.f32.partialorder %v5476, 0.0
    %vm5541 = vcmp.gt.f32.partialorder %v5477, 0.0
    %vm5542 = vcmp.gt.f32.partialorder %v5478, 0.0
    %vm5543 = vcmp.gt.f32.partialorder %v5479, 0.0
    %vm5544 = vcmp.gt.f32.partialorder %v5480, 0.0
    %vm5545 = vcmp.gt.f32.partialorder %v5481, 0.0
    %vm5546 = vcmp.gt.f32.partialorder %v5482, 0.0
    %vm5547 = vcmp.gt.f32.partialorder %v5483, 0.0
    %vm5548 = vcmp.gt.f32.partialorder %v5484, 0.0
    %vm5549 = vcmp.gt.f32.partialorder %v5485, 0.0
    %vm5550 = vcmp.gt.f32.partialorder %v5486, 0.0
    %vm5551 = vcmp.gt.f32.partialorder %v5487, 0.0
    %vm5552 = vcmp.gt.f32.partialorder %v5488, 0.0
    %vm5553 = vcmp.gt.f32.partialorder %v5489, 0.0
    %vm5554 = vcmp.gt.f32.partialorder %v5490, 0.0
    %vm5555 = vcmp.gt.f32.partialorder %v5491, 0.0
    %vm5556 = vcmp.gt.f32.partialorder %v5492, 0.0
    %vm5557 = vcmp.gt.f32.partialorder %v5493, 0.0
    %vm5558 = vcmp.gt.f32.partialorder %v5494, 0.0
    %vm5559 = vcmp.gt.f32.partialorder %v5495, 0.0
    %vm5560 = vcmp.gt.f32.partialorder %v5496, 0.0
    %vm5561 = vcmp.gt.f32.partialorder %v5497, 0.0
    %vm5562 = vcmp.gt.f32.partialorder %v5498, 0.0
    %vm5563 = vcmp.gt.f32.partialorder %v5499, 0.0
    %vm5564 = vcmp.gt.f32.partialorder %v5500, 0.0
    %vm5565 = vcmp.gt.f32.partialorder %v5501, 0.0
    %vm5566 = vcmp.gt.f32.partialorder %v5502, 0.0
    %vm5567 = vcmp.gt.f32.partialorder %v5503, 0.0
    %vm5568 = vcmp.gt.f32.partialorder %v5504, 0.0
    %v5569 = vmul.f32 %v5441, 0.2
    %v5570 = vmul.f32 %v5442, 0.2
    %v5571 = vmul.f32 %v5443, 0.2
    %v5572 = vmul.f32 %v5444, 0.2
    %v5573 = vmul.f32 %v5445, 0.2
    %v5574 = vmul.f32 %v5446, 0.2
    %v5575 = vmul.f32 %v5447, 0.2
    %v5576 = vmul.f32 %v5448, 0.2
    %v5577 = vmul.f32 %v5449, 0.2
    %v5578 = vmul.f32 %v5450, 0.2
    %v5579 = vmul.f32 %v5451, 0.2
    %v5580 = vmul.f32 %v5452, 0.2
    %v5581 = vmul.f32 %v5453, 0.2
    %v5582 = vmul.f32 %v5454, 0.2
    %v5583 = vmul.f32 %v5455, 0.2
    %v5584 = vmul.f32 %v5456, 0.2
    %v5585 = vmul.f32 %v5457, 0.2
    %v5586 = vmul.f32 %v5458, 0.2
    %v5587 = vmul.f32 %v5459, 0.2
    %v5588 = vmul.f32 %v5460, 0.2
    %v5589 = vmul.f32 %v5461, 0.2
    %v5590 = vmul.f32 %v5462, 0.2
    %v5591 = vmul.f32 %v5463, 0.2
    %v5592 = vmul.f32 %v5464, 0.2
    %v5593 = vmul.f32 %v5465, 0.2
    %v5594 = vmul.f32 %v5466, 0.2
    %v5595 = vmul.f32 %v5467, 0.2
    %v5596 = vmul.f32 %v5468, 0.2
    %v5597 = vmul.f32 %v5469, 0.2
    %v5598 = vmul.f32 %v5470, 0.2
    %v5599 = vmul.f32 %v5471, 0.2
    %v5600 = vmul.f32 %v5472, 0.2
    %v5601 = vmul.f32 %v5473, 0.2
    %v5602 = vmul.f32 %v5474, 0.2
    %v5603 = vmul.f32 %v5475, 0.2
    %v5604 = vmul.f32 %v5476, 0.2
    %v5605 = vmul.f32 %v5477, 0.2
    %v5606 = vmul.f32 %v5478, 0.2
    %v5607 = vmul.f32 %v5479, 0.2
    %v5608 = vmul.f32 %v5480, 0.2
    %v5609 = vmul.f32 %v5481, 0.2
    %v5610 = vmul.f32 %v5482, 0.2
    %v5611 = vmul.f32 %v5483, 0.2
    %v5612 = vmul.f32 %v5484, 0.2
    %v5613 = vmul.f32 %v5485, 0.2
    %v5614 = vmul.f32 %v5486, 0.2
    %v5615 = vmul.f32 %v5487, 0.2
    %v5616 = vmul.f32 %v5488, 0.2
    %v5617 = vmul.f32 %v5489, 0.2
    %v5618 = vmul.f32 %v5490, 0.2
    %v5619 = vmul.f32 %v5491, 0.2
    %v5620 = vmul.f32 %v5492, 0.2
    %v5621 = vmul.f32 %v5493, 0.2
    %v5622 = vmul.f32 %v5494, 0.2
    %v5623 = vmul.f32 %v5495, 0.2
    %v5624 = vmul.f32 %v5496, 0.2
    %v5625 = vmul.f32 %v5497, 0.2
    %v5626 = vmul.f32 %v5498, 0.2
    %v5627 = vmul.f32 %v5499, 0.2
    %v5628 = vmul.f32 %v5500, 0.2
    %v5629 = vmul.f32 %v5501, 0.2
    %v5630 = vmul.f32 %v5502, 0.2
    %v5631 = vmul.f32 %v5503, 0.2
    %v5632 = vmul.f32 %v5504, 0.2
    %v5633 = vsel %vm5505, %v5441, %v5569
    %v5634 = vsel %vm5506, %v5442, %v5570
    %v5635 = vsel %vm5507, %v5443, %v5571
    %v5636 = vsel %vm5508, %v5444, %v5572
    %v5637 = vsel %vm5509, %v5445, %v5573
    %v5638 = vsel %vm5510, %v5446, %v5574
    %v5639 = vsel %vm5511, %v5447, %v5575
    %v5640 = vsel %vm5512, %v5448, %v5576
    %v5641 = vsel %vm5513, %v5449, %v5577
    %v5642 = vsel %vm5514, %v5450, %v5578
    %v5643 = vsel %vm5515, %v5451, %v5579
    %v5644 = vsel %vm5516, %v5452, %v5580
    %v5645 = vsel %vm5517, %v5453, %v5581
    %v5646 = vsel %vm5518, %v5454, %v5582
    %v5647 = vsel %vm5519, %v5455, %v5583
    %v5648 = vsel %vm5520, %v5456, %v5584
    %v5649 = vsel %vm5521, %v5457, %v5585
    %v5650 = vsel %vm5522, %v5458, %v5586
    %v5651 = vsel %vm5523, %v5459, %v5587
    %v5652 = vsel %vm5524, %v5460, %v5588
    %v5653 = vsel %vm5525, %v5461, %v5589
    %v5654 = vsel %vm5526, %v5462, %v5590
    %v5655 = vsel %vm5527, %v5463, %v5591
    %v5656 = vsel %vm5528, %v5464, %v5592
    %v5657 = vsel %vm5529, %v5465, %v5593
    %v5658 = vsel %vm5530, %v5466, %v5594
    %v5659 = vsel %vm5531, %v5467, %v5595
    %v5660 = vsel %vm5532, %v5468, %v5596
    %v5661 = vsel %vm5533, %v5469, %v5597
    %v5662 = vsel %vm5534, %v5470, %v5598
    %v5663 = vsel %vm5535, %v5471, %v5599
    %v5664 = vsel %vm5536, %v5472, %v5600
    %v5665 = vsel %vm5537, %v5473, %v5601
    %v5666 = vsel %vm5538, %v5474, %v5602
    %v5667 = vsel %vm5539, %v5475, %v5603
    %v5668 = vsel %vm5540, %v5476, %v5604
    %v5669 = vsel %vm5541, %v5477, %v5605
    %v5670 = vsel %vm5542, %v5478, %v5606
    %v5671 = vsel %vm5543, %v5479, %v5607
    %v5672 = vsel %vm5544, %v5480, %v5608
    %v5673 = vsel %vm5545, %v5481, %v5609
    %v5674 = vsel %vm5546, %v5482, %v5610
    %v5675 = vsel %vm5547, %v5483, %v5611
    %v5676 = vsel %vm5548, %v5484, %v5612
    %v5677 = vsel %vm5549, %v5485, %v5613
    %v5678 = vsel %vm5550, %v5486, %v5614
    %v5679 = vsel %vm5551, %v5487, %v5615
    %v5680 = vsel %vm5552, %v5488, %v5616
    %v5681 = vsel %vm5553, %v5489, %v5617
    %v5682 = vsel %vm5554, %v5490, %v5618
    %v5683 = vsel %vm5555, %v5491, %v5619
    %v5684 = vsel %vm5556, %v5492, %v5620
    %v5685 = vsel %vm5557, %v5493, %v5621
    %v5686 = vsel %vm5558, %v5494, %v5622
    %v5687 = vsel %vm5559, %v5495, %v5623
    %v5688 = vsel %vm5560, %v5496, %v5624
    %v5689 = vsel %vm5561, %v5497, %v5625
    %v5690 = vsel %vm5562, %v5498, %v5626
    %v5691 = vsel %vm5563, %v5499, %v5627
    %v5692 = vsel %vm5564, %v5500, %v5628
    %v5693 = vsel %vm5565, %v5501, %v5629
    %v5694 = vsel %vm5566, %v5502, %v5630
    %v5695 = vsel %vm5567, %v5503, %v5631
    %v5696 = vsel %vm5568, %v5504, %v5632
    %5697 = vst.msk [vmem:[#allocation4] sm:$0xff] %vm4899, 0.0
    %5698 = vst.msk [vmem:[#allocation4 + $0x8] sm:$0xff] %vm4899, 0.0
    %5699 = vst.msk [vmem:[#allocation4 + $0x10] sm:$0xff] %vm4899, 0.0
    %5700 = vst.msk [vmem:[#allocation4 + $0x18] sm:$0xff] %vm4899, 0.0
    %5701 = vst.msk [vmem:[#allocation4 + $0x240] sm:$0xff] %vm4899, 0.0
    %5702 = vst.msk [vmem:[#allocation4 + $0x248] sm:$0xff] %vm4899, 0.0
    %5703 = vst.msk [vmem:[#allocation4 + $0x250] sm:$0xff] %vm4899, 0.0
    %5704 = vst.msk [vmem:[#allocation4 + $0x258] sm:$0xff] %vm4899, 0.0
    %s5705 = scalar_lea.vmem [#allocation4], 544
    %5706 = vst.msk [vmem:[%s5705] sm:$0xff] %vm4899, 0.0
    %5707 = vst.msk [vmem:[%s5705 + $0x8] sm:$0xff] %vm4899, 0.0
    %5708 = vst.msk [vmem:[%s5705 + $0x10] sm:$0xff] %vm4899, 0.0
    %5709 = vst.msk [vmem:[%s5705 + $0x18] sm:$0xff] %vm4899, 0.0
    %5710 = vst.msk [vmem:[%s5705 + $0x240] sm:$0xff] %vm4899, 0.0
    %5711 = vst.msk [vmem:[%s5705 + $0x248] sm:$0xff] %vm4899, 0.0
    %5712 = vst.msk [vmem:[%s5705 + $0x250] sm:$0xff] %vm4899, 0.0
    %5713 = vst.msk [vmem:[%s5705 + $0x258] sm:$0xff] %vm4899, 0.0
    %s5714 = scalar_lea.vmem [#allocation4], 32
    %vm5715 = vcmask 516096
    %5716 = vst.msk [vmem:[%s5714 + $0x7] sm:$0x1] %vm5715, 0.0
    %5717 = vst.msk [vmem:[%s5714 + $0x27] sm:$0x1] %vm5715, 0.0
    %5718 = vst.msk [vmem:[%s5714 + $0x47] sm:$0x1] %vm5715, 0.0
    %5719 = vst.msk [vmem:[%s5714 + $0x67] sm:$0x1] %vm5715, 0.0
    %5720 = vst.msk [vmem:[%s5714 + $0x87] sm:$0x1] %vm5715, 0.0
    %5721 = vst.msk [vmem:[%s5714 + $0xa7] sm:$0x1] %vm5715, 0.0
    %5722 = vst.msk [vmem:[%s5714 + $0xc7] sm:$0x1] %vm5715, 0.0
    %5723 = vst.msk [vmem:[%s5714 + $0xe7] sm:$0x1] %vm5715, 0.0
    %5724 = vst.msk [vmem:[%s5714 + $0x107] sm:$0x1] %vm5715, 0.0
    %5725 = vst.msk [vmem:[%s5714 + $0x127] sm:$0x1] %vm5715, 0.0
    %5726 = vst.msk [vmem:[%s5714 + $0x147] sm:$0x1] %vm5715, 0.0
    %5727 = vst.msk [vmem:[%s5714 + $0x167] sm:$0x1] %vm5715, 0.0
    %5728 = vst.msk [vmem:[%s5714 + $0x187] sm:$0x1] %vm5715, 0.0
    %5729 = vst.msk [vmem:[%s5714 + $0x1a7] sm:$0x1] %vm5715, 0.0
    %5730 = vst.msk [vmem:[%s5714 + $0x1c7] sm:$0x1] %vm5715, 0.0
    %5731 = vst.msk [vmem:[%s5714 + $0x1e7] sm:$0x1] %vm5715, 0.0
    %5732 = vst.msk [vmem:[%s5714 + $0x247] sm:$0x1] %vm5715, 0.0
    %5733 = vst.msk [vmem:[%s5714 + $0x267] sm:$0x1] %vm5715, 0.0
    %5734 = vst.msk [vmem:[%s5714 + $0x287] sm:$0x1] %vm5715, 0.0
    %5735 = vst.msk [vmem:[%s5714 + $0x2a7] sm:$0x1] %vm5715, 0.0
    %5736 = vst.msk [vmem:[%s5714 + $0x2c7] sm:$0x1] %vm5715, 0.0
    %5737 = vst.msk [vmem:[%s5714 + $0x2e7] sm:$0x1] %vm5715, 0.0
    %5738 = vst.msk [vmem:[%s5714 + $0x307] sm:$0x1] %vm5715, 0.0
    %5739 = vst.msk [vmem:[%s5714 + $0x327] sm:$0x1] %vm5715, 0.0
    %5740 = vst.msk [vmem:[%s5714 + $0x347] sm:$0x1] %vm5715, 0.0
    %5741 = vst.msk [vmem:[%s5714 + $0x367] sm:$0x1] %vm5715, 0.0
    %5742 = vst.msk [vmem:[%s5714 + $0x387] sm:$0x1] %vm5715, 0.0
    %5743 = vst.msk [vmem:[%s5714 + $0x3a7] sm:$0x1] %vm5715, 0.0
    %5744 = vst.msk [vmem:[%s5714 + $0x3c7] sm:$0x1] %vm5715, 0.0
    %5745 = vst.msk [vmem:[%s5714 + $0x3e7] sm:$0x1] %vm5715, 0.0
    %5746 = vst.msk [vmem:[%s5714 + $0x407] sm:$0x1] %vm5715, 0.0
    %5747 = vst.msk [vmem:[%s5714 + $0x427] sm:$0x1] %vm5715, 0.0
    %5748 = vst.msk [vmem:[%s5714 + $0x18] sm:$0x1] %vm5715, 0.0
    %5749 = vst.msk [vmem:[%s5714 + $0x38] sm:$0x1] %vm5715, 0.0
    %5750 = vst.msk [vmem:[%s5714 + $0x58] sm:$0x1] %vm5715, 0.0
    %5751 = vst.msk [vmem:[%s5714 + $0x78] sm:$0x1] %vm5715, 0.0
    %5752 = vst.msk [vmem:[%s5714 + $0x98] sm:$0x1] %vm5715, 0.0
    %5753 = vst.msk [vmem:[%s5714 + $0xb8] sm:$0x1] %vm5715, 0.0
    %5754 = vst.msk [vmem:[%s5714 + $0xd8] sm:$0x1] %vm5715, 0.0
    %5755 = vst.msk [vmem:[%s5714 + $0xf8] sm:$0x1] %vm5715, 0.0
    %5756 = vst.msk [vmem:[%s5714 + $0x118] sm:$0x1] %vm5715, 0.0
    %5757 = vst.msk [vmem:[%s5714 + $0x138] sm:$0x1] %vm5715, 0.0
    %5758 = vst.msk [vmem:[%s5714 + $0x158] sm:$0x1] %vm5715, 0.0
    %5759 = vst.msk [vmem:[%s5714 + $0x178] sm:$0x1] %vm5715, 0.0
    %5760 = vst.msk [vmem:[%s5714 + $0x198] sm:$0x1] %vm5715, 0.0
    %5761 = vst.msk [vmem:[%s5714 + $0x1b8] sm:$0x1] %vm5715, 0.0
    %5762 = vst.msk [vmem:[%s5714 + $0x1d8] sm:$0x1] %vm5715, 0.0
    %5763 = vst.msk [vmem:[%s5714 + $0x1f8] sm:$0x1] %vm5715, 0.0
    %5764 = vst.msk [vmem:[%s5714 + $0x258] sm:$0x1] %vm5715, 0.0
    %5765 = vst.msk [vmem:[%s5714 + $0x278] sm:$0x1] %vm5715, 0.0
    %5766 = vst.msk [vmem:[%s5714 + $0x298] sm:$0x1] %vm5715, 0.0
    %5767 = vst.msk [vmem:[%s5714 + $0x2b8] sm:$0x1] %vm5715, 0.0
    %5768 = vst.msk [vmem:[%s5714 + $0x2d8] sm:$0x1] %vm5715, 0.0
    %5769 = vst.msk [vmem:[%s5714 + $0x2f8] sm:$0x1] %vm5715, 0.0
    %5770 = vst.msk [vmem:[%s5714 + $0x318] sm:$0x1] %vm5715, 0.0
    %5771 = vst.msk [vmem:[%s5714 + $0x338] sm:$0x1] %vm5715, 0.0
    %5772 = vst.msk [vmem:[%s5714 + $0x358] sm:$0x1] %vm5715, 0.0
    %5773 = vst.msk [vmem:[%s5714 + $0x378] sm:$0x1] %vm5715, 0.0
    %5774 = vst.msk [vmem:[%s5714 + $0x398] sm:$0x1] %vm5715, 0.0
    %5775 = vst.msk [vmem:[%s5714 + $0x3b8] sm:$0x1] %vm5715, 0.0
    %5776 = vst.msk [vmem:[%s5714 + $0x3d8] sm:$0x1] %vm5715, 0.0
    %5777 = vst.msk [vmem:[%s5714 + $0x3f8] sm:$0x1] %vm5715, 0.0
    %5778 = vst.msk [vmem:[%s5714 + $0x418] sm:$0x1] %vm5715, 0.0
    %5779 = vst.msk [vmem:[%s5714 + $0x438] sm:$0x1] %vm5715, 0.0
    %5780 = vst.msk [vmem:[%s5714 + $0x8] sm:$0xff] %vm4899, %v5633
    %5781 = vst.msk [vmem:[%s5714 + $0x10] sm:$0xff] %vm4899, %v5634
    %5782 = vst.msk [vmem:[%s5714 + $0x28] sm:$0xff] %vm4899, %v5635
    %5783 = vst.msk [vmem:[%s5714 + $0x30] sm:$0xff] %vm4899, %v5636
    %5784 = vst.msk [vmem:[%s5714 + $0x48] sm:$0xff] %vm4899, %v5637
    %5785 = vst.msk [vmem:[%s5714 + $0x50] sm:$0xff] %vm4899, %v5638
    %5786 = vst.msk [vmem:[%s5714 + $0x68] sm:$0xff] %vm4899, %v5639
    %5787 = vst.msk [vmem:[%s5714 + $0x70] sm:$0xff] %vm4899, %v5640
    %5788 = vst.msk [vmem:[%s5714 + $0x88] sm:$0xff] %vm4899, %v5641
    %5789 = vst.msk [vmem:[%s5714 + $0x90] sm:$0xff] %vm4899, %v5642
    %5790 = vst.msk [vmem:[%s5714 + $0xa8] sm:$0xff] %vm4899, %v5643
    %5791 = vst.msk [vmem:[%s5714 + $0xb0] sm:$0xff] %vm4899, %v5644
    %5792 = vst.msk [vmem:[%s5714 + $0xc8] sm:$0xff] %vm4899, %v5645
    %5793 = vst.msk [vmem:[%s5714 + $0xd0] sm:$0xff] %vm4899, %v5646
    %5794 = vst.msk [vmem:[%s5714 + $0xe8] sm:$0xff] %vm4899, %v5647
    %5795 = vst.msk [vmem:[%s5714 + $0xf0] sm:$0xff] %vm4899, %v5648
    %5796 = vst.msk [vmem:[%s5714 + $0x108] sm:$0xff] %vm4899, %v5649
    %5797 = vst.msk [vmem:[%s5714 + $0x110] sm:$0xff] %vm4899, %v5650
    %5798 = vst.msk [vmem:[%s5714 + $0x128] sm:$0xff] %vm4899, %v5651
    %5799 = vst.msk [vmem:[%s5714 + $0x130] sm:$0xff] %vm4899, %v5652
    %5800 = vst.msk [vmem:[%s5714 + $0x148] sm:$0xff] %vm4899, %v5653
    %5801 = vst.msk [vmem:[%s5714 + $0x150] sm:$0xff] %vm4899, %v5654
    %5802 = vst.msk [vmem:[%s5714 + $0x168] sm:$0xff] %vm4899, %v5655
    %5803 = vst.msk [vmem:[%s5714 + $0x170] sm:$0xff] %vm4899, %v5656
    %5804 = vst.msk [vmem:[%s5714 + $0x188] sm:$0xff] %vm4899, %v5657
    %5805 = vst.msk [vmem:[%s5714 + $0x190] sm:$0xff] %vm4899, %v5658
    %5806 = vst.msk [vmem:[%s5714 + $0x1a8] sm:$0xff] %vm4899, %v5659
    %5807 = vst.msk [vmem:[%s5714 + $0x1b0] sm:$0xff] %vm4899, %v5660
    %5808 = vst.msk [vmem:[%s5714 + $0x1c8] sm:$0xff] %vm4899, %v5661
    %5809 = vst.msk [vmem:[%s5714 + $0x1d0] sm:$0xff] %vm4899, %v5662
    %5810 = vst.msk [vmem:[%s5714 + $0x1e8] sm:$0xff] %vm4899, %v5663
    %5811 = vst.msk [vmem:[%s5714 + $0x1f0] sm:$0xff] %vm4899, %v5664
    %5812 = vst.msk [vmem:[%s5714 + $0x248] sm:$0xff] %vm4899, %v5665
    %5813 = vst.msk [vmem:[%s5714 + $0x250] sm:$0xff] %vm4899, %v5666
    %5814 = vst.msk [vmem:[%s5714 + $0x268] sm:$0xff] %vm4899, %v5667
    %5815 = vst.msk [vmem:[%s5714 + $0x270] sm:$0xff] %vm4899, %v5668
    %5816 = vst.msk [vmem:[%s5714 + $0x288] sm:$0xff] %vm4899, %v5669
    %5817 = vst.msk [vmem:[%s5714 + $0x290] sm:$0xff] %vm4899, %v5670
    %5818 = vst.msk [vmem:[%s5714 + $0x2a8] sm:$0xff] %vm4899, %v5671
    %5819 = vst.msk [vmem:[%s5714 + $0x2b0] sm:$0xff] %vm4899, %v5672
    %5820 = vst.msk [vmem:[%s5714 + $0x2c8] sm:$0xff] %vm4899, %v5673
    %5821 = vst.msk [vmem:[%s5714 + $0x2d0] sm:$0xff] %vm4899, %v5674
    %5822 = vst.msk [vmem:[%s5714 + $0x2e8] sm:$0xff] %vm4899, %v5675
    %5823 = vst.msk [vmem:[%s5714 + $0x2f0] sm:$0xff] %vm4899, %v5676
    %5824 = vst.msk [vmem:[%s5714 + $0x308] sm:$0xff] %vm4899, %v5677
    %5825 = vst.msk [vmem:[%s5714 + $0x310] sm:$0xff] %vm4899, %v5678
    %5826 = vst.msk [vmem:[%s5714 + $0x328] sm:$0xff] %vm4899, %v5679
    %5827 = vst.msk [vmem:[%s5714 + $0x330] sm:$0xff] %vm4899, %v5680
    %5828 = vst.msk [vmem:[%s5714 + $0x348] sm:$0xff] %vm4899, %v5681
    %5829 = vst.msk [vmem:[%s5714 + $0x350] sm:$0xff] %vm4899, %v5682
    %5830 = vst.msk [vmem:[%s5714 + $0x368] sm:$0xff] %vm4899, %v5683
    %5831 = vst.msk [vmem:[%s5714 + $0x370] sm:$0xff] %vm4899, %v5684
    %5832 = vst.msk [vmem:[%s5714 + $0x388] sm:$0xff] %vm4899, %v5685
    %5833 = vst.msk [vmem:[%s5714 + $0x390] sm:$0xff] %vm4899, %v5686
    %5834 = vst.msk [vmem:[%s5714 + $0x3a8] sm:$0xff] %vm4899, %v5687
    %5835 = vst.msk [vmem:[%s5714 + $0x3b0] sm:$0xff] %vm4899, %v5688
    %5836 = vst.msk [vmem:[%s5714 + $0x3c8] sm:$0xff] %vm4899, %v5689
    %5837 = vst.msk [vmem:[%s5714 + $0x3d0] sm:$0xff] %vm4899, %v5690
    %5838 = vst.msk [vmem:[%s5714 + $0x3e8] sm:$0xff] %vm4899, %v5691
    %5839 = vst.msk [vmem:[%s5714 + $0x3f0] sm:$0xff] %vm4899, %v5692
    %5840 = vst.msk [vmem:[%s5714 + $0x408] sm:$0xff] %vm4899, %v5693
    %5841 = vst.msk [vmem:[%s5714 + $0x410] sm:$0xff] %vm4899, %v5694
    %5842 = vst.msk [vmem:[%s5714 + $0x428] sm:$0xff] %vm4899, %v5695
    %5843 = vst.msk [vmem:[%s5714 + $0x430] sm:$0xff] %vm4899, %v5696
    %v5844 = vld [vmem:[%s7] sm:$0xff]
    %v5845 = vld [vmem:[%s7 + $0x8] sm:$0x1]
    %v5846 = vld [vmem:[#allocation4 + $0x7] sm:$0xff]
    %v5847 = vld [vmem:[#allocation4 + $0xf] sm:$0xff]
    %v5848 = vld [vmem:[#allocation4 + $0x27] sm:$0xff]
    %v5849 = vld [vmem:[#allocation4 + $0x2f] sm:$0xff]
    %v5850 = vld [vmem:[#allocation4 + $0x47] sm:$0xff]
    %v5851 = vld [vmem:[#allocation4 + $0x4f] sm:$0xff]
    %v5852 = vld [vmem:[#allocation4 + $0x67] sm:$0xff]
    %v5853 = vld [vmem:[#allocation4 + $0x6f] sm:$0xff]
    %v5854 = vld [vmem:[#allocation4 + $0x87] sm:$0xff]
    %v5855 = vld [vmem:[#allocation4 + $0x8f] sm:$0xff]
    %v5856 = vld [vmem:[#allocation4 + $0xa7] sm:$0xff]
    %v5857 = vld [vmem:[#allocation4 + $0xaf] sm:$0xff]
    %v5858 = vld [vmem:[#allocation4 + $0xc7] sm:$0xff]
    %v5859 = vld [vmem:[#allocation4 + $0xcf] sm:$0xff]
    %v5860 = vld [vmem:[#allocation4 + $0xe7] sm:$0xff]
    %v5861 = vld [vmem:[#allocation4 + $0xef] sm:$0xff]
    %v5862 = vld [vmem:[#allocation4 + $0x107] sm:$0xff]
    %v5863 = vld [vmem:[#allocation4 + $0x10f] sm:$0xff]
    %v5864 = vld [vmem:[#allocation4 + $0x127] sm:$0xff]
    %v5865 = vld [vmem:[#allocation4 + $0x12f] sm:$0xff]
    %v5866 = vld [vmem:[#allocation4 + $0x147] sm:$0xff]
    %v5867 = vld [vmem:[#allocation4 + $0x14f] sm:$0xff]
    %v5868 = vld [vmem:[#allocation4 + $0x167] sm:$0xff]
    %v5869 = vld [vmem:[#allocation4 + $0x16f] sm:$0xff]
    %v5870 = vld [vmem:[#allocation4 + $0x187] sm:$0xff]
    %v5871 = vld [vmem:[#allocation4 + $0x18f] sm:$0xff]
    %v5872 = vld [vmem:[#allocation4 + $0x1a7] sm:$0xff]
    %v5873 = vld [vmem:[#allocation4 + $0x1af] sm:$0xff]
    %v5874 = vld [vmem:[#allocation4 + $0x1c7] sm:$0xff]
    %v5875 = vld [vmem:[#allocation4 + $0x1cf] sm:$0xff]
    %v5876 = vld [vmem:[#allocation4 + $0x1e7] sm:$0xff]
    %v5877 = vld [vmem:[#allocation4 + $0x1ef] sm:$0xff]
    %v5878 = vld [vmem:[#allocation4 + $0x247] sm:$0xff]
    %v5879 = vld [vmem:[#allocation4 + $0x24f] sm:$0xff]
    %v5880 = vld [vmem:[#allocation4 + $0x267] sm:$0xff]
    %v5881 = vld [vmem:[#allocation4 + $0x26f] sm:$0xff]
    %v5882 = vld [vmem:[#allocation4 + $0x287] sm:$0xff]
    %v5883 = vld [vmem:[#allocation4 + $0x28f] sm:$0xff]
    %v5884 = vld [vmem:[#allocation4 + $0x2a7] sm:$0xff]
    %v5885 = vld [vmem:[#allocation4 + $0x2af] sm:$0xff]
    %v5886 = vld [vmem:[#allocation4 + $0x2c7] sm:$0xff]
    %v5887 = vld [vmem:[#allocation4 + $0x2cf] sm:$0xff]
    %v5888 = vld [vmem:[#allocation4 + $0x2e7] sm:$0xff]
    %v5889 = vld [vmem:[#allocation4 + $0x2ef] sm:$0xff]
    %v5890 = vld [vmem:[#allocation4 + $0x307] sm:$0xff]
    %v5891 = vld [vmem:[#allocation4 + $0x30f] sm:$0xff]
    %v5892 = vld [vmem:[#allocation4 + $0x327] sm:$0xff]
    %v5893 = vld [vmem:[#allocation4 + $0x32f] sm:$0xff]
    %v5894 = vld [vmem:[#allocation4 + $0x347] sm:$0xff]
    %v5895 = vld [vmem:[#allocation4 + $0x34f] sm:$0xff]
    %v5896 = vld [vmem:[#allocation4 + $0x367] sm:$0xff]
    %v5897 = vld [vmem:[#allocation4 + $0x36f] sm:$0xff]
    %v5898 = vld [vmem:[#allocation4 + $0x387] sm:$0xff]
    %v5899 = vld [vmem:[#allocation4 + $0x38f] sm:$0xff]
    %v5900 = vld [vmem:[#allocation4 + $0x3a7] sm:$0xff]
    %v5901 = vld [vmem:[#allocation4 + $0x3af] sm:$0xff]
    %v5902 = vld [vmem:[#allocation4 + $0x3c7] sm:$0xff]
    %v5903 = vld [vmem:[#allocation4 + $0x3cf] sm:$0xff]
    %v5904 = vld [vmem:[#allocation4 + $0x3e7] sm:$0xff]
    %v5905 = vld [vmem:[#allocation4 + $0x3ef] sm:$0xff]
    %v5906 = vld [vmem:[#allocation4 + $0x407] sm:$0xff]
    %v5907 = vld [vmem:[#allocation4 + $0x40f] sm:$0xff]
    %v5908 = vld [vmem:[#allocation4 + $0x427] sm:$0xff]
    %v5909 = vld [vmem:[#allocation4 + $0x42f] sm:$0xff]
    %v5910 = vperm.slane %v5844, 0
    %v5911 = vmul.f32 %v5846, %v5910
    %v5912 = vmul.f32 %v5847, %v5910
    %v5913 = vmul.f32 %v5848, %v5910
    %v5914 = vmul.f32 %v5849, %v5910
    %v5915 = vmul.f32 %v5850, %v5910
    %v5916 = vmul.f32 %v5851, %v5910
    %v5917 = vmul.f32 %v5852, %v5910
    %v5918 = vmul.f32 %v5853, %v5910
    %v5919 = vmul.f32 %v5854, %v5910
    %v5920 = vmul.f32 %v5855, %v5910
    %v5921 = vmul.f32 %v5856, %v5910
    %v5922 = vmul.f32 %v5857, %v5910
    %v5923 = vmul.f32 %v5858, %v5910
    %v5924 = vmul.f32 %v5859, %v5910
    %v5925 = vmul.f32 %v5860, %v5910
    %v5926 = vmul.f32 %v5861, %v5910
    %v5927 = vmul.f32 %v5862, %v5910
    %v5928 = vmul.f32 %v5863, %v5910
    %v5929 = vmul.f32 %v5864, %v5910
    %v5930 = vmul.f32 %v5865, %v5910
    %v5931 = vmul.f32 %v5866, %v5910
    %v5932 = vmul.f32 %v5867, %v5910
    %v5933 = vmul.f32 %v5868, %v5910
    %v5934 = vmul.f32 %v5869, %v5910
    %v5935 = vmul.f32 %v5870, %v5910
    %v5936 = vmul.f32 %v5871, %v5910
    %v5937 = vmul.f32 %v5872, %v5910
    %v5938 = vmul.f32 %v5873, %v5910
    %v5939 = vmul.f32 %v5874, %v5910
    %v5940 = vmul.f32 %v5875, %v5910
    %v5941 = vmul.f32 %v5876, %v5910
    %v5942 = vmul.f32 %v5877, %v5910
    %v5943 = vmul.f32 %v5878, %v5910
    %v5944 = vmul.f32 %v5879, %v5910
    %v5945 = vmul.f32 %v5880, %v5910
    %v5946 = vmul.f32 %v5881, %v5910
    %v5947 = vmul.f32 %v5882, %v5910
    %v5948 = vmul.f32 %v5883, %v5910
    %v5949 = vmul.f32 %v5884, %v5910
    %v5950 = vmul.f32 %v5885, %v5910
    %v5951 = vmul.f32 %v5886, %v5910
    %v5952 = vmul.f32 %v5887, %v5910
    %v5953 = vmul.f32 %v5888, %v5910
    %v5954 = vmul.f32 %v5889, %v5910
    %v5955 = vmul.f32 %v5890, %v5910
    %v5956 = vmul.f32 %v5891, %v5910
    %v5957 = vmul.f32 %v5892, %v5910
    %v5958 = vmul.f32 %v5893, %v5910
    %v5959 = vmul.f32 %v5894, %v5910
    %v5960 = vmul.f32 %v5895, %v5910
    %v5961 = vmul.f32 %v5896, %v5910
    %v5962 = vmul.f32 %v5897, %v5910
    %v5963 = vmul.f32 %v5898, %v5910
    %v5964 = vmul.f32 %v5899, %v5910
    %v5965 = vmul.f32 %v5900, %v5910
    %v5966 = vmul.f32 %v5901, %v5910
    %v5967 = vmul.f32 %v5902, %v5910
    %v5968 = vmul.f32 %v5903, %v5910
    %v5969 = vmul.f32 %v5904, %v5910
    %v5970 = vmul.f32 %v5905, %v5910
    %v5971 = vmul.f32 %v5906, %v5910
    %v5972 = vmul.f32 %v5907, %v5910
    %v5973 = vmul.f32 %v5908, %v5910
    %v5974 = vmul.f32 %v5909, %v5910
    %v5975 = vsel %vm4899, %v5911, 0.0
    %5976 = vadd.xlane.f32.xlu0 %v5975
    %v5977 = vpop.xlane.xlu0 %5976
    %v5978 = vsel %vm4899, %v5912, 0.0
    %5979 = vadd.xlane.f32.xlu0 %v5978
    %v5980 = vpop.xlane.xlu0 %5979
    %v5981 = vsel %vm4899, %v5913, 0.0
    %5982 = vadd.xlane.f32.xlu0 %v5981
    %v5983 = vpop.xlane.xlu0 %5982
    %v5984 = vsel %vm4899, %v5914, 0.0
    %5985 = vadd.xlane.f32.xlu0 %v5984
    %v5986 = vpop.xlane.xlu0 %5985
    %v5987 = vsel %vm4899, %v5915, 0.0
    %5988 = vadd.xlane.f32.xlu0 %v5987
    %v5989 = vpop.xlane.xlu0 %5988
    %v5990 = vsel %vm4899, %v5916, 0.0
    %5991 = vadd.xlane.f32.xlu0 %v5990
    %v5992 = vpop.xlane.xlu0 %5991
    %v5993 = vsel %vm4899, %v5917, 0.0
    %5994 = vadd.xlane.f32.xlu0 %v5993
    %v5995 = vpop.xlane.xlu0 %5994
    %v5996 = vsel %vm4899, %v5918, 0.0
    %5997 = vadd.xlane.f32.xlu0 %v5996
    %v5998 = vpop.xlane.xlu0 %5997
    %v5999 = vsel %vm4899, %v5919, 0.0
    %6000 = vadd.xlane.f32.xlu0 %v5999
    %v6001 = vpop.xlane.xlu0 %6000
    %v6002 = vsel %vm4899, %v5920, 0.0
    %6003 = vadd.xlane.f32.xlu0 %v6002
    %v6004 = vpop.xlane.xlu0 %6003
    %v6005 = vsel %vm4899, %v5921, 0.0
    %6006 = vadd.xlane.f32.xlu0 %v6005
    %v6007 = vpop.xlane.xlu0 %6006
    %v6008 = vsel %vm4899, %v5922, 0.0
    %6009 = vadd.xlane.f32.xlu0 %v6008
    %v6010 = vpop.xlane.xlu0 %6009
    %v6011 = vsel %vm4899, %v5923, 0.0
    %6012 = vadd.xlane.f32.xlu0 %v6011
    %v6013 = vpop.xlane.xlu0 %6012
    %v6014 = vsel %vm4899, %v5924, 0.0
    %6015 = vadd.xlane.f32.xlu0 %v6014
    %v6016 = vpop.xlane.xlu0 %6015
    %v6017 = vsel %vm4899, %v5925, 0.0
    %6018 = vadd.xlane.f32.xlu0 %v6017
    %v6019 = vpop.xlane.xlu0 %6018
    %v6020 = vsel %vm4899, %v5926, 0.0
    %6021 = vadd.xlane.f32.xlu0 %v6020
    %v6022 = vpop.xlane.xlu0 %6021
    %v6023 = vsel %vm4899, %v5927, 0.0
    %6024 = vadd.xlane.f32.xlu0 %v6023
    %v6025 = vpop.xlane.xlu0 %6024
    %v6026 = vsel %vm4899, %v5928, 0.0
    %6027 = vadd.xlane.f32.xlu0 %v6026
    %v6028 = vpop.xlane.xlu0 %6027
    %v6029 = vsel %vm4899, %v5929, 0.0
    %6030 = vadd.xlane.f32.xlu0 %v6029
    %v6031 = vpop.xlane.xlu0 %6030
    %v6032 = vsel %vm4899, %v5930, 0.0
    %6033 = vadd.xlane.f32.xlu0 %v6032
    %v6034 = vpop.xlane.xlu0 %6033
    %v6035 = vsel %vm4899, %v5931, 0.0
    %6036 = vadd.xlane.f32.xlu0 %v6035
    %v6037 = vpop.xlane.xlu0 %6036
    %v6038 = vsel %vm4899, %v5932, 0.0
    %6039 = vadd.xlane.f32.xlu0 %v6038
    %v6040 = vpop.xlane.xlu0 %6039
    %v6041 = vsel %vm4899, %v5933, 0.0
    %6042 = vadd.xlane.f32.xlu0 %v6041
    %v6043 = vpop.xlane.xlu0 %6042
    %v6044 = vsel %vm4899, %v5934, 0.0
    %6045 = vadd.xlane.f32.xlu0 %v6044
    %v6046 = vpop.xlane.xlu0 %6045
    %v6047 = vsel %vm4899, %v5935, 0.0
    %6048 = vadd.xlane.f32.xlu0 %v6047
    %v6049 = vpop.xlane.xlu0 %6048
    %v6050 = vsel %vm4899, %v5936, 0.0
    %6051 = vadd.xlane.f32.xlu0 %v6050
    %v6052 = vpop.xlane.xlu0 %6051
    %v6053 = vsel %vm4899, %v5937, 0.0
    %6054 = vadd.xlane.f32.xlu0 %v6053
    %v6055 = vpop.xlane.xlu0 %6054
    %v6056 = vsel %vm4899, %v5938, 0.0
    %6057 = vadd.xlane.f32.xlu0 %v6056
    %v6058 = vpop.xlane.xlu0 %6057
    %v6059 = vsel %vm4899, %v5939, 0.0
    %6060 = vadd.xlane.f32.xlu0 %v6059
    %v6061 = vpop.xlane.xlu0 %6060
    %v6062 = vsel %vm4899, %v5940, 0.0
    %6063 = vadd.xlane.f32.xlu0 %v6062
    %v6064 = vpop.xlane.xlu0 %6063
    %v6065 = vsel %vm4899, %v5941, 0.0
    %6066 = vadd.xlane.f32.xlu0 %v6065
    %v6067 = vpop.xlane.xlu0 %6066
    %v6068 = vsel %vm4899, %v5942, 0.0
    %6069 = vadd.xlane.f32.xlu0 %v6068
    %v6070 = vpop.xlane.xlu0 %6069
    %v6071 = vsel %vm4899, %v5943, 0.0
    %6072 = vadd.xlane.f32.xlu0 %v6071
    %v6073 = vpop.xlane.xlu0 %6072
    %v6074 = vsel %vm4899, %v5944, 0.0
    %6075 = vadd.xlane.f32.xlu0 %v6074
    %v6076 = vpop.xlane.xlu0 %6075
    %v6077 = vsel %vm4899, %v5945, 0.0
    %6078 = vadd.xlane.f32.xlu0 %v6077
    %v6079 = vpop.xlane.xlu0 %6078
    %v6080 = vsel %vm4899, %v5946, 0.0
    %6081 = vadd.xlane.f32.xlu0 %v6080
    %v6082 = vpop.xlane.xlu0 %6081
    %v6083 = vsel %vm4899, %v5947, 0.0
    %6084 = vadd.xlane.f32.xlu0 %v6083
    %v6085 = vpop.xlane.xlu0 %6084
    %v6086 = vsel %vm4899, %v5948, 0.0
    %6087 = vadd.xlane.f32.xlu0 %v6086
    %v6088 = vpop.xlane.xlu0 %6087
    %v6089 = vsel %vm4899, %v5949, 0.0
    %6090 = vadd.xlane.f32.xlu0 %v6089
    %v6091 = vpop.xlane.xlu0 %6090
    %v6092 = vsel %vm4899, %v5950, 0.0
    %6093 = vadd.xlane.f32.xlu0 %v6092
    %v6094 = vpop.xlane.xlu0 %6093
    %v6095 = vsel %vm4899, %v5951, 0.0
    %6096 = vadd.xlane.f32.xlu0 %v6095
    %v6097 = vpop.xlane.xlu0 %6096
    %v6098 = vsel %vm4899, %v5952, 0.0
    %6099 = vadd.xlane.f32.xlu0 %v6098
    %v6100 = vpop.xlane.xlu0 %6099
    %v6101 = vsel %vm4899, %v5953, 0.0
    %6102 = vadd.xlane.f32.xlu0 %v6101
    %v6103 = vpop.xlane.xlu0 %6102
    %v6104 = vsel %vm4899, %v5954, 0.0
    %6105 = vadd.xlane.f32.xlu0 %v6104
    %v6106 = vpop.xlane.xlu0 %6105
    %v6107 = vsel %vm4899, %v5955, 0.0
    %6108 = vadd.xlane.f32.xlu0 %v6107
    %v6109 = vpop.xlane.xlu0 %6108
    %v6110 = vsel %vm4899, %v5956, 0.0
    %6111 = vadd.xlane.f32.xlu0 %v6110
    %v6112 = vpop.xlane.xlu0 %6111
    %v6113 = vsel %vm4899, %v5957, 0.0
    %6114 = vadd.xlane.f32.xlu0 %v6113
    %v6115 = vpop.xlane.xlu0 %6114
    %v6116 = vsel %vm4899, %v5958, 0.0
    %6117 = vadd.xlane.f32.xlu0 %v6116
    %v6118 = vpop.xlane.xlu0 %6117
    %v6119 = vsel %vm4899, %v5959, 0.0
    %6120 = vadd.xlane.f32.xlu0 %v6119
    %v6121 = vpop.xlane.xlu0 %6120
    %v6122 = vsel %vm4899, %v5960, 0.0
    %6123 = vadd.xlane.f32.xlu0 %v6122
    %v6124 = vpop.xlane.xlu0 %6123
    %v6125 = vsel %vm4899, %v5961, 0.0
    %6126 = vadd.xlane.f32.xlu0 %v6125
    %v6127 = vpop.xlane.xlu0 %6126
    %v6128 = vsel %vm4899, %v5962, 0.0
    %6129 = vadd.xlane.f32.xlu0 %v6128
    %v6130 = vpop.xlane.xlu0 %6129
    %v6131 = vsel %vm4899, %v5963, 0.0
    %6132 = vadd.xlane.f32.xlu0 %v6131
    %v6133 = vpop.xlane.xlu0 %6132
    %v6134 = vsel %vm4899, %v5964, 0.0
    %6135 = vadd.xlane.f32.xlu0 %v6134
    %v6136 = vpop.xlane.xlu0 %6135
    %v6137 = vsel %vm4899, %v5965, 0.0
    %6138 = vadd.xlane.f32.xlu0 %v6137
    %v6139 = vpop.xlane.xlu0 %6138
    %v6140 = vsel %vm4899, %v5966, 0.0
    %6141 = vadd.xlane.f32.xlu0 %v6140
    %v6142 = vpop.xlane.xlu0 %6141
    %v6143 = vsel %vm4899, %v5967, 0.0
    %6144 = vadd.xlane.f32.xlu0 %v6143
    %v6145 = vpop.xlane.xlu0 %6144
    %v6146 = vsel %vm4899, %v5968, 0.0
    %6147 = vadd.xlane.f32.xlu0 %v6146
    %v6148 = vpop.xlane.xlu0 %6147
    %v6149 = vsel %vm4899, %v5969, 0.0
    %6150 = vadd.xlane.f32.xlu0 %v6149
    %v6151 = vpop.xlane.xlu0 %6150
    %v6152 = vsel %vm4899, %v5970, 0.0
    %6153 = vadd.xlane.f32.xlu0 %v6152
    %v6154 = vpop.xlane.xlu0 %6153
    %v6155 = vsel %vm4899, %v5971, 0.0
    %6156 = vadd.xlane.f32.xlu0 %v6155
    %v6157 = vpop.xlane.xlu0 %6156
    %v6158 = vsel %vm4899, %v5972, 0.0
    %6159 = vadd.xlane.f32.xlu0 %v6158
    %v6160 = vpop.xlane.xlu0 %6159
    %v6161 = vsel %vm4899, %v5973, 0.0
    %6162 = vadd.xlane.f32.xlu0 %v6161
    %v6163 = vpop.xlane.xlu0 %6162
    %v6164 = vsel %vm4899, %v5974, 0.0
    %6165 = vadd.xlane.f32.xlu0 %v6164
    %v6166 = vpop.xlane.xlu0 %6165
    %v6167 = vadd.f32 %v5977, 0.0
    %v6168 = vadd.f32 %v5980, 0.0
    %v6169 = vadd.f32 %v5983, 0.0
    %v6170 = vadd.f32 %v5986, 0.0
    %v6171 = vadd.f32 %v5989, 0.0
    %v6172 = vadd.f32 %v5992, 0.0
    %v6173 = vadd.f32 %v5995, 0.0
    %v6174 = vadd.f32 %v5998, 0.0
    %v6175 = vadd.f32 %v6001, 0.0
    %v6176 = vadd.f32 %v6004, 0.0
    %v6177 = vadd.f32 %v6007, 0.0
    %v6178 = vadd.f32 %v6010, 0.0
    %v6179 = vadd.f32 %v6013, 0.0
    %v6180 = vadd.f32 %v6016, 0.0
    %v6181 = vadd.f32 %v6019, 0.0
    %v6182 = vadd.f32 %v6022, 0.0
    %v6183 = vadd.f32 %v6025, 0.0
    %v6184 = vadd.f32 %v6028, 0.0
    %v6185 = vadd.f32 %v6031, 0.0
    %v6186 = vadd.f32 %v6034, 0.0
    %v6187 = vadd.f32 %v6037, 0.0
    %v6188 = vadd.f32 %v6040, 0.0
    %v6189 = vadd.f32 %v6043, 0.0
    %v6190 = vadd.f32 %v6046, 0.0
    %v6191 = vadd.f32 %v6049, 0.0
    %v6192 = vadd.f32 %v6052, 0.0
    %v6193 = vadd.f32 %v6055, 0.0
    %v6194 = vadd.f32 %v6058, 0.0
    %v6195 = vadd.f32 %v6061, 0.0
    %v6196 = vadd.f32 %v6064, 0.0
    %v6197 = vadd.f32 %v6067, 0.0
    %v6198 = vadd.f32 %v6070, 0.0
    %v6199 = vadd.f32 %v6073, 0.0
    %v6200 = vadd.f32 %v6076, 0.0
    %v6201 = vadd.f32 %v6079, 0.0
    %v6202 = vadd.f32 %v6082, 0.0
    %v6203 = vadd.f32 %v6085, 0.0
    %v6204 = vadd.f32 %v6088, 0.0
    %v6205 = vadd.f32 %v6091, 0.0
    %v6206 = vadd.f32 %v6094, 0.0
    %v6207 = vadd.f32 %v6097, 0.0
    %v6208 = vadd.f32 %v6100, 0.0
    %v6209 = vadd.f32 %v6103, 0.0
    %v6210 = vadd.f32 %v6106, 0.0
    %v6211 = vadd.f32 %v6109, 0.0
    %v6212 = vadd.f32 %v6112, 0.0
    %v6213 = vadd.f32 %v6115, 0.0
    %v6214 = vadd.f32 %v6118, 0.0
    %v6215 = vadd.f32 %v6121, 0.0
    %v6216 = vadd.f32 %v6124, 0.0
    %v6217 = vadd.f32 %v6127, 0.0
    %v6218 = vadd.f32 %v6130, 0.0
    %v6219 = vadd.f32 %v6133, 0.0
    %v6220 = vadd.f32 %v6136, 0.0
    %v6221 = vadd.f32 %v6139, 0.0
    %v6222 = vadd.f32 %v6142, 0.0
    %v6223 = vadd.f32 %v6145, 0.0
    %v6224 = vadd.f32 %v6148, 0.0
    %v6225 = vadd.f32 %v6151, 0.0
    %v6226 = vadd.f32 %v6154, 0.0
    %v6227 = vadd.f32 %v6157, 0.0
    %v6228 = vadd.f32 %v6160, 0.0
    %v6229 = vadd.f32 %v6163, 0.0
    %v6230 = vadd.f32 %v6166, 0.0
    %v6231 = vld [vmem:[#allocation4 + $0x8] sm:$0xff]
    %v6232 = vld [vmem:[#allocation4 + $0x10] sm:$0xff]
    %v6233 = vld [vmem:[#allocation4 + $0x28] sm:$0xff]
    %v6234 = vld [vmem:[#allocation4 + $0x30] sm:$0xff]
    %v6235 = vld [vmem:[#allocation4 + $0x48] sm:$0xff]
    %v6236 = vld [vmem:[#allocation4 + $0x50] sm:$0xff]
    %v6237 = vld [vmem:[#allocation4 + $0x68] sm:$0xff]
    %v6238 = vld [vmem:[#allocation4 + $0x70] sm:$0xff]
    %v6239 = vld [vmem:[#allocation4 + $0x88] sm:$0xff]
    %v6240 = vld [vmem:[#allocation4 + $0x90] sm:$0xff]
    %v6241 = vld [vmem:[#allocation4 + $0xa8] sm:$0xff]
    %v6242 = vld [vmem:[#allocation4 + $0xb0] sm:$0xff]
    %v6243 = vld [vmem:[#allocation4 + $0xc8] sm:$0xff]
    %v6244 = vld [vmem:[#allocation4 + $0xd0] sm:$0xff]
    %v6245 = vld [vmem:[#allocation4 + $0xe8] sm:$0xff]
    %v6246 = vld [vmem:[#allocation4 + $0xf0] sm:$0xff]
    %v6247 = vld [vmem:[#allocation4 + $0x108] sm:$0xff]
    %v6248 = vld [vmem:[#allocation4 + $0x110] sm:$0xff]
    %v6249 = vld [vmem:[#allocation4 + $0x128] sm:$0xff]
    %v6250 = vld [vmem:[#allocation4 + $0x130] sm:$0xff]
    %v6251 = vld [vmem:[#allocation4 + $0x148] sm:$0xff]
    %v6252 = vld [vmem:[#allocation4 + $0x150] sm:$0xff]
    %v6253 = vld [vmem:[#allocation4 + $0x168] sm:$0xff]
    %v6254 = vld [vmem:[#allocation4 + $0x170] sm:$0xff]
    %v6255 = vld [vmem:[#allocation4 + $0x188] sm:$0xff]
    %v6256 = vld [vmem:[#allocation4 + $0x190] sm:$0xff]
    %v6257 = vld [vmem:[#allocation4 + $0x1a8] sm:$0xff]
    %v6258 = vld [vmem:[#allocation4 + $0x1b0] sm:$0xff]
    %v6259 = vld [vmem:[#allocation4 + $0x1c8] sm:$0xff]
    %v6260 = vld [vmem:[#allocation4 + $0x1d0] sm:$0xff]
    %v6261 = vld [vmem:[#allocation4 + $0x1e8] sm:$0xff]
    %v6262 = vld [vmem:[#allocation4 + $0x1f0] sm:$0xff]
    %v6263 = vld [vmem:[#allocation4 + $0x248] sm:$0xff]
    %v6264 = vld [vmem:[#allocation4 + $0x250] sm:$0xff]
    %v6265 = vld [vmem:[#allocation4 + $0x268] sm:$0xff]
    %v6266 = vld [vmem:[#allocation4 + $0x270] sm:$0xff]
    %v6267 = vld [vmem:[#allocation4 + $0x288] sm:$0xff]
    %v6268 = vld [vmem:[#allocation4 + $0x290] sm:$0xff]
    %v6269 = vld [vmem:[#allocation4 + $0x2a8] sm:$0xff]
    %v6270 = vld [vmem:[#allocation4 + $0x2b0] sm:$0xff]
    %v6271 = vld [vmem:[#allocation4 + $0x2c8] sm:$0xff]
    %v6272 = vld [vmem:[#allocation4 + $0x2d0] sm:$0xff]
    %v6273 = vld [vmem:[#allocation4 + $0x2e8] sm:$0xff]
    %v6274 = vld [vmem:[#allocation4 + $0x2f0] sm:$0xff]
    %v6275 = vld [vmem:[#allocation4 + $0x308] sm:$0xff]
    %v6276 = vld [vmem:[#allocation4 + $0x310] sm:$0xff]
    %v6277 = vld [vmem:[#allocation4 + $0x328] sm:$0xff]
    %v6278 = vld [vmem:[#allocation4 + $0x330] sm:$0xff]
    %v6279 = vld [vmem:[#allocation4 + $0x348] sm:$0xff]
    %v6280 = vld [vmem:[#allocation4 + $0x350] sm:$0xff]
    %v6281 = vld [vmem:[#allocation4 + $0x368] sm:$0xff]
    %v6282 = vld [vmem:[#allocation4 + $0x370] sm:$0xff]
    %v6283 = vld [vmem:[#allocation4 + $0x388] sm:$0xff]
    %v6284 = vld [vmem:[#allocation4 + $0x390] sm:$0xff]
    %v6285 = vld [vmem:[#allocation4 + $0x3a8] sm:$0xff]
    %v6286 = vld [vmem:[#allocation4 + $0x3b0] sm:$0xff]
    %v6287 = vld [vmem:[#allocation4 + $0x3c8] sm:$0xff]
    %v6288 = vld [vmem:[#allocation4 + $0x3d0] sm:$0xff]
    %v6289 = vld [vmem:[#allocation4 + $0x3e8] sm:$0xff]
    %v6290 = vld [vmem:[#allocation4 + $0x3f0] sm:$0xff]
    %v6291 = vld [vmem:[#allocation4 + $0x408] sm:$0xff]
    %v6292 = vld [vmem:[#allocation4 + $0x410] sm:$0xff]
    %v6293 = vld [vmem:[#allocation4 + $0x428] sm:$0xff]
    %v6294 = vld [vmem:[#allocation4 + $0x430] sm:$0xff]
    %v6295 = vperm.slane %v5844, 1
    %v6296 = vmul.f32 %v6231, %v6295
    %v6297 = vmul.f32 %v6232, %v6295
    %v6298 = vmul.f32 %v6233, %v6295
    %v6299 = vmul.f32 %v6234, %v6295
    %v6300 = vmul.f32 %v6235, %v6295
    %v6301 = vmul.f32 %v6236, %v6295
    %v6302 = vmul.f32 %v6237, %v6295
    %v6303 = vmul.f32 %v6238, %v6295
    %v6304 = vmul.f32 %v6239, %v6295
    %v6305 = vmul.f32 %v6240, %v6295
    %v6306 = vmul.f32 %v6241, %v6295
    %v6307 = vmul.f32 %v6242, %v6295
    %v6308 = vmul.f32 %v6243, %v6295
    %v6309 = vmul.f32 %v6244, %v6295
    %v6310 = vmul.f32 %v6245, %v6295
    %v6311 = vmul.f32 %v6246, %v6295
    %v6312 = vmul.f32 %v6247, %v6295
    %v6313 = vmul.f32 %v6248, %v6295
    %v6314 = vmul.f32 %v6249, %v6295
    %v6315 = vmul.f32 %v6250, %v6295
    %v6316 = vmul.f32 %v6251, %v6295
    %v6317 = vmul.f32 %v6252, %v6295
    %v6318 = vmul.f32 %v6253, %v6295
    %v6319 = vmul.f32 %v6254, %v6295
    %v6320 = vmul.f32 %v6255, %v6295
    %v6321 = vmul.f32 %v6256, %v6295
    %v6322 = vmul.f32 %v6257, %v6295
    %v6323 = vmul.f32 %v6258, %v6295
    %v6324 = vmul.f32 %v6259, %v6295
    %v6325 = vmul.f32 %v6260, %v6295
    %v6326 = vmul.f32 %v6261, %v6295
    %v6327 = vmul.f32 %v6262, %v6295
    %v6328 = vmul.f32 %v6263, %v6295
    %v6329 = vmul.f32 %v6264, %v6295
    %v6330 = vmul.f32 %v6265, %v6295
    %v6331 = vmul.f32 %v6266, %v6295
    %v6332 = vmul.f32 %v6267, %v6295
    %v6333 = vmul.f32 %v6268, %v6295
    %v6334 = vmul.f32 %v6269, %v6295
    %v6335 = vmul.f32 %v6270, %v6295
    %v6336 = vmul.f32 %v6271, %v6295
    %v6337 = vmul.f32 %v6272, %v6295
    %v6338 = vmul.f32 %v6273, %v6295
    %v6339 = vmul.f32 %v6274, %v6295
    %v6340 = vmul.f32 %v6275, %v6295
    %v6341 = vmul.f32 %v6276, %v6295
    %v6342 = vmul.f32 %v6277, %v6295
    %v6343 = vmul.f32 %v6278, %v6295
    %v6344 = vmul.f32 %v6279, %v6295
    %v6345 = vmul.f32 %v6280, %v6295
    %v6346 = vmul.f32 %v6281, %v6295
    %v6347 = vmul.f32 %v6282, %v6295
    %v6348 = vmul.f32 %v6283, %v6295
    %v6349 = vmul.f32 %v6284, %v6295
    %v6350 = vmul.f32 %v6285, %v6295
    %v6351 = vmul.f32 %v6286, %v6295
    %v6352 = vmul.f32 %v6287, %v6295
    %v6353 = vmul.f32 %v6288, %v6295
    %v6354 = vmul.f32 %v6289, %v6295
    %v6355 = vmul.f32 %v6290, %v6295
    %v6356 = vmul.f32 %v6291, %v6295
    %v6357 = vmul.f32 %v6292, %v6295
    %v6358 = vmul.f32 %v6293, %v6295
    %v6359 = vmul.f32 %v6294, %v6295
    %v6360 = vsel %vm4899, %v6296, 0.0
    %6361 = vadd.xlane.f32.xlu0 %v6360
    %v6362 = vpop.xlane.xlu0 %6361
    %v6363 = vsel %vm4899, %v6297, 0.0
    %6364 = vadd.xlane.f32.xlu0 %v6363
    %v6365 = vpop.xlane.xlu0 %6364
    %v6366 = vsel %vm4899, %v6298, 0.0
    %6367 = vadd.xlane.f32.xlu0 %v6366
    %v6368 = vpop.xlane.xlu0 %6367
    %v6369 = vsel %vm4899, %v6299, 0.0
    %6370 = vadd.xlane.f32.xlu0 %v6369
    %v6371 = vpop.xlane.xlu0 %6370
    %v6372 = vsel %vm4899, %v6300, 0.0
    %6373 = vadd.xlane.f32.xlu0 %v6372
    %v6374 = vpop.xlane.xlu0 %6373
    %v6375 = vsel %vm4899, %v6301, 0.0
    %6376 = vadd.xlane.f32.xlu0 %v6375
    %v6377 = vpop.xlane.xlu0 %6376
    %v6378 = vsel %vm4899, %v6302, 0.0
    %6379 = vadd.xlane.f32.xlu0 %v6378
    %v6380 = vpop.xlane.xlu0 %6379
    %v6381 = vsel %vm4899, %v6303, 0.0
    %6382 = vadd.xlane.f32.xlu0 %v6381
    %v6383 = vpop.xlane.xlu0 %6382
    %v6384 = vsel %vm4899, %v6304, 0.0
    %6385 = vadd.xlane.f32.xlu0 %v6384
    %v6386 = vpop.xlane.xlu0 %6385
    %v6387 = vsel %vm4899, %v6305, 0.0
    %6388 = vadd.xlane.f32.xlu0 %v6387
    %v6389 = vpop.xlane.xlu0 %6388
    %v6390 = vsel %vm4899, %v6306, 0.0
    %6391 = vadd.xlane.f32.xlu0 %v6390
    %v6392 = vpop.xlane.xlu0 %6391
    %v6393 = vsel %vm4899, %v6307, 0.0
    %6394 = vadd.xlane.f32.xlu0 %v6393
    %v6395 = vpop.xlane.xlu0 %6394
    %v6396 = vsel %vm4899, %v6308, 0.0
    %6397 = vadd.xlane.f32.xlu0 %v6396
    %v6398 = vpop.xlane.xlu0 %6397
    %v6399 = vsel %vm4899, %v6309, 0.0
    %6400 = vadd.xlane.f32.xlu0 %v6399
    %v6401 = vpop.xlane.xlu0 %6400
    %v6402 = vsel %vm4899, %v6310, 0.0
    %6403 = vadd.xlane.f32.xlu0 %v6402
    %v6404 = vpop.xlane.xlu0 %6403
    %v6405 = vsel %vm4899, %v6311, 0.0
    %6406 = vadd.xlane.f32.xlu0 %v6405
    %v6407 = vpop.xlane.xlu0 %6406
    %v6408 = vsel %vm4899, %v6312, 0.0
    %6409 = vadd.xlane.f32.xlu0 %v6408
    %v6410 = vpop.xlane.xlu0 %6409
    %v6411 = vsel %vm4899, %v6313, 0.0
    %6412 = vadd.xlane.f32.xlu0 %v6411
    %v6413 = vpop.xlane.xlu0 %6412
    %v6414 = vsel %vm4899, %v6314, 0.0
    %6415 = vadd.xlane.f32.xlu0 %v6414
    %v6416 = vpop.xlane.xlu0 %6415
    %v6417 = vsel %vm4899, %v6315, 0.0
    %6418 = vadd.xlane.f32.xlu0 %v6417
    %v6419 = vpop.xlane.xlu0 %6418
    %v6420 = vsel %vm4899, %v6316, 0.0
    %6421 = vadd.xlane.f32.xlu0 %v6420
    %v6422 = vpop.xlane.xlu0 %6421
    %v6423 = vsel %vm4899, %v6317, 0.0
    %6424 = vadd.xlane.f32.xlu0 %v6423
    %v6425 = vpop.xlane.xlu0 %6424
    %v6426 = vsel %vm4899, %v6318, 0.0
    %6427 = vadd.xlane.f32.xlu0 %v6426
    %v6428 = vpop.xlane.xlu0 %6427
    %v6429 = vsel %vm4899, %v6319, 0.0
    %6430 = vadd.xlane.f32.xlu0 %v6429
    %v6431 = vpop.xlane.xlu0 %6430
    %v6432 = vsel %vm4899, %v6320, 0.0
    %6433 = vadd.xlane.f32.xlu0 %v6432
    %v6434 = vpop.xlane.xlu0 %6433
    %v6435 = vsel %vm4899, %v6321, 0.0
    %6436 = vadd.xlane.f32.xlu0 %v6435
    %v6437 = vpop.xlane.xlu0 %6436
    %v6438 = vsel %vm4899, %v6322, 0.0
    %6439 = vadd.xlane.f32.xlu0 %v6438
    %v6440 = vpop.xlane.xlu0 %6439
    %v6441 = vsel %vm4899, %v6323, 0.0
    %6442 = vadd.xlane.f32.xlu0 %v6441
    %v6443 = vpop.xlane.xlu0 %6442
    %v6444 = vsel %vm4899, %v6324, 0.0
    %6445 = vadd.xlane.f32.xlu0 %v6444
    %v6446 = vpop.xlane.xlu0 %6445
    %v6447 = vsel %vm4899, %v6325, 0.0
    %6448 = vadd.xlane.f32.xlu0 %v6447
    %v6449 = vpop.xlane.xlu0 %6448
    %v6450 = vsel %vm4899, %v6326, 0.0
    %6451 = vadd.xlane.f32.xlu0 %v6450
    %v6452 = vpop.xlane.xlu0 %6451
    %v6453 = vsel %vm4899, %v6327, 0.0
    %6454 = vadd.xlane.f32.xlu0 %v6453
    %v6455 = vpop.xlane.xlu0 %6454
    %v6456 = vsel %vm4899, %v6328, 0.0
    %6457 = vadd.xlane.f32.xlu0 %v6456
    %v6458 = vpop.xlane.xlu0 %6457
    %v6459 = vsel %vm4899, %v6329, 0.0
    %6460 = vadd.xlane.f32.xlu0 %v6459
    %v6461 = vpop.xlane.xlu0 %6460
    %v6462 = vsel %vm4899, %v6330, 0.0
    %6463 = vadd.xlane.f32.xlu0 %v6462
    %v6464 = vpop.xlane.xlu0 %6463
    %v6465 = vsel %vm4899, %v6331, 0.0
    %6466 = vadd.xlane.f32.xlu0 %v6465
    %v6467 = vpop.xlane.xlu0 %6466
    %v6468 = vsel %vm4899, %v6332, 0.0
    %6469 = vadd.xlane.f32.xlu0 %v6468
    %v6470 = vpop.xlane.xlu0 %6469
    %v6471 = vsel %vm4899, %v6333, 0.0
    %6472 = vadd.xlane.f32.xlu0 %v6471
    %v6473 = vpop.xlane.xlu0 %6472
    %v6474 = vsel %vm4899, %v6334, 0.0
    %6475 = vadd.xlane.f32.xlu0 %v6474
    %v6476 = vpop.xlane.xlu0 %6475
    %v6477 = vsel %vm4899, %v6335, 0.0
    %6478 = vadd.xlane.f32.xlu0 %v6477
    %v6479 = vpop.xlane.xlu0 %6478
    %v6480 = vsel %vm4899, %v6336, 0.0
    %6481 = vadd.xlane.f32.xlu0 %v6480
    %v6482 = vpop.xlane.xlu0 %6481
    %v6483 = vsel %vm4899, %v6337, 0.0
    %6484 = vadd.xlane.f32.xlu0 %v6483
    %v6485 = vpop.xlane.xlu0 %6484
    %v6486 = vsel %vm4899, %v6338, 0.0
    %6487 = vadd.xlane.f32.xlu0 %v6486
    %v6488 = vpop.xlane.xlu0 %6487
    %v6489 = vsel %vm4899, %v6339, 0.0
    %6490 = vadd.xlane.f32.xlu0 %v6489
    %v6491 = vpop.xlane.xlu0 %6490
    %v6492 = vsel %vm4899, %v6340, 0.0
    %6493 = vadd.xlane.f32.xlu0 %v6492
    %v6494 = vpop.xlane.xlu0 %6493
    %v6495 = vsel %vm4899, %v6341, 0.0
    %6496 = vadd.xlane.f32.xlu0 %v6495
    %v6497 = vpop.xlane.xlu0 %6496
    %v6498 = vsel %vm4899, %v6342, 0.0
    %6499 = vadd.xlane.f32.xlu0 %v6498
    %v6500 = vpop.xlane.xlu0 %6499
    %v6501 = vsel %vm4899, %v6343, 0.0
    %6502 = vadd.xlane.f32.xlu0 %v6501
    %v6503 = vpop.xlane.xlu0 %6502
    %v6504 = vsel %vm4899, %v6344, 0.0
    %6505 = vadd.xlane.f32.xlu0 %v6504
    %v6506 = vpop.xlane.xlu0 %6505
    %v6507 = vsel %vm4899, %v6345, 0.0
    %6508 = vadd.xlane.f32.xlu0 %v6507
    %v6509 = vpop.xlane.xlu0 %6508
    %v6510 = vsel %vm4899, %v6346, 0.0
    %6511 = vadd.xlane.f32.xlu0 %v6510
    %v6512 = vpop.xlane.xlu0 %6511
    %v6513 = vsel %vm4899, %v6347, 0.0
    %6514 = vadd.xlane.f32.xlu0 %v6513
    %v6515 = vpop.xlane.xlu0 %6514
    %v6516 = vsel %vm4899, %v6348, 0.0
    %6517 = vadd.xlane.f32.xlu0 %v6516
    %v6518 = vpop.xlane.xlu0 %6517
    %v6519 = vsel %vm4899, %v6349, 0.0
    %6520 = vadd.xlane.f32.xlu0 %v6519
    %v6521 = vpop.xlane.xlu0 %6520
    %v6522 = vsel %vm4899, %v6350, 0.0
    %6523 = vadd.xlane.f32.xlu0 %v6522
    %v6524 = vpop.xlane.xlu0 %6523
    %v6525 = vsel %vm4899, %v6351, 0.0
    %6526 = vadd.xlane.f32.xlu0 %v6525
    %v6527 = vpop.xlane.xlu0 %6526
    %v6528 = vsel %vm4899, %v6352, 0.0
    %6529 = vadd.xlane.f32.xlu0 %v6528
    %v6530 = vpop.xlane.xlu0 %6529
    %v6531 = vsel %vm4899, %v6353, 0.0
    %6532 = vadd.xlane.f32.xlu0 %v6531
    %v6533 = vpop.xlane.xlu0 %6532
    %v6534 = vsel %vm4899, %v6354, 0.0
    %6535 = vadd.xlane.f32.xlu0 %v6534
    %v6536 = vpop.xlane.xlu0 %6535
    %v6537 = vsel %vm4899, %v6355, 0.0
    %6538 = vadd.xlane.f32.xlu0 %v6537
    %v6539 = vpop.xlane.xlu0 %6538
    %v6540 = vsel %vm4899, %v6356, 0.0
    %6541 = vadd.xlane.f32.xlu0 %v6540
    %v6542 = vpop.xlane.xlu0 %6541
    %v6543 = vsel %vm4899, %v6357, 0.0
    %6544 = vadd.xlane.f32.xlu0 %v6543
    %v6545 = vpop.xlane.xlu0 %6544
    %v6546 = vsel %vm4899, %v6358, 0.0
    %6547 = vadd.xlane.f32.xlu0 %v6546
    %v6548 = vpop.xlane.xlu0 %6547
    %v6549 = vsel %vm4899, %v6359, 0.0
    %6550 = vadd.xlane.f32.xlu0 %v6549
    %v6551 = vpop.xlane.xlu0 %6550
    %v6552 = vadd.f32 %v6167, %v6362
    %v6553 = vadd.f32 %v6168, %v6365
    %v6554 = vadd.f32 %v6169, %v6368
    %v6555 = vadd.f32 %v6170, %v6371
    %v6556 = vadd.f32 %v6171, %v6374
    %v6557 = vadd.f32 %v6172, %v6377
    %v6558 = vadd.f32 %v6173, %v6380
    %v6559 = vadd.f32 %v6174, %v6383
    %v6560 = vadd.f32 %v6175, %v6386
    %v6561 = vadd.f32 %v6176, %v6389
    %v6562 = vadd.f32 %v6177, %v6392
    %v6563 = vadd.f32 %v6178, %v6395
    %v6564 = vadd.f32 %v6179, %v6398
    %v6565 = vadd.f32 %v6180, %v6401
    %v6566 = vadd.f32 %v6181, %v6404
    %v6567 = vadd.f32 %v6182, %v6407
    %v6568 = vadd.f32 %v6183, %v6410
    %v6569 = vadd.f32 %v6184, %v6413
    %v6570 = vadd.f32 %v6185, %v6416
    %v6571 = vadd.f32 %v6186, %v6419
    %v6572 = vadd.f32 %v6187, %v6422
    %v6573 = vadd.f32 %v6188, %v6425
    %v6574 = vadd.f32 %v6189, %v6428
    %v6575 = vadd.f32 %v6190, %v6431
    %v6576 = vadd.f32 %v6191, %v6434
    %v6577 = vadd.f32 %v6192, %v6437
    %v6578 = vadd.f32 %v6193, %v6440
    %v6579 = vadd.f32 %v6194, %v6443
    %v6580 = vadd.f32 %v6195, %v6446
    %v6581 = vadd.f32 %v6196, %v6449
    %v6582 = vadd.f32 %v6197, %v6452
    %v6583 = vadd.f32 %v6198, %v6455
    %v6584 = vadd.f32 %v6199, %v6458
    %v6585 = vadd.f32 %v6200, %v6461
    %v6586 = vadd.f32 %v6201, %v6464
    %v6587 = vadd.f32 %v6202, %v6467
    %v6588 = vadd.f32 %v6203, %v6470
    %v6589 = vadd.f32 %v6204, %v6473
    %v6590 = vadd.f32 %v6205, %v6476
    %v6591 = vadd.f32 %v6206, %v6479
    %v6592 = vadd.f32 %v6207, %v6482
    %v6593 = vadd.f32 %v6208, %v6485
    %v6594 = vadd.f32 %v6209, %v6488
    %v6595 = vadd.f32 %v6210, %v6491
    %v6596 = vadd.f32 %v6211, %v6494
    %v6597 = vadd.f32 %v6212, %v6497
    %v6598 = vadd.f32 %v6213, %v6500
    %v6599 = vadd.f32 %v6214, %v6503
    %v6600 = vadd.f32 %v6215, %v6506
    %v6601 = vadd.f32 %v6216, %v6509
    %v6602 = vadd.f32 %v6217, %v6512
    %v6603 = vadd.f32 %v6218, %v6515
    %v6604 = vadd.f32 %v6219, %v6518
    %v6605 = vadd.f32 %v6220, %v6521
    %v6606 = vadd.f32 %v6221, %v6524
    %v6607 = vadd.f32 %v6222, %v6527
    %v6608 = vadd.f32 %v6223, %v6530
    %v6609 = vadd.f32 %v6224, %v6533
    %v6610 = vadd.f32 %v6225, %v6536
    %v6611 = vadd.f32 %v6226, %v6539
    %v6612 = vadd.f32 %v6227, %v6542
    %v6613 = vadd.f32 %v6228, %v6545
    %v6614 = vadd.f32 %v6229, %v6548
    %v6615 = vadd.f32 %v6230, %v6551
    %v6616 = vld [vmem:[#allocation4 + $0x9] sm:$0xff]
    %v6617 = vld [vmem:[#allocation4 + $0x11] sm:$0xff]
    %v6618 = vld [vmem:[#allocation4 + $0x29] sm:$0xff]
    %v6619 = vld [vmem:[#allocation4 + $0x31] sm:$0xff]
    %v6620 = vld [vmem:[#allocation4 + $0x49] sm:$0xff]
    %v6621 = vld [vmem:[#allocation4 + $0x51] sm:$0xff]
    %v6622 = vld [vmem:[#allocation4 + $0x69] sm:$0xff]
    %v6623 = vld [vmem:[#allocation4 + $0x71] sm:$0xff]
    %v6624 = vld [vmem:[#allocation4 + $0x89] sm:$0xff]
    %v6625 = vld [vmem:[#allocation4 + $0x91] sm:$0xff]
    %v6626 = vld [vmem:[#allocation4 + $0xa9] sm:$0xff]
    %v6627 = vld [vmem:[#allocation4 + $0xb1] sm:$0xff]
    %v6628 = vld [vmem:[#allocation4 + $0xc9] sm:$0xff]
    %v6629 = vld [vmem:[#allocation4 + $0xd1] sm:$0xff]
    %v6630 = vld [vmem:[#allocation4 + $0xe9] sm:$0xff]
    %v6631 = vld [vmem:[#allocation4 + $0xf1] sm:$0xff]
    %v6632 = vld [vmem:[#allocation4 + $0x109] sm:$0xff]
    %v6633 = vld [vmem:[#allocation4 + $0x111] sm:$0xff]
    %v6634 = vld [vmem:[#allocation4 + $0x129] sm:$0xff]
    %v6635 = vld [vmem:[#allocation4 + $0x131] sm:$0xff]
    %v6636 = vld [vmem:[#allocation4 + $0x149] sm:$0xff]
    %v6637 = vld [vmem:[#allocation4 + $0x151] sm:$0xff]
    %v6638 = vld [vmem:[#allocation4 + $0x169] sm:$0xff]
    %v6639 = vld [vmem:[#allocation4 + $0x171] sm:$0xff]
    %v6640 = vld [vmem:[#allocation4 + $0x189] sm:$0xff]
    %v6641 = vld [vmem:[#allocation4 + $0x191] sm:$0xff]
    %v6642 = vld [vmem:[#allocation4 + $0x1a9] sm:$0xff]
    %v6643 = vld [vmem:[#allocation4 + $0x1b1] sm:$0xff]
    %v6644 = vld [vmem:[#allocation4 + $0x1c9] sm:$0xff]
    %v6645 = vld [vmem:[#allocation4 + $0x1d1] sm:$0xff]
    %v6646 = vld [vmem:[#allocation4 + $0x1e9] sm:$0xff]
    %v6647 = vld [vmem:[#allocation4 + $0x1f1] sm:$0xff]
    %v6648 = vld [vmem:[#allocation4 + $0x249] sm:$0xff]
    %v6649 = vld [vmem:[#allocation4 + $0x251] sm:$0xff]
    %v6650 = vld [vmem:[#allocation4 + $0x269] sm:$0xff]
    %v6651 = vld [vmem:[#allocation4 + $0x271] sm:$0xff]
    %v6652 = vld [vmem:[#allocation4 + $0x289] sm:$0xff]
    %v6653 = vld [vmem:[#allocation4 + $0x291] sm:$0xff]
    %v6654 = vld [vmem:[#allocation4 + $0x2a9] sm:$0xff]
    %v6655 = vld [vmem:[#allocation4 + $0x2b1] sm:$0xff]
    %v6656 = vld [vmem:[#allocation4 + $0x2c9] sm:$0xff]
    %v6657 = vld [vmem:[#allocation4 + $0x2d1] sm:$0xff]
    %v6658 = vld [vmem:[#allocation4 + $0x2e9] sm:$0xff]
    %v6659 = vld [vmem:[#allocation4 + $0x2f1] sm:$0xff]
    %v6660 = vld [vmem:[#allocation4 + $0x309] sm:$0xff]
    %v6661 = vld [vmem:[#allocation4 + $0x311] sm:$0xff]
    %v6662 = vld [vmem:[#allocation4 + $0x329] sm:$0xff]
    %v6663 = vld [vmem:[#allocation4 + $0x331] sm:$0xff]
    %v6664 = vld [vmem:[#allocation4 + $0x349] sm:$0xff]
    %v6665 = vld [vmem:[#allocation4 + $0x351] sm:$0xff]
    %v6666 = vld [vmem:[#allocation4 + $0x369] sm:$0xff]
    %v6667 = vld [vmem:[#allocation4 + $0x371] sm:$0xff]
    %v6668 = vld [vmem:[#allocation4 + $0x389] sm:$0xff]
    %v6669 = vld [vmem:[#allocation4 + $0x391] sm:$0xff]
    %v6670 = vld [vmem:[#allocation4 + $0x3a9] sm:$0xff]
    %v6671 = vld [vmem:[#allocation4 + $0x3b1] sm:$0xff]
    %v6672 = vld [vmem:[#allocation4 + $0x3c9] sm:$0xff]
    %v6673 = vld [vmem:[#allocation4 + $0x3d1] sm:$0xff]
    %v6674 = vld [vmem:[#allocation4 + $0x3e9] sm:$0xff]
    %v6675 = vld [vmem:[#allocation4 + $0x3f1] sm:$0xff]
    %v6676 = vld [vmem:[#allocation4 + $0x409] sm:$0xff]
    %v6677 = vld [vmem:[#allocation4 + $0x411] sm:$0xff]
    %v6678 = vld [vmem:[#allocation4 + $0x429] sm:$0xff]
    %v6679 = vld [vmem:[#allocation4 + $0x431] sm:$0xff]
    %v6680 = vperm.slane %v5844, 2
    %v6681 = vmul.f32 %v6616, %v6680
    %v6682 = vmul.f32 %v6617, %v6680
    %v6683 = vmul.f32 %v6618, %v6680
    %v6684 = vmul.f32 %v6619, %v6680
    %v6685 = vmul.f32 %v6620, %v6680
    %v6686 = vmul.f32 %v6621, %v6680
    %v6687 = vmul.f32 %v6622, %v6680
    %v6688 = vmul.f32 %v6623, %v6680
    %v6689 = vmul.f32 %v6624, %v6680
    %v6690 = vmul.f32 %v6625, %v6680
    %v6691 = vmul.f32 %v6626, %v6680
    %v6692 = vmul.f32 %v6627, %v6680
    %v6693 = vmul.f32 %v6628, %v6680
    %v6694 = vmul.f32 %v6629, %v6680
    %v6695 = vmul.f32 %v6630, %v6680
    %v6696 = vmul.f32 %v6631, %v6680
    %v6697 = vmul.f32 %v6632, %v6680
    %v6698 = vmul.f32 %v6633, %v6680
    %v6699 = vmul.f32 %v6634, %v6680
    %v6700 = vmul.f32 %v6635, %v6680
    %v6701 = vmul.f32 %v6636, %v6680
    %v6702 = vmul.f32 %v6637, %v6680
    %v6703 = vmul.f32 %v6638, %v6680
    %v6704 = vmul.f32 %v6639, %v6680
    %v6705 = vmul.f32 %v6640, %v6680
    %v6706 = vmul.f32 %v6641, %v6680
    %v6707 = vmul.f32 %v6642, %v6680
    %v6708 = vmul.f32 %v6643, %v6680
    %v6709 = vmul.f32 %v6644, %v6680
    %v6710 = vmul.f32 %v6645, %v6680
    %v6711 = vmul.f32 %v6646, %v6680
    %v6712 = vmul.f32 %v6647, %v6680
    %v6713 = vmul.f32 %v6648, %v6680
    %v6714 = vmul.f32 %v6649, %v6680
    %v6715 = vmul.f32 %v6650, %v6680
    %v6716 = vmul.f32 %v6651, %v6680
    %v6717 = vmul.f32 %v6652, %v6680
    %v6718 = vmul.f32 %v6653, %v6680
    %v6719 = vmul.f32 %v6654, %v6680
    %v6720 = vmul.f32 %v6655, %v6680
    %v6721 = vmul.f32 %v6656, %v6680
    %v6722 = vmul.f32 %v6657, %v6680
    %v6723 = vmul.f32 %v6658, %v6680
    %v6724 = vmul.f32 %v6659, %v6680
    %v6725 = vmul.f32 %v6660, %v6680
    %v6726 = vmul.f32 %v6661, %v6680
    %v6727 = vmul.f32 %v6662, %v6680
    %v6728 = vmul.f32 %v6663, %v6680
    %v6729 = vmul.f32 %v6664, %v6680
    %v6730 = vmul.f32 %v6665, %v6680
    %v6731 = vmul.f32 %v6666, %v6680
    %v6732 = vmul.f32 %v6667, %v6680
    %v6733 = vmul.f32 %v6668, %v6680
    %v6734 = vmul.f32 %v6669, %v6680
    %v6735 = vmul.f32 %v6670, %v6680
    %v6736 = vmul.f32 %v6671, %v6680
    %v6737 = vmul.f32 %v6672, %v6680
    %v6738 = vmul.f32 %v6673, %v6680
    %v6739 = vmul.f32 %v6674, %v6680
    %v6740 = vmul.f32 %v6675, %v6680
    %v6741 = vmul.f32 %v6676, %v6680
    %v6742 = vmul.f32 %v6677, %v6680
    %v6743 = vmul.f32 %v6678, %v6680
    %v6744 = vmul.f32 %v6679, %v6680
    %v6745 = vsel %vm4899, %v6681, 0.0
    %6746 = vadd.xlane.f32.xlu0 %v6745
    %v6747 = vpop.xlane.xlu0 %6746
    %v6748 = vsel %vm4899, %v6682, 0.0
    %6749 = vadd.xlane.f32.xlu0 %v6748
    %v6750 = vpop.xlane.xlu0 %6749
    %v6751 = vsel %vm4899, %v6683, 0.0
    %6752 = vadd.xlane.f32.xlu0 %v6751
    %v6753 = vpop.xlane.xlu0 %6752
    %v6754 = vsel %vm4899, %v6684, 0.0
    %6755 = vadd.xlane.f32.xlu0 %v6754
    %v6756 = vpop.xlane.xlu0 %6755
    %v6757 = vsel %vm4899, %v6685, 0.0
    %6758 = vadd.xlane.f32.xlu0 %v6757
    %v6759 = vpop.xlane.xlu0 %6758
    %v6760 = vsel %vm4899, %v6686, 0.0
    %6761 = vadd.xlane.f32.xlu0 %v6760
    %v6762 = vpop.xlane.xlu0 %6761
    %v6763 = vsel %vm4899, %v6687, 0.0
    %6764 = vadd.xlane.f32.xlu0 %v6763
    %v6765 = vpop.xlane.xlu0 %6764
    %v6766 = vsel %vm4899, %v6688, 0.0
    %6767 = vadd.xlane.f32.xlu0 %v6766
    %v6768 = vpop.xlane.xlu0 %6767
    %v6769 = vsel %vm4899, %v6689, 0.0
    %6770 = vadd.xlane.f32.xlu0 %v6769
    %v6771 = vpop.xlane.xlu0 %6770
    %v6772 = vsel %vm4899, %v6690, 0.0
    %6773 = vadd.xlane.f32.xlu0 %v6772
    %v6774 = vpop.xlane.xlu0 %6773
    %v6775 = vsel %vm4899, %v6691, 0.0
    %6776 = vadd.xlane.f32.xlu0 %v6775
    %v6777 = vpop.xlane.xlu0 %6776
    %v6778 = vsel %vm4899, %v6692, 0.0
    %6779 = vadd.xlane.f32.xlu0 %v6778
    %v6780 = vpop.xlane.xlu0 %6779
    %v6781 = vsel %vm4899, %v6693, 0.0
    %6782 = vadd.xlane.f32.xlu0 %v6781
    %v6783 = vpop.xlane.xlu0 %6782
    %v6784 = vsel %vm4899, %v6694, 0.0
    %6785 = vadd.xlane.f32.xlu0 %v6784
    %v6786 = vpop.xlane.xlu0 %6785
    %v6787 = vsel %vm4899, %v6695, 0.0
    %6788 = vadd.xlane.f32.xlu0 %v6787
    %v6789 = vpop.xlane.xlu0 %6788
    %v6790 = vsel %vm4899, %v6696, 0.0
    %6791 = vadd.xlane.f32.xlu0 %v6790
    %v6792 = vpop.xlane.xlu0 %6791
    %v6793 = vsel %vm4899, %v6697, 0.0
    %6794 = vadd.xlane.f32.xlu0 %v6793
    %v6795 = vpop.xlane.xlu0 %6794
    %v6796 = vsel %vm4899, %v6698, 0.0
    %6797 = vadd.xlane.f32.xlu0 %v6796
    %v6798 = vpop.xlane.xlu0 %6797
    %v6799 = vsel %vm4899, %v6699, 0.0
    %6800 = vadd.xlane.f32.xlu0 %v6799
    %v6801 = vpop.xlane.xlu0 %6800
    %v6802 = vsel %vm4899, %v6700, 0.0
    %6803 = vadd.xlane.f32.xlu0 %v6802
    %v6804 = vpop.xlane.xlu0 %6803
    %v6805 = vsel %vm4899, %v6701, 0.0
    %6806 = vadd.xlane.f32.xlu0 %v6805
    %v6807 = vpop.xlane.xlu0 %6806
    %v6808 = vsel %vm4899, %v6702, 0.0
    %6809 = vadd.xlane.f32.xlu0 %v6808
    %v6810 = vpop.xlane.xlu0 %6809
    %v6811 = vsel %vm4899, %v6703, 0.0
    %6812 = vadd.xlane.f32.xlu0 %v6811
    %v6813 = vpop.xlane.xlu0 %6812
    %v6814 = vsel %vm4899, %v6704, 0.0
    %6815 = vadd.xlane.f32.xlu0 %v6814
    %v6816 = vpop.xlane.xlu0 %6815
    %v6817 = vsel %vm4899, %v6705, 0.0
    %6818 = vadd.xlane.f32.xlu0 %v6817
    %v6819 = vpop.xlane.xlu0 %6818
    %v6820 = vsel %vm4899, %v6706, 0.0
    %6821 = vadd.xlane.f32.xlu0 %v6820
    %v6822 = vpop.xlane.xlu0 %6821
    %v6823 = vsel %vm4899, %v6707, 0.0
    %6824 = vadd.xlane.f32.xlu0 %v6823
    %v6825 = vpop.xlane.xlu0 %6824
    %v6826 = vsel %vm4899, %v6708, 0.0
    %6827 = vadd.xlane.f32.xlu0 %v6826
    %v6828 = vpop.xlane.xlu0 %6827
    %v6829 = vsel %vm4899, %v6709, 0.0
    %6830 = vadd.xlane.f32.xlu0 %v6829
    %v6831 = vpop.xlane.xlu0 %6830
    %v6832 = vsel %vm4899, %v6710, 0.0
    %6833 = vadd.xlane.f32.xlu0 %v6832
    %v6834 = vpop.xlane.xlu0 %6833
    %v6835 = vsel %vm4899, %v6711, 0.0
    %6836 = vadd.xlane.f32.xlu0 %v6835
    %v6837 = vpop.xlane.xlu0 %6836
    %v6838 = vsel %vm4899, %v6712, 0.0
    %6839 = vadd.xlane.f32.xlu0 %v6838
    %v6840 = vpop.xlane.xlu0 %6839
    %v6841 = vsel %vm4899, %v6713, 0.0
    %6842 = vadd.xlane.f32.xlu0 %v6841
    %v6843 = vpop.xlane.xlu0 %6842
    %v6844 = vsel %vm4899, %v6714, 0.0
    %6845 = vadd.xlane.f32.xlu0 %v6844
    %v6846 = vpop.xlane.xlu0 %6845
    %v6847 = vsel %vm4899, %v6715, 0.0
    %6848 = vadd.xlane.f32.xlu0 %v6847
    %v6849 = vpop.xlane.xlu0 %6848
    %v6850 = vsel %vm4899, %v6716, 0.0
    %6851 = vadd.xlane.f32.xlu0 %v6850
    %v6852 = vpop.xlane.xlu0 %6851
    %v6853 = vsel %vm4899, %v6717, 0.0
    %6854 = vadd.xlane.f32.xlu0 %v6853
    %v6855 = vpop.xlane.xlu0 %6854
    %v6856 = vsel %vm4899, %v6718, 0.0
    %6857 = vadd.xlane.f32.xlu0 %v6856
    %v6858 = vpop.xlane.xlu0 %6857
    %v6859 = vsel %vm4899, %v6719, 0.0
    %6860 = vadd.xlane.f32.xlu0 %v6859
    %v6861 = vpop.xlane.xlu0 %6860
    %v6862 = vsel %vm4899, %v6720, 0.0
    %6863 = vadd.xlane.f32.xlu0 %v6862
    %v6864 = vpop.xlane.xlu0 %6863
    %v6865 = vsel %vm4899, %v6721, 0.0
    %6866 = vadd.xlane.f32.xlu0 %v6865
    %v6867 = vpop.xlane.xlu0 %6866
    %v6868 = vsel %vm4899, %v6722, 0.0
    %6869 = vadd.xlane.f32.xlu0 %v6868
    %v6870 = vpop.xlane.xlu0 %6869
    %v6871 = vsel %vm4899, %v6723, 0.0
    %6872 = vadd.xlane.f32.xlu0 %v6871
    %v6873 = vpop.xlane.xlu0 %6872
    %v6874 = vsel %vm4899, %v6724, 0.0
    %6875 = vadd.xlane.f32.xlu0 %v6874
    %v6876 = vpop.xlane.xlu0 %6875
    %v6877 = vsel %vm4899, %v6725, 0.0
    %6878 = vadd.xlane.f32.xlu0 %v6877
    %v6879 = vpop.xlane.xlu0 %6878
    %v6880 = vsel %vm4899, %v6726, 0.0
    %6881 = vadd.xlane.f32.xlu0 %v6880
    %v6882 = vpop.xlane.xlu0 %6881
    %v6883 = vsel %vm4899, %v6727, 0.0
    %6884 = vadd.xlane.f32.xlu0 %v6883
    %v6885 = vpop.xlane.xlu0 %6884
    %v6886 = vsel %vm4899, %v6728, 0.0
    %6887 = vadd.xlane.f32.xlu0 %v6886
    %v6888 = vpop.xlane.xlu0 %6887
    %v6889 = vsel %vm4899, %v6729, 0.0
    %6890 = vadd.xlane.f32.xlu0 %v6889
    %v6891 = vpop.xlane.xlu0 %6890
    %v6892 = vsel %vm4899, %v6730, 0.0
    %6893 = vadd.xlane.f32.xlu0 %v6892
    %v6894 = vpop.xlane.xlu0 %6893
    %v6895 = vsel %vm4899, %v6731, 0.0
    %6896 = vadd.xlane.f32.xlu0 %v6895
    %v6897 = vpop.xlane.xlu0 %6896
    %v6898 = vsel %vm4899, %v6732, 0.0
    %6899 = vadd.xlane.f32.xlu0 %v6898
    %v6900 = vpop.xlane.xlu0 %6899
    %v6901 = vsel %vm4899, %v6733, 0.0
    %6902 = vadd.xlane.f32.xlu0 %v6901
    %v6903 = vpop.xlane.xlu0 %6902
    %v6904 = vsel %vm4899, %v6734, 0.0
    %6905 = vadd.xlane.f32.xlu0 %v6904
    %v6906 = vpop.xlane.xlu0 %6905
    %v6907 = vsel %vm4899, %v6735, 0.0
    %6908 = vadd.xlane.f32.xlu0 %v6907
    %v6909 = vpop.xlane.xlu0 %6908
    %v6910 = vsel %vm4899, %v6736, 0.0
    %6911 = vadd.xlane.f32.xlu0 %v6910
    %v6912 = vpop.xlane.xlu0 %6911
    %v6913 = vsel %vm4899, %v6737, 0.0
    %6914 = vadd.xlane.f32.xlu0 %v6913
    %v6915 = vpop.xlane.xlu0 %6914
    %v6916 = vsel %vm4899, %v6738, 0.0
    %6917 = vadd.xlane.f32.xlu0 %v6916
    %v6918 = vpop.xlane.xlu0 %6917
    %v6919 = vsel %vm4899, %v6739, 0.0
    %6920 = vadd.xlane.f32.xlu0 %v6919
    %v6921 = vpop.xlane.xlu0 %6920
    %v6922 = vsel %vm4899, %v6740, 0.0
    %6923 = vadd.xlane.f32.xlu0 %v6922
    %v6924 = vpop.xlane.xlu0 %6923
    %v6925 = vsel %vm4899, %v6741, 0.0
    %6926 = vadd.xlane.f32.xlu0 %v6925
    %v6927 = vpop.xlane.xlu0 %6926
    %v6928 = vsel %vm4899, %v6742, 0.0
    %6929 = vadd.xlane.f32.xlu0 %v6928
    %v6930 = vpop.xlane.xlu0 %6929
    %v6931 = vsel %vm4899, %v6743, 0.0
    %6932 = vadd.xlane.f32.xlu0 %v6931
    %v6933 = vpop.xlane.xlu0 %6932
    %v6934 = vsel %vm4899, %v6744, 0.0
    %6935 = vadd.xlane.f32.xlu0 %v6934
    %v6936 = vpop.xlane.xlu0 %6935
    %v6937 = vadd.f32 %v6552, %v6747
    %v6938 = vadd.f32 %v6553, %v6750
    %v6939 = vadd.f32 %v6554, %v6753
    %v6940 = vadd.f32 %v6555, %v6756
    %v6941 = vadd.f32 %v6556, %v6759
    %v6942 = vadd.f32 %v6557, %v6762
    %v6943 = vadd.f32 %v6558, %v6765
    %v6944 = vadd.f32 %v6559, %v6768
    %v6945 = vadd.f32 %v6560, %v6771
    %v6946 = vadd.f32 %v6561, %v6774
    %v6947 = vadd.f32 %v6562, %v6777
    %v6948 = vadd.f32 %v6563, %v6780
    %v6949 = vadd.f32 %v6564, %v6783
    %v6950 = vadd.f32 %v6565, %v6786
    %v6951 = vadd.f32 %v6566, %v6789
    %v6952 = vadd.f32 %v6567, %v6792
    %v6953 = vadd.f32 %v6568, %v6795
    %v6954 = vadd.f32 %v6569, %v6798
    %v6955 = vadd.f32 %v6570, %v6801
    %v6956 = vadd.f32 %v6571, %v6804
    %v6957 = vadd.f32 %v6572, %v6807
    %v6958 = vadd.f32 %v6573, %v6810
    %v6959 = vadd.f32 %v6574, %v6813
    %v6960 = vadd.f32 %v6575, %v6816
    %v6961 = vadd.f32 %v6576, %v6819
    %v6962 = vadd.f32 %v6577, %v6822
    %v6963 = vadd.f32 %v6578, %v6825
    %v6964 = vadd.f32 %v6579, %v6828
    %v6965 = vadd.f32 %v6580, %v6831
    %v6966 = vadd.f32 %v6581, %v6834
    %v6967 = vadd.f32 %v6582, %v6837
    %v6968 = vadd.f32 %v6583, %v6840
    %v6969 = vadd.f32 %v6584, %v6843
    %v6970 = vadd.f32 %v6585, %v6846
    %v6971 = vadd.f32 %v6586, %v6849
    %v6972 = vadd.f32 %v6587, %v6852
    %v6973 = vadd.f32 %v6588, %v6855
    %v6974 = vadd.f32 %v6589, %v6858
    %v6975 = vadd.f32 %v6590, %v6861
    %v6976 = vadd.f32 %v6591, %v6864
    %v6977 = vadd.f32 %v6592, %v6867
    %v6978 = vadd.f32 %v6593, %v6870
    %v6979 = vadd.f32 %v6594, %v6873
    %v6980 = vadd.f32 %v6595, %v6876
    %v6981 = vadd.f32 %v6596, %v6879
    %v6982 = vadd.f32 %v6597, %v6882
    %v6983 = vadd.f32 %v6598, %v6885
    %v6984 = vadd.f32 %v6599, %v6888
    %v6985 = vadd.f32 %v6600, %v6891
    %v6986 = vadd.f32 %v6601, %v6894
    %v6987 = vadd.f32 %v6602, %v6897
    %v6988 = vadd.f32 %v6603, %v6900
    %v6989 = vadd.f32 %v6604, %v6903
    %v6990 = vadd.f32 %v6605, %v6906
    %v6991 = vadd.f32 %v6606, %v6909
    %v6992 = vadd.f32 %v6607, %v6912
    %v6993 = vadd.f32 %v6608, %v6915
    %v6994 = vadd.f32 %v6609, %v6918
    %v6995 = vadd.f32 %v6610, %v6921
    %v6996 = vadd.f32 %v6611, %v6924
    %v6997 = vadd.f32 %v6612, %v6927
    %v6998 = vadd.f32 %v6613, %v6930
    %v6999 = vadd.f32 %v6614, %v6933
    %v7000 = vadd.f32 %v6615, %v6936
    %v7001 = vld [vmem:[%s5714 + $0x7] sm:$0xff]
    %v7002 = vld [vmem:[%s5714 + $0xf] sm:$0xff]
    %v7003 = vld [vmem:[%s5714 + $0x27] sm:$0xff]
    %v7004 = vld [vmem:[%s5714 + $0x2f] sm:$0xff]
    %v7005 = vld [vmem:[%s5714 + $0x47] sm:$0xff]
    %v7006 = vld [vmem:[%s5714 + $0x4f] sm:$0xff]
    %v7007 = vld [vmem:[%s5714 + $0x67] sm:$0xff]
    %v7008 = vld [vmem:[%s5714 + $0x6f] sm:$0xff]
    %v7009 = vld [vmem:[%s5714 + $0x87] sm:$0xff]
    %v7010 = vld [vmem:[%s5714 + $0x8f] sm:$0xff]
    %v7011 = vld [vmem:[%s5714 + $0xa7] sm:$0xff]
    %v7012 = vld [vmem:[%s5714 + $0xaf] sm:$0xff]
    %v7013 = vld [vmem:[%s5714 + $0xc7] sm:$0xff]
    %v7014 = vld [vmem:[%s5714 + $0xcf] sm:$0xff]
    %v7015 = vld [vmem:[%s5714 + $0xe7] sm:$0xff]
    %v7016 = vld [vmem:[%s5714 + $0xef] sm:$0xff]
    %v7017 = vld [vmem:[%s5714 + $0x107] sm:$0xff]
    %v7018 = vld [vmem:[%s5714 + $0x10f] sm:$0xff]
    %v7019 = vld [vmem:[%s5714 + $0x127] sm:$0xff]
    %v7020 = vld [vmem:[%s5714 + $0x12f] sm:$0xff]
    %v7021 = vld [vmem:[%s5714 + $0x147] sm:$0xff]
    %v7022 = vld [vmem:[%s5714 + $0x14f] sm:$0xff]
    %v7023 = vld [vmem:[%s5714 + $0x167] sm:$0xff]
    %v7024 = vld [vmem:[%s5714 + $0x16f] sm:$0xff]
    %v7025 = vld [vmem:[%s5714 + $0x187] sm:$0xff]
    %v7026 = vld [vmem:[%s5714 + $0x18f] sm:$0xff]
    %v7027 = vld [vmem:[%s5714 + $0x1a7] sm:$0xff]
    %v7028 = vld [vmem:[%s5714 + $0x1af] sm:$0xff]
    %v7029 = vld [vmem:[%s5714 + $0x1c7] sm:$0xff]
    %v7030 = vld [vmem:[%s5714 + $0x1cf] sm:$0xff]
    %v7031 = vld [vmem:[%s5714 + $0x1e7] sm:$0xff]
    %v7032 = vld [vmem:[%s5714 + $0x1ef] sm:$0xff]
    %v7033 = vld [vmem:[%s5714 + $0x247] sm:$0xff]
    %v7034 = vld [vmem:[%s5714 + $0x24f] sm:$0xff]
    %v7035 = vld [vmem:[%s5714 + $0x267] sm:$0xff]
    %v7036 = vld [vmem:[%s5714 + $0x26f] sm:$0xff]
    %v7037 = vld [vmem:[%s5714 + $0x287] sm:$0xff]
    %v7038 = vld [vmem:[%s5714 + $0x28f] sm:$0xff]
    %v7039 = vld [vmem:[%s5714 + $0x2a7] sm:$0xff]
    %v7040 = vld [vmem:[%s5714 + $0x2af] sm:$0xff]
    %v7041 = vld [vmem:[%s5714 + $0x2c7] sm:$0xff]
    %v7042 = vld [vmem:[%s5714 + $0x2cf] sm:$0xff]
    %v7043 = vld [vmem:[%s5714 + $0x2e7] sm:$0xff]
    %v7044 = vld [vmem:[%s5714 + $0x2ef] sm:$0xff]
    %v7045 = vld [vmem:[%s5714 + $0x307] sm:$0xff]
    %v7046 = vld [vmem:[%s5714 + $0x30f] sm:$0xff]
    %v7047 = vld [vmem:[%s5714 + $0x327] sm:$0xff]
    %v7048 = vld [vmem:[%s5714 + $0x32f] sm:$0xff]
    %v7049 = vld [vmem:[%s5714 + $0x347] sm:$0xff]
    %v7050 = vld [vmem:[%s5714 + $0x34f] sm:$0xff]
    %v7051 = vld [vmem:[%s5714 + $0x367] sm:$0xff]
    %v7052 = vld [vmem:[%s5714 + $0x36f] sm:$0xff]
    %v7053 = vld [vmem:[%s5714 + $0x387] sm:$0xff]
    %v7054 = vld [vmem:[%s5714 + $0x38f] sm:$0xff]
    %v7055 = vld [vmem:[%s5714 + $0x3a7] sm:$0xff]
    %v7056 = vld [vmem:[%s5714 + $0x3af] sm:$0xff]
    %v7057 = vld [vmem:[%s5714 + $0x3c7] sm:$0xff]
    %v7058 = vld [vmem:[%s5714 + $0x3cf] sm:$0xff]
    %v7059 = vld [vmem:[%s5714 + $0x3e7] sm:$0xff]
    %v7060 = vld [vmem:[%s5714 + $0x3ef] sm:$0xff]
    %v7061 = vld [vmem:[%s5714 + $0x407] sm:$0xff]
    %v7062 = vld [vmem:[%s5714 + $0x40f] sm:$0xff]
    %v7063 = vld [vmem:[%s5714 + $0x427] sm:$0xff]
    %v7064 = vld [vmem:[%s5714 + $0x42f] sm:$0xff]
    %v7065 = vperm.slane %v5844, 3
    %v7066 = vmul.f32 %v7001, %v7065
    %v7067 = vmul.f32 %v7002, %v7065
    %v7068 = vmul.f32 %v7003, %v7065
    %v7069 = vmul.f32 %v7004, %v7065
    %v7070 = vmul.f32 %v7005, %v7065
    %v7071 = vmul.f32 %v7006, %v7065
    %v7072 = vmul.f32 %v7007, %v7065
    %v7073 = vmul.f32 %v7008, %v7065
    %v7074 = vmul.f32 %v7009, %v7065
    %v7075 = vmul.f32 %v7010, %v7065
    %v7076 = vmul.f32 %v7011, %v7065
    %v7077 = vmul.f32 %v7012, %v7065
    %v7078 = vmul.f32 %v7013, %v7065
    %v7079 = vmul.f32 %v7014, %v7065
    %v7080 = vmul.f32 %v7015, %v7065
    %v7081 = vmul.f32 %v7016, %v7065
    %v7082 = vmul.f32 %v7017, %v7065
    %v7083 = vmul.f32 %v7018, %v7065
    %v7084 = vmul.f32 %v7019, %v7065
    %v7085 = vmul.f32 %v7020, %v7065
    %v7086 = vmul.f32 %v7021, %v7065
    %v7087 = vmul.f32 %v7022, %v7065
    %v7088 = vmul.f32 %v7023, %v7065
    %v7089 = vmul.f32 %v7024, %v7065
    %v7090 = vmul.f32 %v7025, %v7065
    %v7091 = vmul.f32 %v7026, %v7065
    %v7092 = vmul.f32 %v7027, %v7065
    %v7093 = vmul.f32 %v7028, %v7065
    %v7094 = vmul.f32 %v7029, %v7065
    %v7095 = vmul.f32 %v7030, %v7065
    %v7096 = vmul.f32 %v7031, %v7065
    %v7097 = vmul.f32 %v7032, %v7065
    %v7098 = vmul.f32 %v7033, %v7065
    %v7099 = vmul.f32 %v7034, %v7065
    %v7100 = vmul.f32 %v7035, %v7065
    %v7101 = vmul.f32 %v7036, %v7065
    %v7102 = vmul.f32 %v7037, %v7065
    %v7103 = vmul.f32 %v7038, %v7065
    %v7104 = vmul.f32 %v7039, %v7065
    %v7105 = vmul.f32 %v7040, %v7065
    %v7106 = vmul.f32 %v7041, %v7065
    %v7107 = vmul.f32 %v7042, %v7065
    %v7108 = vmul.f32 %v7043, %v7065
    %v7109 = vmul.f32 %v7044, %v7065
    %v7110 = vmul.f32 %v7045, %v7065
    %v7111 = vmul.f32 %v7046, %v7065
    %v7112 = vmul.f32 %v7047, %v7065
    %v7113 = vmul.f32 %v7048, %v7065
    %v7114 = vmul.f32 %v7049, %v7065
    %v7115 = vmul.f32 %v7050, %v7065
    %v7116 = vmul.f32 %v7051, %v7065
    %v7117 = vmul.f32 %v7052, %v7065
    %v7118 = vmul.f32 %v7053, %v7065
    %v7119 = vmul.f32 %v7054, %v7065
    %v7120 = vmul.f32 %v7055, %v7065
    %v7121 = vmul.f32 %v7056, %v7065
    %v7122 = vmul.f32 %v7057, %v7065
    %v7123 = vmul.f32 %v7058, %v7065
    %v7124 = vmul.f32 %v7059, %v7065
    %v7125 = vmul.f32 %v7060, %v7065
    %v7126 = vmul.f32 %v7061, %v7065
    %v7127 = vmul.f32 %v7062, %v7065
    %v7128 = vmul.f32 %v7063, %v7065
    %v7129 = vmul.f32 %v7064, %v7065
    %v7130 = vsel %vm4899, %v7066, 0.0
    %7131 = vadd.xlane.f32.xlu0 %v7130
    %v7132 = vpop.xlane.xlu0 %7131
    %v7133 = vsel %vm4899, %v7067, 0.0
    %7134 = vadd.xlane.f32.xlu0 %v7133
    %v7135 = vpop.xlane.xlu0 %7134
    %v7136 = vsel %vm4899, %v7068, 0.0
    %7137 = vadd.xlane.f32.xlu0 %v7136
    %v7138 = vpop.xlane.xlu0 %7137
    %v7139 = vsel %vm4899, %v7069, 0.0
    %7140 = vadd.xlane.f32.xlu0 %v7139
    %v7141 = vpop.xlane.xlu0 %7140
    %v7142 = vsel %vm4899, %v7070, 0.0
    %7143 = vadd.xlane.f32.xlu0 %v7142
    %v7144 = vpop.xlane.xlu0 %7143
    %v7145 = vsel %vm4899, %v7071, 0.0
    %7146 = vadd.xlane.f32.xlu0 %v7145
    %v7147 = vpop.xlane.xlu0 %7146
    %v7148 = vsel %vm4899, %v7072, 0.0
    %7149 = vadd.xlane.f32.xlu0 %v7148
    %v7150 = vpop.xlane.xlu0 %7149
    %v7151 = vsel %vm4899, %v7073, 0.0
    %7152 = vadd.xlane.f32.xlu0 %v7151
    %v7153 = vpop.xlane.xlu0 %7152
    %v7154 = vsel %vm4899, %v7074, 0.0
    %7155 = vadd.xlane.f32.xlu0 %v7154
    %v7156 = vpop.xlane.xlu0 %7155
    %v7157 = vsel %vm4899, %v7075, 0.0
    %7158 = vadd.xlane.f32.xlu0 %v7157
    %v7159 = vpop.xlane.xlu0 %7158
    %v7160 = vsel %vm4899, %v7076, 0.0
    %7161 = vadd.xlane.f32.xlu0 %v7160
    %v7162 = vpop.xlane.xlu0 %7161
    %v7163 = vsel %vm4899, %v7077, 0.0
    %7164 = vadd.xlane.f32.xlu0 %v7163
    %v7165 = vpop.xlane.xlu0 %7164
    %v7166 = vsel %vm4899, %v7078, 0.0
    %7167 = vadd.xlane.f32.xlu0 %v7166
    %v7168 = vpop.xlane.xlu0 %7167
    %v7169 = vsel %vm4899, %v7079, 0.0
    %7170 = vadd.xlane.f32.xlu0 %v7169
    %v7171 = vpop.xlane.xlu0 %7170
    %v7172 = vsel %vm4899, %v7080, 0.0
    %7173 = vadd.xlane.f32.xlu0 %v7172
    %v7174 = vpop.xlane.xlu0 %7173
    %v7175 = vsel %vm4899, %v7081, 0.0
    %7176 = vadd.xlane.f32.xlu0 %v7175
    %v7177 = vpop.xlane.xlu0 %7176
    %v7178 = vsel %vm4899, %v7082, 0.0
    %7179 = vadd.xlane.f32.xlu0 %v7178
    %v7180 = vpop.xlane.xlu0 %7179
    %v7181 = vsel %vm4899, %v7083, 0.0
    %7182 = vadd.xlane.f32.xlu0 %v7181
    %v7183 = vpop.xlane.xlu0 %7182
    %v7184 = vsel %vm4899, %v7084, 0.0
    %7185 = vadd.xlane.f32.xlu0 %v7184
    %v7186 = vpop.xlane.xlu0 %7185
    %v7187 = vsel %vm4899, %v7085, 0.0
    %7188 = vadd.xlane.f32.xlu0 %v7187
    %v7189 = vpop.xlane.xlu0 %7188
    %v7190 = vsel %vm4899, %v7086, 0.0
    %7191 = vadd.xlane.f32.xlu0 %v7190
    %v7192 = vpop.xlane.xlu0 %7191
    %v7193 = vsel %vm4899, %v7087, 0.0
    %7194 = vadd.xlane.f32.xlu0 %v7193
    %v7195 = vpop.xlane.xlu0 %7194
    %v7196 = vsel %vm4899, %v7088, 0.0
    %7197 = vadd.xlane.f32.xlu0 %v7196
    %v7198 = vpop.xlane.xlu0 %7197
    %v7199 = vsel %vm4899, %v7089, 0.0
    %7200 = vadd.xlane.f32.xlu0 %v7199
    %v7201 = vpop.xlane.xlu0 %7200
    %v7202 = vsel %vm4899, %v7090, 0.0
    %7203 = vadd.xlane.f32.xlu0 %v7202
    %v7204 = vpop.xlane.xlu0 %7203
    %v7205 = vsel %vm4899, %v7091, 0.0
    %7206 = vadd.xlane.f32.xlu0 %v7205
    %v7207 = vpop.xlane.xlu0 %7206
    %v7208 = vsel %vm4899, %v7092, 0.0
    %7209 = vadd.xlane.f32.xlu0 %v7208
    %v7210 = vpop.xlane.xlu0 %7209
    %v7211 = vsel %vm4899, %v7093, 0.0
    %7212 = vadd.xlane.f32.xlu0 %v7211
    %v7213 = vpop.xlane.xlu0 %7212
    %v7214 = vsel %vm4899, %v7094, 0.0
    %7215 = vadd.xlane.f32.xlu0 %v7214
    %v7216 = vpop.xlane.xlu0 %7215
    %v7217 = vsel %vm4899, %v7095, 0.0
    %7218 = vadd.xlane.f32.xlu0 %v7217
    %v7219 = vpop.xlane.xlu0 %7218
    %v7220 = vsel %vm4899, %v7096, 0.0
    %7221 = vadd.xlane.f32.xlu0 %v7220
    %v7222 = vpop.xlane.xlu0 %7221
    %v7223 = vsel %vm4899, %v7097, 0.0
    %7224 = vadd.xlane.f32.xlu0 %v7223
    %v7225 = vpop.xlane.xlu0 %7224
    %v7226 = vsel %vm4899, %v7098, 0.0
    %7227 = vadd.xlane.f32.xlu0 %v7226
    %v7228 = vpop.xlane.xlu0 %7227
    %v7229 = vsel %vm4899, %v7099, 0.0
    %7230 = vadd.xlane.f32.xlu0 %v7229
    %v7231 = vpop.xlane.xlu0 %7230
    %v7232 = vsel %vm4899, %v7100, 0.0
    %7233 = vadd.xlane.f32.xlu0 %v7232
    %v7234 = vpop.xlane.xlu0 %7233
    %v7235 = vsel %vm4899, %v7101, 0.0
    %7236 = vadd.xlane.f32.xlu0 %v7235
    %v7237 = vpop.xlane.xlu0 %7236
    %v7238 = vsel %vm4899, %v7102, 0.0
    %7239 = vadd.xlane.f32.xlu0 %v7238
    %v7240 = vpop.xlane.xlu0 %7239
    %v7241 = vsel %vm4899, %v7103, 0.0
    %7242 = vadd.xlane.f32.xlu0 %v7241
    %v7243 = vpop.xlane.xlu0 %7242
    %v7244 = vsel %vm4899, %v7104, 0.0
    %7245 = vadd.xlane.f32.xlu0 %v7244
    %v7246 = vpop.xlane.xlu0 %7245
    %v7247 = vsel %vm4899, %v7105, 0.0
    %7248 = vadd.xlane.f32.xlu0 %v7247
    %v7249 = vpop.xlane.xlu0 %7248
    %v7250 = vsel %vm4899, %v7106, 0.0
    %7251 = vadd.xlane.f32.xlu0 %v7250
    %v7252 = vpop.xlane.xlu0 %7251
    %v7253 = vsel %vm4899, %v7107, 0.0
    %7254 = vadd.xlane.f32.xlu0 %v7253
    %v7255 = vpop.xlane.xlu0 %7254
    %v7256 = vsel %vm4899, %v7108, 0.0
    %7257 = vadd.xlane.f32.xlu0 %v7256
    %v7258 = vpop.xlane.xlu0 %7257
    %v7259 = vsel %vm4899, %v7109, 0.0
    %7260 = vadd.xlane.f32.xlu0 %v7259
    %v7261 = vpop.xlane.xlu0 %7260
    %v7262 = vsel %vm4899, %v7110, 0.0
    %7263 = vadd.xlane.f32.xlu0 %v7262
    %v7264 = vpop.xlane.xlu0 %7263
    %v7265 = vsel %vm4899, %v7111, 0.0
    %7266 = vadd.xlane.f32.xlu0 %v7265
    %v7267 = vpop.xlane.xlu0 %7266
    %v7268 = vsel %vm4899, %v7112, 0.0
    %7269 = vadd.xlane.f32.xlu0 %v7268
    %v7270 = vpop.xlane.xlu0 %7269
    %v7271 = vsel %vm4899, %v7113, 0.0
    %7272 = vadd.xlane.f32.xlu0 %v7271
    %v7273 = vpop.xlane.xlu0 %7272
    %v7274 = vsel %vm4899, %v7114, 0.0
    %7275 = vadd.xlane.f32.xlu0 %v7274
    %v7276 = vpop.xlane.xlu0 %7275
    %v7277 = vsel %vm4899, %v7115, 0.0
    %7278 = vadd.xlane.f32.xlu0 %v7277
    %v7279 = vpop.xlane.xlu0 %7278
    %v7280 = vsel %vm4899, %v7116, 0.0
    %7281 = vadd.xlane.f32.xlu0 %v7280
    %v7282 = vpop.xlane.xlu0 %7281
    %v7283 = vsel %vm4899, %v7117, 0.0
    %7284 = vadd.xlane.f32.xlu0 %v7283
    %v7285 = vpop.xlane.xlu0 %7284
    %v7286 = vsel %vm4899, %v7118, 0.0
    %7287 = vadd.xlane.f32.xlu0 %v7286
    %v7288 = vpop.xlane.xlu0 %7287
    %v7289 = vsel %vm4899, %v7119, 0.0
    %7290 = vadd.xlane.f32.xlu0 %v7289
    %v7291 = vpop.xlane.xlu0 %7290
    %v7292 = vsel %vm4899, %v7120, 0.0
    %7293 = vadd.xlane.f32.xlu0 %v7292
    %v7294 = vpop.xlane.xlu0 %7293
    %v7295 = vsel %vm4899, %v7121, 0.0
    %7296 = vadd.xlane.f32.xlu0 %v7295
    %v7297 = vpop.xlane.xlu0 %7296
    %v7298 = vsel %vm4899, %v7122, 0.0
    %7299 = vadd.xlane.f32.xlu0 %v7298
    %v7300 = vpop.xlane.xlu0 %7299
    %v7301 = vsel %vm4899, %v7123, 0.0
    %7302 = vadd.xlane.f32.xlu0 %v7301
    %v7303 = vpop.xlane.xlu0 %7302
    %v7304 = vsel %vm4899, %v7124, 0.0
    %7305 = vadd.xlane.f32.xlu0 %v7304
    %v7306 = vpop.xlane.xlu0 %7305
    %v7307 = vsel %vm4899, %v7125, 0.0
    %7308 = vadd.xlane.f32.xlu0 %v7307
    %v7309 = vpop.xlane.xlu0 %7308
    %v7310 = vsel %vm4899, %v7126, 0.0
    %7311 = vadd.xlane.f32.xlu0 %v7310
    %v7312 = vpop.xlane.xlu0 %7311
    %v7313 = vsel %vm4899, %v7127, 0.0
    %7314 = vadd.xlane.f32.xlu0 %v7313
    %v7315 = vpop.xlane.xlu0 %7314
    %v7316 = vsel %vm4899, %v7128, 0.0
    %7317 = vadd.xlane.f32.xlu0 %v7316
    %v7318 = vpop.xlane.xlu0 %7317
    %v7319 = vsel %vm4899, %v7129, 0.0
    %7320 = vadd.xlane.f32.xlu0 %v7319
    %v7321 = vpop.xlane.xlu0 %7320
    %v7322 = vadd.f32 %v6937, %v7132
    %v7323 = vadd.f32 %v6938, %v7135
    %v7324 = vadd.f32 %v6939, %v7138
    %v7325 = vadd.f32 %v6940, %v7141
    %v7326 = vadd.f32 %v6941, %v7144
    %v7327 = vadd.f32 %v6942, %v7147
    %v7328 = vadd.f32 %v6943, %v7150
    %v7329 = vadd.f32 %v6944, %v7153
    %v7330 = vadd.f32 %v6945, %v7156
    %v7331 = vadd.f32 %v6946, %v7159
    %v7332 = vadd.f32 %v6947, %v7162
    %v7333 = vadd.f32 %v6948, %v7165
    %v7334 = vadd.f32 %v6949, %v7168
    %v7335 = vadd.f32 %v6950, %v7171
    %v7336 = vadd.f32 %v6951, %v7174
    %v7337 = vadd.f32 %v6952, %v7177
    %v7338 = vadd.f32 %v6953, %v7180
    %v7339 = vadd.f32 %v6954, %v7183
    %v7340 = vadd.f32 %v6955, %v7186
    %v7341 = vadd.f32 %v6956, %v7189
    %v7342 = vadd.f32 %v6957, %v7192
    %v7343 = vadd.f32 %v6958, %v7195
    %v7344 = vadd.f32 %v6959, %v7198
    %v7345 = vadd.f32 %v6960, %v7201
    %v7346 = vadd.f32 %v6961, %v7204
    %v7347 = vadd.f32 %v6962, %v7207
    %v7348 = vadd.f32 %v6963, %v7210
    %v7349 = vadd.f32 %v6964, %v7213
    %v7350 = vadd.f32 %v6965, %v7216
    %v7351 = vadd.f32 %v6966, %v7219
    %v7352 = vadd.f32 %v6967, %v7222
    %v7353 = vadd.f32 %v6968, %v7225
    %v7354 = vadd.f32 %v6969, %v7228
    %v7355 = vadd.f32 %v6970, %v7231
    %v7356 = vadd.f32 %v6971, %v7234
    %v7357 = vadd.f32 %v6972, %v7237
    %v7358 = vadd.f32 %v6973, %v7240
    %v7359 = vadd.f32 %v6974, %v7243
    %v7360 = vadd.f32 %v6975, %v7246
    %v7361 = vadd.f32 %v6976, %v7249
    %v7362 = vadd.f32 %v6977, %v7252
    %v7363 = vadd.f32 %v6978, %v7255
    %v7364 = vadd.f32 %v6979, %v7258
    %v7365 = vadd.f32 %v6980, %v7261
    %v7366 = vadd.f32 %v6981, %v7264
    %v7367 = vadd.f32 %v6982, %v7267
    %v7368 = vadd.f32 %v6983, %v7270
    %v7369 = vadd.f32 %v6984, %v7273
    %v7370 = vadd.f32 %v6985, %v7276
    %v7371 = vadd.f32 %v6986, %v7279
    %v7372 = vadd.f32 %v6987, %v7282
    %v7373 = vadd.f32 %v6988, %v7285
    %v7374 = vadd.f32 %v6989, %v7288
    %v7375 = vadd.f32 %v6990, %v7291
    %v7376 = vadd.f32 %v6991, %v7294
    %v7377 = vadd.f32 %v6992, %v7297
    %v7378 = vadd.f32 %v6993, %v7300
    %v7379 = vadd.f32 %v6994, %v7303
    %v7380 = vadd.f32 %v6995, %v7306
    %v7381 = vadd.f32 %v6996, %v7309
    %v7382 = vadd.f32 %v6997, %v7312
    %v7383 = vadd.f32 %v6998, %v7315
    %v7384 = vadd.f32 %v6999, %v7318
    %v7385 = vadd.f32 %v7000, %v7321
    %v7386 = vld [vmem:[%s5714 + $0x8] sm:$0xff]
    %v7387 = vld [vmem:[%s5714 + $0x10] sm:$0xff]
    %v7388 = vld [vmem:[%s5714 + $0x28] sm:$0xff]
    %v7389 = vld [vmem:[%s5714 + $0x30] sm:$0xff]
    %v7390 = vld [vmem:[%s5714 + $0x48] sm:$0xff]
    %v7391 = vld [vmem:[%s5714 + $0x50] sm:$0xff]
    %v7392 = vld [vmem:[%s5714 + $0x68] sm:$0xff]
    %v7393 = vld [vmem:[%s5714 + $0x70] sm:$0xff]
    %v7394 = vld [vmem:[%s5714 + $0x88] sm:$0xff]
    %v7395 = vld [vmem:[%s5714 + $0x90] sm:$0xff]
    %v7396 = vld [vmem:[%s5714 + $0xa8] sm:$0xff]
    %v7397 = vld [vmem:[%s5714 + $0xb0] sm:$0xff]
    %v7398 = vld [vmem:[%s5714 + $0xc8] sm:$0xff]
    %v7399 = vld [vmem:[%s5714 + $0xd0] sm:$0xff]
    %v7400 = vld [vmem:[%s5714 + $0xe8] sm:$0xff]
    %v7401 = vld [vmem:[%s5714 + $0xf0] sm:$0xff]
    %v7402 = vld [vmem:[%s5714 + $0x108] sm:$0xff]
    %v7403 = vld [vmem:[%s5714 + $0x110] sm:$0xff]
    %v7404 = vld [vmem:[%s5714 + $0x128] sm:$0xff]
    %v7405 = vld [vmem:[%s5714 + $0x130] sm:$0xff]
    %v7406 = vld [vmem:[%s5714 + $0x148] sm:$0xff]
    %v7407 = vld [vmem:[%s5714 + $0x150] sm:$0xff]
    %v7408 = vld [vmem:[%s5714 + $0x168] sm:$0xff]
    %v7409 = vld [vmem:[%s5714 + $0x170] sm:$0xff]
    %v7410 = vld [vmem:[%s5714 + $0x188] sm:$0xff]
    %v7411 = vld [vmem:[%s5714 + $0x190] sm:$0xff]
    %v7412 = vld [vmem:[%s5714 + $0x1a8] sm:$0xff]
    %v7413 = vld [vmem:[%s5714 + $0x1b0] sm:$0xff]
    %v7414 = vld [vmem:[%s5714 + $0x1c8] sm:$0xff]
    %v7415 = vld [vmem:[%s5714 + $0x1d0] sm:$0xff]
    %v7416 = vld [vmem:[%s5714 + $0x1e8] sm:$0xff]
    %v7417 = vld [vmem:[%s5714 + $0x1f0] sm:$0xff]
    %v7418 = vld [vmem:[%s5714 + $0x248] sm:$0xff]
    %v7419 = vld [vmem:[%s5714 + $0x250] sm:$0xff]
    %v7420 = vld [vmem:[%s5714 + $0x268] sm:$0xff]
    %v7421 = vld [vmem:[%s5714 + $0x270] sm:$0xff]
    %v7422 = vld [vmem:[%s5714 + $0x288] sm:$0xff]
    %v7423 = vld [vmem:[%s5714 + $0x290] sm:$0xff]
    %v7424 = vld [vmem:[%s5714 + $0x2a8] sm:$0xff]
    %v7425 = vld [vmem:[%s5714 + $0x2b0] sm:$0xff]
    %v7426 = vld [vmem:[%s5714 + $0x2c8] sm:$0xff]
    %v7427 = vld [vmem:[%s5714 + $0x2d0] sm:$0xff]
    %v7428 = vld [vmem:[%s5714 + $0x2e8] sm:$0xff]
    %v7429 = vld [vmem:[%s5714 + $0x2f0] sm:$0xff]
    %v7430 = vld [vmem:[%s5714 + $0x308] sm:$0xff]
    %v7431 = vld [vmem:[%s5714 + $0x310] sm:$0xff]
    %v7432 = vld [vmem:[%s5714 + $0x328] sm:$0xff]
    %v7433 = vld [vmem:[%s5714 + $0x330] sm:$0xff]
    %v7434 = vld [vmem:[%s5714 + $0x348] sm:$0xff]
    %v7435 = vld [vmem:[%s5714 + $0x350] sm:$0xff]
    %v7436 = vld [vmem:[%s5714 + $0x368] sm:$0xff]
    %v7437 = vld [vmem:[%s5714 + $0x370] sm:$0xff]
    %v7438 = vld [vmem:[%s5714 + $0x388] sm:$0xff]
    %v7439 = vld [vmem:[%s5714 + $0x390] sm:$0xff]
    %v7440 = vld [vmem:[%s5714 + $0x3a8] sm:$0xff]
    %v7441 = vld [vmem:[%s5714 + $0x3b0] sm:$0xff]
    %v7442 = vld [vmem:[%s5714 + $0x3c8] sm:$0xff]
    %v7443 = vld [vmem:[%s5714 + $0x3d0] sm:$0xff]
    %v7444 = vld [vmem:[%s5714 + $0x3e8] sm:$0xff]
    %v7445 = vld [vmem:[%s5714 + $0x3f0] sm:$0xff]
    %v7446 = vld [vmem:[%s5714 + $0x408] sm:$0xff]
    %v7447 = vld [vmem:[%s5714 + $0x410] sm:$0xff]
    %v7448 = vld [vmem:[%s5714 + $0x428] sm:$0xff]
    %v7449 = vld [vmem:[%s5714 + $0x430] sm:$0xff]
    %v7450 = vperm.slane %v5844, 4
    %v7451 = vmul.f32 %v7386, %v7450
    %v7452 = vmul.f32 %v7387, %v7450
    %v7453 = vmul.f32 %v7388, %v7450
    %v7454 = vmul.f32 %v7389, %v7450
    %v7455 = vmul.f32 %v7390, %v7450
    %v7456 = vmul.f32 %v7391, %v7450
    %v7457 = vmul.f32 %v7392, %v7450
    %v7458 = vmul.f32 %v7393, %v7450
    %v7459 = vmul.f32 %v7394, %v7450
    %v7460 = vmul.f32 %v7395, %v7450
    %v7461 = vmul.f32 %v7396, %v7450
    %v7462 = vmul.f32 %v7397, %v7450
    %v7463 = vmul.f32 %v7398, %v7450
    %v7464 = vmul.f32 %v7399, %v7450
    %v7465 = vmul.f32 %v7400, %v7450
    %v7466 = vmul.f32 %v7401, %v7450
    %v7467 = vmul.f32 %v7402, %v7450
    %v7468 = vmul.f32 %v7403, %v7450
    %v7469 = vmul.f32 %v7404, %v7450
    %v7470 = vmul.f32 %v7405, %v7450
    %v7471 = vmul.f32 %v7406, %v7450
    %v7472 = vmul.f32 %v7407, %v7450
    %v7473 = vmul.f32 %v7408, %v7450
    %v7474 = vmul.f32 %v7409, %v7450
    %v7475 = vmul.f32 %v7410, %v7450
    %v7476 = vmul.f32 %v7411, %v7450
    %v7477 = vmul.f32 %v7412, %v7450
    %v7478 = vmul.f32 %v7413, %v7450
    %v7479 = vmul.f32 %v7414, %v7450
    %v7480 = vmul.f32 %v7415, %v7450
    %v7481 = vmul.f32 %v7416, %v7450
    %v7482 = vmul.f32 %v7417, %v7450
    %v7483 = vmul.f32 %v7418, %v7450
    %v7484 = vmul.f32 %v7419, %v7450
    %v7485 = vmul.f32 %v7420, %v7450
    %v7486 = vmul.f32 %v7421, %v7450
    %v7487 = vmul.f32 %v7422, %v7450
    %v7488 = vmul.f32 %v7423, %v7450
    %v7489 = vmul.f32 %v7424, %v7450
    %v7490 = vmul.f32 %v7425, %v7450
    %v7491 = vmul.f32 %v7426, %v7450
    %v7492 = vmul.f32 %v7427, %v7450
    %v7493 = vmul.f32 %v7428, %v7450
    %v7494 = vmul.f32 %v7429, %v7450
    %v7495 = vmul.f32 %v7430, %v7450
    %v7496 = vmul.f32 %v7431, %v7450
    %v7497 = vmul.f32 %v7432, %v7450
    %v7498 = vmul.f32 %v7433, %v7450
    %v7499 = vmul.f32 %v7434, %v7450
    %v7500 = vmul.f32 %v7435, %v7450
    %v7501 = vmul.f32 %v7436, %v7450
    %v7502 = vmul.f32 %v7437, %v7450
    %v7503 = vmul.f32 %v7438, %v7450
    %v7504 = vmul.f32 %v7439, %v7450
    %v7505 = vmul.f32 %v7440, %v7450
    %v7506 = vmul.f32 %v7441, %v7450
    %v7507 = vmul.f32 %v7442, %v7450
    %v7508 = vmul.f32 %v7443, %v7450
    %v7509 = vmul.f32 %v7444, %v7450
    %v7510 = vmul.f32 %v7445, %v7450
    %v7511 = vmul.f32 %v7446, %v7450
    %v7512 = vmul.f32 %v7447, %v7450
    %v7513 = vmul.f32 %v7448, %v7450
    %v7514 = vmul.f32 %v7449, %v7450
    %v7515 = vsel %vm4899, %v7451, 0.0
    %7516 = vadd.xlane.f32.xlu0 %v7515
    %v7517 = vpop.xlane.xlu0 %7516
    %v7518 = vsel %vm4899, %v7452, 0.0
    %7519 = vadd.xlane.f32.xlu0 %v7518
    %v7520 = vpop.xlane.xlu0 %7519
    %v7521 = vsel %vm4899, %v7453, 0.0
    %7522 = vadd.xlane.f32.xlu0 %v7521
    %v7523 = vpop.xlane.xlu0 %7522
    %v7524 = vsel %vm4899, %v7454, 0.0
    %7525 = vadd.xlane.f32.xlu0 %v7524
    %v7526 = vpop.xlane.xlu0 %7525
    %v7527 = vsel %vm4899, %v7455, 0.0
    %7528 = vadd.xlane.f32.xlu0 %v7527
    %v7529 = vpop.xlane.xlu0 %7528
    %v7530 = vsel %vm4899, %v7456, 0.0
    %7531 = vadd.xlane.f32.xlu0 %v7530
    %v7532 = vpop.xlane.xlu0 %7531
    %v7533 = vsel %vm4899, %v7457, 0.0
    %7534 = vadd.xlane.f32.xlu0 %v7533
    %v7535 = vpop.xlane.xlu0 %7534
    %v7536 = vsel %vm4899, %v7458, 0.0
    %7537 = vadd.xlane.f32.xlu0 %v7536
    %v7538 = vpop.xlane.xlu0 %7537
    %v7539 = vsel %vm4899, %v7459, 0.0
    %7540 = vadd.xlane.f32.xlu0 %v7539
    %v7541 = vpop.xlane.xlu0 %7540
    %v7542 = vsel %vm4899, %v7460, 0.0
    %7543 = vadd.xlane.f32.xlu0 %v7542
    %v7544 = vpop.xlane.xlu0 %7543
    %v7545 = vsel %vm4899, %v7461, 0.0
    %7546 = vadd.xlane.f32.xlu0 %v7545
    %v7547 = vpop.xlane.xlu0 %7546
    %v7548 = vsel %vm4899, %v7462, 0.0
    %7549 = vadd.xlane.f32.xlu0 %v7548
    %v7550 = vpop.xlane.xlu0 %7549
    %v7551 = vsel %vm4899, %v7463, 0.0
    %7552 = vadd.xlane.f32.xlu0 %v7551
    %v7553 = vpop.xlane.xlu0 %7552
    %v7554 = vsel %vm4899, %v7464, 0.0
    %7555 = vadd.xlane.f32.xlu0 %v7554
    %v7556 = vpop.xlane.xlu0 %7555
    %v7557 = vsel %vm4899, %v7465, 0.0
    %7558 = vadd.xlane.f32.xlu0 %v7557
    %v7559 = vpop.xlane.xlu0 %7558
    %v7560 = vsel %vm4899, %v7466, 0.0
    %7561 = vadd.xlane.f32.xlu0 %v7560
    %v7562 = vpop.xlane.xlu0 %7561
    %v7563 = vsel %vm4899, %v7467, 0.0
    %7564 = vadd.xlane.f32.xlu0 %v7563
    %v7565 = vpop.xlane.xlu0 %7564
    %v7566 = vsel %vm4899, %v7468, 0.0
    %7567 = vadd.xlane.f32.xlu0 %v7566
    %v7568 = vpop.xlane.xlu0 %7567
    %v7569 = vsel %vm4899, %v7469, 0.0
    %7570 = vadd.xlane.f32.xlu0 %v7569
    %v7571 = vpop.xlane.xlu0 %7570
    %v7572 = vsel %vm4899, %v7470, 0.0
    %7573 = vadd.xlane.f32.xlu0 %v7572
    %v7574 = vpop.xlane.xlu0 %7573
    %v7575 = vsel %vm4899, %v7471, 0.0
    %7576 = vadd.xlane.f32.xlu0 %v7575
    %v7577 = vpop.xlane.xlu0 %7576
    %v7578 = vsel %vm4899, %v7472, 0.0
    %7579 = vadd.xlane.f32.xlu0 %v7578
    %v7580 = vpop.xlane.xlu0 %7579
    %v7581 = vsel %vm4899, %v7473, 0.0
    %7582 = vadd.xlane.f32.xlu0 %v7581
    %v7583 = vpop.xlane.xlu0 %7582
    %v7584 = vsel %vm4899, %v7474, 0.0
    %7585 = vadd.xlane.f32.xlu0 %v7584
    %v7586 = vpop.xlane.xlu0 %7585
    %v7587 = vsel %vm4899, %v7475, 0.0
    %7588 = vadd.xlane.f32.xlu0 %v7587
    %v7589 = vpop.xlane.xlu0 %7588
    %v7590 = vsel %vm4899, %v7476, 0.0
    %7591 = vadd.xlane.f32.xlu0 %v7590
    %v7592 = vpop.xlane.xlu0 %7591
    %v7593 = vsel %vm4899, %v7477, 0.0
    %7594 = vadd.xlane.f32.xlu0 %v7593
    %v7595 = vpop.xlane.xlu0 %7594
    %v7596 = vsel %vm4899, %v7478, 0.0
    %7597 = vadd.xlane.f32.xlu0 %v7596
    %v7598 = vpop.xlane.xlu0 %7597
    %v7599 = vsel %vm4899, %v7479, 0.0
    %7600 = vadd.xlane.f32.xlu0 %v7599
    %v7601 = vpop.xlane.xlu0 %7600
    %v7602 = vsel %vm4899, %v7480, 0.0
    %7603 = vadd.xlane.f32.xlu0 %v7602
    %v7604 = vpop.xlane.xlu0 %7603
    %v7605 = vsel %vm4899, %v7481, 0.0
    %7606 = vadd.xlane.f32.xlu0 %v7605
    %v7607 = vpop.xlane.xlu0 %7606
    %v7608 = vsel %vm4899, %v7482, 0.0
    %7609 = vadd.xlane.f32.xlu0 %v7608
    %v7610 = vpop.xlane.xlu0 %7609
    %v7611 = vsel %vm4899, %v7483, 0.0
    %7612 = vadd.xlane.f32.xlu0 %v7611
    %v7613 = vpop.xlane.xlu0 %7612
    %v7614 = vsel %vm4899, %v7484, 0.0
    %7615 = vadd.xlane.f32.xlu0 %v7614
    %v7616 = vpop.xlane.xlu0 %7615
    %v7617 = vsel %vm4899, %v7485, 0.0
    %7618 = vadd.xlane.f32.xlu0 %v7617
    %v7619 = vpop.xlane.xlu0 %7618
    %v7620 = vsel %vm4899, %v7486, 0.0
    %7621 = vadd.xlane.f32.xlu0 %v7620
    %v7622 = vpop.xlane.xlu0 %7621
    %v7623 = vsel %vm4899, %v7487, 0.0
    %7624 = vadd.xlane.f32.xlu0 %v7623
    %v7625 = vpop.xlane.xlu0 %7624
    %v7626 = vsel %vm4899, %v7488, 0.0
    %7627 = vadd.xlane.f32.xlu0 %v7626
    %v7628 = vpop.xlane.xlu0 %7627
    %v7629 = vsel %vm4899, %v7489, 0.0
    %7630 = vadd.xlane.f32.xlu0 %v7629
    %v7631 = vpop.xlane.xlu0 %7630
    %v7632 = vsel %vm4899, %v7490, 0.0
    %7633 = vadd.xlane.f32.xlu0 %v7632
    %v7634 = vpop.xlane.xlu0 %7633
    %v7635 = vsel %vm4899, %v7491, 0.0
    %7636 = vadd.xlane.f32.xlu0 %v7635
    %v7637 = vpop.xlane.xlu0 %7636
    %v7638 = vsel %vm4899, %v7492, 0.0
    %7639 = vadd.xlane.f32.xlu0 %v7638
    %v7640 = vpop.xlane.xlu0 %7639
    %v7641 = vsel %vm4899, %v7493, 0.0
    %7642 = vadd.xlane.f32.xlu0 %v7641
    %v7643 = vpop.xlane.xlu0 %7642
    %v7644 = vsel %vm4899, %v7494, 0.0
    %7645 = vadd.xlane.f32.xlu0 %v7644
    %v7646 = vpop.xlane.xlu0 %7645
    %v7647 = vsel %vm4899, %v7495, 0.0
    %7648 = vadd.xlane.f32.xlu0 %v7647
    %v7649 = vpop.xlane.xlu0 %7648
    %v7650 = vsel %vm4899, %v7496, 0.0
    %7651 = vadd.xlane.f32.xlu0 %v7650
    %v7652 = vpop.xlane.xlu0 %7651
    %v7653 = vsel %vm4899, %v7497, 0.0
    %7654 = vadd.xlane.f32.xlu0 %v7653
    %v7655 = vpop.xlane.xlu0 %7654
    %v7656 = vsel %vm4899, %v7498, 0.0
    %7657 = vadd.xlane.f32.xlu0 %v7656
    %v7658 = vpop.xlane.xlu0 %7657
    %v7659 = vsel %vm4899, %v7499, 0.0
    %7660 = vadd.xlane.f32.xlu0 %v7659
    %v7661 = vpop.xlane.xlu0 %7660
    %v7662 = vsel %vm4899, %v7500, 0.0
    %7663 = vadd.xlane.f32.xlu0 %v7662
    %v7664 = vpop.xlane.xlu0 %7663
    %v7665 = vsel %vm4899, %v7501, 0.0
    %7666 = vadd.xlane.f32.xlu0 %v7665
    %v7667 = vpop.xlane.xlu0 %7666
    %v7668 = vsel %vm4899, %v7502, 0.0
    %7669 = vadd.xlane.f32.xlu0 %v7668
    %v7670 = vpop.xlane.xlu0 %7669
    %v7671 = vsel %vm4899, %v7503, 0.0
    %7672 = vadd.xlane.f32.xlu0 %v7671
    %v7673 = vpop.xlane.xlu0 %7672
    %v7674 = vsel %vm4899, %v7504, 0.0
    %7675 = vadd.xlane.f32.xlu0 %v7674
    %v7676 = vpop.xlane.xlu0 %7675
    %v7677 = vsel %vm4899, %v7505, 0.0
    %7678 = vadd.xlane.f32.xlu0 %v7677
    %v7679 = vpop.xlane.xlu0 %7678
    %v7680 = vsel %vm4899, %v7506, 0.0
    %7681 = vadd.xlane.f32.xlu0 %v7680
    %v7682 = vpop.xlane.xlu0 %7681
    %v7683 = vsel %vm4899, %v7507, 0.0
    %7684 = vadd.xlane.f32.xlu0 %v7683
    %v7685 = vpop.xlane.xlu0 %7684
    %v7686 = vsel %vm4899, %v7508, 0.0
    %7687 = vadd.xlane.f32.xlu0 %v7686
    %v7688 = vpop.xlane.xlu0 %7687
    %v7689 = vsel %vm4899, %v7509, 0.0
    %7690 = vadd.xlane.f32.xlu0 %v7689
    %v7691 = vpop.xlane.xlu0 %7690
    %v7692 = vsel %vm4899, %v7510, 0.0
    %7693 = vadd.xlane.f32.xlu0 %v7692
    %v7694 = vpop.xlane.xlu0 %7693
    %v7695 = vsel %vm4899, %v7511, 0.0
    %7696 = vadd.xlane.f32.xlu0 %v7695
    %v7697 = vpop.xlane.xlu0 %7696
    %v7698 = vsel %vm4899, %v7512, 0.0
    %7699 = vadd.xlane.f32.xlu0 %v7698
    %v7700 = vpop.xlane.xlu0 %7699
    %v7701 = vsel %vm4899, %v7513, 0.0
    %7702 = vadd.xlane.f32.xlu0 %v7701
    %v7703 = vpop.xlane.xlu0 %7702
    %v7704 = vsel %vm4899, %v7514, 0.0
    %7705 = vadd.xlane.f32.xlu0 %v7704
    %v7706 = vpop.xlane.xlu0 %7705
    %v7707 = vadd.f32 %v7322, %v7517
    %v7708 = vadd.f32 %v7323, %v7520
    %v7709 = vadd.f32 %v7324, %v7523
    %v7710 = vadd.f32 %v7325, %v7526
    %v7711 = vadd.f32 %v7326, %v7529
    %v7712 = vadd.f32 %v7327, %v7532
    %v7713 = vadd.f32 %v7328, %v7535
    %v7714 = vadd.f32 %v7329, %v7538
    %v7715 = vadd.f32 %v7330, %v7541
    %v7716 = vadd.f32 %v7331, %v7544
    %v7717 = vadd.f32 %v7332, %v7547
    %v7718 = vadd.f32 %v7333, %v7550
    %v7719 = vadd.f32 %v7334, %v7553
    %v7720 = vadd.f32 %v7335, %v7556
    %v7721 = vadd.f32 %v7336, %v7559
    %v7722 = vadd.f32 %v7337, %v7562
    %v7723 = vadd.f32 %v7338, %v7565
    %v7724 = vadd.f32 %v7339, %v7568
    %v7725 = vadd.f32 %v7340, %v7571
    %v7726 = vadd.f32 %v7341, %v7574
    %v7727 = vadd.f32 %v7342, %v7577
    %v7728 = vadd.f32 %v7343, %v7580
    %v7729 = vadd.f32 %v7344, %v7583
    %v7730 = vadd.f32 %v7345, %v7586
    %v7731 = vadd.f32 %v7346, %v7589
    %v7732 = vadd.f32 %v7347, %v7592
    %v7733 = vadd.f32 %v7348, %v7595
    %v7734 = vadd.f32 %v7349, %v7598
    %v7735 = vadd.f32 %v7350, %v7601
    %v7736 = vadd.f32 %v7351, %v7604
    %v7737 = vadd.f32 %v7352, %v7607
    %v7738 = vadd.f32 %v7353, %v7610
    %v7739 = vadd.f32 %v7354, %v7613
    %v7740 = vadd.f32 %v7355, %v7616
    %v7741 = vadd.f32 %v7356, %v7619
    %v7742 = vadd.f32 %v7357, %v7622
    %v7743 = vadd.f32 %v7358, %v7625
    %v7744 = vadd.f32 %v7359, %v7628
    %v7745 = vadd.f32 %v7360, %v7631
    %v7746 = vadd.f32 %v7361, %v7634
    %v7747 = vadd.f32 %v7362, %v7637
    %v7748 = vadd.f32 %v7363, %v7640
    %v7749 = vadd.f32 %v7364, %v7643
    %v7750 = vadd.f32 %v7365, %v7646
    %v7751 = vadd.f32 %v7366, %v7649
    %v7752 = vadd.f32 %v7367, %v7652
    %v7753 = vadd.f32 %v7368, %v7655
    %v7754 = vadd.f32 %v7369, %v7658
    %v7755 = vadd.f32 %v7370, %v7661
    %v7756 = vadd.f32 %v7371, %v7664
    %v7757 = vadd.f32 %v7372, %v7667
    %v7758 = vadd.f32 %v7373, %v7670
    %v7759 = vadd.f32 %v7374, %v7673
    %v7760 = vadd.f32 %v7375, %v7676
    %v7761 = vadd.f32 %v7376, %v7679
    %v7762 = vadd.f32 %v7377, %v7682
    %v7763 = vadd.f32 %v7378, %v7685
    %v7764 = vadd.f32 %v7379, %v7688
    %v7765 = vadd.f32 %v7380, %v7691
    %v7766 = vadd.f32 %v7381, %v7694
    %v7767 = vadd.f32 %v7382, %v7697
    %v7768 = vadd.f32 %v7383, %v7700
    %v7769 = vadd.f32 %v7384, %v7703
    %v7770 = vadd.f32 %v7385, %v7706
    %v7771 = vld [vmem:[%s5714 + $0x9] sm:$0xff]
    %v7772 = vld [vmem:[%s5714 + $0x11] sm:$0xff]
    %v7773 = vld [vmem:[%s5714 + $0x29] sm:$0xff]
    %v7774 = vld [vmem:[%s5714 + $0x31] sm:$0xff]
    %v7775 = vld [vmem:[%s5714 + $0x49] sm:$0xff]
    %v7776 = vld [vmem:[%s5714 + $0x51] sm:$0xff]
    %v7777 = vld [vmem:[%s5714 + $0x69] sm:$0xff]
    %v7778 = vld [vmem:[%s5714 + $0x71] sm:$0xff]
    %v7779 = vld [vmem:[%s5714 + $0x89] sm:$0xff]
    %v7780 = vld [vmem:[%s5714 + $0x91] sm:$0xff]
    %v7781 = vld [vmem:[%s5714 + $0xa9] sm:$0xff]
    %v7782 = vld [vmem:[%s5714 + $0xb1] sm:$0xff]
    %v7783 = vld [vmem:[%s5714 + $0xc9] sm:$0xff]
    %v7784 = vld [vmem:[%s5714 + $0xd1] sm:$0xff]
    %v7785 = vld [vmem:[%s5714 + $0xe9] sm:$0xff]
    %v7786 = vld [vmem:[%s5714 + $0xf1] sm:$0xff]
    %v7787 = vld [vmem:[%s5714 + $0x109] sm:$0xff]
    %v7788 = vld [vmem:[%s5714 + $0x111] sm:$0xff]
    %v7789 = vld [vmem:[%s5714 + $0x129] sm:$0xff]
    %v7790 = vld [vmem:[%s5714 + $0x131] sm:$0xff]
    %v7791 = vld [vmem:[%s5714 + $0x149] sm:$0xff]
    %v7792 = vld [vmem:[%s5714 + $0x151] sm:$0xff]
    %v7793 = vld [vmem:[%s5714 + $0x169] sm:$0xff]
    %v7794 = vld [vmem:[%s5714 + $0x171] sm:$0xff]
    %v7795 = vld [vmem:[%s5714 + $0x189] sm:$0xff]
    %v7796 = vld [vmem:[%s5714 + $0x191] sm:$0xff]
    %v7797 = vld [vmem:[%s5714 + $0x1a9] sm:$0xff]
    %v7798 = vld [vmem:[%s5714 + $0x1b1] sm:$0xff]
    %v7799 = vld [vmem:[%s5714 + $0x1c9] sm:$0xff]
    %v7800 = vld [vmem:[%s5714 + $0x1d1] sm:$0xff]
    %v7801 = vld [vmem:[%s5714 + $0x1e9] sm:$0xff]
    %v7802 = vld [vmem:[%s5714 + $0x1f1] sm:$0xff]
    %v7803 = vld [vmem:[%s5714 + $0x249] sm:$0xff]
    %v7804 = vld [vmem:[%s5714 + $0x251] sm:$0xff]
    %v7805 = vld [vmem:[%s5714 + $0x269] sm:$0xff]
    %v7806 = vld [vmem:[%s5714 + $0x271] sm:$0xff]
    %v7807 = vld [vmem:[%s5714 + $0x289] sm:$0xff]
    %v7808 = vld [vmem:[%s5714 + $0x291] sm:$0xff]
    %v7809 = vld [vmem:[%s5714 + $0x2a9] sm:$0xff]
    %v7810 = vld [vmem:[%s5714 + $0x2b1] sm:$0xff]
    %v7811 = vld [vmem:[%s5714 + $0x2c9] sm:$0xff]
    %v7812 = vld [vmem:[%s5714 + $0x2d1] sm:$0xff]
    %v7813 = vld [vmem:[%s5714 + $0x2e9] sm:$0xff]
    %v7814 = vld [vmem:[%s5714 + $0x2f1] sm:$0xff]
    %v7815 = vld [vmem:[%s5714 + $0x309] sm:$0xff]
    %v7816 = vld [vmem:[%s5714 + $0x311] sm:$0xff]
    %v7817 = vld [vmem:[%s5714 + $0x329] sm:$0xff]
    %v7818 = vld [vmem:[%s5714 + $0x331] sm:$0xff]
    %v7819 = vld [vmem:[%s5714 + $0x349] sm:$0xff]
    %v7820 = vld [vmem:[%s5714 + $0x351] sm:$0xff]
    %v7821 = vld [vmem:[%s5714 + $0x369] sm:$0xff]
    %v7822 = vld [vmem:[%s5714 + $0x371] sm:$0xff]
    %v7823 = vld [vmem:[%s5714 + $0x389] sm:$0xff]
    %v7824 = vld [vmem:[%s5714 + $0x391] sm:$0xff]
    %v7825 = vld [vmem:[%s5714 + $0x3a9] sm:$0xff]
    %v7826 = vld [vmem:[%s5714 + $0x3b1] sm:$0xff]
    %v7827 = vld [vmem:[%s5714 + $0x3c9] sm:$0xff]
    %v7828 = vld [vmem:[%s5714 + $0x3d1] sm:$0xff]
    %v7829 = vld [vmem:[%s5714 + $0x3e9] sm:$0xff]
    %v7830 = vld [vmem:[%s5714 + $0x3f1] sm:$0xff]
    %v7831 = vld [vmem:[%s5714 + $0x409] sm:$0xff]
    %v7832 = vld [vmem:[%s5714 + $0x411] sm:$0xff]
    %v7833 = vld [vmem:[%s5714 + $0x429] sm:$0xff]
    %v7834 = vld [vmem:[%s5714 + $0x431] sm:$0xff]
    %v7835 = vperm.slane %v5844, 5
    %v7836 = vmul.f32 %v7771, %v7835
    %v7837 = vmul.f32 %v7772, %v7835
    %v7838 = vmul.f32 %v7773, %v7835
    %v7839 = vmul.f32 %v7774, %v7835
    %v7840 = vmul.f32 %v7775, %v7835
    %v7841 = vmul.f32 %v7776, %v7835
    %v7842 = vmul.f32 %v7777, %v7835
    %v7843 = vmul.f32 %v7778, %v7835
    %v7844 = vmul.f32 %v7779, %v7835
    %v7845 = vmul.f32 %v7780, %v7835
    %v7846 = vmul.f32 %v7781, %v7835
    %v7847 = vmul.f32 %v7782, %v7835
    %v7848 = vmul.f32 %v7783, %v7835
    %v7849 = vmul.f32 %v7784, %v7835
    %v7850 = vmul.f32 %v7785, %v7835
    %v7851 = vmul.f32 %v7786, %v7835
    %v7852 = vmul.f32 %v7787, %v7835
    %v7853 = vmul.f32 %v7788, %v7835
    %v7854 = vmul.f32 %v7789, %v7835
    %v7855 = vmul.f32 %v7790, %v7835
    %v7856 = vmul.f32 %v7791, %v7835
    %v7857 = vmul.f32 %v7792, %v7835
    %v7858 = vmul.f32 %v7793, %v7835
    %v7859 = vmul.f32 %v7794, %v7835
    %v7860 = vmul.f32 %v7795, %v7835
    %v7861 = vmul.f32 %v7796, %v7835
    %v7862 = vmul.f32 %v7797, %v7835
    %v7863 = vmul.f32 %v7798, %v7835
    %v7864 = vmul.f32 %v7799, %v7835
    %v7865 = vmul.f32 %v7800, %v7835
    %v7866 = vmul.f32 %v7801, %v7835
    %v7867 = vmul.f32 %v7802, %v7835
    %v7868 = vmul.f32 %v7803, %v7835
    %v7869 = vmul.f32 %v7804, %v7835
    %v7870 = vmul.f32 %v7805, %v7835
    %v7871 = vmul.f32 %v7806, %v7835
    %v7872 = vmul.f32 %v7807, %v7835
    %v7873 = vmul.f32 %v7808, %v7835
    %v7874 = vmul.f32 %v7809, %v7835
    %v7875 = vmul.f32 %v7810, %v7835
    %v7876 = vmul.f32 %v7811, %v7835
    %v7877 = vmul.f32 %v7812, %v7835
    %v7878 = vmul.f32 %v7813, %v7835
    %v7879 = vmul.f32 %v7814, %v7835
    %v7880 = vmul.f32 %v7815, %v7835
    %v7881 = vmul.f32 %v7816, %v7835
    %v7882 = vmul.f32 %v7817, %v7835
    %v7883 = vmul.f32 %v7818, %v7835
    %v7884 = vmul.f32 %v7819, %v7835
    %v7885 = vmul.f32 %v7820, %v7835
    %v7886 = vmul.f32 %v7821, %v7835
    %v7887 = vmul.f32 %v7822, %v7835
    %v7888 = vmul.f32 %v7823, %v7835
    %v7889 = vmul.f32 %v7824, %v7835
    %v7890 = vmul.f32 %v7825, %v7835
    %v7891 = vmul.f32 %v7826, %v7835
    %v7892 = vmul.f32 %v7827, %v7835
    %v7893 = vmul.f32 %v7828, %v7835
    %v7894 = vmul.f32 %v7829, %v7835
    %v7895 = vmul.f32 %v7830, %v7835
    %v7896 = vmul.f32 %v7831, %v7835
    %v7897 = vmul.f32 %v7832, %v7835
    %v7898 = vmul.f32 %v7833, %v7835
    %v7899 = vmul.f32 %v7834, %v7835
    %v7900 = vsel %vm4899, %v7836, 0.0
    %7901 = vadd.xlane.f32.xlu0 %v7900
    %v7902 = vpop.xlane.xlu0 %7901
    %v7903 = vsel %vm4899, %v7837, 0.0
    %7904 = vadd.xlane.f32.xlu0 %v7903
    %v7905 = vpop.xlane.xlu0 %7904
    %v7906 = vsel %vm4899, %v7838, 0.0
    %7907 = vadd.xlane.f32.xlu0 %v7906
    %v7908 = vpop.xlane.xlu0 %7907
    %v7909 = vsel %vm4899, %v7839, 0.0
    %7910 = vadd.xlane.f32.xlu0 %v7909
    %v7911 = vpop.xlane.xlu0 %7910
    %v7912 = vsel %vm4899, %v7840, 0.0
    %7913 = vadd.xlane.f32.xlu0 %v7912
    %v7914 = vpop.xlane.xlu0 %7913
    %v7915 = vsel %vm4899, %v7841, 0.0
    %7916 = vadd.xlane.f32.xlu0 %v7915
    %v7917 = vpop.xlane.xlu0 %7916
    %v7918 = vsel %vm4899, %v7842, 0.0
    %7919 = vadd.xlane.f32.xlu0 %v7918
    %v7920 = vpop.xlane.xlu0 %7919
    %v7921 = vsel %vm4899, %v7843, 0.0
    %7922 = vadd.xlane.f32.xlu0 %v7921
    %v7923 = vpop.xlane.xlu0 %7922
    %v7924 = vsel %vm4899, %v7844, 0.0
    %7925 = vadd.xlane.f32.xlu0 %v7924
    %v7926 = vpop.xlane.xlu0 %7925
    %v7927 = vsel %vm4899, %v7845, 0.0
    %7928 = vadd.xlane.f32.xlu0 %v7927
    %v7929 = vpop.xlane.xlu0 %7928
    %v7930 = vsel %vm4899, %v7846, 0.0
    %7931 = vadd.xlane.f32.xlu0 %v7930
    %v7932 = vpop.xlane.xlu0 %7931
    %v7933 = vsel %vm4899, %v7847, 0.0
    %7934 = vadd.xlane.f32.xlu0 %v7933
    %v7935 = vpop.xlane.xlu0 %7934
    %v7936 = vsel %vm4899, %v7848, 0.0
    %7937 = vadd.xlane.f32.xlu0 %v7936
    %v7938 = vpop.xlane.xlu0 %7937
    %v7939 = vsel %vm4899, %v7849, 0.0
    %7940 = vadd.xlane.f32.xlu0 %v7939
    %v7941 = vpop.xlane.xlu0 %7940
    %v7942 = vsel %vm4899, %v7850, 0.0
    %7943 = vadd.xlane.f32.xlu0 %v7942
    %v7944 = vpop.xlane.xlu0 %7943
    %v7945 = vsel %vm4899, %v7851, 0.0
    %7946 = vadd.xlane.f32.xlu0 %v7945
    %v7947 = vpop.xlane.xlu0 %7946
    %v7948 = vsel %vm4899, %v7852, 0.0
    %7949 = vadd.xlane.f32.xlu0 %v7948
    %v7950 = vpop.xlane.xlu0 %7949
    %v7951 = vsel %vm4899, %v7853, 0.0
    %7952 = vadd.xlane.f32.xlu0 %v7951
    %v7953 = vpop.xlane.xlu0 %7952
    %v7954 = vsel %vm4899, %v7854, 0.0
    %7955 = vadd.xlane.f32.xlu0 %v7954
    %v7956 = vpop.xlane.xlu0 %7955
    %v7957 = vsel %vm4899, %v7855, 0.0
    %7958 = vadd.xlane.f32.xlu0 %v7957
    %v7959 = vpop.xlane.xlu0 %7958
    %v7960 = vsel %vm4899, %v7856, 0.0
    %7961 = vadd.xlane.f32.xlu0 %v7960
    %v7962 = vpop.xlane.xlu0 %7961
    %v7963 = vsel %vm4899, %v7857, 0.0
    %7964 = vadd.xlane.f32.xlu0 %v7963
    %v7965 = vpop.xlane.xlu0 %7964
    %v7966 = vsel %vm4899, %v7858, 0.0
    %7967 = vadd.xlane.f32.xlu0 %v7966
    %v7968 = vpop.xlane.xlu0 %7967
    %v7969 = vsel %vm4899, %v7859, 0.0
    %7970 = vadd.xlane.f32.xlu0 %v7969
    %v7971 = vpop.xlane.xlu0 %7970
    %v7972 = vsel %vm4899, %v7860, 0.0
    %7973 = vadd.xlane.f32.xlu0 %v7972
    %v7974 = vpop.xlane.xlu0 %7973
    %v7975 = vsel %vm4899, %v7861, 0.0
    %7976 = vadd.xlane.f32.xlu0 %v7975
    %v7977 = vpop.xlane.xlu0 %7976
    %v7978 = vsel %vm4899, %v7862, 0.0
    %7979 = vadd.xlane.f32.xlu0 %v7978
    %v7980 = vpop.xlane.xlu0 %7979
    %v7981 = vsel %vm4899, %v7863, 0.0
    %7982 = vadd.xlane.f32.xlu0 %v7981
    %v7983 = vpop.xlane.xlu0 %7982
    %v7984 = vsel %vm4899, %v7864, 0.0
    %7985 = vadd.xlane.f32.xlu0 %v7984
    %v7986 = vpop.xlane.xlu0 %7985
    %v7987 = vsel %vm4899, %v7865, 0.0
    %7988 = vadd.xlane.f32.xlu0 %v7987
    %v7989 = vpop.xlane.xlu0 %7988
    %v7990 = vsel %vm4899, %v7866, 0.0
    %7991 = vadd.xlane.f32.xlu0 %v7990
    %v7992 = vpop.xlane.xlu0 %7991
    %v7993 = vsel %vm4899, %v7867, 0.0
    %7994 = vadd.xlane.f32.xlu0 %v7993
    %v7995 = vpop.xlane.xlu0 %7994
    %v7996 = vsel %vm4899, %v7868, 0.0
    %7997 = vadd.xlane.f32.xlu0 %v7996
    %v7998 = vpop.xlane.xlu0 %7997
    %v7999 = vsel %vm4899, %v7869, 0.0
    %8000 = vadd.xlane.f32.xlu0 %v7999
    %v8001 = vpop.xlane.xlu0 %8000
    %v8002 = vsel %vm4899, %v7870, 0.0
    %8003 = vadd.xlane.f32.xlu0 %v8002
    %v8004 = vpop.xlane.xlu0 %8003
    %v8005 = vsel %vm4899, %v7871, 0.0
    %8006 = vadd.xlane.f32.xlu0 %v8005
    %v8007 = vpop.xlane.xlu0 %8006
    %v8008 = vsel %vm4899, %v7872, 0.0
    %8009 = vadd.xlane.f32.xlu0 %v8008
    %v8010 = vpop.xlane.xlu0 %8009
    %v8011 = vsel %vm4899, %v7873, 0.0
    %8012 = vadd.xlane.f32.xlu0 %v8011
    %v8013 = vpop.xlane.xlu0 %8012
    %v8014 = vsel %vm4899, %v7874, 0.0
    %8015 = vadd.xlane.f32.xlu0 %v8014
    %v8016 = vpop.xlane.xlu0 %8015
    %v8017 = vsel %vm4899, %v7875, 0.0
    %8018 = vadd.xlane.f32.xlu0 %v8017
    %v8019 = vpop.xlane.xlu0 %8018
    %v8020 = vsel %vm4899, %v7876, 0.0
    %8021 = vadd.xlane.f32.xlu0 %v8020
    %v8022 = vpop.xlane.xlu0 %8021
    %v8023 = vsel %vm4899, %v7877, 0.0
    %8024 = vadd.xlane.f32.xlu0 %v8023
    %v8025 = vpop.xlane.xlu0 %8024
    %v8026 = vsel %vm4899, %v7878, 0.0
    %8027 = vadd.xlane.f32.xlu0 %v8026
    %v8028 = vpop.xlane.xlu0 %8027
    %v8029 = vsel %vm4899, %v7879, 0.0
    %8030 = vadd.xlane.f32.xlu0 %v8029
    %v8031 = vpop.xlane.xlu0 %8030
    %v8032 = vsel %vm4899, %v7880, 0.0
    %8033 = vadd.xlane.f32.xlu0 %v8032
    %v8034 = vpop.xlane.xlu0 %8033
    %v8035 = vsel %vm4899, %v7881, 0.0
    %8036 = vadd.xlane.f32.xlu0 %v8035
    %v8037 = vpop.xlane.xlu0 %8036
    %v8038 = vsel %vm4899, %v7882, 0.0
    %8039 = vadd.xlane.f32.xlu0 %v8038
    %v8040 = vpop.xlane.xlu0 %8039
    %v8041 = vsel %vm4899, %v7883, 0.0
    %8042 = vadd.xlane.f32.xlu0 %v8041
    %v8043 = vpop.xlane.xlu0 %8042
    %v8044 = vsel %vm4899, %v7884, 0.0
    %8045 = vadd.xlane.f32.xlu0 %v8044
    %v8046 = vpop.xlane.xlu0 %8045
    %v8047 = vsel %vm4899, %v7885, 0.0
    %8048 = vadd.xlane.f32.xlu0 %v8047
    %v8049 = vpop.xlane.xlu0 %8048
    %v8050 = vsel %vm4899, %v7886, 0.0
    %8051 = vadd.xlane.f32.xlu0 %v8050
    %v8052 = vpop.xlane.xlu0 %8051
    %v8053 = vsel %vm4899, %v7887, 0.0
    %8054 = vadd.xlane.f32.xlu0 %v8053
    %v8055 = vpop.xlane.xlu0 %8054
    %v8056 = vsel %vm4899, %v7888, 0.0
    %8057 = vadd.xlane.f32.xlu0 %v8056
    %v8058 = vpop.xlane.xlu0 %8057
    %v8059 = vsel %vm4899, %v7889, 0.0
    %8060 = vadd.xlane.f32.xlu0 %v8059
    %v8061 = vpop.xlane.xlu0 %8060
    %v8062 = vsel %vm4899, %v7890, 0.0
    %8063 = vadd.xlane.f32.xlu0 %v8062
    %v8064 = vpop.xlane.xlu0 %8063
    %v8065 = vsel %vm4899, %v7891, 0.0
    %8066 = vadd.xlane.f32.xlu0 %v8065
    %v8067 = vpop.xlane.xlu0 %8066
    %v8068 = vsel %vm4899, %v7892, 0.0
    %8069 = vadd.xlane.f32.xlu0 %v8068
    %v8070 = vpop.xlane.xlu0 %8069
    %v8071 = vsel %vm4899, %v7893, 0.0
    %8072 = vadd.xlane.f32.xlu0 %v8071
    %v8073 = vpop.xlane.xlu0 %8072
    %v8074 = vsel %vm4899, %v7894, 0.0
    %8075 = vadd.xlane.f32.xlu0 %v8074
    %v8076 = vpop.xlane.xlu0 %8075
    %v8077 = vsel %vm4899, %v7895, 0.0
    %8078 = vadd.xlane.f32.xlu0 %v8077
    %v8079 = vpop.xlane.xlu0 %8078
    %v8080 = vsel %vm4899, %v7896, 0.0
    %8081 = vadd.xlane.f32.xlu0 %v8080
    %v8082 = vpop.xlane.xlu0 %8081
    %v8083 = vsel %vm4899, %v7897, 0.0
    %8084 = vadd.xlane.f32.xlu0 %v8083
    %v8085 = vpop.xlane.xlu0 %8084
    %v8086 = vsel %vm4899, %v7898, 0.0
    %8087 = vadd.xlane.f32.xlu0 %v8086
    %v8088 = vpop.xlane.xlu0 %8087
    %v8089 = vsel %vm4899, %v7899, 0.0
    %8090 = vadd.xlane.f32.xlu0 %v8089
    %v8091 = vpop.xlane.xlu0 %8090
    %v8092 = vadd.f32 %v7707, %v7902
    %v8093 = vadd.f32 %v7708, %v7905
    %v8094 = vadd.f32 %v7709, %v7908
    %v8095 = vadd.f32 %v7710, %v7911
    %v8096 = vadd.f32 %v7711, %v7914
    %v8097 = vadd.f32 %v7712, %v7917
    %v8098 = vadd.f32 %v7713, %v7920
    %v8099 = vadd.f32 %v7714, %v7923
    %v8100 = vadd.f32 %v7715, %v7926
    %v8101 = vadd.f32 %v7716, %v7929
    %v8102 = vadd.f32 %v7717, %v7932
    %v8103 = vadd.f32 %v7718, %v7935
    %v8104 = vadd.f32 %v7719, %v7938
    %v8105 = vadd.f32 %v7720, %v7941
    %v8106 = vadd.f32 %v7721, %v7944
    %v8107 = vadd.f32 %v7722, %v7947
    %v8108 = vadd.f32 %v7723, %v7950
    %v8109 = vadd.f32 %v7724, %v7953
    %v8110 = vadd.f32 %v7725, %v7956
    %v8111 = vadd.f32 %v7726, %v7959
    %v8112 = vadd.f32 %v7727, %v7962
    %v8113 = vadd.f32 %v7728, %v7965
    %v8114 = vadd.f32 %v7729, %v7968
    %v8115 = vadd.f32 %v7730, %v7971
    %v8116 = vadd.f32 %v7731, %v7974
    %v8117 = vadd.f32 %v7732, %v7977
    %v8118 = vadd.f32 %v7733, %v7980
    %v8119 = vadd.f32 %v7734, %v7983
    %v8120 = vadd.f32 %v7735, %v7986
    %v8121 = vadd.f32 %v7736, %v7989
    %v8122 = vadd.f32 %v7737, %v7992
    %v8123 = vadd.f32 %v7738, %v7995
    %v8124 = vadd.f32 %v7739, %v7998
    %v8125 = vadd.f32 %v7740, %v8001
    %v8126 = vadd.f32 %v7741, %v8004
    %v8127 = vadd.f32 %v7742, %v8007
    %v8128 = vadd.f32 %v7743, %v8010
    %v8129 = vadd.f32 %v7744, %v8013
    %v8130 = vadd.f32 %v7745, %v8016
    %v8131 = vadd.f32 %v7746, %v8019
    %v8132 = vadd.f32 %v7747, %v8022
    %v8133 = vadd.f32 %v7748, %v8025
    %v8134 = vadd.f32 %v7749, %v8028
    %v8135 = vadd.f32 %v7750, %v8031
    %v8136 = vadd.f32 %v7751, %v8034
    %v8137 = vadd.f32 %v7752, %v8037
    %v8138 = vadd.f32 %v7753, %v8040
    %v8139 = vadd.f32 %v7754, %v8043
    %v8140 = vadd.f32 %v7755, %v8046
    %v8141 = vadd.f32 %v7756, %v8049
    %v8142 = vadd.f32 %v7757, %v8052
    %v8143 = vadd.f32 %v7758, %v8055
    %v8144 = vadd.f32 %v7759, %v8058
    %v8145 = vadd.f32 %v7760, %v8061
    %v8146 = vadd.f32 %v7761, %v8064
    %v8147 = vadd.f32 %v7762, %v8067
    %v8148 = vadd.f32 %v7763, %v8070
    %v8149 = vadd.f32 %v7764, %v8073
    %v8150 = vadd.f32 %v7765, %v8076
    %v8151 = vadd.f32 %v7766, %v8079
    %v8152 = vadd.f32 %v7767, %v8082
    %v8153 = vadd.f32 %v7768, %v8085
    %v8154 = vadd.f32 %v7769, %v8088
    %v8155 = vadd.f32 %v7770, %v8091
    %s8156 = scalar_lea.vmem [#allocation4], 64
    %v8157 = vld [vmem:[%s8156 + $0x7] sm:$0xff]
    %v8158 = vld [vmem:[%s8156 + $0xf] sm:$0xff]
    %v8159 = vld [vmem:[%s8156 + $0x27] sm:$0xff]
    %v8160 = vld [vmem:[%s8156 + $0x2f] sm:$0xff]
    %v8161 = vld [vmem:[%s8156 + $0x47] sm:$0xff]
    %v8162 = vld [vmem:[%s8156 + $0x4f] sm:$0xff]
    %v8163 = vld [vmem:[%s8156 + $0x67] sm:$0xff]
    %v8164 = vld [vmem:[%s8156 + $0x6f] sm:$0xff]
    %v8165 = vld [vmem:[%s8156 + $0x87] sm:$0xff]
    %v8166 = vld [vmem:[%s8156 + $0x8f] sm:$0xff]
    %v8167 = vld [vmem:[%s8156 + $0xa7] sm:$0xff]
    %v8168 = vld [vmem:[%s8156 + $0xaf] sm:$0xff]
    %v8169 = vld [vmem:[%s8156 + $0xc7] sm:$0xff]
    %v8170 = vld [vmem:[%s8156 + $0xcf] sm:$0xff]
    %v8171 = vld [vmem:[%s8156 + $0xe7] sm:$0xff]
    %v8172 = vld [vmem:[%s8156 + $0xef] sm:$0xff]
    %v8173 = vld [vmem:[%s8156 + $0x107] sm:$0xff]
    %v8174 = vld [vmem:[%s8156 + $0x10f] sm:$0xff]
    %v8175 = vld [vmem:[%s8156 + $0x127] sm:$0xff]
    %v8176 = vld [vmem:[%s8156 + $0x12f] sm:$0xff]
    %v8177 = vld [vmem:[%s8156 + $0x147] sm:$0xff]
    %v8178 = vld [vmem:[%s8156 + $0x14f] sm:$0xff]
    %v8179 = vld [vmem:[%s8156 + $0x167] sm:$0xff]
    %v8180 = vld [vmem:[%s8156 + $0x16f] sm:$0xff]
    %v8181 = vld [vmem:[%s8156 + $0x187] sm:$0xff]
    %v8182 = vld [vmem:[%s8156 + $0x18f] sm:$0xff]
    %v8183 = vld [vmem:[%s8156 + $0x1a7] sm:$0xff]
    %v8184 = vld [vmem:[%s8156 + $0x1af] sm:$0xff]
    %v8185 = vld [vmem:[%s8156 + $0x1c7] sm:$0xff]
    %v8186 = vld [vmem:[%s8156 + $0x1cf] sm:$0xff]
    %v8187 = vld [vmem:[%s8156 + $0x1e7] sm:$0xff]
    %v8188 = vld [vmem:[%s8156 + $0x1ef] sm:$0xff]
    %v8189 = vld [vmem:[%s8156 + $0x247] sm:$0xff]
    %v8190 = vld [vmem:[%s8156 + $0x24f] sm:$0xff]
    %v8191 = vld [vmem:[%s8156 + $0x267] sm:$0xff]
    %v8192 = vld [vmem:[%s8156 + $0x26f] sm:$0xff]
    %v8193 = vld [vmem:[%s8156 + $0x287] sm:$0xff]
    %v8194 = vld [vmem:[%s8156 + $0x28f] sm:$0xff]
    %v8195 = vld [vmem:[%s8156 + $0x2a7] sm:$0xff]
    %v8196 = vld [vmem:[%s8156 + $0x2af] sm:$0xff]
    %v8197 = vld [vmem:[%s8156 + $0x2c7] sm:$0xff]
    %v8198 = vld [vmem:[%s8156 + $0x2cf] sm:$0xff]
    %v8199 = vld [vmem:[%s8156 + $0x2e7] sm:$0xff]
    %v8200 = vld [vmem:[%s8156 + $0x2ef] sm:$0xff]
    %v8201 = vld [vmem:[%s8156 + $0x307] sm:$0xff]
    %v8202 = vld [vmem:[%s8156 + $0x30f] sm:$0xff]
    %v8203 = vld [vmem:[%s8156 + $0x327] sm:$0xff]
    %v8204 = vld [vmem:[%s8156 + $0x32f] sm:$0xff]
    %v8205 = vld [vmem:[%s8156 + $0x347] sm:$0xff]
    %v8206 = vld [vmem:[%s8156 + $0x34f] sm:$0xff]
    %v8207 = vld [vmem:[%s8156 + $0x367] sm:$0xff]
    %v8208 = vld [vmem:[%s8156 + $0x36f] sm:$0xff]
    %v8209 = vld [vmem:[%s8156 + $0x387] sm:$0xff]
    %v8210 = vld [vmem:[%s8156 + $0x38f] sm:$0xff]
    %v8211 = vld [vmem:[%s8156 + $0x3a7] sm:$0xff]
    %v8212 = vld [vmem:[%s8156 + $0x3af] sm:$0xff]
    %v8213 = vld [vmem:[%s8156 + $0x3c7] sm:$0xff]
    %v8214 = vld [vmem:[%s8156 + $0x3cf] sm:$0xff]
    %v8215 = vld [vmem:[%s8156 + $0x3e7] sm:$0xff]
    %v8216 = vld [vmem:[%s8156 + $0x3ef] sm:$0xff]
    %v8217 = vld [vmem:[%s8156 + $0x407] sm:$0xff]
    %v8218 = vld [vmem:[%s8156 + $0x40f] sm:$0xff]
    %v8219 = vld [vmem:[%s8156 + $0x427] sm:$0xff]
    %v8220 = vld [vmem:[%s8156 + $0x42f] sm:$0xff]
    %v8221 = vperm.slane %v5844, 6
    %v8222 = vmul.f32 %v8157, %v8221
    %v8223 = vmul.f32 %v8158, %v8221
    %v8224 = vmul.f32 %v8159, %v8221
    %v8225 = vmul.f32 %v8160, %v8221
    %v8226 = vmul.f32 %v8161, %v8221
    %v8227 = vmul.f32 %v8162, %v8221
    %v8228 = vmul.f32 %v8163, %v8221
    %v8229 = vmul.f32 %v8164, %v8221
    %v8230 = vmul.f32 %v8165, %v8221
    %v8231 = vmul.f32 %v8166, %v8221
    %v8232 = vmul.f32 %v8167, %v8221
    %v8233 = vmul.f32 %v8168, %v8221
    %v8234 = vmul.f32 %v8169, %v8221
    %v8235 = vmul.f32 %v8170, %v8221
    %v8236 = vmul.f32 %v8171, %v8221
    %v8237 = vmul.f32 %v8172, %v8221
    %v8238 = vmul.f32 %v8173, %v8221
    %v8239 = vmul.f32 %v8174, %v8221
    %v8240 = vmul.f32 %v8175, %v8221
    %v8241 = vmul.f32 %v8176, %v8221
    %v8242 = vmul.f32 %v8177, %v8221
    %v8243 = vmul.f32 %v8178, %v8221
    %v8244 = vmul.f32 %v8179, %v8221
    %v8245 = vmul.f32 %v8180, %v8221
    %v8246 = vmul.f32 %v8181, %v8221
    %v8247 = vmul.f32 %v8182, %v8221
    %v8248 = vmul.f32 %v8183, %v8221
    %v8249 = vmul.f32 %v8184, %v8221
    %v8250 = vmul.f32 %v8185, %v8221
    %v8251 = vmul.f32 %v8186, %v8221
    %v8252 = vmul.f32 %v8187, %v8221
    %v8253 = vmul.f32 %v8188, %v8221
    %v8254 = vmul.f32 %v8189, %v8221
    %v8255 = vmul.f32 %v8190, %v8221
    %v8256 = vmul.f32 %v8191, %v8221
    %v8257 = vmul.f32 %v8192, %v8221
    %v8258 = vmul.f32 %v8193, %v8221
    %v8259 = vmul.f32 %v8194, %v8221
    %v8260 = vmul.f32 %v8195, %v8221
    %v8261 = vmul.f32 %v8196, %v8221
    %v8262 = vmul.f32 %v8197, %v8221
    %v8263 = vmul.f32 %v8198, %v8221
    %v8264 = vmul.f32 %v8199, %v8221
    %v8265 = vmul.f32 %v8200, %v8221
    %v8266 = vmul.f32 %v8201, %v8221
    %v8267 = vmul.f32 %v8202, %v8221
    %v8268 = vmul.f32 %v8203, %v8221
    %v8269 = vmul.f32 %v8204, %v8221
    %v8270 = vmul.f32 %v8205, %v8221
    %v8271 = vmul.f32 %v8206, %v8221
    %v8272 = vmul.f32 %v8207, %v8221
    %v8273 = vmul.f32 %v8208, %v8221
    %v8274 = vmul.f32 %v8209, %v8221
    %v8275 = vmul.f32 %v8210, %v8221
    %v8276 = vmul.f32 %v8211, %v8221
    %v8277 = vmul.f32 %v8212, %v8221
    %v8278 = vmul.f32 %v8213, %v8221
    %v8279 = vmul.f32 %v8214, %v8221
    %v8280 = vmul.f32 %v8215, %v8221
    %v8281 = vmul.f32 %v8216, %v8221
    %v8282 = vmul.f32 %v8217, %v8221
    %v8283 = vmul.f32 %v8218, %v8221
    %v8284 = vmul.f32 %v8219, %v8221
    %v8285 = vmul.f32 %v8220, %v8221
    %v8286 = vsel %vm4899, %v8222, 0.0
    %8287 = vadd.xlane.f32.xlu0 %v8286
    %v8288 = vpop.xlane.xlu0 %8287
    %v8289 = vsel %vm4899, %v8223, 0.0
    %8290 = vadd.xlane.f32.xlu0 %v8289
    %v8291 = vpop.xlane.xlu0 %8290
    %v8292 = vsel %vm4899, %v8224, 0.0
    %8293 = vadd.xlane.f32.xlu0 %v8292
    %v8294 = vpop.xlane.xlu0 %8293
    %v8295 = vsel %vm4899, %v8225, 0.0
    %8296 = vadd.xlane.f32.xlu0 %v8295
    %v8297 = vpop.xlane.xlu0 %8296
    %v8298 = vsel %vm4899, %v8226, 0.0
    %8299 = vadd.xlane.f32.xlu0 %v8298
    %v8300 = vpop.xlane.xlu0 %8299
    %v8301 = vsel %vm4899, %v8227, 0.0
    %8302 = vadd.xlane.f32.xlu0 %v8301
    %v8303 = vpop.xlane.xlu0 %8302
    %v8304 = vsel %vm4899, %v8228, 0.0
    %8305 = vadd.xlane.f32.xlu0 %v8304
    %v8306 = vpop.xlane.xlu0 %8305
    %v8307 = vsel %vm4899, %v8229, 0.0
    %8308 = vadd.xlane.f32.xlu0 %v8307
    %v8309 = vpop.xlane.xlu0 %8308
    %v8310 = vsel %vm4899, %v8230, 0.0
    %8311 = vadd.xlane.f32.xlu0 %v8310
    %v8312 = vpop.xlane.xlu0 %8311
    %v8313 = vsel %vm4899, %v8231, 0.0
    %8314 = vadd.xlane.f32.xlu0 %v8313
    %v8315 = vpop.xlane.xlu0 %8314
    %v8316 = vsel %vm4899, %v8232, 0.0
    %8317 = vadd.xlane.f32.xlu0 %v8316
    %v8318 = vpop.xlane.xlu0 %8317
    %v8319 = vsel %vm4899, %v8233, 0.0
    %8320 = vadd.xlane.f32.xlu0 %v8319
    %v8321 = vpop.xlane.xlu0 %8320
    %v8322 = vsel %vm4899, %v8234, 0.0
    %8323 = vadd.xlane.f32.xlu0 %v8322
    %v8324 = vpop.xlane.xlu0 %8323
    %v8325 = vsel %vm4899, %v8235, 0.0
    %8326 = vadd.xlane.f32.xlu0 %v8325
    %v8327 = vpop.xlane.xlu0 %8326
    %v8328 = vsel %vm4899, %v8236, 0.0
    %8329 = vadd.xlane.f32.xlu0 %v8328
    %v8330 = vpop.xlane.xlu0 %8329
    %v8331 = vsel %vm4899, %v8237, 0.0
    %8332 = vadd.xlane.f32.xlu0 %v8331
    %v8333 = vpop.xlane.xlu0 %8332
    %v8334 = vsel %vm4899, %v8238, 0.0
    %8335 = vadd.xlane.f32.xlu0 %v8334
    %v8336 = vpop.xlane.xlu0 %8335
    %v8337 = vsel %vm4899, %v8239, 0.0
    %8338 = vadd.xlane.f32.xlu0 %v8337
    %v8339 = vpop.xlane.xlu0 %8338
    %v8340 = vsel %vm4899, %v8240, 0.0
    %8341 = vadd.xlane.f32.xlu0 %v8340
    %v8342 = vpop.xlane.xlu0 %8341
    %v8343 = vsel %vm4899, %v8241, 0.0
    %8344 = vadd.xlane.f32.xlu0 %v8343
    %v8345 = vpop.xlane.xlu0 %8344
    %v8346 = vsel %vm4899, %v8242, 0.0
    %8347 = vadd.xlane.f32.xlu0 %v8346
    %v8348 = vpop.xlane.xlu0 %8347
    %v8349 = vsel %vm4899, %v8243, 0.0
    %8350 = vadd.xlane.f32.xlu0 %v8349
    %v8351 = vpop.xlane.xlu0 %8350
    %v8352 = vsel %vm4899, %v8244, 0.0
    %8353 = vadd.xlane.f32.xlu0 %v8352
    %v8354 = vpop.xlane.xlu0 %8353
    %v8355 = vsel %vm4899, %v8245, 0.0
    %8356 = vadd.xlane.f32.xlu0 %v8355
    %v8357 = vpop.xlane.xlu0 %8356
    %v8358 = vsel %vm4899, %v8246, 0.0
    %8359 = vadd.xlane.f32.xlu0 %v8358
    %v8360 = vpop.xlane.xlu0 %8359
    %v8361 = vsel %vm4899, %v8247, 0.0
    %8362 = vadd.xlane.f32.xlu0 %v8361
    %v8363 = vpop.xlane.xlu0 %8362
    %v8364 = vsel %vm4899, %v8248, 0.0
    %8365 = vadd.xlane.f32.xlu0 %v8364
    %v8366 = vpop.xlane.xlu0 %8365
    %v8367 = vsel %vm4899, %v8249, 0.0
    %8368 = vadd.xlane.f32.xlu0 %v8367
    %v8369 = vpop.xlane.xlu0 %8368
    %v8370 = vsel %vm4899, %v8250, 0.0
    %8371 = vadd.xlane.f32.xlu0 %v8370
    %v8372 = vpop.xlane.xlu0 %8371
    %v8373 = vsel %vm4899, %v8251, 0.0
    %8374 = vadd.xlane.f32.xlu0 %v8373
    %v8375 = vpop.xlane.xlu0 %8374
    %v8376 = vsel %vm4899, %v8252, 0.0
    %8377 = vadd.xlane.f32.xlu0 %v8376
    %v8378 = vpop.xlane.xlu0 %8377
    %v8379 = vsel %vm4899, %v8253, 0.0
    %8380 = vadd.xlane.f32.xlu0 %v8379
    %v8381 = vpop.xlane.xlu0 %8380
    %v8382 = vsel %vm4899, %v8254, 0.0
    %8383 = vadd.xlane.f32.xlu0 %v8382
    %v8384 = vpop.xlane.xlu0 %8383
    %v8385 = vsel %vm4899, %v8255, 0.0
    %8386 = vadd.xlane.f32.xlu0 %v8385
    %v8387 = vpop.xlane.xlu0 %8386
    %v8388 = vsel %vm4899, %v8256, 0.0
    %8389 = vadd.xlane.f32.xlu0 %v8388
    %v8390 = vpop.xlane.xlu0 %8389
    %v8391 = vsel %vm4899, %v8257, 0.0
    %8392 = vadd.xlane.f32.xlu0 %v8391
    %v8393 = vpop.xlane.xlu0 %8392
    %v8394 = vsel %vm4899, %v8258, 0.0
    %8395 = vadd.xlane.f32.xlu0 %v8394
    %v8396 = vpop.xlane.xlu0 %8395
    %v8397 = vsel %vm4899, %v8259, 0.0
    %8398 = vadd.xlane.f32.xlu0 %v8397
    %v8399 = vpop.xlane.xlu0 %8398
    %v8400 = vsel %vm4899, %v8260, 0.0
    %8401 = vadd.xlane.f32.xlu0 %v8400
    %v8402 = vpop.xlane.xlu0 %8401
    %v8403 = vsel %vm4899, %v8261, 0.0
    %8404 = vadd.xlane.f32.xlu0 %v8403
    %v8405 = vpop.xlane.xlu0 %8404
    %v8406 = vsel %vm4899, %v8262, 0.0
    %8407 = vadd.xlane.f32.xlu0 %v8406
    %v8408 = vpop.xlane.xlu0 %8407
    %v8409 = vsel %vm4899, %v8263, 0.0
    %8410 = vadd.xlane.f32.xlu0 %v8409
    %v8411 = vpop.xlane.xlu0 %8410
    %v8412 = vsel %vm4899, %v8264, 0.0
    %8413 = vadd.xlane.f32.xlu0 %v8412
    %v8414 = vpop.xlane.xlu0 %8413
    %v8415 = vsel %vm4899, %v8265, 0.0
    %8416 = vadd.xlane.f32.xlu0 %v8415
    %v8417 = vpop.xlane.xlu0 %8416
    %v8418 = vsel %vm4899, %v8266, 0.0
    %8419 = vadd.xlane.f32.xlu0 %v8418
    %v8420 = vpop.xlane.xlu0 %8419
    %v8421 = vsel %vm4899, %v8267, 0.0
    %8422 = vadd.xlane.f32.xlu0 %v8421
    %v8423 = vpop.xlane.xlu0 %8422
    %v8424 = vsel %vm4899, %v8268, 0.0
    %8425 = vadd.xlane.f32.xlu0 %v8424
    %v8426 = vpop.xlane.xlu0 %8425
    %v8427 = vsel %vm4899, %v8269, 0.0
    %8428 = vadd.xlane.f32.xlu0 %v8427
    %v8429 = vpop.xlane.xlu0 %8428
    %v8430 = vsel %vm4899, %v8270, 0.0
    %8431 = vadd.xlane.f32.xlu0 %v8430
    %v8432 = vpop.xlane.xlu0 %8431
    %v8433 = vsel %vm4899, %v8271, 0.0
    %8434 = vadd.xlane.f32.xlu0 %v8433
    %v8435 = vpop.xlane.xlu0 %8434
    %v8436 = vsel %vm4899, %v8272, 0.0
    %8437 = vadd.xlane.f32.xlu0 %v8436
    %v8438 = vpop.xlane.xlu0 %8437
    %v8439 = vsel %vm4899, %v8273, 0.0
    %8440 = vadd.xlane.f32.xlu0 %v8439
    %v8441 = vpop.xlane.xlu0 %8440
    %v8442 = vsel %vm4899, %v8274, 0.0
    %8443 = vadd.xlane.f32.xlu0 %v8442
    %v8444 = vpop.xlane.xlu0 %8443
    %v8445 = vsel %vm4899, %v8275, 0.0
    %8446 = vadd.xlane.f32.xlu0 %v8445
    %v8447 = vpop.xlane.xlu0 %8446
    %v8448 = vsel %vm4899, %v8276, 0.0
    %8449 = vadd.xlane.f32.xlu0 %v8448
    %v8450 = vpop.xlane.xlu0 %8449
    %v8451 = vsel %vm4899, %v8277, 0.0
    %8452 = vadd.xlane.f32.xlu0 %v8451
    %v8453 = vpop.xlane.xlu0 %8452
    %v8454 = vsel %vm4899, %v8278, 0.0
    %8455 = vadd.xlane.f32.xlu0 %v8454
    %v8456 = vpop.xlane.xlu0 %8455
    %v8457 = vsel %vm4899, %v8279, 0.0
    %8458 = vadd.xlane.f32.xlu0 %v8457
    %v8459 = vpop.xlane.xlu0 %8458
    %v8460 = vsel %vm4899, %v8280, 0.0
    %8461 = vadd.xlane.f32.xlu0 %v8460
    %v8462 = vpop.xlane.xlu0 %8461
    %v8463 = vsel %vm4899, %v8281, 0.0
    %8464 = vadd.xlane.f32.xlu0 %v8463
    %v8465 = vpop.xlane.xlu0 %8464
    %v8466 = vsel %vm4899, %v8282, 0.0
    %8467 = vadd.xlane.f32.xlu0 %v8466
    %v8468 = vpop.xlane.xlu0 %8467
    %v8469 = vsel %vm4899, %v8283, 0.0
    %8470 = vadd.xlane.f32.xlu0 %v8469
    %v8471 = vpop.xlane.xlu0 %8470
    %v8472 = vsel %vm4899, %v8284, 0.0
    %8473 = vadd.xlane.f32.xlu0 %v8472
    %v8474 = vpop.xlane.xlu0 %8473
    %v8475 = vsel %vm4899, %v8285, 0.0
    %8476 = vadd.xlane.f32.xlu0 %v8475
    %v8477 = vpop.xlane.xlu0 %8476
    %v8478 = vadd.f32 %v8092, %v8288
    %v8479 = vadd.f32 %v8093, %v8291
    %v8480 = vadd.f32 %v8094, %v8294
    %v8481 = vadd.f32 %v8095, %v8297
    %v8482 = vadd.f32 %v8096, %v8300
    %v8483 = vadd.f32 %v8097, %v8303
    %v8484 = vadd.f32 %v8098, %v8306
    %v8485 = vadd.f32 %v8099, %v8309
    %v8486 = vadd.f32 %v8100, %v8312
    %v8487 = vadd.f32 %v8101, %v8315
    %v8488 = vadd.f32 %v8102, %v8318
    %v8489 = vadd.f32 %v8103, %v8321
    %v8490 = vadd.f32 %v8104, %v8324
    %v8491 = vadd.f32 %v8105, %v8327
    %v8492 = vadd.f32 %v8106, %v8330
    %v8493 = vadd.f32 %v8107, %v8333
    %v8494 = vadd.f32 %v8108, %v8336
    %v8495 = vadd.f32 %v8109, %v8339
    %v8496 = vadd.f32 %v8110, %v8342
    %v8497 = vadd.f32 %v8111, %v8345
    %v8498 = vadd.f32 %v8112, %v8348
    %v8499 = vadd.f32 %v8113, %v8351
    %v8500 = vadd.f32 %v8114, %v8354
    %v8501 = vadd.f32 %v8115, %v8357
    %v8502 = vadd.f32 %v8116, %v8360
    %v8503 = vadd.f32 %v8117, %v8363
    %v8504 = vadd.f32 %v8118, %v8366
    %v8505 = vadd.f32 %v8119, %v8369
    %v8506 = vadd.f32 %v8120, %v8372
    %v8507 = vadd.f32 %v8121, %v8375
    %v8508 = vadd.f32 %v8122, %v8378
    %v8509 = vadd.f32 %v8123, %v8381
    %v8510 = vadd.f32 %v8124, %v8384
    %v8511 = vadd.f32 %v8125, %v8387
    %v8512 = vadd.f32 %v8126, %v8390
    %v8513 = vadd.f32 %v8127, %v8393
    %v8514 = vadd.f32 %v8128, %v8396
    %v8515 = vadd.f32 %v8129, %v8399
    %v8516 = vadd.f32 %v8130, %v8402
    %v8517 = vadd.f32 %v8131, %v8405
    %v8518 = vadd.f32 %v8132, %v8408
    %v8519 = vadd.f32 %v8133, %v8411
    %v8520 = vadd.f32 %v8134, %v8414
    %v8521 = vadd.f32 %v8135, %v8417
    %v8522 = vadd.f32 %v8136, %v8420
    %v8523 = vadd.f32 %v8137, %v8423
    %v8524 = vadd.f32 %v8138, %v8426
    %v8525 = vadd.f32 %v8139, %v8429
    %v8526 = vadd.f32 %v8140, %v8432
    %v8527 = vadd.f32 %v8141, %v8435
    %v8528 = vadd.f32 %v8142, %v8438
    %v8529 = vadd.f32 %v8143, %v8441
    %v8530 = vadd.f32 %v8144, %v8444
    %v8531 = vadd.f32 %v8145, %v8447
    %v8532 = vadd.f32 %v8146, %v8450
    %v8533 = vadd.f32 %v8147, %v8453
    %v8534 = vadd.f32 %v8148, %v8456
    %v8535 = vadd.f32 %v8149, %v8459
    %v8536 = vadd.f32 %v8150, %v8462
    %v8537 = vadd.f32 %v8151, %v8465
    %v8538 = vadd.f32 %v8152, %v8468
    %v8539 = vadd.f32 %v8153, %v8471
    %v8540 = vadd.f32 %v8154, %v8474
    %v8541 = vadd.f32 %v8155, %v8477
    %v8542 = vld [vmem:[%s8156 + $0x8] sm:$0xff]
    %v8543 = vld [vmem:[%s8156 + $0x10] sm:$0xff]
    %v8544 = vld [vmem:[%s8156 + $0x28] sm:$0xff]
    %v8545 = vld [vmem:[%s8156 + $0x30] sm:$0xff]
    %v8546 = vld [vmem:[%s8156 + $0x48] sm:$0xff]
    %v8547 = vld [vmem:[%s8156 + $0x50] sm:$0xff]
    %v8548 = vld [vmem:[%s8156 + $0x68] sm:$0xff]
    %v8549 = vld [vmem:[%s8156 + $0x70] sm:$0xff]
    %v8550 = vld [vmem:[%s8156 + $0x88] sm:$0xff]
    %v8551 = vld [vmem:[%s8156 + $0x90] sm:$0xff]
    %v8552 = vld [vmem:[%s8156 + $0xa8] sm:$0xff]
    %v8553 = vld [vmem:[%s8156 + $0xb0] sm:$0xff]
    %v8554 = vld [vmem:[%s8156 + $0xc8] sm:$0xff]
    %v8555 = vld [vmem:[%s8156 + $0xd0] sm:$0xff]
    %v8556 = vld [vmem:[%s8156 + $0xe8] sm:$0xff]
    %v8557 = vld [vmem:[%s8156 + $0xf0] sm:$0xff]
    %v8558 = vld [vmem:[%s8156 + $0x108] sm:$0xff]
    %v8559 = vld [vmem:[%s8156 + $0x110] sm:$0xff]
    %v8560 = vld [vmem:[%s8156 + $0x128] sm:$0xff]
    %v8561 = vld [vmem:[%s8156 + $0x130] sm:$0xff]
    %v8562 = vld [vmem:[%s8156 + $0x148] sm:$0xff]
    %v8563 = vld [vmem:[%s8156 + $0x150] sm:$0xff]
    %v8564 = vld [vmem:[%s8156 + $0x168] sm:$0xff]
    %v8565 = vld [vmem:[%s8156 + $0x170] sm:$0xff]
    %v8566 = vld [vmem:[%s8156 + $0x188] sm:$0xff]
    %v8567 = vld [vmem:[%s8156 + $0x190] sm:$0xff]
    %v8568 = vld [vmem:[%s8156 + $0x1a8] sm:$0xff]
    %v8569 = vld [vmem:[%s8156 + $0x1b0] sm:$0xff]
    %v8570 = vld [vmem:[%s8156 + $0x1c8] sm:$0xff]
    %v8571 = vld [vmem:[%s8156 + $0x1d0] sm:$0xff]
    %v8572 = vld [vmem:[%s8156 + $0x1e8] sm:$0xff]
    %v8573 = vld [vmem:[%s8156 + $0x1f0] sm:$0xff]
    %v8574 = vld [vmem:[%s8156 + $0x248] sm:$0xff]
    %v8575 = vld [vmem:[%s8156 + $0x250] sm:$0xff]
    %v8576 = vld [vmem:[%s8156 + $0x268] sm:$0xff]
    %v8577 = vld [vmem:[%s8156 + $0x270] sm:$0xff]
    %v8578 = vld [vmem:[%s8156 + $0x288] sm:$0xff]
    %v8579 = vld [vmem:[%s8156 + $0x290] sm:$0xff]
    %v8580 = vld [vmem:[%s8156 + $0x2a8] sm:$0xff]
    %v8581 = vld [vmem:[%s8156 + $0x2b0] sm:$0xff]
    %v8582 = vld [vmem:[%s8156 + $0x2c8] sm:$0xff]
    %v8583 = vld [vmem:[%s8156 + $0x2d0] sm:$0xff]
    %v8584 = vld [vmem:[%s8156 + $0x2e8] sm:$0xff]
    %v8585 = vld [vmem:[%s8156 + $0x2f0] sm:$0xff]
    %v8586 = vld [vmem:[%s8156 + $0x308] sm:$0xff]
    %v8587 = vld [vmem:[%s8156 + $0x310] sm:$0xff]
    %v8588 = vld [vmem:[%s8156 + $0x328] sm:$0xff]
    %v8589 = vld [vmem:[%s8156 + $0x330] sm:$0xff]
    %v8590 = vld [vmem:[%s8156 + $0x348] sm:$0xff]
    %v8591 = vld [vmem:[%s8156 + $0x350] sm:$0xff]
    %v8592 = vld [vmem:[%s8156 + $0x368] sm:$0xff]
    %v8593 = vld [vmem:[%s8156 + $0x370] sm:$0xff]
    %v8594 = vld [vmem:[%s8156 + $0x388] sm:$0xff]
    %v8595 = vld [vmem:[%s8156 + $0x390] sm:$0xff]
    %v8596 = vld [vmem:[%s8156 + $0x3a8] sm:$0xff]
    %v8597 = vld [vmem:[%s8156 + $0x3b0] sm:$0xff]
    %v8598 = vld [vmem:[%s8156 + $0x3c8] sm:$0xff]
    %v8599 = vld [vmem:[%s8156 + $0x3d0] sm:$0xff]
    %v8600 = vld [vmem:[%s8156 + $0x3e8] sm:$0xff]
    %v8601 = vld [vmem:[%s8156 + $0x3f0] sm:$0xff]
    %v8602 = vld [vmem:[%s8156 + $0x408] sm:$0xff]
    %v8603 = vld [vmem:[%s8156 + $0x410] sm:$0xff]
    %v8604 = vld [vmem:[%s8156 + $0x428] sm:$0xff]
    %v8605 = vld [vmem:[%s8156 + $0x430] sm:$0xff]
    %v8606 = vperm.slane %v5844, 7
    %v8607 = vmul.f32 %v8542, %v8606
    %v8608 = vmul.f32 %v8543, %v8606
    %v8609 = vmul.f32 %v8544, %v8606
    %v8610 = vmul.f32 %v8545, %v8606
    %v8611 = vmul.f32 %v8546, %v8606
    %v8612 = vmul.f32 %v8547, %v8606
    %v8613 = vmul.f32 %v8548, %v8606
    %v8614 = vmul.f32 %v8549, %v8606
    %v8615 = vmul.f32 %v8550, %v8606
    %v8616 = vmul.f32 %v8551, %v8606
    %v8617 = vmul.f32 %v8552, %v8606
    %v8618 = vmul.f32 %v8553, %v8606
    %v8619 = vmul.f32 %v8554, %v8606
    %v8620 = vmul.f32 %v8555, %v8606
    %v8621 = vmul.f32 %v8556, %v8606
    %v8622 = vmul.f32 %v8557, %v8606
    %v8623 = vmul.f32 %v8558, %v8606
    %v8624 = vmul.f32 %v8559, %v8606
    %v8625 = vmul.f32 %v8560, %v8606
    %v8626 = vmul.f32 %v8561, %v8606
    %v8627 = vmul.f32 %v8562, %v8606
    %v8628 = vmul.f32 %v8563, %v8606
    %v8629 = vmul.f32 %v8564, %v8606
    %v8630 = vmul.f32 %v8565, %v8606
    %v8631 = vmul.f32 %v8566, %v8606
    %v8632 = vmul.f32 %v8567, %v8606
    %v8633 = vmul.f32 %v8568, %v8606
    %v8634 = vmul.f32 %v8569, %v8606
    %v8635 = vmul.f32 %v8570, %v8606
    %v8636 = vmul.f32 %v8571, %v8606
    %v8637 = vmul.f32 %v8572, %v8606
    %v8638 = vmul.f32 %v8573, %v8606
    %v8639 = vmul.f32 %v8574, %v8606
    %v8640 = vmul.f32 %v8575, %v8606
    %v8641 = vmul.f32 %v8576, %v8606
    %v8642 = vmul.f32 %v8577, %v8606
    %v8643 = vmul.f32 %v8578, %v8606
    %v8644 = vmul.f32 %v8579, %v8606
    %v8645 = vmul.f32 %v8580, %v8606
    %v8646 = vmul.f32 %v8581, %v8606
    %v8647 = vmul.f32 %v8582, %v8606
    %v8648 = vmul.f32 %v8583, %v8606
    %v8649 = vmul.f32 %v8584, %v8606
    %v8650 = vmul.f32 %v8585, %v8606
    %v8651 = vmul.f32 %v8586, %v8606
    %v8652 = vmul.f32 %v8587, %v8606
    %v8653 = vmul.f32 %v8588, %v8606
    %v8654 = vmul.f32 %v8589, %v8606
    %v8655 = vmul.f32 %v8590, %v8606
    %v8656 = vmul.f32 %v8591, %v8606
    %v8657 = vmul.f32 %v8592, %v8606
    %v8658 = vmul.f32 %v8593, %v8606
    %v8659 = vmul.f32 %v8594, %v8606
    %v8660 = vmul.f32 %v8595, %v8606
    %v8661 = vmul.f32 %v8596, %v8606
    %v8662 = vmul.f32 %v8597, %v8606
    %v8663 = vmul.f32 %v8598, %v8606
    %v8664 = vmul.f32 %v8599, %v8606
    %v8665 = vmul.f32 %v8600, %v8606
    %v8666 = vmul.f32 %v8601, %v8606
    %v8667 = vmul.f32 %v8602, %v8606
    %v8668 = vmul.f32 %v8603, %v8606
    %v8669 = vmul.f32 %v8604, %v8606
    %v8670 = vmul.f32 %v8605, %v8606
    %v8671 = vsel %vm4899, %v8607, 0.0
    %8672 = vadd.xlane.f32.xlu0 %v8671
    %v8673 = vpop.xlane.xlu0 %8672
    %v8674 = vsel %vm4899, %v8608, 0.0
    %8675 = vadd.xlane.f32.xlu0 %v8674
    %v8676 = vpop.xlane.xlu0 %8675
    %v8677 = vsel %vm4899, %v8609, 0.0
    %8678 = vadd.xlane.f32.xlu0 %v8677
    %v8679 = vpop.xlane.xlu0 %8678
    %v8680 = vsel %vm4899, %v8610, 0.0
    %8681 = vadd.xlane.f32.xlu0 %v8680
    %v8682 = vpop.xlane.xlu0 %8681
    %v8683 = vsel %vm4899, %v8611, 0.0
    %8684 = vadd.xlane.f32.xlu0 %v8683
    %v8685 = vpop.xlane.xlu0 %8684
    %v8686 = vsel %vm4899, %v8612, 0.0
    %8687 = vadd.xlane.f32.xlu0 %v8686
    %v8688 = vpop.xlane.xlu0 %8687
    %v8689 = vsel %vm4899, %v8613, 0.0
    %8690 = vadd.xlane.f32.xlu0 %v8689
    %v8691 = vpop.xlane.xlu0 %8690
    %v8692 = vsel %vm4899, %v8614, 0.0
    %8693 = vadd.xlane.f32.xlu0 %v8692
    %v8694 = vpop.xlane.xlu0 %8693
    %v8695 = vsel %vm4899, %v8615, 0.0
    %8696 = vadd.xlane.f32.xlu0 %v8695
    %v8697 = vpop.xlane.xlu0 %8696
    %v8698 = vsel %vm4899, %v8616, 0.0
    %8699 = vadd.xlane.f32.xlu0 %v8698
    %v8700 = vpop.xlane.xlu0 %8699
    %v8701 = vsel %vm4899, %v8617, 0.0
    %8702 = vadd.xlane.f32.xlu0 %v8701
    %v8703 = vpop.xlane.xlu0 %8702
    %v8704 = vsel %vm4899, %v8618, 0.0
    %8705 = vadd.xlane.f32.xlu0 %v8704
    %v8706 = vpop.xlane.xlu0 %8705
    %v8707 = vsel %vm4899, %v8619, 0.0
    %8708 = vadd.xlane.f32.xlu0 %v8707
    %v8709 = vpop.xlane.xlu0 %8708
    %v8710 = vsel %vm4899, %v8620, 0.0
    %8711 = vadd.xlane.f32.xlu0 %v8710
    %v8712 = vpop.xlane.xlu0 %8711
    %v8713 = vsel %vm4899, %v8621, 0.0
    %8714 = vadd.xlane.f32.xlu0 %v8713
    %v8715 = vpop.xlane.xlu0 %8714
    %v8716 = vsel %vm4899, %v8622, 0.0
    %8717 = vadd.xlane.f32.xlu0 %v8716
    %v8718 = vpop.xlane.xlu0 %8717
    %v8719 = vsel %vm4899, %v8623, 0.0
    %8720 = vadd.xlane.f32.xlu0 %v8719
    %v8721 = vpop.xlane.xlu0 %8720
    %v8722 = vsel %vm4899, %v8624, 0.0
    %8723 = vadd.xlane.f32.xlu0 %v8722
    %v8724 = vpop.xlane.xlu0 %8723
    %v8725 = vsel %vm4899, %v8625, 0.0
    %8726 = vadd.xlane.f32.xlu0 %v8725
    %v8727 = vpop.xlane.xlu0 %8726
    %v8728 = vsel %vm4899, %v8626, 0.0
    %8729 = vadd.xlane.f32.xlu0 %v8728
    %v8730 = vpop.xlane.xlu0 %8729
    %v8731 = vsel %vm4899, %v8627, 0.0
    %8732 = vadd.xlane.f32.xlu0 %v8731
    %v8733 = vpop.xlane.xlu0 %8732
    %v8734 = vsel %vm4899, %v8628, 0.0
    %8735 = vadd.xlane.f32.xlu0 %v8734
    %v8736 = vpop.xlane.xlu0 %8735
    %v8737 = vsel %vm4899, %v8629, 0.0
    %8738 = vadd.xlane.f32.xlu0 %v8737
    %v8739 = vpop.xlane.xlu0 %8738
    %v8740 = vsel %vm4899, %v8630, 0.0
    %8741 = vadd.xlane.f32.xlu0 %v8740
    %v8742 = vpop.xlane.xlu0 %8741
    %v8743 = vsel %vm4899, %v8631, 0.0
    %8744 = vadd.xlane.f32.xlu0 %v8743
    %v8745 = vpop.xlane.xlu0 %8744
    %v8746 = vsel %vm4899, %v8632, 0.0
    %8747 = vadd.xlane.f32.xlu0 %v8746
    %v8748 = vpop.xlane.xlu0 %8747
    %v8749 = vsel %vm4899, %v8633, 0.0
    %8750 = vadd.xlane.f32.xlu0 %v8749
    %v8751 = vpop.xlane.xlu0 %8750
    %v8752 = vsel %vm4899, %v8634, 0.0
    %8753 = vadd.xlane.f32.xlu0 %v8752
    %v8754 = vpop.xlane.xlu0 %8753
    %v8755 = vsel %vm4899, %v8635, 0.0
    %8756 = vadd.xlane.f32.xlu0 %v8755
    %v8757 = vpop.xlane.xlu0 %8756
    %v8758 = vsel %vm4899, %v8636, 0.0
    %8759 = vadd.xlane.f32.xlu0 %v8758
    %v8760 = vpop.xlane.xlu0 %8759
    %v8761 = vsel %vm4899, %v8637, 0.0
    %8762 = vadd.xlane.f32.xlu0 %v8761
    %v8763 = vpop.xlane.xlu0 %8762
    %v8764 = vsel %vm4899, %v8638, 0.0
    %8765 = vadd.xlane.f32.xlu0 %v8764
    %v8766 = vpop.xlane.xlu0 %8765
    %v8767 = vsel %vm4899, %v8639, 0.0
    %8768 = vadd.xlane.f32.xlu0 %v8767
    %v8769 = vpop.xlane.xlu0 %8768
    %v8770 = vsel %vm4899, %v8640, 0.0
    %8771 = vadd.xlane.f32.xlu0 %v8770
    %v8772 = vpop.xlane.xlu0 %8771
    %v8773 = vsel %vm4899, %v8641, 0.0
    %8774 = vadd.xlane.f32.xlu0 %v8773
    %v8775 = vpop.xlane.xlu0 %8774
    %v8776 = vsel %vm4899, %v8642, 0.0
    %8777 = vadd.xlane.f32.xlu0 %v8776
    %v8778 = vpop.xlane.xlu0 %8777
    %v8779 = vsel %vm4899, %v8643, 0.0
    %8780 = vadd.xlane.f32.xlu0 %v8779
    %v8781 = vpop.xlane.xlu0 %8780
    %v8782 = vsel %vm4899, %v8644, 0.0
    %8783 = vadd.xlane.f32.xlu0 %v8782
    %v8784 = vpop.xlane.xlu0 %8783
    %v8785 = vsel %vm4899, %v8645, 0.0
    %8786 = vadd.xlane.f32.xlu0 %v8785
    %v8787 = vpop.xlane.xlu0 %8786
    %v8788 = vsel %vm4899, %v8646, 0.0
    %8789 = vadd.xlane.f32.xlu0 %v8788
    %v8790 = vpop.xlane.xlu0 %8789
    %v8791 = vsel %vm4899, %v8647, 0.0
    %8792 = vadd.xlane.f32.xlu0 %v8791
    %v8793 = vpop.xlane.xlu0 %8792
    %v8794 = vsel %vm4899, %v8648, 0.0
    %8795 = vadd.xlane.f32.xlu0 %v8794
    %v8796 = vpop.xlane.xlu0 %8795
    %v8797 = vsel %vm4899, %v8649, 0.0
    %8798 = vadd.xlane.f32.xlu0 %v8797
    %v8799 = vpop.xlane.xlu0 %8798
    %v8800 = vsel %vm4899, %v8650, 0.0
    %8801 = vadd.xlane.f32.xlu0 %v8800
    %v8802 = vpop.xlane.xlu0 %8801
    %v8803 = vsel %vm4899, %v8651, 0.0
    %8804 = vadd.xlane.f32.xlu0 %v8803
    %v8805 = vpop.xlane.xlu0 %8804
    %v8806 = vsel %vm4899, %v8652, 0.0
    %8807 = vadd.xlane.f32.xlu0 %v8806
    %v8808 = vpop.xlane.xlu0 %8807
    %v8809 = vsel %vm4899, %v8653, 0.0
    %8810 = vadd.xlane.f32.xlu0 %v8809
    %v8811 = vpop.xlane.xlu0 %8810
    %v8812 = vsel %vm4899, %v8654, 0.0
    %8813 = vadd.xlane.f32.xlu0 %v8812
    %v8814 = vpop.xlane.xlu0 %8813
    %v8815 = vsel %vm4899, %v8655, 0.0
    %8816 = vadd.xlane.f32.xlu0 %v8815
    %v8817 = vpop.xlane.xlu0 %8816
    %v8818 = vsel %vm4899, %v8656, 0.0
    %8819 = vadd.xlane.f32.xlu0 %v8818
    %v8820 = vpop.xlane.xlu0 %8819
    %v8821 = vsel %vm4899, %v8657, 0.0
    %8822 = vadd.xlane.f32.xlu0 %v8821
    %v8823 = vpop.xlane.xlu0 %8822
    %v8824 = vsel %vm4899, %v8658, 0.0
    %8825 = vadd.xlane.f32.xlu0 %v8824
    %v8826 = vpop.xlane.xlu0 %8825
    %v8827 = vsel %vm4899, %v8659, 0.0
    %8828 = vadd.xlane.f32.xlu0 %v8827
    %v8829 = vpop.xlane.xlu0 %8828
    %v8830 = vsel %vm4899, %v8660, 0.0
    %8831 = vadd.xlane.f32.xlu0 %v8830
    %v8832 = vpop.xlane.xlu0 %8831
    %v8833 = vsel %vm4899, %v8661, 0.0
    %8834 = vadd.xlane.f32.xlu0 %v8833
    %v8835 = vpop.xlane.xlu0 %8834
    %v8836 = vsel %vm4899, %v8662, 0.0
    %8837 = vadd.xlane.f32.xlu0 %v8836
    %v8838 = vpop.xlane.xlu0 %8837
    %v8839 = vsel %vm4899, %v8663, 0.0
    %8840 = vadd.xlane.f32.xlu0 %v8839
    %v8841 = vpop.xlane.xlu0 %8840
    %v8842 = vsel %vm4899, %v8664, 0.0
    %8843 = vadd.xlane.f32.xlu0 %v8842
    %v8844 = vpop.xlane.xlu0 %8843
    %v8845 = vsel %vm4899, %v8665, 0.0
    %8846 = vadd.xlane.f32.xlu0 %v8845
    %v8847 = vpop.xlane.xlu0 %8846
    %v8848 = vsel %vm4899, %v8666, 0.0
    %8849 = vadd.xlane.f32.xlu0 %v8848
    %v8850 = vpop.xlane.xlu0 %8849
    %v8851 = vsel %vm4899, %v8667, 0.0
    %8852 = vadd.xlane.f32.xlu0 %v8851
    %v8853 = vpop.xlane.xlu0 %8852
    %v8854 = vsel %vm4899, %v8668, 0.0
    %8855 = vadd.xlane.f32.xlu0 %v8854
    %v8856 = vpop.xlane.xlu0 %8855
    %v8857 = vsel %vm4899, %v8669, 0.0
    %8858 = vadd.xlane.f32.xlu0 %v8857
    %v8859 = vpop.xlane.xlu0 %8858
    %v8860 = vsel %vm4899, %v8670, 0.0
    %8861 = vadd.xlane.f32.xlu0 %v8860
    %v8862 = vpop.xlane.xlu0 %8861
    %v8863 = vadd.f32 %v8478, %v8673
    %v8864 = vadd.f32 %v8479, %v8676
    %v8865 = vadd.f32 %v8480, %v8679
    %v8866 = vadd.f32 %v8481, %v8682
    %v8867 = vadd.f32 %v8482, %v8685
    %v8868 = vadd.f32 %v8483, %v8688
    %v8869 = vadd.f32 %v8484, %v8691
    %v8870 = vadd.f32 %v8485, %v8694
    %v8871 = vadd.f32 %v8486, %v8697
    %v8872 = vadd.f32 %v8487, %v8700
    %v8873 = vadd.f32 %v8488, %v8703
    %v8874 = vadd.f32 %v8489, %v8706
    %v8875 = vadd.f32 %v8490, %v8709
    %v8876 = vadd.f32 %v8491, %v8712
    %v8877 = vadd.f32 %v8492, %v8715
    %v8878 = vadd.f32 %v8493, %v8718
    %v8879 = vadd.f32 %v8494, %v8721
    %v8880 = vadd.f32 %v8495, %v8724
    %v8881 = vadd.f32 %v8496, %v8727
    %v8882 = vadd.f32 %v8497, %v8730
    %v8883 = vadd.f32 %v8498, %v8733
    %v8884 = vadd.f32 %v8499, %v8736
    %v8885 = vadd.f32 %v8500, %v8739
    %v8886 = vadd.f32 %v8501, %v8742
    %v8887 = vadd.f32 %v8502, %v8745
    %v8888 = vadd.f32 %v8503, %v8748
    %v8889 = vadd.f32 %v8504, %v8751
    %v8890 = vadd.f32 %v8505, %v8754
    %v8891 = vadd.f32 %v8506, %v8757
    %v8892 = vadd.f32 %v8507, %v8760
    %v8893 = vadd.f32 %v8508, %v8763
    %v8894 = vadd.f32 %v8509, %v8766
    %v8895 = vadd.f32 %v8510, %v8769
    %v8896 = vadd.f32 %v8511, %v8772
    %v8897 = vadd.f32 %v8512, %v8775
    %v8898 = vadd.f32 %v8513, %v8778
    %v8899 = vadd.f32 %v8514, %v8781
    %v8900 = vadd.f32 %v8515, %v8784
    %v8901 = vadd.f32 %v8516, %v8787
    %v8902 = vadd.f32 %v8517, %v8790
    %v8903 = vadd.f32 %v8518, %v8793
    %v8904 = vadd.f32 %v8519, %v8796
    %v8905 = vadd.f32 %v8520, %v8799
    %v8906 = vadd.f32 %v8521, %v8802
    %v8907 = vadd.f32 %v8522, %v8805
    %v8908 = vadd.f32 %v8523, %v8808
    %v8909 = vadd.f32 %v8524, %v8811
    %v8910 = vadd.f32 %v8525, %v8814
    %v8911 = vadd.f32 %v8526, %v8817
    %v8912 = vadd.f32 %v8527, %v8820
    %v8913 = vadd.f32 %v8528, %v8823
    %v8914 = vadd.f32 %v8529, %v8826
    %v8915 = vadd.f32 %v8530, %v8829
    %v8916 = vadd.f32 %v8531, %v8832
    %v8917 = vadd.f32 %v8532, %v8835
    %v8918 = vadd.f32 %v8533, %v8838
    %v8919 = vadd.f32 %v8534, %v8841
    %v8920 = vadd.f32 %v8535, %v8844
    %v8921 = vadd.f32 %v8536, %v8847
    %v8922 = vadd.f32 %v8537, %v8850
    %v8923 = vadd.f32 %v8538, %v8853
    %v8924 = vadd.f32 %v8539, %v8856
    %v8925 = vadd.f32 %v8540, %v8859
    %v8926 = vadd.f32 %v8541, %v8862
    %v8927 = vld [vmem:[%s8156 + $0x9] sm:$0xff]
    %v8928 = vld [vmem:[%s8156 + $0x11] sm:$0xff]
    %v8929 = vld [vmem:[%s8156 + $0x29] sm:$0xff]
    %v8930 = vld [vmem:[%s8156 + $0x31] sm:$0xff]
    %v8931 = vld [vmem:[%s8156 + $0x49] sm:$0xff]
    %v8932 = vld [vmem:[%s8156 + $0x51] sm:$0xff]
    %v8933 = vld [vmem:[%s8156 + $0x69] sm:$0xff]
    %v8934 = vld [vmem:[%s8156 + $0x71] sm:$0xff]
    %v8935 = vld [vmem:[%s8156 + $0x89] sm:$0xff]
    %v8936 = vld [vmem:[%s8156 + $0x91] sm:$0xff]
    %v8937 = vld [vmem:[%s8156 + $0xa9] sm:$0xff]
    %v8938 = vld [vmem:[%s8156 + $0xb1] sm:$0xff]
    %v8939 = vld [vmem:[%s8156 + $0xc9] sm:$0xff]
    %v8940 = vld [vmem:[%s8156 + $0xd1] sm:$0xff]
    %v8941 = vld [vmem:[%s8156 + $0xe9] sm:$0xff]
    %v8942 = vld [vmem:[%s8156 + $0xf1] sm:$0xff]
    %v8943 = vld [vmem:[%s8156 + $0x109] sm:$0xff]
    %v8944 = vld [vmem:[%s8156 + $0x111] sm:$0xff]
    %v8945 = vld [vmem:[%s8156 + $0x129] sm:$0xff]
    %v8946 = vld [vmem:[%s8156 + $0x131] sm:$0xff]
    %v8947 = vld [vmem:[%s8156 + $0x149] sm:$0xff]
    %v8948 = vld [vmem:[%s8156 + $0x151] sm:$0xff]
    %v8949 = vld [vmem:[%s8156 + $0x169] sm:$0xff]
    %v8950 = vld [vmem:[%s8156 + $0x171] sm:$0xff]
    %v8951 = vld [vmem:[%s8156 + $0x189] sm:$0xff]
    %v8952 = vld [vmem:[%s8156 + $0x191] sm:$0xff]
    %v8953 = vld [vmem:[%s8156 + $0x1a9] sm:$0xff]
    %v8954 = vld [vmem:[%s8156 + $0x1b1] sm:$0xff]
    %v8955 = vld [vmem:[%s8156 + $0x1c9] sm:$0xff]
    %v8956 = vld [vmem:[%s8156 + $0x1d1] sm:$0xff]
    %v8957 = vld [vmem:[%s8156 + $0x1e9] sm:$0xff]
    %v8958 = vld [vmem:[%s8156 + $0x1f1] sm:$0xff]
    %v8959 = vld [vmem:[%s8156 + $0x249] sm:$0xff]
    %v8960 = vld [vmem:[%s8156 + $0x251] sm:$0xff]
    %v8961 = vld [vmem:[%s8156 + $0x269] sm:$0xff]
    %v8962 = vld [vmem:[%s8156 + $0x271] sm:$0xff]
    %v8963 = vld [vmem:[%s8156 + $0x289] sm:$0xff]
    %v8964 = vld [vmem:[%s8156 + $0x291] sm:$0xff]
    %v8965 = vld [vmem:[%s8156 + $0x2a9] sm:$0xff]
    %v8966 = vld [vmem:[%s8156 + $0x2b1] sm:$0xff]
    %v8967 = vld [vmem:[%s8156 + $0x2c9] sm:$0xff]
    %v8968 = vld [vmem:[%s8156 + $0x2d1] sm:$0xff]
    %v8969 = vld [vmem:[%s8156 + $0x2e9] sm:$0xff]
    %v8970 = vld [vmem:[%s8156 + $0x2f1] sm:$0xff]
    %v8971 = vld [vmem:[%s8156 + $0x309] sm:$0xff]
    %v8972 = vld [vmem:[%s8156 + $0x311] sm:$0xff]
    %v8973 = vld [vmem:[%s8156 + $0x329] sm:$0xff]
    %v8974 = vld [vmem:[%s8156 + $0x331] sm:$0xff]
    %v8975 = vld [vmem:[%s8156 + $0x349] sm:$0xff]
    %v8976 = vld [vmem:[%s8156 + $0x351] sm:$0xff]
    %v8977 = vld [vmem:[%s8156 + $0x369] sm:$0xff]
    %v8978 = vld [vmem:[%s8156 + $0x371] sm:$0xff]
    %v8979 = vld [vmem:[%s8156 + $0x389] sm:$0xff]
    %v8980 = vld [vmem:[%s8156 + $0x391] sm:$0xff]
    %v8981 = vld [vmem:[%s8156 + $0x3a9] sm:$0xff]
    %v8982 = vld [vmem:[%s8156 + $0x3b1] sm:$0xff]
    %v8983 = vld [vmem:[%s8156 + $0x3c9] sm:$0xff]
    %v8984 = vld [vmem:[%s8156 + $0x3d1] sm:$0xff]
    %v8985 = vld [vmem:[%s8156 + $0x3e9] sm:$0xff]
    %v8986 = vld [vmem:[%s8156 + $0x3f1] sm:$0xff]
    %v8987 = vld [vmem:[%s8156 + $0x409] sm:$0xff]
    %v8988 = vld [vmem:[%s8156 + $0x411] sm:$0xff]
    %v8989 = vld [vmem:[%s8156 + $0x429] sm:$0xff]
    %v8990 = vld [vmem:[%s8156 + $0x431] sm:$0xff]
    %v8991 = vperm.slane %v5845, 0
    %v8992 = vmul.f32 %v8927, %v8991
    %v8993 = vmul.f32 %v8928, %v8991
    %v8994 = vmul.f32 %v8929, %v8991
    %v8995 = vmul.f32 %v8930, %v8991
    %v8996 = vmul.f32 %v8931, %v8991
    %v8997 = vmul.f32 %v8932, %v8991
    %v8998 = vmul.f32 %v8933, %v8991
    %v8999 = vmul.f32 %v8934, %v8991
    %v9000 = vmul.f32 %v8935, %v8991
    %v9001 = vmul.f32 %v8936, %v8991
    %v9002 = vmul.f32 %v8937, %v8991
    %v9003 = vmul.f32 %v8938, %v8991
    %v9004 = vmul.f32 %v8939, %v8991
    %v9005 = vmul.f32 %v8940, %v8991
    %v9006 = vmul.f32 %v8941, %v8991
    %v9007 = vmul.f32 %v8942, %v8991
    %v9008 = vmul.f32 %v8943, %v8991
    %v9009 = vmul.f32 %v8944, %v8991
    %v9010 = vmul.f32 %v8945, %v8991
    %v9011 = vmul.f32 %v8946, %v8991
    %v9012 = vmul.f32 %v8947, %v8991
    %v9013 = vmul.f32 %v8948, %v8991
    %v9014 = vmul.f32 %v8949, %v8991
    %v9015 = vmul.f32 %v8950, %v8991
    %v9016 = vmul.f32 %v8951, %v8991
    %v9017 = vmul.f32 %v8952, %v8991
    %v9018 = vmul.f32 %v8953, %v8991
    %v9019 = vmul.f32 %v8954, %v8991
    %v9020 = vmul.f32 %v8955, %v8991
    %v9021 = vmul.f32 %v8956, %v8991
    %v9022 = vmul.f32 %v8957, %v8991
    %v9023 = vmul.f32 %v8958, %v8991
    %v9024 = vmul.f32 %v8959, %v8991
    %v9025 = vmul.f32 %v8960, %v8991
    %v9026 = vmul.f32 %v8961, %v8991
    %v9027 = vmul.f32 %v8962, %v8991
    %v9028 = vmul.f32 %v8963, %v8991
    %v9029 = vmul.f32 %v8964, %v8991
    %v9030 = vmul.f32 %v8965, %v8991
    %v9031 = vmul.f32 %v8966, %v8991
    %v9032 = vmul.f32 %v8967, %v8991
    %v9033 = vmul.f32 %v8968, %v8991
    %v9034 = vmul.f32 %v8969, %v8991
    %v9035 = vmul.f32 %v8970, %v8991
    %v9036 = vmul.f32 %v8971, %v8991
    %v9037 = vmul.f32 %v8972, %v8991
    %v9038 = vmul.f32 %v8973, %v8991
    %v9039 = vmul.f32 %v8974, %v8991
    %v9040 = vmul.f32 %v8975, %v8991
    %v9041 = vmul.f32 %v8976, %v8991
    %v9042 = vmul.f32 %v8977, %v8991
    %v9043 = vmul.f32 %v8978, %v8991
    %v9044 = vmul.f32 %v8979, %v8991
    %v9045 = vmul.f32 %v8980, %v8991
    %v9046 = vmul.f32 %v8981, %v8991
    %v9047 = vmul.f32 %v8982, %v8991
    %v9048 = vmul.f32 %v8983, %v8991
    %v9049 = vmul.f32 %v8984, %v8991
    %v9050 = vmul.f32 %v8985, %v8991
    %v9051 = vmul.f32 %v8986, %v8991
    %v9052 = vmul.f32 %v8987, %v8991
    %v9053 = vmul.f32 %v8988, %v8991
    %v9054 = vmul.f32 %v8989, %v8991
    %v9055 = vmul.f32 %v8990, %v8991
    %v9056 = vsel %vm4899, %v8992, 0.0
    %9057 = vadd.xlane.f32.xlu0 %v9056
    %v9058 = vpop.xlane.xlu0 %9057
    %v9059 = vsel %vm4899, %v8993, 0.0
    %9060 = vadd.xlane.f32.xlu0 %v9059
    %v9061 = vpop.xlane.xlu0 %9060
    %v9062 = vsel %vm4899, %v8994, 0.0
    %9063 = vadd.xlane.f32.xlu0 %v9062
    %v9064 = vpop.xlane.xlu0 %9063
    %v9065 = vsel %vm4899, %v8995, 0.0
    %9066 = vadd.xlane.f32.xlu0 %v9065
    %v9067 = vpop.xlane.xlu0 %9066
    %v9068 = vsel %vm4899, %v8996, 0.0
    %9069 = vadd.xlane.f32.xlu0 %v9068
    %v9070 = vpop.xlane.xlu0 %9069
    %v9071 = vsel %vm4899, %v8997, 0.0
    %9072 = vadd.xlane.f32.xlu0 %v9071
    %v9073 = vpop.xlane.xlu0 %9072
    %v9074 = vsel %vm4899, %v8998, 0.0
    %9075 = vadd.xlane.f32.xlu0 %v9074
    %v9076 = vpop.xlane.xlu0 %9075
    %v9077 = vsel %vm4899, %v8999, 0.0
    %9078 = vadd.xlane.f32.xlu0 %v9077
    %v9079 = vpop.xlane.xlu0 %9078
    %v9080 = vsel %vm4899, %v9000, 0.0
    %9081 = vadd.xlane.f32.xlu0 %v9080
    %v9082 = vpop.xlane.xlu0 %9081
    %v9083 = vsel %vm4899, %v9001, 0.0
    %9084 = vadd.xlane.f32.xlu0 %v9083
    %v9085 = vpop.xlane.xlu0 %9084
    %v9086 = vsel %vm4899, %v9002, 0.0
    %9087 = vadd.xlane.f32.xlu0 %v9086
    %v9088 = vpop.xlane.xlu0 %9087
    %v9089 = vsel %vm4899, %v9003, 0.0
    %9090 = vadd.xlane.f32.xlu0 %v9089
    %v9091 = vpop.xlane.xlu0 %9090
    %v9092 = vsel %vm4899, %v9004, 0.0
    %9093 = vadd.xlane.f32.xlu0 %v9092
    %v9094 = vpop.xlane.xlu0 %9093
    %v9095 = vsel %vm4899, %v9005, 0.0
    %9096 = vadd.xlane.f32.xlu0 %v9095
    %v9097 = vpop.xlane.xlu0 %9096
    %v9098 = vsel %vm4899, %v9006, 0.0
    %9099 = vadd.xlane.f32.xlu0 %v9098
    %v9100 = vpop.xlane.xlu0 %9099
    %v9101 = vsel %vm4899, %v9007, 0.0
    %9102 = vadd.xlane.f32.xlu0 %v9101
    %v9103 = vpop.xlane.xlu0 %9102
    %v9104 = vsel %vm4899, %v9008, 0.0
    %9105 = vadd.xlane.f32.xlu0 %v9104
    %v9106 = vpop.xlane.xlu0 %9105
    %v9107 = vsel %vm4899, %v9009, 0.0
    %9108 = vadd.xlane.f32.xlu0 %v9107
    %v9109 = vpop.xlane.xlu0 %9108
    %v9110 = vsel %vm4899, %v9010, 0.0
    %9111 = vadd.xlane.f32.xlu0 %v9110
    %v9112 = vpop.xlane.xlu0 %9111
    %v9113 = vsel %vm4899, %v9011, 0.0
    %9114 = vadd.xlane.f32.xlu0 %v9113
    %v9115 = vpop.xlane.xlu0 %9114
    %v9116 = vsel %vm4899, %v9012, 0.0
    %9117 = vadd.xlane.f32.xlu0 %v9116
    %v9118 = vpop.xlane.xlu0 %9117
    %v9119 = vsel %vm4899, %v9013, 0.0
    %9120 = vadd.xlane.f32.xlu0 %v9119
    %v9121 = vpop.xlane.xlu0 %9120
    %v9122 = vsel %vm4899, %v9014, 0.0
    %9123 = vadd.xlane.f32.xlu0 %v9122
    %v9124 = vpop.xlane.xlu0 %9123
    %v9125 = vsel %vm4899, %v9015, 0.0
    %9126 = vadd.xlane.f32.xlu0 %v9125
    %v9127 = vpop.xlane.xlu0 %9126
    %v9128 = vsel %vm4899, %v9016, 0.0
    %9129 = vadd.xlane.f32.xlu0 %v9128
    %v9130 = vpop.xlane.xlu0 %9129
    %v9131 = vsel %vm4899, %v9017, 0.0
    %9132 = vadd.xlane.f32.xlu0 %v9131
    %v9133 = vpop.xlane.xlu0 %9132
    %v9134 = vsel %vm4899, %v9018, 0.0
    %9135 = vadd.xlane.f32.xlu0 %v9134
    %v9136 = vpop.xlane.xlu0 %9135
    %v9137 = vsel %vm4899, %v9019, 0.0
    %9138 = vadd.xlane.f32.xlu0 %v9137
    %v9139 = vpop.xlane.xlu0 %9138
    %v9140 = vsel %vm4899, %v9020, 0.0
    %9141 = vadd.xlane.f32.xlu0 %v9140
    %v9142 = vpop.xlane.xlu0 %9141
    %v9143 = vsel %vm4899, %v9021, 0.0
    %9144 = vadd.xlane.f32.xlu0 %v9143
    %v9145 = vpop.xlane.xlu0 %9144
    %v9146 = vsel %vm4899, %v9022, 0.0
    %9147 = vadd.xlane.f32.xlu0 %v9146
    %v9148 = vpop.xlane.xlu0 %9147
    %v9149 = vsel %vm4899, %v9023, 0.0
    %9150 = vadd.xlane.f32.xlu0 %v9149
    %v9151 = vpop.xlane.xlu0 %9150
    %v9152 = vsel %vm4899, %v9024, 0.0
    %9153 = vadd.xlane.f32.xlu0 %v9152
    %v9154 = vpop.xlane.xlu0 %9153
    %v9155 = vsel %vm4899, %v9025, 0.0
    %9156 = vadd.xlane.f32.xlu0 %v9155
    %v9157 = vpop.xlane.xlu0 %9156
    %v9158 = vsel %vm4899, %v9026, 0.0
    %9159 = vadd.xlane.f32.xlu0 %v9158
    %v9160 = vpop.xlane.xlu0 %9159
    %v9161 = vsel %vm4899, %v9027, 0.0
    %9162 = vadd.xlane.f32.xlu0 %v9161
    %v9163 = vpop.xlane.xlu0 %9162
    %v9164 = vsel %vm4899, %v9028, 0.0
    %9165 = vadd.xlane.f32.xlu0 %v9164
    %v9166 = vpop.xlane.xlu0 %9165
    %v9167 = vsel %vm4899, %v9029, 0.0
    %9168 = vadd.xlane.f32.xlu0 %v9167
    %v9169 = vpop.xlane.xlu0 %9168
    %v9170 = vsel %vm4899, %v9030, 0.0
    %9171 = vadd.xlane.f32.xlu0 %v9170
    %v9172 = vpop.xlane.xlu0 %9171
    %v9173 = vsel %vm4899, %v9031, 0.0
    %9174 = vadd.xlane.f32.xlu0 %v9173
    %v9175 = vpop.xlane.xlu0 %9174
    %v9176 = vsel %vm4899, %v9032, 0.0
    %9177 = vadd.xlane.f32.xlu0 %v9176
    %v9178 = vpop.xlane.xlu0 %9177
    %v9179 = vsel %vm4899, %v9033, 0.0
    %9180 = vadd.xlane.f32.xlu0 %v9179
    %v9181 = vpop.xlane.xlu0 %9180
    %v9182 = vsel %vm4899, %v9034, 0.0
    %9183 = vadd.xlane.f32.xlu0 %v9182
    %v9184 = vpop.xlane.xlu0 %9183
    %v9185 = vsel %vm4899, %v9035, 0.0
    %9186 = vadd.xlane.f32.xlu0 %v9185
    %v9187 = vpop.xlane.xlu0 %9186
    %v9188 = vsel %vm4899, %v9036, 0.0
    %9189 = vadd.xlane.f32.xlu0 %v9188
    %v9190 = vpop.xlane.xlu0 %9189
    %v9191 = vsel %vm4899, %v9037, 0.0
    %9192 = vadd.xlane.f32.xlu0 %v9191
    %v9193 = vpop.xlane.xlu0 %9192
    %v9194 = vsel %vm4899, %v9038, 0.0
    %9195 = vadd.xlane.f32.xlu0 %v9194
    %v9196 = vpop.xlane.xlu0 %9195
    %v9197 = vsel %vm4899, %v9039, 0.0
    %9198 = vadd.xlane.f32.xlu0 %v9197
    %v9199 = vpop.xlane.xlu0 %9198
    %v9200 = vsel %vm4899, %v9040, 0.0
    %9201 = vadd.xlane.f32.xlu0 %v9200
    %v9202 = vpop.xlane.xlu0 %9201
    %v9203 = vsel %vm4899, %v9041, 0.0
    %9204 = vadd.xlane.f32.xlu0 %v9203
    %v9205 = vpop.xlane.xlu0 %9204
    %v9206 = vsel %vm4899, %v9042, 0.0
    %9207 = vadd.xlane.f32.xlu0 %v9206
    %v9208 = vpop.xlane.xlu0 %9207
    %v9209 = vsel %vm4899, %v9043, 0.0
    %9210 = vadd.xlane.f32.xlu0 %v9209
    %v9211 = vpop.xlane.xlu0 %9210
    %v9212 = vsel %vm4899, %v9044, 0.0
    %9213 = vadd.xlane.f32.xlu0 %v9212
    %v9214 = vpop.xlane.xlu0 %9213
    %v9215 = vsel %vm4899, %v9045, 0.0
    %9216 = vadd.xlane.f32.xlu0 %v9215
    %v9217 = vpop.xlane.xlu0 %9216
    %v9218 = vsel %vm4899, %v9046, 0.0
    %9219 = vadd.xlane.f32.xlu0 %v9218
    %v9220 = vpop.xlane.xlu0 %9219
    %v9221 = vsel %vm4899, %v9047, 0.0
    %9222 = vadd.xlane.f32.xlu0 %v9221
    %v9223 = vpop.xlane.xlu0 %9222
    %v9224 = vsel %vm4899, %v9048, 0.0
    %9225 = vadd.xlane.f32.xlu0 %v9224
    %v9226 = vpop.xlane.xlu0 %9225
    %v9227 = vsel %vm4899, %v9049, 0.0
    %9228 = vadd.xlane.f32.xlu0 %v9227
    %v9229 = vpop.xlane.xlu0 %9228
    %v9230 = vsel %vm4899, %v9050, 0.0
    %9231 = vadd.xlane.f32.xlu0 %v9230
    %v9232 = vpop.xlane.xlu0 %9231
    %v9233 = vsel %vm4899, %v9051, 0.0
    %9234 = vadd.xlane.f32.xlu0 %v9233
    %v9235 = vpop.xlane.xlu0 %9234
    %v9236 = vsel %vm4899, %v9052, 0.0
    %9237 = vadd.xlane.f32.xlu0 %v9236
    %v9238 = vpop.xlane.xlu0 %9237
    %v9239 = vsel %vm4899, %v9053, 0.0
    %9240 = vadd.xlane.f32.xlu0 %v9239
    %v9241 = vpop.xlane.xlu0 %9240
    %v9242 = vsel %vm4899, %v9054, 0.0
    %9243 = vadd.xlane.f32.xlu0 %v9242
    %v9244 = vpop.xlane.xlu0 %9243
    %v9245 = vsel %vm4899, %v9055, 0.0
    %9246 = vadd.xlane.f32.xlu0 %v9245
    %v9247 = vpop.xlane.xlu0 %9246
    %v9248 = vadd.f32 %v8863, %v9058
    %v9249 = vadd.f32 %v8864, %v9061
    %v9250 = vadd.f32 %v8865, %v9064
    %v9251 = vadd.f32 %v8866, %v9067
    %v9252 = vadd.f32 %v8867, %v9070
    %v9253 = vadd.f32 %v8868, %v9073
    %v9254 = vadd.f32 %v8869, %v9076
    %v9255 = vadd.f32 %v8870, %v9079
    %v9256 = vadd.f32 %v8871, %v9082
    %v9257 = vadd.f32 %v8872, %v9085
    %v9258 = vadd.f32 %v8873, %v9088
    %v9259 = vadd.f32 %v8874, %v9091
    %v9260 = vadd.f32 %v8875, %v9094
    %v9261 = vadd.f32 %v8876, %v9097
    %v9262 = vadd.f32 %v8877, %v9100
    %v9263 = vadd.f32 %v8878, %v9103
    %v9264 = vadd.f32 %v8879, %v9106
    %v9265 = vadd.f32 %v8880, %v9109
    %v9266 = vadd.f32 %v8881, %v9112
    %v9267 = vadd.f32 %v8882, %v9115
    %v9268 = vadd.f32 %v8883, %v9118
    %v9269 = vadd.f32 %v8884, %v9121
    %v9270 = vadd.f32 %v8885, %v9124
    %v9271 = vadd.f32 %v8886, %v9127
    %v9272 = vadd.f32 %v8887, %v9130
    %v9273 = vadd.f32 %v8888, %v9133
    %v9274 = vadd.f32 %v8889, %v9136
    %v9275 = vadd.f32 %v8890, %v9139
    %v9276 = vadd.f32 %v8891, %v9142
    %v9277 = vadd.f32 %v8892, %v9145
    %v9278 = vadd.f32 %v8893, %v9148
    %v9279 = vadd.f32 %v8894, %v9151
    %v9280 = vadd.f32 %v8895, %v9154
    %v9281 = vadd.f32 %v8896, %v9157
    %v9282 = vadd.f32 %v8897, %v9160
    %v9283 = vadd.f32 %v8898, %v9163
    %v9284 = vadd.f32 %v8899, %v9166
    %v9285 = vadd.f32 %v8900, %v9169
    %v9286 = vadd.f32 %v8901, %v9172
    %v9287 = vadd.f32 %v8902, %v9175
    %v9288 = vadd.f32 %v8903, %v9178
    %v9289 = vadd.f32 %v8904, %v9181
    %v9290 = vadd.f32 %v8905, %v9184
    %v9291 = vadd.f32 %v8906, %v9187
    %v9292 = vadd.f32 %v8907, %v9190
    %v9293 = vadd.f32 %v8908, %v9193
    %v9294 = vadd.f32 %v8909, %v9196
    %v9295 = vadd.f32 %v8910, %v9199
    %v9296 = vadd.f32 %v8911, %v9202
    %v9297 = vadd.f32 %v8912, %v9205
    %v9298 = vadd.f32 %v8913, %v9208
    %v9299 = vadd.f32 %v8914, %v9211
    %v9300 = vadd.f32 %v8915, %v9214
    %v9301 = vadd.f32 %v8916, %v9217
    %v9302 = vadd.f32 %v8917, %v9220
    %v9303 = vadd.f32 %v8918, %v9223
    %v9304 = vadd.f32 %v8919, %v9226
    %v9305 = vadd.f32 %v8920, %v9229
    %v9306 = vadd.f32 %v8921, %v9232
    %v9307 = vadd.f32 %v8922, %v9235
    %v9308 = vadd.f32 %v8923, %v9238
    %v9309 = vadd.f32 %v8924, %v9241
    %v9310 = vadd.f32 %v8925, %v9244
    %v9311 = vadd.f32 %v8926, %v9247
    %v9312 = vtanh.pop %v9248
    %v9313 = vtanh.pop %v9249
    %v9314 = vtanh.pop %v9250
    %v9315 = vtanh.pop %v9251
    %v9316 = vtanh.pop %v9252
    %v9317 = vtanh.pop %v9253
    %v9318 = vtanh.pop %v9254
    %v9319 = vtanh.pop %v9255
    %v9320 = vtanh.pop %v9256
    %v9321 = vtanh.pop %v9257
    %v9322 = vtanh.pop %v9258
    %v9323 = vtanh.pop %v9259
    %v9324 = vtanh.pop %v9260
    %v9325 = vtanh.pop %v9261
    %v9326 = vtanh.pop %v9262
    %v9327 = vtanh.pop %v9263
    %v9328 = vtanh.pop %v9264
    %v9329 = vtanh.pop %v9265
    %v9330 = vtanh.pop %v9266
    %v9331 = vtanh.pop %v9267
    %v9332 = vtanh.pop %v9268
    %v9333 = vtanh.pop %v9269
    %v9334 = vtanh.pop %v9270
    %v9335 = vtanh.pop %v9271
    %v9336 = vtanh.pop %v9272
    %v9337 = vtanh.pop %v9273
    %v9338 = vtanh.pop %v9274
    %v9339 = vtanh.pop %v9275
    %v9340 = vtanh.pop %v9276
    %v9341 = vtanh.pop %v9277
    %v9342 = vtanh.pop %v9278
    %v9343 = vtanh.pop %v9279
    %v9344 = vtanh.pop %v9280
    %v9345 = vtanh.pop %v9281
    %v9346 = vtanh.pop %v9282
    %v9347 = vtanh.pop %v9283
    %v9348 = vtanh.pop %v9284
    %v9349 = vtanh.pop %v9285
    %v9350 = vtanh.pop %v9286
    %v9351 = vtanh.pop %v9287
    %v9352 = vtanh.pop %v9288
    %v9353 = vtanh.pop %v9289
    %v9354 = vtanh.pop %v9290
    %v9355 = vtanh.pop %v9291
    %v9356 = vtanh.pop %v9292
    %v9357 = vtanh.pop %v9293
    %v9358 = vtanh.pop %v9294
    %v9359 = vtanh.pop %v9295
    %v9360 = vtanh.pop %v9296
    %v9361 = vtanh.pop %v9297
    %v9362 = vtanh.pop %v9298
    %v9363 = vtanh.pop %v9299
    %v9364 = vtanh.pop %v9300
    %v9365 = vtanh.pop %v9301
    %v9366 = vtanh.pop %v9302
    %v9367 = vtanh.pop %v9303
    %v9368 = vtanh.pop %v9304
    %v9369 = vtanh.pop %v9305
    %v9370 = vtanh.pop %v9306
    %v9371 = vtanh.pop %v9307
    %v9372 = vtanh.pop %v9308
    %v9373 = vtanh.pop %v9309
    %v9374 = vtanh.pop %v9310
    %v9375 = vtanh.pop %v9311
    %v9440 = vlaneseq
    %v9441 = vand.u32 %v9440, 127
    %v9442 = vperm.slane %v9312, %v9441
    %v9443 = vadd.s32 %v9441, 4294967288
    %v9444 = vperm.slane %v9313, %v9443
    %vm9445 = vcmask 130112
    %v9446 = vsel %vm9445, %v9444, %v9442
    %v9447 = vperm.slane %v9314, %v9441
    %v9448 = vperm.slane %v9315, %v9443
    %v9449 = vsel %vm9445, %v9448, %v9447
    %v9450 = vperm.slane %v9316, %v9441
    %v9451 = vperm.slane %v9317, %v9443
    %v9452 = vsel %vm9445, %v9451, %v9450
    %v9453 = vperm.slane %v9318, %v9441
    %v9454 = vperm.slane %v9319, %v9443
    %v9455 = vsel %vm9445, %v9454, %v9453
    %v9456 = vperm.slane %v9320, %v9441
    %v9457 = vperm.slane %v9321, %v9443
    %v9458 = vsel %vm9445, %v9457, %v9456
    %v9459 = vperm.slane %v9322, %v9441
    %v9460 = vperm.slane %v9323, %v9443
    %v9461 = vsel %vm9445, %v9460, %v9459
    %v9462 = vperm.slane %v9324, %v9441
    %v9463 = vperm.slane %v9325, %v9443
    %v9464 = vsel %vm9445, %v9463, %v9462
    %v9465 = vperm.slane %v9326, %v9441
    %v9466 = vperm.slane %v9327, %v9443
    %v9467 = vsel %vm9445, %v9466, %v9465
    %v9468 = vperm.slane %v9328, %v9441
    %v9469 = vperm.slane %v9329, %v9443
    %v9470 = vsel %vm9445, %v9469, %v9468
    %v9471 = vperm.slane %v9330, %v9441
    %v9472 = vperm.slane %v9331, %v9443
    %v9473 = vsel %vm9445, %v9472, %v9471
    %v9474 = vperm.slane %v9332, %v9441
    %v9475 = vperm.slane %v9333, %v9443
    %v9476 = vsel %vm9445, %v9475, %v9474
    %v9477 = vperm.slane %v9334, %v9441
    %v9478 = vperm.slane %v9335, %v9443
    %v9479 = vsel %vm9445, %v9478, %v9477
    %v9480 = vperm.slane %v9336, %v9441
    %v9481 = vperm.slane %v9337, %v9443
    %v9482 = vsel %vm9445, %v9481, %v9480
    %v9483 = vperm.slane %v9338, %v9441
    %v9484 = vperm.slane %v9339, %v9443
    %v9485 = vsel %vm9445, %v9484, %v9483
    %v9486 = vperm.slane %v9340, %v9441
    %v9487 = vperm.slane %v9341, %v9443
    %v9488 = vsel %vm9445, %v9487, %v9486
    %v9489 = vperm.slane %v9342, %v9441
    %v9490 = vperm.slane %v9343, %v9443
    %v9491 = vsel %vm9445, %v9490, %v9489
    %v9492 = vperm.slane %v9344, %v9441
    %v9493 = vperm.slane %v9345, %v9443
    %v9494 = vsel %vm9445, %v9493, %v9492
    %v9495 = vperm.slane %v9346, %v9441
    %v9496 = vperm.slane %v9347, %v9443
    %v9497 = vsel %vm9445, %v9496, %v9495
    %v9498 = vperm.slane %v9348, %v9441
    %v9499 = vperm.slane %v9349, %v9443
    %v9500 = vsel %vm9445, %v9499, %v9498
    %v9501 = vperm.slane %v9350, %v9441
    %v9502 = vperm.slane %v9351, %v9443
    %v9503 = vsel %vm9445, %v9502, %v9501
    %v9504 = vperm.slane %v9352, %v9441
    %v9505 = vperm.slane %v9353, %v9443
    %v9506 = vsel %vm9445, %v9505, %v9504
    %v9507 = vperm.slane %v9354, %v9441
    %v9508 = vperm.slane %v9355, %v9443
    %v9509 = vsel %vm9445, %v9508, %v9507
    %v9510 = vperm.slane %v9356, %v9441
    %v9511 = vperm.slane %v9357, %v9443
    %v9512 = vsel %vm9445, %v9511, %v9510
    %v9513 = vperm.slane %v9358, %v9441
    %v9514 = vperm.slane %v9359, %v9443
    %v9515 = vsel %vm9445, %v9514, %v9513
    %v9516 = vperm.slane %v9360, %v9441
    %v9517 = vperm.slane %v9361, %v9443
    %v9518 = vsel %vm9445, %v9517, %v9516
    %v9519 = vperm.slane %v9362, %v9441
    %v9520 = vperm.slane %v9363, %v9443
    %v9521 = vsel %vm9445, %v9520, %v9519
    %v9522 = vperm.slane %v9364, %v9441
    %v9523 = vperm.slane %v9365, %v9443
    %v9524 = vsel %vm9445, %v9523, %v9522
    %v9525 = vperm.slane %v9366, %v9441
    %v9526 = vperm.slane %v9367, %v9443
    %v9527 = vsel %vm9445, %v9526, %v9525
    %v9528 = vperm.slane %v9368, %v9441
    %v9529 = vperm.slane %v9369, %v9443
    %v9530 = vsel %vm9445, %v9529, %v9528
    %v9531 = vperm.slane %v9370, %v9441
    %v9532 = vperm.slane %v9371, %v9443
    %v9533 = vsel %vm9445, %v9532, %v9531
    %v9534 = vperm.slane %v9372, %v9441
    %v9535 = vperm.slane %v9373, %v9443
    %v9536 = vsel %vm9445, %v9535, %v9534
    %v9537 = vperm.slane %v9374, %v9441
    %v9538 = vperm.slane %v9375, %v9443
    %v9539 = vsel %vm9445, %v9538, %v9537
    %vm9540 = vcmask 1041409
    %v9541 = vsel %vm9540, %v9449, %v9446
    %vm9542 = vcmask 1042434
    %v9543 = vsel %vm9542, %v9452, %v9541
    %vm9544 = vcmask 1043459
    %v9545 = vsel %vm9544, %v9455, %v9543
    %vm9546 = vcmask 1044484
    %v9547 = vsel %vm9546, %v9458, %v9545
    %vm9548 = vcmask 1045509
    %v9549 = vsel %vm9548, %v9461, %v9547
    %vm9550 = vcmask 1046534
    %v9551 = vsel %vm9550, %v9464, %v9549
    %vm9552 = vcmask 1047559
    %v9553 = vsel %vm9552, %v9467, %v9551
    %v9554 = vsel %vm9540, %v9473, %v9470
    %v9555 = vsel %vm9542, %v9476, %v9554
    %v9556 = vsel %vm9544, %v9479, %v9555
    %v9557 = vsel %vm9546, %v9482, %v9556
    %v9558 = vsel %vm9548, %v9485, %v9557
    %v9559 = vsel %vm9550, %v9488, %v9558
    %v9560 = vsel %vm9552, %v9491, %v9559
    %v9561 = vsel %vm9540, %v9497, %v9494
    %v9562 = vsel %vm9542, %v9500, %v9561
    %v9563 = vsel %vm9544, %v9503, %v9562
    %v9564 = vsel %vm9546, %v9506, %v9563
    %v9565 = vsel %vm9548, %v9509, %v9564
    %v9566 = vsel %vm9550, %v9512, %v9565
    %v9567 = vsel %vm9552, %v9515, %v9566
    %v9568 = vsel %vm9540, %v9521, %v9518
    %v9569 = vsel %vm9542, %v9524, %v9568
    %v9570 = vsel %vm9544, %v9527, %v9569
    %v9571 = vsel %vm9546, %v9530, %v9570
    %v9572 = vsel %vm9548, %v9533, %v9571
    %v9573 = vsel %vm9550, %v9536, %v9572
    %v9574 = vsel %vm9552, %v9539, %v9573
    %vm9579 = vcmask 130048
    %9580 = vst.msk [vmem:[#allocation5] sm:$0xff] %vm9579, %v9553
    %9581 = vst.msk [vmem:[#allocation5 + $0x8] sm:$0xff] %vm9579, %v9560
    %9582 = vst.msk [vmem:[#allocation5 + $0x10] sm:$0xff] %vm9579, %v9567
    %9583 = vst.msk [vmem:[#allocation5 + $0x18] sm:$0xff] %vm9579, %v9574
    // Predicated region
    $region34: #{gen_one_forward.1} parent=1 // pred_check
      _
    $region35: #{gen_one_forward.1} parent=1 // pred_check_branch
      %9585 = sbr.rel (0) target = $region37
    $region36: #{gen_one_forward.1} parent=1 // pred_region
      %9587 = vsyncadd [#allocation6], 0
      %s9588 = sshll.u32 [#allocation5], 4
      %s9589 = int_to_ptr.vmem [resolvable:$true] %s9588
      %s9590 = sshll.u32 %s8, 4
      %s9591 = int_to_ptr.hbm [resolvable:$true] %s9590
      %9596 = dma.vmem_to_hbm [thread:$0]  %s9589, 512, %s9591, [#allocation6], 128, 128, 8
    $region37: #{gen_one_forward.1} parent=1 // pred_fallthru
      _
    // Predicated region
    $region38: #{gen_one_forward.1} parent=1 // pred_check
      _
    $region39: #{gen_one_forward.1} parent=1 // pred_check_branch
      %9598 = sbr.rel (0) target = $region41
    $region40: #{gen_one_forward.1} parent=1 // pred_region
      %9600 = dma.done [#allocation6], 512
    $region41: #{gen_one_forward.1} parent=1 // pred_fallthru
      _
    %9601 = vsyncpa [#allocation6], 1

</llo_original>
